<compile_context>
chip_gen: v5e
topology: v5e:2x2
jax: 0.10.0
libtpu: 0.0.40
codegen_flags: <defaults>
</compile_context>

<pallas_src>
import functools

import jax
import jax.numpy as jnp
from jax import lax
from jax.experimental import pallas as pl
from jax.experimental.pallas import tpu as pltpu

EPS = 1e-5
LANES = 128
_VMEM_LIMIT = 32 * 1024 * 1024


# ----------------------------- small helpers --------------------------------

def _round_up(x, m):
    return (x + m - 1) // m * m


def _row_tiling(m):
    """Row-tile, padded row count and grid size for an (m, C) operand."""
    if m >= 512:
        tm = 256          # 512 is fine on v5e/v6e; 256 keeps v7x (64 MiB VMEM) happy
    elif m >= 256:
        tm = 128
    elif m >= 64:
        tm = _round_up(m // 2, 8)   # keep >= 2 grid steps (v7x has 2 TCs/chip)
    else:
        tm = _round_up(m, 8)
    mp = _round_up(m, tm)
    return tm, mp, mp // tm


def _pad_rows(x, mp):
    return x if x.shape[0] == mp else jnp.pad(x, ((0, mp - x.shape[0]), (0, 0)))


def _pad_vec(v, c):
    v = v.astype(jnp.float32)
    return jnp.pad(v, (0, c - v.shape[0]))


def _pad_mat(w, r, c):
    w = w.astype(jnp.float32)
    return jnp.pad(w, ((0, r - w.shape[0]), (0, c - w.shape[1])))


def _compiler_params():
    return pltpu.CompilerParams(dimension_semantics=("parallel",),
                                vmem_limit_bytes=_VMEM_LIMIT)


# ------------------------- in-kernel building blocks -------------------------

def _row_mask(tm, m_true):
    rows = lax.broadcasted_iota(jnp.int32, (tm, 1), 0) + pl.program_id(0) * tm
    return (rows < m_true).astype(jnp.float32)


def _emit_partial_stats(val, mask, sum_ref, ssq_ref):
    """Per-block partial sum and block-mean-centered sum-of-squares of `val`."""
    c = val.shape[-1]
    vm = val * mask
    s = jnp.sum(vm, axis=0, keepdims=True)                       # (1, C)
    cnt = jnp.maximum(jnp.sum(mask), 1.0)
    mu = s / cnt
    q = jnp.sum(jnp.square((val - mu) * mask), axis=0, keepdims=True)
    sum_ref[0] = jnp.broadcast_to(s, (8, c))
    ssq_ref[0] = jnp.broadcast_to(q, (8, c))


# ------------------------------- kernels -------------------------------------

def _xstats_kernel(x_ref, sum_ref, ssq_ref, *, tm, m_true):
    # Partial batch statistics of the block input (needed before bn1 can fold).
    x = x_ref[...].astype(jnp.float32)
    _emit_partial_stats(x, _row_mask(tm, m_true), sum_ref, ssq_ref)


def _gemm_stats_kernel(*refs, bn_relu, tm, m_true):
    # [optional BN+ReLU prologue] -> bf16 1x1-conv GEMM -> output + partial stats.
    if bn_relu:
        x_ref, s_ref, b_ref, w_ref, y_ref, sum_ref, ssq_ref = refs
    else:
        x_ref, w_ref, y_ref, sum_ref, ssq_ref = refs
    x = x_ref[...].astype(jnp.float32)
    if bn_relu:
        x = jnp.maximum(x * s_ref[...] + b_ref[...], 0.0)
    y = jnp.dot(x.astype(jnp.bfloat16), w_ref[...],
                preferred_element_type=jnp.float32)               # MXU bf16 -> f32
    y_ref[...] = y.astype(y_ref.dtype)
    _emit_partial_stats(y, _row_mask(tm, m_true), sum_ref, ssq_ref)


def _conv2_kernel(y1_ref, s_ref, b_ref, w_ref, y2_ref, sum_ref, ssq_ref,
                  scr_ref, acc_ref, *, H, W, Ho, Wo, stride):
    # Fused: BN2+ReLU prologue -> zero-padded image in VMEM -> 3x3(/stride) conv
    # as 9 shifted GEMMs accumulated in f32 -> y2 + its partial batch stats.
    Wp = W + 2
    Q = H * Wp - 2
    scr_ref[...] = jnp.zeros_like(scr_ref)          # zero padding border
    for y in range(H):                               # interior rows, BN applied first
        row = jnp.maximum(
            y1_ref[0, y].astype(jnp.float32) * s_ref[...] + b_ref[...], 0.0)
        base = (y + 1) * Wp + 1
        scr_ref[base:base + W, :] = row
    k = 0
    for dy in range(3):
        for dx in range(3):
            shift = dy * Wp + dx
            tap = scr_ref[shift:shift + Q, :].astype(jnp.bfloat16)
            p = jnp.dot(tap, w_ref[k], preferred_element_type=jnp.float32)
            if k == 0:
                acc_ref[...] = p
            else:
                acc_ref[...] += p
            k += 1
    # gather the valid (strided) output positions
    span = stride * (Wo - 1) + 1
    if stride > 1:
        oxi = lax.broadcasted_iota(jnp.int32, (Wo, span), 0)
        ji = lax.broadcasted_iota(jnp.int32, (Wo, span), 1)
        csel = (ji == stride * oxi).astype(jnp.float32)
    rows = []
    for oy in range(Ho):
        blk = acc_ref[stride * oy * Wp: stride * oy * Wp + span, :]
        rows.append(blk if stride == 1
                    else jnp.dot(csel, blk, preferred_element_type=jnp.float32))
    y2 = jnp.concatenate(rows, axis=0)               # (Ho*Wo, C) f32
    y2_ref[0] = y2.astype(y2_ref.dtype)
    ones = jnp.ones((Ho * Wo, 1), jnp.float32)
    _emit_partial_stats(y2, ones, sum_ref, ssq_ref)


def _conv3_kernel(*refs, sc_bn):
    # Fused: BN3+ReLU prologue -> bf16 1x1-conv GEMM -> residual epilogue
    # (adds shortcut, with its folded BatchNorm when projecting).
    if sc_bn:
        y2_ref, s_ref, b_ref, w_ref, sc_ref, ss_ref, sb_ref, o_ref = refs
    else:
        y2_ref, s_ref, b_ref, w_ref, sc_ref, o_ref = refs
    a = jnp.maximum(y2_ref[...].astype(jnp.float32) * s_ref[...] + b_ref[...], 0.0)
    y3 = jnp.dot(a.astype(jnp.bfloat16), w_ref[...],
                 preferred_element_type=jnp.float32)
    sc = sc_ref[...].astype(jnp.float32)
    if sc_bn:
        sc = sc * ss_ref[...] + sb_ref[...]
    o_ref[...] = (y3 + sc).astype(o_ref.dtype)


# ------------------------------ wrappers --------------------------------------

def partial_stats(x2d):
    m, c = x2d.shape
    tm, mp, g = _row_tiling(m)
    sums, ssqs = pl.pallas_call(
        functools.partial(_xstats_kernel, tm=tm, m_true=m),
        out_shape=[jax.ShapeDtypeStruct((g, 8, c), jnp.float32),
                   jax.ShapeDtypeStruct((g, 8, c), jnp.float32)],
        grid_spec=pltpu.PrefetchScalarGridSpec(
            num_scalar_prefetch=0, grid=(g,),
            in_specs=[pl.BlockSpec((tm, c), lambda i: (i, 0))],
            out_specs=[pl.BlockSpec((1, 8, c), lambda i: (i, 0, 0)),
                       pl.BlockSpec((1, 8, c), lambda i: (i, 0, 0))]),
        compiler_params=_compiler_params(),
    )(_pad_rows(x2d, mp))
    counts = jnp.clip(m - jnp.arange(g) * tm, 0, tm).astype(jnp.float32)
    return sums[:, 0, :], ssqs[:, 0, :], counts


def gemm_with_stats(x2d, w, scale=None, shift=None, *, out_dtype=jnp.bfloat16):
    m, k = x2d.shape
    _, n = w.shape
    tm, mp, g = _row_tiling(m)
    bn_relu = scale is not None
    in_specs = [pl.BlockSpec((tm, k), lambda i: (i, 0))]
    args = [_pad_rows(x2d, mp)]
    if bn_relu:
        in_specs += [pl.BlockSpec((1, k), lambda i: (0, 0)),
                     pl.BlockSpec((1, k), lambda i: (0, 0))]
        args += [scale.reshape(1, k), shift.reshape(1, k)]
    in_specs += [pl.BlockSpec((k, n), lambda i: (0, 0))]
    args += [w]
    y, sums, ssqs = pl.pallas_call(
        functools.partial(_gemm_stats_kernel, bn_relu=bn_relu, tm=tm, m_true=m),
        out_shape=[jax.ShapeDtypeStruct((mp, n), out_dtype),
                   jax.ShapeDtypeStruct((g, 8, n), jnp.float32),
                   jax.ShapeDtypeStruct((g, 8, n), jnp.float32)],
        grid_spec=pltpu.PrefetchScalarGridSpec(
            num_scalar_prefetch=0, grid=(g,),
            in_specs=in_specs,
            out_specs=[pl.BlockSpec((tm, n), lambda i: (i, 0)),
                       pl.BlockSpec((1, 8, n), lambda i: (i, 0, 0)),
                       pl.BlockSpec((1, 8, n), lambda i: (i, 0, 0))]),
        compiler_params=_compiler_params(),
    )(*args)
    counts = jnp.clip(m - jnp.arange(g) * tm, 0, tm).astype(jnp.float32)
    return y[:m], sums[:, 0, :], ssqs[:, 0, :], counts


def conv2_3x3(y1_img, scale, shift, w_taps, *, stride):
    n, h, w, c = y1_img.shape
    ho = (h - 1) // stride + 1
    wo = (w - 1) // stride + 1
    q = h * (w + 2) - 2
    y2, sums, ssqs = pl.pallas_call(
        functools.partial(_conv2_kernel, H=h, W=w, Ho=ho, Wo=wo, stride=stride),
        out_shape=[jax.ShapeDtypeStruct((n, ho * wo, c), jnp.bfloat16),
                   jax.ShapeDtypeStruct((n, 8, c), jnp.float32),
                   jax.ShapeDtypeStruct((n, 8, c), jnp.float32)],
        grid_spec=pltpu.PrefetchScalarGridSpec(
            num_scalar_prefetch=0, grid=(n,),
            in_specs=[pl.BlockSpec((1, h, w, c), lambda b: (b, 0, 0, 0)),
                      pl.BlockSpec((1, c), lambda b: (0, 0)),
                      pl.BlockSpec((1, c), lambda b: (0, 0)),
                      pl.BlockSpec((9, c, c), lambda b: (0, 0, 0))],
            out_specs=[pl.BlockSpec((1, ho * wo, c), lambda b: (b, 0, 0)),
                       pl.BlockSpec((1, 8, c), lambda b: (b, 0, 0)),
                       pl.BlockSpec((1, 8, c), lambda b: (b, 0, 0))],
            scratch_shapes=[pltpu.VMEM(((h + 2) * (w + 2), c), jnp.float32),
                            pltpu.VMEM((q, c), jnp.float32)]),
        compiler_params=_compiler_params(),
    )(y1_img, scale.reshape(1, c), shift.reshape(1, c), w_taps)
    counts = jnp.full((n,), float(ho * wo), jnp.float32)
    return y2, sums[:, 0, :], ssqs[:, 0, :], counts


def conv3_residual(y2_flat, scale, shift, w3, sc, ss=None, sb=None):
    m, k = y2_flat.shape
    _, n = w3.shape
    tm, mp, g = _row_tiling(m)
    sc_bn = ss is not None
    in_specs = [pl.BlockSpec((tm, k), lambda i: (i, 0)),
                pl.BlockSpec((1, k), lambda i: (0, 0)),
                pl.BlockSpec((1, k), lambda i: (0, 0)),
                pl.BlockSpec((k, n), lambda i: (0, 0)),
                pl.BlockSpec((tm, n), lambda i: (i, 0))]
    args = [_pad_rows(y2_flat, mp), scale.reshape(1, k), shift.reshape(1, k),
            w3, _pad_rows(sc, mp)]
    if sc_bn:
        in_specs += [pl.BlockSpec((1, n), lambda i: (0, 0)),
                     pl.BlockSpec((1, n), lambda i: (0, 0))]
        args += [ss.reshape(1, n), sb.reshape(1, n)]
    out = pl.pallas_call(
        functools.partial(_conv3_kernel, sc_bn=sc_bn),
        out_shape=jax.ShapeDtypeStruct((mp, n), jnp.float32),
        grid_spec=pltpu.PrefetchScalarGridSpec(
            num_scalar_prefetch=0, grid=(g,),
            in_specs=in_specs,
            out_specs=pl.BlockSpec((tm, n), lambda i: (i, 0))),
        compiler_params=_compiler_params(),
    )(*args)
    return out[:m]


# --------------------------- JAX-side glue ------------------------------------

def combine_stats(sums, ssqs, counts):
    """Chan's parallel combine of per-block (sum, centered ssq) -> biased mean/var."""
    counts = counts[:, None]
    n = jnp.sum(counts)
    mean = jnp.sum(sums, axis=0) / n
    mu_j = sums / jnp.maximum(counts, 1.0)
    m2 = jnp.sum(ssqs, axis=0) + jnp.sum(counts * jnp.square(mu_j - mean[None, :]), axis=0)
    var = jnp.maximum(m2 / n, 0.0)
    return mean, var


def fold_bn(gamma, beta, mean, var):
    scale = gamma * lax.rsqrt(var + EPS)
    shift = beta - mean * scale
    return scale, shift


def resblock50_forward(x_nchw, params, *, stride, has_proj):
    n, cin, h, w = x_nchw.shape
    t = params["conv1_w"].shape[0]
    c4 = 4 * t
    cinp, tp, c4p = _round_up(cin, LANES), _round_up(t, LANES), _round_up(c4, LANES)
    ho = (h - 1) // stride + 1
    wo = (w - 1) // stride + 1

    x_nhwc = jnp.transpose(x_nchw, (0, 2, 3, 1)).astype(jnp.float32)
    x_flat = jnp.pad(x_nhwc.reshape(n * h * w, cin),
                     ((0, 0), (0, cinp - cin))).astype(jnp.bfloat16)

    # bn1 statistics of x (gridded partial-stats kernel + tiny combine in JAX)
    s_x, q_x, c_x = partial_stats(x_flat)
    sc1, sh1 = fold_bn(_pad_vec(params["bn1_g"], cinp), _pad_vec(params["bn1_b"], cinp),
                       *combine_stats(s_x, q_x, c_x))

    # conv1 = conv1(relu(bn1(x))): fused prologue + GEMM + partial stats of y1
    w1 = _pad_mat(params["conv1_w"][:, :, 0, 0].T, cinp, tp).astype(jnp.bfloat16)
    y1, s1, q1, c1 = gemm_with_stats(x_flat, w1, sc1, sh1)
    sc2, sh2 = fold_bn(_pad_vec(params["bn2_g"], tp), _pad_vec(params["bn2_b"], tp),
                       *combine_stats(s1, q1, c1))

    # conv2 = conv2(relu(bn2(y1))): fused prologue + in-VMEM 3x3/stride conv + stats
    w2 = jnp.stack([_pad_mat(params["conv2_w"][:, :, dy, dx].T, tp, tp)
                    for dy in range(3) for dx in range(3)]).astype(jnp.bfloat16)
    y2, s2, q2, c2 = conv2_3x3(y1.reshape(n, h, w, tp), sc2, sh2, w2, stride=stride)
    sc3, sh3 = fold_bn(_pad_vec(params["bn3_g"], tp), _pad_vec(params["bn3_b"], tp),
                       *combine_stats(s2, q2, c2))
    y2_flat = y2.reshape(n * ho * wo, tp)

    # shortcut(x)
    if has_proj:
        xs = jnp.pad(x_nhwc[:, ::stride, ::stride, :].reshape(n * ho * wo, cin),
                     ((0, 0), (0, cinp - cin))).astype(jnp.bfloat16)
        ws = _pad_mat(params["convs_w"][:, :, 0, 0].T, cinp, c4p).astype(jnp.bfloat16)
        sc_raw, s_s, q_s, c_s = gemm_with_stats(xs, ws)       # plain GEMM (no fake BN)
        scs, shs = fold_bn(_pad_vec(params["bns_g"], c4p), _pad_vec(params["bns_b"], c4p),
                           *combine_stats(s_s, q_s, c_s))
    else:
        sc_raw, scs, shs = x_flat, None, None                  # identity shortcut

    # conv3 = conv3(relu(bn3(y2))) + shortcut: fused prologue + GEMM + epilogue
    w3 = _pad_mat(params["conv3_w"][:, :, 0, 0].T, tp, c4p).astype(jnp.bfloat16)
    out_flat = conv3_residual(y2_flat, sc3, sh3, w3, sc_raw, scs, shs)

    out = out_flat[:, :c4].reshape(n, ho, wo, c4)
    return jnp.transpose(out, (0, 3, 1, 2))


# --------------------------- reference & params -------------------------------

def _reference_forward(x, params, *, stride, has_proj):
    def bn(v, g, b):
        mean = jnp.mean(v, axis=(0, 2, 3), keepdims=True)
        var = jnp.mean(jnp.square(v - mean), axis=(0, 2, 3), keepdims=True)
        return (v - mean) * lax.rsqrt(var + EPS) * g[None, :, None, None] \
            + b[None, :, None, None]

    def conv(v, wt, s, p):
        return lax.conv_general_dilated(v, wt, (s, s), [(p, p), (p, p)],
                                        dimension_numbers=("NCHW", "OIHW", "NCHW"))

    out = conv(jax.nn.relu(bn(x, params["bn1_g"], params["bn1_b"])), params["conv1_w"], 1, 0)
    out = conv(jax.nn.relu(bn(out, params["bn2_g"], params["bn2_b"])), params["conv2_w"], stride, 1)
    out = conv(jax.nn.relu(bn(out, params["bn3_g"], params["bn3_b"])), params["conv3_w"], 1, 0)
    sc = bn(conv(x, params["convs_w"], stride, 0), params["bns_g"], params["bns_b"]) \
        if has_proj else x
    return out + sc


def init_params(key, in_channels, tmp_channels, stride):
    expansion = 4
    out_channels = expansion * tmp_channels
    ks = jax.random.split(key, 10)

    def conv_w(k, cout, cin, kh, kw):
        fan_in = float(cin * kh * kw)
        return jax.random.normal(k, (cout, cin, kh, kw), jnp.float32) / jnp.sqrt(fan_in)

    def bn_pair(kg, kb, c):
        g = 1.0 + 0.1 * jax.random.normal(kg, (c,), jnp.float32)
        b = 0.1 * jax.random.normal(kb, (c,), jnp.float32)
        return g, b

    p = {
        "conv1_w": conv_w(ks[0], tmp_channels, in_channels, 1, 1),
        "conv2_w": conv_w(ks[1], tmp_channels, tmp_channels, 3, 3),
        "conv3_w": conv_w(ks[2], out_channels, tmp_channels, 1, 1),
    }
    p["bn1_g"], p["bn1_b"] = bn_pair(ks[3], ks[4], in_channels)
    p["bn2_g"], p["bn2_b"] = bn_pair(ks[5], ks[6], tmp_channels)
    p["bn3_g"], p["bn3_b"] = bn_pair(ks[7], ks[8], tmp_channels)

    has_proj = (stride != 1) or (in_channels != out_channels)
    if has_proj:
        kw1, kw2, kw3 = jax.random.split(ks[9], 3)
        p["convs_w"] = conv_w(kw1, out_channels, in_channels, 1, 1)
        p["bns_g"], p["bns_b"] = bn_pair(kw2, kw3, out_channels)
    return p, has_proj


if __name__ == "__main__":
    key = jax.random.PRNGKey(0)

    configs = [
        dict(n=2, cin=16, h=16, w=16, tmp=8, stride=2),   # projection shortcut path
        dict(n=2, cin=32, h=8, w=8, tmp=8, stride=1),     # identity shortcut path
    ]
    for idx, cfg in enumerate(configs):
        k_x, k_p = jax.random.split(jax.random.fold_in(key, idx))
        x = jax.random.normal(k_x, (cfg["n"], cfg["cin"], cfg["h"], cfg["w"]), jnp.float32)
        params, has_proj = init_params(k_p, cfg["cin"], cfg["tmp"], cfg["stride"])

        fwd = jax.jit(functools.partial(resblock50_forward,
                                        stride=cfg["stride"], has_proj=has_proj))
        out = fwd(x, params)
        jax.block_until_ready(out)

        ho = (cfg["h"] - 1) // cfg["stride"] + 1
        wo = (cfg["w"] - 1) // cfg["stride"] + 1
        assert out.shape == (cfg["n"], 4 * cfg["tmp"], ho, wo), out.shape
        assert bool(jnp.all(jnp.isfinite(out)))

        ref = _reference_forward(x, params, stride=cfg["stride"], has_proj=has_proj)
        err = float(jnp.max(jnp.abs(out - ref)))
        assert err < 0.5, f"max abs err vs f32 reference: {err}"

    print("KERNEL_OK")
</pallas_src>

<mosaic_0001>
module attributes {stable_mosaic.version = 11 : i64} {
  func.func @_gemm_stats_kernel(%arg0: i32, %arg1: memref<64x128xbf16, #tpu.memory_space<vmem>>, %arg2: memref<128x128xbf16, #tpu.memory_space<vmem>>, %arg3: memref<64x128xbf16, #tpu.memory_space<vmem>>, %arg4: memref<1x8x128xf32, #tpu.memory_space<vmem>>, %arg5: memref<1x8x128xf32, #tpu.memory_space<vmem>>) attributes {dimension_semantics = [#tpu.dimension_semantics<parallel>], iteration_bounds = array<i64: 2>, scalar_prefetch = 0 : i64, scratch_operands = 0 : i64, tpu.core_type = #tpu.core_type<tc>, window_params = [{transform_indices = @transform_0, window_bounds = array<i64: 64, 128>}, {pipeline_mode = #tpu.pipeline_mode<synchronous>, transform_indices = @transform_1, window_bounds = array<i64: 128, 128>}, {transform_indices = @transform_2, window_bounds = array<i64: 64, 128>}, {transform_indices = @transform_3, window_bounds = array<i64: 1, 8, 128>}, {transform_indices = @transform_4, window_bounds = array<i64: 1, 8, 128>}]} {
    %c0 = arith.constant 0 : index
    %c0_0 = arith.constant 0 : index
    %0 = vector.load %arg1[%c0, %c0_0] : memref<64x128xbf16, #tpu.memory_space<vmem>>, vector<64x128xbf16>
    %1 = arith.extf %0 : vector<64x128xbf16> to vector<64x128xf32>
    %2 = arith.truncf %1 : vector<64x128xf32> to vector<64x128xbf16>
    %c0_1 = arith.constant 0 : index
    %c0_2 = arith.constant 0 : index
    %3 = vector.load %arg2[%c0_1, %c0_2] : memref<128x128xbf16, #tpu.memory_space<vmem>>, vector<128x128xbf16>
    %cst = arith.constant dense<0.000000e+00> : vector<64x128xf32>
    %4 = tpu.matmul %2, %3, %cst {dimension_numbers = #tpu.dot_dimension_numbers<[1], [0], [0], [1], [0, 0, 1, 1], [], []>} : vector<64x128xbf16>, vector<128x128xbf16>, vector<64x128xf32> -> vector<64x128xf32>
    %5 = arith.truncf %4 : vector<64x128xf32> to vector<64x128xbf16>
    %c0_3 = arith.constant 0 : index
    %c0_4 = arith.constant 0 : index
    %6 = vector.load %arg3[%c0_3, %c0_4] : memref<64x128xbf16, #tpu.memory_space<vmem>>, vector<64x128xbf16>
    tpu.vector_store %arg3[%c0_3, %c0_4], %5 {strides = array<i32>} : memref<64x128xbf16, #tpu.memory_space<vmem>>, vector<64x128xbf16>,
    %7 = tpu.iota {dimensions = array<i32: 0>} : vector<64x1xi32>
    %c64_i32 = arith.constant 64 : i32
    %8 = arith.muli %arg0, %c64_i32 : i32
    %9 = vector.broadcast %8 : i32 to vector<64x1xi32>
    %10 = arith.addi %7, %9 : vector<64x1xi32>
    %c128_i32 = arith.constant 128 : i32
    %11 = vector.broadcast %c128_i32 : i32 to vector<64x1xi32>
    %12 = arith.cmpi slt, %10, %11 : vector<64x1xi32>
    %13 = arith.extui %12 : vector<64x1xi1> to vector<64x1xi32>
    %14 = arith.sitofp %13 : vector<64x1xi32> to vector<64x1xf32>
    %15 = vector.broadcast %14 : vector<64x1xf32> to vector<64x128xf32>
    %16 = arith.mulf %4, %15 : vector<64x128xf32>
    %cst_5 = arith.constant dense<0.000000e+00> : vector<128xf32>
    %17 = vector.multi_reduction <add>, %16, %cst_5 [0] : vector<64x128xf32> to vector<128xf32>
    %18 = vector.shape_cast %17 : vector<128xf32> to vector<1x128xf32>
    %19 = vector.shape_cast %14 : vector<64x1xf32> to vector<1x64x1xf32>
    %cst_6 = arith.constant dense<0.000000e+00> : vector<1xf32>
    %20 = vector.multi_reduction <add>, %19, %cst_6 [1, 2] : vector<1x64x1xf32> to vector<1xf32>
    %21 = vector.shape_cast %20 : vector<1xf32> to vector<1x1x1xf32>
    %22 = vector.extract %21[0, 0, 0] : f32 from vector<1x1x1xf32>
    %cst_7 = arith.constant 1.000000e+00 : f32
    %23 = arith.maximumf %22, %cst_7 : f32
    %24 = vector.broadcast %23 : f32 to vector<1x128xf32>
    %25 = arith.divf %18, %24 : vector<1x128xf32>
    %26 = vector.broadcast %25 : vector<1x128xf32> to vector<64x128xf32>
    %27 = arith.subf %4, %26 : vector<64x128xf32>
    %28 = vector.broadcast %14 : vector<64x1xf32> to vector<64x128xf32>
    %29 = arith.mulf %27, %28 : vector<64x128xf32>
    %30 = arith.mulf %29, %29 : vector<64x128xf32>
    %cst_8 = arith.constant dense<0.000000e+00> : vector<128xf32>
    %31 = vector.multi_reduction <add>, %30, %cst_8 [0] : vector<64x128xf32> to vector<128xf32>
    %32 = vector.shape_cast %31 : vector<128xf32> to vector<1x128xf32>
    %33 = vector.shape_cast %18 : vector<1x128xf32> to vector<1x128xf32>
    %34 = vector.broadcast %33 : vector<1x128xf32> to vector<8x128xf32>
    %c0_9 = arith.constant 0 : index
    %c0_10 = arith.constant 0 : index
    %c0_11 = arith.constant 0 : index
    %35 = vector.load %arg4[%c0_9, %c0_10, %c0_11] : memref<1x8x128xf32, #tpu.memory_space<vmem>>, vector<1x8x128xf32>
    %36 = vector.shape_cast %35 : vector<1x8x128xf32> to vector<8x128xf32>
    %37 = vector.shape_cast %34 : vector<8x128xf32> to vector<1x8x128xf32>
    tpu.vector_store %arg4[%c0_9, %c0_10, %c0_11], %37 {strides = array<i32>} : memref<1x8x128xf32, #tpu.memory_space<vmem>>, vector<1x8x128xf32>,
    %38 = vector.shape_cast %32 : vector<1x128xf32> to vector<1x128xf32>
    %39 = vector.broadcast %38 : vector<1x128xf32> to vector<8x128xf32>
    %c0_12 = arith.constant 0 : index
    %c0_13 = arith.constant 0 : index
    %c0_14 = arith.constant 0 : index
    %40 = vector.load %arg5[%c0_12, %c0_13, %c0_14] : memref<1x8x128xf32, #tpu.memory_space<vmem>>, vector<1x8x128xf32>
    %41 = vector.shape_cast %40 : vector<1x8x128xf32> to vector<8x128xf32>
    %42 = vector.shape_cast %39 : vector<8x128xf32> to vector<1x8x128xf32>
    tpu.vector_store %arg5[%c0_12, %c0_13, %c0_14], %42 {strides = array<i32>} : memref<1x8x128xf32, #tpu.memory_space<vmem>>, vector<1x8x128xf32>,
    return
  }
  func.func @transform_0(%arg0: i32) -> (i32, i32) {
    %c0_i32 = arith.constant 0 : i32
    %c0_i32_0 = arith.constant 0 : i32
    return %arg0, %c0_i32 : i32, i32
  }
  func.func @transform_1(%arg0: i32) -> (i32, i32) {
    %c0_i32 = arith.constant 0 : i32
    %c0_i32_0 = arith.constant 0 : i32
    %c0_i32_1 = arith.constant 0 : i32
    return %c0_i32, %c0_i32_0 : i32, i32
  }
  func.func @transform_2(%arg0: i32) -> (i32, i32) {
    %c0_i32 = arith.constant 0 : i32
    %c0_i32_0 = arith.constant 0 : i32
    return %arg0, %c0_i32 : i32, i32
  }
  func.func @transform_3(%arg0: i32) -> (i32, i32, i32) {
    %c0_i32 = arith.constant 0 : i32
    %c0_i32_0 = arith.constant 0 : i32
    %c0_i32_1 = arith.constant 0 : i32
    return %arg0, %c0_i32, %c0_i32_0 : i32, i32, i32
  }
  func.func @transform_4(%arg0: i32) -> (i32, i32, i32) {
    %c0_i32 = arith.constant 0 : i32
    %c0_i32_0 = arith.constant 0 : i32
    %c0_i32_1 = arith.constant 0 : i32
    return %arg0, %c0_i32, %c0_i32_0 : i32, i32, i32
  }
}

module attributes {stable_mosaic.version = 11 : i64} {
  func.func @_xstats_kernel(%arg0: i32, %arg1: memref<256x128xbf16, #tpu.memory_space<vmem>>, %arg2: memref<1x8x128xf32, #tpu.memory_space<vmem>>, %arg3: memref<1x8x128xf32, #tpu.memory_space<vmem>>) attributes {dimension_semantics = [#tpu.dimension_semantics<parallel>], iteration_bounds = array<i64: 2>, scalar_prefetch = 0 : i64, scratch_operands = 0 : i64, tpu.core_type = #tpu.core_type<tc>, window_params = [{transform_indices = @transform_0, window_bounds = array<i64: 256, 128>}, {transform_indices = @transform_1, window_bounds = array<i64: 1, 8, 128>}, {transform_indices = @transform_2, window_bounds = array<i64: 1, 8, 128>}]} {
    %c0 = arith.constant 0 : index
    %c0_0 = arith.constant 0 : index
    %0 = vector.load %arg1[%c0, %c0_0] : memref<256x128xbf16, #tpu.memory_space<vmem>>, vector<256x128xbf16>
    %1 = arith.extf %0 : vector<256x128xbf16> to vector<256x128xf32>
    %2 = tpu.iota {dimensions = array<i32: 0>} : vector<256x1xi32>
    %c256_i32 = arith.constant 256 : i32
    %3 = arith.muli %arg0, %c256_i32 : i32
    %4 = vector.broadcast %3 : i32 to vector<256x1xi32>
    %5 = arith.addi %2, %4 : vector<256x1xi32>
    %c512_i32 = arith.constant 512 : i32
    %6 = vector.broadcast %c512_i32 : i32 to vector<256x1xi32>
    %7 = arith.cmpi slt, %5, %6 : vector<256x1xi32>
    %8 = arith.extui %7 : vector<256x1xi1> to vector<256x1xi32>
    %9 = arith.sitofp %8 : vector<256x1xi32> to vector<256x1xf32>
    %10 = vector.broadcast %9 : vector<256x1xf32> to vector<256x128xf32>
    %11 = arith.mulf %1, %10 : vector<256x128xf32>
    %cst = arith.constant dense<0.000000e+00> : vector<128xf32>
    %12 = vector.multi_reduction <add>, %11, %cst [0] : vector<256x128xf32> to vector<128xf32>
    %13 = vector.shape_cast %12 : vector<128xf32> to vector<1x128xf32>
    %14 = vector.shape_cast %9 : vector<256x1xf32> to vector<1x256x1xf32>
    %cst_1 = arith.constant dense<0.000000e+00> : vector<1xf32>
    %15 = vector.multi_reduction <add>, %14, %cst_1 [1, 2] : vector<1x256x1xf32> to vector<1xf32>
    %16 = vector.shape_cast %15 : vector<1xf32> to vector<1x1x1xf32>
    %17 = vector.extract %16[0, 0, 0] : f32 from vector<1x1x1xf32>
    %cst_2 = arith.constant 1.000000e+00 : f32
    %18 = arith.maximumf %17, %cst_2 : f32
    %19 = vector.broadcast %18 : f32 to vector<1x128xf32>
    %20 = arith.divf %13, %19 : vector<1x128xf32>
    %21 = vector.broadcast %20 : vector<1x128xf32> to vector<256x128xf32>
    %22 = arith.subf %1, %21 : vector<256x128xf32>
    %23 = vector.broadcast %9 : vector<256x1xf32> to vector<256x128xf32>
    %24 = arith.mulf %22, %23 : vector<256x128xf32>
    %25 = arith.mulf %24, %24 : vector<256x128xf32>
    %cst_3 = arith.constant dense<0.000000e+00> : vector<128xf32>
    %26 = vector.multi_reduction <add>, %25, %cst_3 [0] : vector<256x128xf32> to vector<128xf32>
    %27 = vector.shape_cast %26 : vector<128xf32> to vector<1x128xf32>
    %28 = vector.shape_cast %13 : vector<1x128xf32> to vector<1x128xf32>
    %29 = vector.broadcast %28 : vector<1x128xf32> to vector<8x128xf32>
    %c0_4 = arith.constant 0 : index
    %c0_5 = arith.constant 0 : index
    %c0_6 = arith.constant 0 : index
    %30 = vector.load %arg2[%c0_4, %c0_5, %c0_6] : memref<1x8x128xf32, #tpu.memory_space<vmem>>, vector<1x8x128xf32>
    %31 = vector.shape_cast %30 : vector<1x8x128xf32> to vector<8x128xf32>
    %32 = vector.shape_cast %29 : vector<8x128xf32> to vector<1x8x128xf32>
    tpu.vector_store %arg2[%c0_4, %c0_5, %c0_6], %32 {strides = array<i32>} : memref<1x8x128xf32, #tpu.memory_space<vmem>>, vector<1x8x128xf32>,
    %33 = vector.shape_cast %27 : vector<1x128xf32> to vector<1x128xf32>
    %34 = vector.broadcast %33 : vector<1x128xf32> to vector<8x128xf32>
    %c0_7 = arith.constant 0 : index
    %c0_8 = arith.constant 0 : index
    %c0_9 = arith.constant 0 : index
    %35 = vector.load %arg3[%c0_7, %c0_8, %c0_9] : memref<1x8x128xf32, #tpu.memory_space<vmem>>, vector<1x8x128xf32>
    %36 = vector.shape_cast %35 : vector<1x8x128xf32> to vector<8x128xf32>
    %37 = vector.shape_cast %34 : vector<8x128xf32> to vector<1x8x128xf32>
    tpu.vector_store %arg3[%c0_7, %c0_8, %c0_9], %37 {strides = array<i32>} : memref<1x8x128xf32, #tpu.memory_space<vmem>>, vector<1x8x128xf32>,
    return
  }
  func.func @transform_0(%arg0: i32) -> (i32, i32) {
    %c0_i32 = arith.constant 0 : i32
    %c0_i32_0 = arith.constant 0 : i32
    return %arg0, %c0_i32 : i32, i32
  }
  func.func @transform_1(%arg0: i32) -> (i32, i32, i32) {
    %c0_i32 = arith.constant 0 : i32
    %c0_i32_0 = arith.constant 0 : i32
    %c0_i32_1 = arith.constant 0 : i32
    return %arg0, %c0_i32, %c0_i32_0 : i32, i32, i32
  }
  func.func @transform_2(%arg0: i32) -> (i32, i32, i32) {
    %c0_i32 = arith.constant 0 : i32
    %c0_i32_0 = arith.constant 0 : i32
    %c0_i32_1 = arith.constant 0 : i32
    return %arg0, %c0_i32, %c0_i32_0 : i32, i32, i32
  }
}

module attributes {stable_mosaic.version = 11 : i64} {
  func.func @_gemm_stats_kernel(%arg0: i32, %arg1: memref<256x128xbf16, #tpu.memory_space<vmem>>, %arg2: memref<1x128xf32, #tpu.memory_space<vmem>>, %arg3: memref<1x128xf32, #tpu.memory_space<vmem>>, %arg4: memref<128x128xbf16, #tpu.memory_space<vmem>>, %arg5: memref<256x128xbf16, #tpu.memory_space<vmem>>, %arg6: memref<1x8x128xf32, #tpu.memory_space<vmem>>, %arg7: memref<1x8x128xf32, #tpu.memory_space<vmem>>) attributes {dimension_semantics = [#tpu.dimension_semantics<parallel>], iteration_bounds = array<i64: 2>, scalar_prefetch = 0 : i64, scratch_operands = 0 : i64, tpu.core_type = #tpu.core_type<tc>, window_params = [{transform_indices = @transform_0, window_bounds = array<i64: 256, 128>}, {pipeline_mode = #tpu.pipeline_mode<synchronous>, transform_indices = @transform_1, window_bounds = array<i64: 1, 128>}, {pipeline_mode = #tpu.pipeline_mode<synchronous>, transform_indices = @transform_2, window_bounds = array<i64: 1, 128>}, {pipeline_mode = #tpu.pipeline_mode<synchronous>, transform_indices = @transform_3, window_bounds = array<i64: 128, 128>}, {transform_indices = @transform_4, window_bounds = array<i64: 256, 128>}, {transform_indices = @transform_5, window_bounds = array<i64: 1, 8, 128>}, {transform_indices = @transform_6, window_bounds = array<i64: 1, 8, 128>}]} {
    %c0 = arith.constant 0 : index
    %c0_0 = arith.constant 0 : index
    %0 = vector.load %arg1[%c0, %c0_0] : memref<256x128xbf16, #tpu.memory_space<vmem>>, vector<256x128xbf16>
    %1 = arith.extf %0 : vector<256x128xbf16> to vector<256x128xf32>
    %c0_1 = arith.constant 0 : index
    %c0_2 = arith.constant 0 : index
    %2 = vector.load %arg2[%c0_1, %c0_2] : memref<1x128xf32, #tpu.memory_space<vmem>>, vector<1x128xf32>
    %3 = vector.broadcast %2 : vector<1x128xf32> to vector<256x128xf32>
    %4 = arith.mulf %1, %3 : vector<256x128xf32>
    %c0_3 = arith.constant 0 : index
    %c0_4 = arith.constant 0 : index
    %5 = vector.load %arg3[%c0_3, %c0_4] : memref<1x128xf32, #tpu.memory_space<vmem>>, vector<1x128xf32>
    %6 = vector.broadcast %5 : vector<1x128xf32> to vector<256x128xf32>
    %7 = arith.addf %4, %6 : vector<256x128xf32>
    %cst = arith.constant 0.000000e+00 : f32
    %8 = vector.broadcast %cst : f32 to vector<256x128xf32>
    %9 = arith.maximumf %7, %8 : vector<256x128xf32>
    %10 = arith.truncf %9 : vector<256x128xf32> to vector<256x128xbf16>
    %c0_5 = arith.constant 0 : index
    %c0_6 = arith.constant 0 : index
    %11 = vector.load %arg4[%c0_5, %c0_6] : memref<128x128xbf16, #tpu.memory_space<vmem>>, vector<128x128xbf16>
    %cst_7 = arith.constant dense<0.000000e+00> : vector<256x128xf32>
    %12 = tpu.matmul %10, %11, %cst_7 {dimension_numbers = #tpu.dot_dimension_numbers<[1], [0], [0], [1], [0, 0, 1, 1], [], []>} : vector<256x128xbf16>, vector<128x128xbf16>, vector<256x128xf32> -> vector<256x128xf32>
    %13 = arith.truncf %12 : vector<256x128xf32> to vector<256x128xbf16>
    %c0_8 = arith.constant 0 : index
    %c0_9 = arith.constant 0 : index
    %14 = vector.load %arg5[%c0_8, %c0_9] : memref<256x128xbf16, #tpu.memory_space<vmem>>, vector<256x128xbf16>
    tpu.vector_store %arg5[%c0_8, %c0_9], %13 {strides = array<i32>} : memref<256x128xbf16, #tpu.memory_space<vmem>>, vector<256x128xbf16>,
    %15 = tpu.iota {dimensions = array<i32: 0>} : vector<256x1xi32>
    %c256_i32 = arith.constant 256 : i32
    %16 = arith.muli %arg0, %c256_i32 : i32
    %17 = vector.broadcast %16 : i32 to vector<256x1xi32>
    %18 = arith.addi %15, %17 : vector<256x1xi32>
    %c512_i32 = arith.constant 512 : i32
    %19 = vector.broadcast %c512_i32 : i32 to vector<256x1xi32>
    %20 = arith.cmpi slt, %18, %19 : vector<256x1xi32>
    %21 = arith.extui %20 : vector<256x1xi1> to vector<256x1xi32>
    %22 = arith.sitofp %21 : vector<256x1xi32> to vector<256x1xf32>
    %23 = vector.broadcast %22 : vector<256x1xf32> to vector<256x128xf32>
    %24 = arith.mulf %12, %23 : vector<256x128xf32>
    %cst_10 = arith.constant dense<0.000000e+00> : vector<128xf32>
    %25 = vector.multi_reduction <add>, %24, %cst_10 [0] : vector<256x128xf32> to vector<128xf32>
    %26 = vector.shape_cast %25 : vector<128xf32> to vector<1x128xf32>
    %27 = vector.shape_cast %22 : vector<256x1xf32> to vector<1x256x1xf32>
    %cst_11 = arith.constant dense<0.000000e+00> : vector<1xf32>
    %28 = vector.multi_reduction <add>, %27, %cst_11 [1, 2] : vector<1x256x1xf32> to vector<1xf32>
    %29 = vector.shape_cast %28 : vector<1xf32> to vector<1x1x1xf32>
    %30 = vector.extract %29[0, 0, 0] : f32 from vector<1x1x1xf32>
    %cst_12 = arith.constant 1.000000e+00 : f32
    %31 = arith.maximumf %30, %cst_12 : f32
    %32 = vector.broadcast %31 : f32 to vector<1x128xf32>
    %33 = arith.divf %26, %32 : vector<1x128xf32>
    %34 = vector.broadcast %33 : vector<1x128xf32> to vector<256x128xf32>
    %35 = arith.subf %12, %34 : vector<256x128xf32>
    %36 = vector.broadcast %22 : vector<256x1xf32> to vector<256x128xf32>
    %37 = arith.mulf %35, %36 : vector<256x128xf32>
    %38 = arith.mulf %37, %37 : vector<256x128xf32>
    %cst_13 = arith.constant dense<0.000000e+00> : vector<128xf32>
    %39 = vector.multi_reduction <add>, %38, %cst_13 [0] : vector<256x128xf32> to vector<128xf32>
    %40 = vector.shape_cast %39 : vector<128xf32> to vector<1x128xf32>
    %41 = vector.shape_cast %26 : vector<1x128xf32> to vector<1x128xf32>
    %42 = vector.broadcast %41 : vector<1x128xf32> to vector<8x128xf32>
    %c0_14 = arith.constant 0 : index
    %c0_15 = arith.constant 0 : index
    %c0_16 = arith.constant 0 : index
    %43 = vector.load %arg6[%c0_14, %c0_15, %c0_16] : memref<1x8x128xf32, #tpu.memory_space<vmem>>, vector<1x8x128xf32>
    %44 = vector.shape_cast %43 : vector<1x8x128xf32> to vector<8x128xf32>
    %45 = vector.shape_cast %42 : vector<8x128xf32> to vector<1x8x128xf32>
    tpu.vector_store %arg6[%c0_14, %c0_15, %c0_16], %45 {strides = array<i32>} : memref<1x8x128xf32, #tpu.memory_space<vmem>>, vector<1x8x128xf32>,
    %46 = vector.shape_cast %40 : vector<1x128xf32> to vector<1x128xf32>
    %47 = vector.broadcast %46 : vector<1x128xf32> to vector<8x128xf32>
    %c0_17 = arith.constant 0 : index
    %c0_18 = arith.constant 0 : index
    %c0_19 = arith.constant 0 : index
    %48 = vector.load %arg7[%c0_17, %c0_18, %c0_19] : memref<1x8x128xf32, #tpu.memory_space<vmem>>, vector<1x8x128xf32>
    %49 = vector.shape_cast %48 : vector<1x8x128xf32> to vector<8x128xf32>
    %50 = vector.shape_cast %47 : vector<8x128xf32> to vector<1x8x128xf32>
    tpu.vector_store %arg7[%c0_17, %c0_18, %c0_19], %50 {strides = array<i32>} : memref<1x8x128xf32, #tpu.memory_space<vmem>>, vector<1x8x128xf32>,
    return
  }
  func.func @transform_0(%arg0: i32) -> (i32, i32) {
    %c0_i32 = arith.constant 0 : i32
    %c0_i32_0 = arith.constant 0 : i32
    return %arg0, %c0_i32 : i32, i32
  }
  func.func @transform_1(%arg0: i32) -> (i32, i32) {
    %c0_i32 = arith.constant 0 : i32
    %c0_i32_0 = arith.constant 0 : i32
    %c0_i32_1 = arith.constant 0 : i32
    return %c0_i32, %c0_i32_0 : i32, i32
  }
  func.func @transform_2(%arg0: i32) -> (i32, i32) {
    %c0_i32 = arith.constant 0 : i32
    %c0_i32_0 = arith.constant 0 : i32
    %c0_i32_1 = arith.constant 0 : i32
    return %c0_i32, %c0_i32_0 : i32, i32
  }
  func.func @transform_3(%arg0: i32) -> (i32, i32) {
    %c0_i32 = arith.constant 0 : i32
    %c0_i32_0 = arith.constant 0 : i32
    %c0_i32_1 = arith.constant 0 : i32
    return %c0_i32, %c0_i32_0 : i32, i32
  }
  func.func @transform_4(%arg0: i32) -> (i32, i32) {
    %c0_i32 = arith.constant 0 : i32
    %c0_i32_0 = arith.constant 0 : i32
    return %arg0, %c0_i32 : i32, i32
  }
  func.func @transform_5(%arg0: i32) -> (i32, i32, i32) {
    %c0_i32 = arith.constant 0 : i32
    %c0_i32_0 = arith.constant 0 : i32
    %c0_i32_1 = arith.constant 0 : i32
    return %arg0, %c0_i32, %c0_i32_0 : i32, i32, i32
  }
  func.func @transform_6(%arg0: i32) -> (i32, i32, i32) {
    %c0_i32 = arith.constant 0 : i32
    %c0_i32_0 = arith.constant 0 : i32
    %c0_i32_1 = arith.constant 0 : i32
    return %arg0, %c0_i32, %c0_i32_0 : i32, i32, i32
  }
}

module attributes {stable_mosaic.version = 11 : i64} {
  func.func @_conv2_kernel(%arg0: i32, %arg1: memref<1x16x16x128xbf16, #tpu.memory_space<vmem>>, %arg2: memref<1x128xf32, #tpu.memory_space<vmem>>, %arg3: memref<1x128xf32, #tpu.memory_space<vmem>>, %arg4: memref<9x128x128xbf16, #tpu.memory_space<vmem>>, %arg5: memref<1x64x128xbf16, #tpu.memory_space<vmem>>, %arg6: memref<1x8x128xf32, #tpu.memory_space<vmem>>, %arg7: memref<1x8x128xf32, #tpu.memory_space<vmem>>, %arg8: memref<324x128xf32, #tpu.memory_space<vmem>>, %arg9: memref<286x128xf32, #tpu.memory_space<vmem>>) attributes {dimension_semantics = [#tpu.dimension_semantics<parallel>], iteration_bounds = array<i64: 2>, scalar_prefetch = 0 : i64, scratch_operands = 2 : i64, tpu.core_type = #tpu.core_type<tc>, window_params = [{transform_indices = @transform_0, window_bounds = array<i64: 1, 16, 16, 128>}, {pipeline_mode = #tpu.pipeline_mode<synchronous>, transform_indices = @transform_1, window_bounds = array<i64: 1, 128>}, {pipeline_mode = #tpu.pipeline_mode<synchronous>, transform_indices = @transform_2, window_bounds = array<i64: 1, 128>}, {pipeline_mode = #tpu.pipeline_mode<synchronous>, transform_indices = @transform_3, window_bounds = array<i64: 9, 128, 128>}, {transform_indices = @transform_4, window_bounds = array<i64: 1, 64, 128>}, {transform_indices = @transform_5, window_bounds = array<i64: 1, 8, 128>}, {transform_indices = @transform_6, window_bounds = array<i64: 1, 8, 128>}]} {
    %cst = arith.constant 0.000000e+00 : f32
    %0 = vector.broadcast %cst : f32 to vector<324x128xf32>
    %c0 = arith.constant 0 : index
    %c0_0 = arith.constant 0 : index
    %1 = vector.load %arg8[%c0, %c0_0] : memref<324x128xf32, #tpu.memory_space<vmem>>, vector<324x128xf32>
    tpu.vector_store %arg8[%c0, %c0_0], %0 {strides = array<i32>} : memref<324x128xf32, #tpu.memory_space<vmem>>, vector<324x128xf32>,
    %c0_1 = arith.constant 0 : index
    %c0_2 = arith.constant 0 : index
    %c0_3 = arith.constant 0 : index
    %c0_4 = arith.constant 0 : index
    %2 = vector.load %arg1[%c0_1, %c0_2, %c0_3, %c0_4] : memref<1x16x16x128xbf16, #tpu.memory_space<vmem>>, vector<1x1x16x128xbf16>
    %3 = vector.shape_cast %2 : vector<1x1x16x128xbf16> to vector<16x128xbf16>
    %4 = arith.extf %3 : vector<16x128xbf16> to vector<16x128xf32>
    %c0_5 = arith.constant 0 : index
    %c0_6 = arith.constant 0 : index
    %5 = vector.load %arg2[%c0_5, %c0_6] : memref<1x128xf32, #tpu.memory_space<vmem>>, vector<1x128xf32>
    %6 = vector.broadcast %5 : vector<1x128xf32> to vector<16x128xf32>
    %7 = arith.mulf %4, %6 : vector<16x128xf32>
    %c0_7 = arith.constant 0 : index
    %c0_8 = arith.constant 0 : index
    %8 = vector.load %arg3[%c0_7, %c0_8] : memref<1x128xf32, #tpu.memory_space<vmem>>, vector<1x128xf32>
    %9 = vector.broadcast %8 : vector<1x128xf32> to vector<16x128xf32>
    %10 = arith.addf %7, %9 : vector<16x128xf32>
    %cst_9 = arith.constant 0.000000e+00 : f32
    %11 = vector.broadcast %cst_9 : f32 to vector<16x128xf32>
    %12 = arith.maximumf %10, %11 : vector<16x128xf32>
    %c19 = arith.constant 19 : index
    %c0_10 = arith.constant 0 : index
    %13 = vector.load %arg8[%c19, %c0_10] : memref<324x128xf32, #tpu.memory_space<vmem>>, vector<16x128xf32>
    tpu.vector_store %arg8[%c19, %c0_10], %12 {strides = array<i32>} : memref<324x128xf32, #tpu.memory_space<vmem>>, vector<16x128xf32>,
    %c0_11 = arith.constant 0 : index
    %c1 = arith.constant 1 : index
    %c0_12 = arith.constant 0 : index
    %c0_13 = arith.constant 0 : index
    %14 = vector.load %arg1[%c0_11, %c1, %c0_12, %c0_13] : memref<1x16x16x128xbf16, #tpu.memory_space<vmem>>, vector<1x1x16x128xbf16>
    %15 = vector.shape_cast %14 : vector<1x1x16x128xbf16> to vector<16x128xbf16>
    %16 = arith.extf %15 : vector<16x128xbf16> to vector<16x128xf32>
    %c0_14 = arith.constant 0 : index
    %c0_15 = arith.constant 0 : index
    %17 = vector.load %arg2[%c0_14, %c0_15] : memref<1x128xf32, #tpu.memory_space<vmem>>, vector<1x128xf32>
    %18 = vector.broadcast %17 : vector<1x128xf32> to vector<16x128xf32>
    %19 = arith.mulf %16, %18 : vector<16x128xf32>
    %c0_16 = arith.constant 0 : index
    %c0_17 = arith.constant 0 : index
    %20 = vector.load %arg3[%c0_16, %c0_17] : memref<1x128xf32, #tpu.memory_space<vmem>>, vector<1x128xf32>
    %21 = vector.broadcast %20 : vector<1x128xf32> to vector<16x128xf32>
    %22 = arith.addf %19, %21 : vector<16x128xf32>
    %cst_18 = arith.constant 0.000000e+00 : f32
    %23 = vector.broadcast %cst_18 : f32 to vector<16x128xf32>
    %24 = arith.maximumf %22, %23 : vector<16x128xf32>
    %c37 = arith.constant 37 : index
    %c0_19 = arith.constant 0 : index
    %25 = vector.load %arg8[%c37, %c0_19] : memref<324x128xf32, #tpu.memory_space<vmem>>, vector<16x128xf32>
    tpu.vector_store %arg8[%c37, %c0_19], %24 {strides = array<i32>} : memref<324x128xf32, #tpu.memory_space<vmem>>, vector<16x128xf32>,
    %c0_20 = arith.constant 0 : index
    %c2 = arith.constant 2 : index
    %c0_21 = arith.constant 0 : index
    %c0_22 = arith.constant 0 : index
    %26 = vector.load %arg1[%c0_20, %c2, %c0_21, %c0_22] : memref<1x16x16x128xbf16, #tpu.memory_space<vmem>>, vector<1x1x16x128xbf16>
    %27 = vector.shape_cast %26 : vector<1x1x16x128xbf16> to vector<16x128xbf16>
    %28 = arith.extf %27 : vector<16x128xbf16> to vector<16x128xf32>
    %c0_23 = arith.constant 0 : index
    %c0_24 = arith.constant 0 : index
    %29 = vector.load %arg2[%c0_23, %c0_24] : memref<1x128xf32, #tpu.memory_space<vmem>>, vector<1x128xf32>
    %30 = vector.broadcast %29 : vector<1x128xf32> to vector<16x128xf32>
    %31 = arith.mulf %28, %30 : vector<16x128xf32>
    %c0_25 = arith.constant 0 : index
    %c0_26 = arith.constant 0 : index
    %32 = vector.load %arg3[%c0_25, %c0_26] : memref<1x128xf32, #tpu.memory_space<vmem>>, vector<1x128xf32>
    %33 = vector.broadcast %32 : vector<1x128xf32> to vector<16x128xf32>
    %34 = arith.addf %31, %33 : vector<16x128xf32>
    %cst_27 = arith.constant 0.000000e+00 : f32
    %35 = vector.broadcast %cst_27 : f32 to vector<16x128xf32>
    %36 = arith.maximumf %34, %35 : vector<16x128xf32>
    %c55 = arith.constant 55 : index
    %c0_28 = arith.constant 0 : index
    %37 = vector.load %arg8[%c55, %c0_28] : memref<324x128xf32, #tpu.memory_space<vmem>>, vector<16x128xf32>
    tpu.vector_store %arg8[%c55, %c0_28], %36 {strides = array<i32>} : memref<324x128xf32, #tpu.memory_space<vmem>>, vector<16x128xf32>,
    %c0_29 = arith.constant 0 : index
    %c3 = arith.constant 3 : index
    %c0_30 = arith.constant 0 : index
    %c0_31 = arith.constant 0 : index
    %38 = vector.load %arg1[%c0_29, %c3, %c0_30, %c0_31] : memref<1x16x16x128xbf16, #tpu.memory_space<vmem>>, vector<1x1x16x128xbf16>
    %39 = vector.shape_cast %38 : vector<1x1x16x128xbf16> to vector<16x128xbf16>
    %40 = arith.extf %39 : vector<16x128xbf16> to vector<16x128xf32>
    %c0_32 = arith.constant 0 : index
    %c0_33 = arith.constant 0 : index
    %41 = vector.load %arg2[%c0_32, %c0_33] : memref<1x128xf32, #tpu.memory_space<vmem>>, vector<1x128xf32>
    %42 = vector.broadcast %41 : vector<1x128xf32> to vector<16x128xf32>
    %43 = arith.mulf %40, %42 : vector<16x128xf32>
    %c0_34 = arith.constant 0 : index
    %c0_35 = arith.constant 0 : index
    %44 = vector.load %arg3[%c0_34, %c0_35] : memref<1x128xf32, #tpu.memory_space<vmem>>, vector<1x128xf32>
    %45 = vector.broadcast %44 : vector<1x128xf32> to vector<16x128xf32>
    %46 = arith.addf %43, %45 : vector<16x128xf32>
    %cst_36 = arith.constant 0.000000e+00 : f32
    %47 = vector.broadcast %cst_36 : f32 to vector<16x128xf32>
    %48 = arith.maximumf %46, %47 : vector<16x128xf32>
    %c73 = arith.constant 73 : index
    %c0_37 = arith.constant 0 : index
    %49 = vector.load %arg8[%c73, %c0_37] : memref<324x128xf32, #tpu.memory_space<vmem>>, vector<16x128xf32>
    tpu.vector_store %arg8[%c73, %c0_37], %48 {strides = array<i32>} : memref<324x128xf32, #tpu.memory_space<vmem>>, vector<16x128xf32>,
    %c0_38 = arith.constant 0 : index
    %c4 = arith.constant 4 : index
    %c0_39 = arith.constant 0 : index
    %c0_40 = arith.constant 0 : index
    %50 = vector.load %arg1[%c0_38, %c4, %c0_39, %c0_40] : memref<1x16x16x128xbf16, #tpu.memory_space<vmem>>, vector<1x1x16x128xbf16>
    %51 = vector.shape_cast %50 : vector<1x1x16x128xbf16> to vector<16x128xbf16>
    %52 = arith.extf %51 : vector<16x128xbf16> to vector<16x128xf32>
    %c0_41 = arith.constant 0 : index
    %c0_42 = arith.constant 0 : index
    %53 = vector.load %arg2[%c0_41, %c0_42] : memref<1x128xf32, #tpu.memory_space<vmem>>, vector<1x128xf32>
    %54 = vector.broadcast %53 : vector<1x128xf32> to vector<16x128xf32>
    %55 = arith.mulf %52, %54 : vector<16x128xf32>
    %c0_43 = arith.constant 0 : index
    %c0_44 = arith.constant 0 : index
    %56 = vector.load %arg3[%c0_43, %c0_44] : memref<1x128xf32, #tpu.memory_space<vmem>>, vector<1x128xf32>
    %57 = vector.broadcast %56 : vector<1x128xf32> to vector<16x128xf32>
    %58 = arith.addf %55, %57 : vector<16x128xf32>
    %cst_45 = arith.constant 0.000000e+00 : f32
    %59 = vector.broadcast %cst_45 : f32 to vector<16x128xf32>
    %60 = arith.maximumf %58, %59 : vector<16x128xf32>
    %c91 = arith.constant 91 : index
    %c0_46 = arith.constant 0 : index
    %61 = vector.load %arg8[%c91, %c0_46] : memref<324x128xf32, #tpu.memory_space<vmem>>, vector<16x128xf32>
    tpu.vector_store %arg8[%c91, %c0_46], %60 {strides = array<i32>} : memref<324x128xf32, #tpu.memory_space<vmem>>, vector<16x128xf32>,
    %c0_47 = arith.constant 0 : index
    %c5 = arith.constant 5 : index
    %c0_48 = arith.constant 0 : index
    %c0_49 = arith.constant 0 : index
    %62 = vector.load %arg1[%c0_47, %c5, %c0_48, %c0_49] : memref<1x16x16x128xbf16, #tpu.memory_space<vmem>>, vector<1x1x16x128xbf16>
    %63 = vector.shape_cast %62 : vector<1x1x16x128xbf16> to vector<16x128xbf16>
    %64 = arith.extf %63 : vector<16x128xbf16> to vector<16x128xf32>
    %c0_50 = arith.constant 0 : index
    %c0_51 = arith.constant 0 : index
    %65 = vector.load %arg2[%c0_50, %c0_51] : memref<1x128xf32, #tpu.memory_space<vmem>>, vector<1x128xf32>
    %66 = vector.broadcast %65 : vector<1x128xf32> to vector<16x128xf32>
    %67 = arith.mulf %64, %66 : vector<16x128xf32>
    %c0_52 = arith.constant 0 : index
    %c0_53 = arith.constant 0 : index
    %68 = vector.load %arg3[%c0_52, %c0_53] : memref<1x128xf32, #tpu.memory_space<vmem>>, vector<1x128xf32>
    %69 = vector.broadcast %68 : vector<1x128xf32> to vector<16x128xf32>
    %70 = arith.addf %67, %69 : vector<16x128xf32>
    %cst_54 = arith.constant 0.000000e+00 : f32
    %71 = vector.broadcast %cst_54 : f32 to vector<16x128xf32>
    %72 = arith.maximumf %70, %71 : vector<16x128xf32>
    %c109 = arith.constant 109 : index
    %c0_55 = arith.constant 0 : index
    %73 = vector.load %arg8[%c109, %c0_55] : memref<324x128xf32, #tpu.memory_space<vmem>>, vector<16x128xf32>
    tpu.vector_store %arg8[%c109, %c0_55], %72 {strides = array<i32>} : memref<324x128xf32, #tpu.memory_space<vmem>>, vector<16x128xf32>,
    %c0_56 = arith.constant 0 : index
    %c6 = arith.constant 6 : index
    %c0_57 = arith.constant 0 : index
    %c0_58 = arith.constant 0 : index
    %74 = vector.load %arg1[%c0_56, %c6, %c0_57, %c0_58] : memref<1x16x16x128xbf16, #tpu.memory_space<vmem>>, vector<1x1x16x128xbf16>
    %75 = vector.shape_cast %74 : vector<1x1x16x128xbf16> to vector<16x128xbf16>
    %76 = arith.extf %75 : vector<16x128xbf16> to vector<16x128xf32>
    %c0_59 = arith.constant 0 : index
    %c0_60 = arith.constant 0 : index
    %77 = vector.load %arg2[%c0_59, %c0_60] : memref<1x128xf32, #tpu.memory_space<vmem>>, vector<1x128xf32>
    %78 = vector.broadcast %77 : vector<1x128xf32> to vector<16x128xf32>
    %79 = arith.mulf %76, %78 : vector<16x128xf32>
    %c0_61 = arith.constant 0 : index
    %c0_62 = arith.constant 0 : index
    %80 = vector.load %arg3[%c0_61, %c0_62] : memref<1x128xf32, #tpu.memory_space<vmem>>, vector<1x128xf32>
    %81 = vector.broadcast %80 : vector<1x128xf32> to vector<16x128xf32>
    %82 = arith.addf %79, %81 : vector<16x128xf32>
    %cst_63 = arith.constant 0.000000e+00 : f32
    %83 = vector.broadcast %cst_63 : f32 to vector<16x128xf32>
    %84 = arith.maximumf %82, %83 : vector<16x128xf32>
    %c127 = arith.constant 127 : index
    %c0_64 = arith.constant 0 : index
    %85 = vector.load %arg8[%c127, %c0_64] : memref<324x128xf32, #tpu.memory_space<vmem>>, vector<16x128xf32>
    tpu.vector_store %arg8[%c127, %c0_64], %84 {strides = array<i32>} : memref<324x128xf32, #tpu.memory_space<vmem>>, vector<16x128xf32>,
    %c0_65 = arith.constant 0 : index
    %c7 = arith.constant 7 : index
    %c0_66 = arith.constant 0 : index
    %c0_67 = arith.constant 0 : index
    %86 = vector.load %arg1[%c0_65, %c7, %c0_66, %c0_67] : memref<1x16x16x128xbf16, #tpu.memory_space<vmem>>, vector<1x1x16x128xbf16>
    %87 = vector.shape_cast %86 : vector<1x1x16x128xbf16> to vector<16x128xbf16>
    %88 = arith.extf %87 : vector<16x128xbf16> to vector<16x128xf32>
    %c0_68 = arith.constant 0 : index
    %c0_69 = arith.constant 0 : index
    %89 = vector.load %arg2[%c0_68, %c0_69] : memref<1x128xf32, #tpu.memory_space<vmem>>, vector<1x128xf32>
    %90 = vector.broadcast %89 : vector<1x128xf32> to vector<16x128xf32>
    %91 = arith.mulf %88, %90 : vector<16x128xf32>
    %c0_70 = arith.constant 0 : index
    %c0_71 = arith.constant 0 : index
    %92 = vector.load %arg3[%c0_70, %c0_71] : memref<1x128xf32, #tpu.memory_space<vmem>>, vector<1x128xf32>
    %93 = vector.broadcast %92 : vector<1x128xf32> to vector<16x128xf32>
    %94 = arith.addf %91, %93 : vector<16x128xf32>
    %cst_72 = arith.constant 0.000000e+00 : f32
    %95 = vector.broadcast %cst_72 : f32 to vector<16x128xf32>
    %96 = arith.maximumf %94, %95 : vector<16x128xf32>
    %c145 = arith.constant 145 : index
    %c0_73 = arith.constant 0 : index
    %97 = vector.load %arg8[%c145, %c0_73] : memref<324x128xf32, #tpu.memory_space<vmem>>, vector<16x128xf32>
    tpu.vector_store %arg8[%c145, %c0_73], %96 {strides = array<i32>} : memref<324x128xf32, #tpu.memory_space<vmem>>, vector<16x128xf32>,
    %c0_74 = arith.constant 0 : index
    %c8 = arith.constant 8 : index
    %c0_75 = arith.constant 0 : index
    %c0_76 = arith.constant 0 : index
    %98 = vector.load %arg1[%c0_74, %c8, %c0_75, %c0_76] : memref<1x16x16x128xbf16, #tpu.memory_space<vmem>>, vector<1x1x16x128xbf16>
    %99 = vector.shape_cast %98 : vector<1x1x16x128xbf16> to vector<16x128xbf16>
    %100 = arith.extf %99 : vector<16x128xbf16> to vector<16x128xf32>
    %c0_77 = arith.constant 0 : index
    %c0_78 = arith.constant 0 : index
    %101 = vector.load %arg2[%c0_77, %c0_78] : memref<1x128xf32, #tpu.memory_space<vmem>>, vector<1x128xf32>
    %102 = vector.broadcast %101 : vector<1x128xf32> to vector<16x128xf32>
    %103 = arith.mulf %100, %102 : vector<16x128xf32>
    %c0_79 = arith.constant 0 : index
    %c0_80 = arith.constant 0 : index
    %104 = vector.load %arg3[%c0_79, %c0_80] : memref<1x128xf32, #tpu.memory_space<vmem>>, vector<1x128xf32>
    %105 = vector.broadcast %104 : vector<1x128xf32> to vector<16x128xf32>
    %106 = arith.addf %103, %105 : vector<16x128xf32>
    %cst_81 = arith.constant 0.000000e+00 : f32
    %107 = vector.broadcast %cst_81 : f32 to vector<16x128xf32>
    %108 = arith.maximumf %106, %107 : vector<16x128xf32>
    %c163 = arith.constant 163 : index
    %c0_82 = arith.constant 0 : index
    %109 = vector.load %arg8[%c163, %c0_82] : memref<324x128xf32, #tpu.memory_space<vmem>>, vector<16x128xf32>
    tpu.vector_store %arg8[%c163, %c0_82], %108 {strides = array<i32>} : memref<324x128xf32, #tpu.memory_space<vmem>>, vector<16x128xf32>,
    %c0_83 = arith.constant 0 : index
    %c9 = arith.constant 9 : index
    %c0_84 = arith.constant 0 : index
    %c0_85 = arith.constant 0 : index
    %110 = vector.load %arg1[%c0_83, %c9, %c0_84, %c0_85] : memref<1x16x16x128xbf16, #tpu.memory_space<vmem>>, vector<1x1x16x128xbf16>
    %111 = vector.shape_cast %110 : vector<1x1x16x128xbf16> to vector<16x128xbf16>
    %112 = arith.extf %111 : vector<16x128xbf16> to vector<16x128xf32>
    %c0_86 = arith.constant 0 : index
    %c0_87 = arith.constant 0 : index
    %113 = vector.load %arg2[%c0_86, %c0_87] : memref<1x128xf32, #tpu.memory_space<vmem>>, vector<1x128xf32>
    %114 = vector.broadcast %113 : vector<1x128xf32> to vector<16x128xf32>
    %115 = arith.mulf %112, %114 : vector<16x128xf32>
    %c0_88 = arith.constant 0 : index
    %c0_89 = arith.constant 0 : index
    %116 = vector.load %arg3[%c0_88, %c0_89] : memref<1x128xf32, #tpu.memory_space<vmem>>, vector<1x128xf32>
    %117 = vector.broadcast %116 : vector<1x128xf32> to vector<16x128xf32>
    %118 = arith.addf %115, %117 : vector<16x128xf32>
    %cst_90 = arith.constant 0.000000e+00 : f32
    %119 = vector.broadcast %cst_90 : f32 to vector<16x128xf32>
    %120 = arith.maximumf %118, %119 : vector<16x128xf32>
    %c181 = arith.constant 181 : index
    %c0_91 = arith.constant 0 : index
    %121 = vector.load %arg8[%c181, %c0_91] : memref<324x128xf32, #tpu.memory_space<vmem>>, vector<16x128xf32>
    tpu.vector_store %arg8[%c181, %c0_91], %120 {strides = array<i32>} : memref<324x128xf32, #tpu.memory_space<vmem>>, vector<16x128xf32>,
    %c0_92 = arith.constant 0 : index
    %c10 = arith.constant 10 : index
    %c0_93 = arith.constant 0 : index
    %c0_94 = arith.constant 0 : index
    %122 = vector.load %arg1[%c0_92, %c10, %c0_93, %c0_94] : memref<1x16x16x128xbf16, #tpu.memory_space<vmem>>, vector<1x1x16x128xbf16>
    %123 = vector.shape_cast %122 : vector<1x1x16x128xbf16> to vector<16x128xbf16>
    %124 = arith.extf %123 : vector<16x128xbf16> to vector<16x128xf32>
    %c0_95 = arith.constant 0 : index
    %c0_96 = arith.constant 0 : index
    %125 = vector.load %arg2[%c0_95, %c0_96] : memref<1x128xf32, #tpu.memory_space<vmem>>, vector<1x128xf32>
    %126 = vector.broadcast %125 : vector<1x128xf32> to vector<16x128xf32>
    %127 = arith.mulf %124, %126 : vector<16x128xf32>
    %c0_97 = arith.constant 0 : index
    %c0_98 = arith.constant 0 : index
    %128 = vector.load %arg3[%c0_97, %c0_98] : memref<1x128xf32, #tpu.memory_space<vmem>>, vector<1x128xf32>
    %129 = vector.broadcast %128 : vector<1x128xf32> to vector<16x128xf32>
    %130 = arith.addf %127, %129 : vector<16x128xf32>
    %cst_99 = arith.constant 0.000000e+00 : f32
    %131 = vector.broadcast %cst_99 : f32 to vector<16x128xf32>
    %132 = arith.maximumf %130, %131 : vector<16x128xf32>
    %c199 = arith.constant 199 : index
    %c0_100 = arith.constant 0 : index
    %133 = vector.load %arg8[%c199, %c0_100] : memref<324x128xf32, #tpu.memory_space<vmem>>, vector<16x128xf32>
    tpu.vector_store %arg8[%c199, %c0_100], %132 {strides = array<i32>} : memref<324x128xf32, #tpu.memory_space<vmem>>, vector<16x128xf32>,
    %c0_101 = arith.constant 0 : index
    %c11 = arith.constant 11 : index
    %c0_102 = arith.constant 0 : index
    %c0_103 = arith.constant 0 : index
    %134 = vector.load %arg1[%c0_101, %c11, %c0_102, %c0_103] : memref<1x16x16x128xbf16, #tpu.memory_space<vmem>>, vector<1x1x16x128xbf16>
    %135 = vector.shape_cast %134 : vector<1x1x16x128xbf16> to vector<16x128xbf16>
    %136 = arith.extf %135 : vector<16x128xbf16> to vector<16x128xf32>
    %c0_104 = arith.constant 0 : index
    %c0_105 = arith.constant 0 : index
    %137 = vector.load %arg2[%c0_104, %c0_105] : memref<1x128xf32, #tpu.memory_space<vmem>>, vector<1x128xf32>
    %138 = vector.broadcast %137 : vector<1x128xf32> to vector<16x128xf32>
    %139 = arith.mulf %136, %138 : vector<16x128xf32>
    %c0_106 = arith.constant 0 : index
    %c0_107 = arith.constant 0 : index
    %140 = vector.load %arg3[%c0_106, %c0_107] : memref<1x128xf32, #tpu.memory_space<vmem>>, vector<1x128xf32>
    %141 = vector.broadcast %140 : vector<1x128xf32> to vector<16x128xf32>
    %142 = arith.addf %139, %141 : vector<16x128xf32>
    %cst_108 = arith.constant 0.000000e+00 : f32
    %143 = vector.broadcast %cst_108 : f32 to vector<16x128xf32>
    %144 = arith.maximumf %142, %143 : vector<16x128xf32>
    %c217 = arith.constant 217 : index
    %c0_109 = arith.constant 0 : index
    %145 = vector.load %arg8[%c217, %c0_109] : memref<324x128xf32, #tpu.memory_space<vmem>>, vector<16x128xf32>
    tpu.vector_store %arg8[%c217, %c0_109], %144 {strides = array<i32>} : memref<324x128xf32, #tpu.memory_space<vmem>>, vector<16x128xf32>,
    %c0_110 = arith.constant 0 : index
    %c12 = arith.constant 12 : index
    %c0_111 = arith.constant 0 : index
    %c0_112 = arith.constant 0 : index
    %146 = vector.load %arg1[%c0_110, %c12, %c0_111, %c0_112] : memref<1x16x16x128xbf16, #tpu.memory_space<vmem>>, vector<1x1x16x128xbf16>
    %147 = vector.shape_cast %146 : vector<1x1x16x128xbf16> to vector<16x128xbf16>
    %148 = arith.extf %147 : vector<16x128xbf16> to vector<16x128xf32>
    %c0_113 = arith.constant 0 : index
    %c0_114 = arith.constant 0 : index
    %149 = vector.load %arg2[%c0_113, %c0_114] : memref<1x128xf32, #tpu.memory_space<vmem>>, vector<1x128xf32>
    %150 = vector.broadcast %149 : vector<1x128xf32> to vector<16x128xf32>
    %151 = arith.mulf %148, %150 : vector<16x128xf32>
    %c0_115 = arith.constant 0 : index
    %c0_116 = arith.constant 0 : index
    %152 = vector.load %arg3[%c0_115, %c0_116] : memref<1x128xf32, #tpu.memory_space<vmem>>, vector<1x128xf32>
    %153 = vector.broadcast %152 : vector<1x128xf32> to vector<16x128xf32>
    %154 = arith.addf %151, %153 : vector<16x128xf32>
    %cst_117 = arith.constant 0.000000e+00 : f32
    %155 = vector.broadcast %cst_117 : f32 to vector<16x128xf32>
    %156 = arith.maximumf %154, %155 : vector<16x128xf32>
    %c235 = arith.constant 235 : index
    %c0_118 = arith.constant 0 : index
    %157 = vector.load %arg8[%c235, %c0_118] : memref<324x128xf32, #tpu.memory_space<vmem>>, vector<16x128xf32>
    tpu.vector_store %arg8[%c235, %c0_118], %156 {strides = array<i32>} : memref<324x128xf32, #tpu.memory_space<vmem>>, vector<16x128xf32>,
    %c0_119 = arith.constant 0 : index
    %c13 = arith.constant 13 : index
    %c0_120 = arith.constant 0 : index
    %c0_121 = arith.constant 0 : index
    %158 = vector.load %arg1[%c0_119, %c13, %c0_120, %c0_121] : memref<1x16x16x128xbf16, #tpu.memory_space<vmem>>, vector<1x1x16x128xbf16>
    %159 = vector.shape_cast %158 : vector<1x1x16x128xbf16> to vector<16x128xbf16>
    %160 = arith.extf %159 : vector<16x128xbf16> to vector<16x128xf32>
    %c0_122 = arith.constant 0 : index
    %c0_123 = arith.constant 0 : index
    %161 = vector.load %arg2[%c0_122, %c0_123] : memref<1x128xf32, #tpu.memory_space<vmem>>, vector<1x128xf32>
    %162 = vector.broadcast %161 : vector<1x128xf32> to vector<16x128xf32>
    %163 = arith.mulf %160, %162 : vector<16x128xf32>
    %c0_124 = arith.constant 0 : index
    %c0_125 = arith.constant 0 : index
    %164 = vector.load %arg3[%c0_124, %c0_125] : memref<1x128xf32, #tpu.memory_space<vmem>>, vector<1x128xf32>
    %165 = vector.broadcast %164 : vector<1x128xf32> to vector<16x128xf32>
    %166 = arith.addf %163, %165 : vector<16x128xf32>
    %cst_126 = arith.constant 0.000000e+00 : f32
    %167 = vector.broadcast %cst_126 : f32 to vector<16x128xf32>
    %168 = arith.maximumf %166, %167 : vector<16x128xf32>
    %c253 = arith.constant 253 : index
    %c0_127 = arith.constant 0 : index
    %169 = vector.load %arg8[%c253, %c0_127] : memref<324x128xf32, #tpu.memory_space<vmem>>, vector<16x128xf32>
    tpu.vector_store %arg8[%c253, %c0_127], %168 {strides = array<i32>} : memref<324x128xf32, #tpu.memory_space<vmem>>, vector<16x128xf32>,
    %c0_128 = arith.constant 0 : index
    %c14 = arith.constant 14 : index
    %c0_129 = arith.constant 0 : index
    %c0_130 = arith.constant 0 : index
    %170 = vector.load %arg1[%c0_128, %c14, %c0_129, %c0_130] : memref<1x16x16x128xbf16, #tpu.memory_space<vmem>>, vector<1x1x16x128xbf16>
    %171 = vector.shape_cast %170 : vector<1x1x16x128xbf16> to vector<16x128xbf16>
    %172 = arith.extf %171 : vector<16x128xbf16> to vector<16x128xf32>
    %c0_131 = arith.constant 0 : index
    %c0_132 = arith.constant 0 : index
    %173 = vector.load %arg2[%c0_131, %c0_132] : memref<1x128xf32, #tpu.memory_space<vmem>>, vector<1x128xf32>
    %174 = vector.broadcast %173 : vector<1x128xf32> to vector<16x128xf32>
    %175 = arith.mulf %172, %174 : vector<16x128xf32>
    %c0_133 = arith.constant 0 : index
    %c0_134 = arith.constant 0 : index
    %176 = vector.load %arg3[%c0_133, %c0_134] : memref<1x128xf32, #tpu.memory_space<vmem>>, vector<1x128xf32>
    %177 = vector.broadcast %176 : vector<1x128xf32> to vector<16x128xf32>
    %178 = arith.addf %175, %177 : vector<16x128xf32>
    %cst_135 = arith.constant 0.000000e+00 : f32
    %179 = vector.broadcast %cst_135 : f32 to vector<16x128xf32>
    %180 = arith.maximumf %178, %179 : vector<16x128xf32>
    %c271 = arith.constant 271 : index
    %c0_136 = arith.constant 0 : index
    %181 = vector.load %arg8[%c271, %c0_136] : memref<324x128xf32, #tpu.memory_space<vmem>>, vector<16x128xf32>
    tpu.vector_store %arg8[%c271, %c0_136], %180 {strides = array<i32>} : memref<324x128xf32, #tpu.memory_space<vmem>>, vector<16x128xf32>,
    %c0_137 = arith.constant 0 : index
    %c15 = arith.constant 15 : index
    %c0_138 = arith.constant 0 : index
    %c0_139 = arith.constant 0 : index
    %182 = vector.load %arg1[%c0_137, %c15, %c0_138, %c0_139] : memref<1x16x16x128xbf16, #tpu.memory_space<vmem>>, vector<1x1x16x128xbf16>
    %183 = vector.shape_cast %182 : vector<1x1x16x128xbf16> to vector<16x128xbf16>
    %184 = arith.extf %183 : vector<16x128xbf16> to vector<16x128xf32>
    %c0_140 = arith.constant 0 : index
    %c0_141 = arith.constant 0 : index
    %185 = vector.load %arg2[%c0_140, %c0_141] : memref<1x128xf32, #tpu.memory_space<vmem>>, vector<1x128xf32>
    %186 = vector.broadcast %185 : vector<1x128xf32> to vector<16x128xf32>
    %187 = arith.mulf %184, %186 : vector<16x128xf32>
    %c0_142 = arith.constant 0 : index
    %c0_143 = arith.constant 0 : index
    %188 = vector.load %arg3[%c0_142, %c0_143] : memref<1x128xf32, #tpu.memory_space<vmem>>, vector<1x128xf32>
    %189 = vector.broadcast %188 : vector<1x128xf32> to vector<16x128xf32>
    %190 = arith.addf %187, %189 : vector<16x128xf32>
    %cst_144 = arith.constant 0.000000e+00 : f32
    %191 = vector.broadcast %cst_144 : f32 to vector<16x128xf32>
    %192 = arith.maximumf %190, %191 : vector<16x128xf32>
    %c289 = arith.constant 289 : index
    %c0_145 = arith.constant 0 : index
    %193 = vector.load %arg8[%c289, %c0_145] : memref<324x128xf32, #tpu.memory_space<vmem>>, vector<16x128xf32>
    tpu.vector_store %arg8[%c289, %c0_145], %192 {strides = array<i32>} : memref<324x128xf32, #tpu.memory_space<vmem>>, vector<16x128xf32>,
    %c0_146 = arith.constant 0 : index
    %c0_147 = arith.constant 0 : index
    %194 = vector.load %arg8[%c0_146, %c0_147] : memref<324x128xf32, #tpu.memory_space<vmem>>, vector<286x128xf32>
    %195 = arith.truncf %194 : vector<286x128xf32> to vector<286x128xbf16>
    %c0_148 = arith.constant 0 : index
    %c0_149 = arith.constant 0 : index
    %c0_150 = arith.constant 0 : index
    %196 = vector.load %arg4[%c0_148, %c0_149, %c0_150] : memref<9x128x128xbf16, #tpu.memory_space<vmem>>, vector<1x128x128xbf16>
    %197 = vector.shape_cast %196 : vector<1x128x128xbf16> to vector<128x128xbf16>
    %cst_151 = arith.constant dense<0.000000e+00> : vector<286x128xf32>
    %198 = tpu.matmul %195, %197, %cst_151 {dimension_numbers = #tpu.dot_dimension_numbers<[1], [0], [0], [1], [0, 0, 1, 1], [], []>} : vector<286x128xbf16>, vector<128x128xbf16>, vector<286x128xf32> -> vector<286x128xf32>
    %c0_152 = arith.constant 0 : index
    %c0_153 = arith.constant 0 : index
    %199 = vector.load %arg9[%c0_152, %c0_153] : memref<286x128xf32, #tpu.memory_space<vmem>>, vector<286x128xf32>
    tpu.vector_store %arg9[%c0_152, %c0_153], %198 {strides = array<i32>} : memref<286x128xf32, #tpu.memory_space<vmem>>, vector<286x128xf32>,
    %c1_154 = arith.constant 1 : index
    %c0_155 = arith.constant 0 : index
    %200 = vector.load %arg8[%c1_154, %c0_155] : memref<324x128xf32, #tpu.memory_space<vmem>>, vector<286x128xf32>
    %201 = arith.truncf %200 : vector<286x128xf32> to vector<286x128xbf16>
    %c1_156 = arith.constant 1 : index
    %c0_157 = arith.constant 0 : index
    %c0_158 = arith.constant 0 : index
    %202 = vector.load %arg4[%c1_156, %c0_157, %c0_158] : memref<9x128x128xbf16, #tpu.memory_space<vmem>>, vector<1x128x128xbf16>
    %203 = vector.shape_cast %202 : vector<1x128x128xbf16> to vector<128x128xbf16>
    %cst_159 = arith.constant dense<0.000000e+00> : vector<286x128xf32>
    %204 = tpu.matmul %201, %203, %cst_159 {dimension_numbers = #tpu.dot_dimension_numbers<[1], [0], [0], [1], [0, 0, 1, 1], [], []>} : vector<286x128xbf16>, vector<128x128xbf16>, vector<286x128xf32> -> vector<286x128xf32>
    %c0_160 = arith.constant 0 : index
    %c0_161 = arith.constant 0 : index
    %205 = vector.load %arg9[%c0_160, %c0_161] : memref<286x128xf32, #tpu.memory_space<vmem>>, vector<286x128xf32>
    %206 = arith.addf %205, %204 : vector<286x128xf32>
    %c0_162 = arith.constant 0 : index
    %c0_163 = arith.constant 0 : index
    %207 = vector.load %arg9[%c0_162, %c0_163] : memref<286x128xf32, #tpu.memory_space<vmem>>, vector<286x128xf32>
    tpu.vector_store %arg9[%c0_162, %c0_163], %206 {strides = array<i32>} : memref<286x128xf32, #tpu.memory_space<vmem>>, vector<286x128xf32>,
    %c2_164 = arith.constant 2 : index
    %c0_165 = arith.constant 0 : index
    %208 = vector.load %arg8[%c2_164, %c0_165] : memref<324x128xf32, #tpu.memory_space<vmem>>, vector<286x128xf32>
    %209 = arith.truncf %208 : vector<286x128xf32> to vector<286x128xbf16>
    %c2_166 = arith.constant 2 : index
    %c0_167 = arith.constant 0 : index
    %c0_168 = arith.constant 0 : index
    %210 = vector.load %arg4[%c2_166, %c0_167, %c0_168] : memref<9x128x128xbf16, #tpu.memory_space<vmem>>, vector<1x128x128xbf16>
    %211 = vector.shape_cast %210 : vector<1x128x128xbf16> to vector<128x128xbf16>
    %cst_169 = arith.constant dense<0.000000e+00> : vector<286x128xf32>
    %212 = tpu.matmul %209, %211, %cst_169 {dimension_numbers = #tpu.dot_dimension_numbers<[1], [0], [0], [1], [0, 0, 1, 1], [], []>} : vector<286x128xbf16>, vector<128x128xbf16>, vector<286x128xf32> -> vector<286x128xf32>
    %c0_170 = arith.constant 0 : index
    %c0_171 = arith.constant 0 : index
    %213 = vector.load %arg9[%c0_170, %c0_171] : memref<286x128xf32, #tpu.memory_space<vmem>>, vector<286x128xf32>
    %214 = arith.addf %213, %212 : vector<286x128xf32>
    %c0_172 = arith.constant 0 : index
    %c0_173 = arith.constant 0 : index
    %215 = vector.load %arg9[%c0_172, %c0_173] : memref<286x128xf32, #tpu.memory_space<vmem>>, vector<286x128xf32>
    tpu.vector_store %arg9[%c0_172, %c0_173], %214 {strides = array<i32>} : memref<286x128xf32, #tpu.memory_space<vmem>>, vector<286x128xf32>,
    %c18 = arith.constant 18 : index
    %c0_174 = arith.constant 0 : index
    %216 = vector.load %arg8[%c18, %c0_174] : memref<324x128xf32, #tpu.memory_space<vmem>>, vector<286x128xf32>
    %217 = arith.truncf %216 : vector<286x128xf32> to vector<286x128xbf16>
    %c3_175 = arith.constant 3 : index
    %c0_176 = arith.constant 0 : index
    %c0_177 = arith.constant 0 : index
    %218 = vector.load %arg4[%c3_175, %c0_176, %c0_177] : memref<9x128x128xbf16, #tpu.memory_space<vmem>>, vector<1x128x128xbf16>
    %219 = vector.shape_cast %218 : vector<1x128x128xbf16> to vector<128x128xbf16>
    %cst_178 = arith.constant dense<0.000000e+00> : vector<286x128xf32>
    %220 = tpu.matmul %217, %219, %cst_178 {dimension_numbers = #tpu.dot_dimension_numbers<[1], [0], [0], [1], [0, 0, 1, 1], [], []>} : vector<286x128xbf16>, vector<128x128xbf16>, vector<286x128xf32> -> vector<286x128xf32>
    %c0_179 = arith.constant 0 : index
    %c0_180 = arith.constant 0 : index
    %221 = vector.load %arg9[%c0_179, %c0_180] : memref<286x128xf32, #tpu.memory_space<vmem>>, vector<286x128xf32>
    %222 = arith.addf %221, %220 : vector<286x128xf32>
    %c0_181 = arith.constant 0 : index
    %c0_182 = arith.constant 0 : index
    %223 = vector.load %arg9[%c0_181, %c0_182] : memref<286x128xf32, #tpu.memory_space<vmem>>, vector<286x128xf32>
    tpu.vector_store %arg9[%c0_181, %c0_182], %222 {strides = array<i32>} : memref<286x128xf32, #tpu.memory_space<vmem>>, vector<286x128xf32>,
    %c19_183 = arith.constant 19 : index
    %c0_184 = arith.constant 0 : index
    %224 = vector.load %arg8[%c19_183, %c0_184] : memref<324x128xf32, #tpu.memory_space<vmem>>, vector<286x128xf32>
    %225 = arith.truncf %224 : vector<286x128xf32> to vector<286x128xbf16>
    %c4_185 = arith.constant 4 : index
    %c0_186 = arith.constant 0 : index
    %c0_187 = arith.constant 0 : index
    %226 = vector.load %arg4[%c4_185, %c0_186, %c0_187] : memref<9x128x128xbf16, #tpu.memory_space<vmem>>, vector<1x128x128xbf16>
    %227 = vector.shape_cast %226 : vector<1x128x128xbf16> to vector<128x128xbf16>
    %cst_188 = arith.constant dense<0.000000e+00> : vector<286x128xf32>
    %228 = tpu.matmul %225, %227, %cst_188 {dimension_numbers = #tpu.dot_dimension_numbers<[1], [0], [0], [1], [0, 0, 1, 1], [], []>} : vector<286x128xbf16>, vector<128x128xbf16>, vector<286x128xf32> -> vector<286x128xf32>
    %c0_189 = arith.constant 0 : index
    %c0_190 = arith.constant 0 : index
    %229 = vector.load %arg9[%c0_189, %c0_190] : memref<286x128xf32, #tpu.memory_space<vmem>>, vector<286x128xf32>
    %230 = arith.addf %229, %228 : vector<286x128xf32>
    %c0_191 = arith.constant 0 : index
    %c0_192 = arith.constant 0 : index
    %231 = vector.load %arg9[%c0_191, %c0_192] : memref<286x128xf32, #tpu.memory_space<vmem>>, vector<286x128xf32>
    tpu.vector_store %arg9[%c0_191, %c0_192], %230 {strides = array<i32>} : memref<286x128xf32, #tpu.memory_space<vmem>>, vector<286x128xf32>,
    %c20 = arith.constant 20 : index
    %c0_193 = arith.constant 0 : index
    %232 = vector.load %arg8[%c20, %c0_193] : memref<324x128xf32, #tpu.memory_space<vmem>>, vector<286x128xf32>
    %233 = arith.truncf %232 : vector<286x128xf32> to vector<286x128xbf16>
    %c5_194 = arith.constant 5 : index
    %c0_195 = arith.constant 0 : index
    %c0_196 = arith.constant 0 : index
    %234 = vector.load %arg4[%c5_194, %c0_195, %c0_196] : memref<9x128x128xbf16, #tpu.memory_space<vmem>>, vector<1x128x128xbf16>
    %235 = vector.shape_cast %234 : vector<1x128x128xbf16> to vector<128x128xbf16>
    %cst_197 = arith.constant dense<0.000000e+00> : vector<286x128xf32>
    %236 = tpu.matmul %233, %235, %cst_197 {dimension_numbers = #tpu.dot_dimension_numbers<[1], [0], [0], [1], [0, 0, 1, 1], [], []>} : vector<286x128xbf16>, vector<128x128xbf16>, vector<286x128xf32> -> vector<286x128xf32>
    %c0_198 = arith.constant 0 : index
    %c0_199 = arith.constant 0 : index
    %237 = vector.load %arg9[%c0_198, %c0_199] : memref<286x128xf32, #tpu.memory_space<vmem>>, vector<286x128xf32>
    %238 = arith.addf %237, %236 : vector<286x128xf32>
    %c0_200 = arith.constant 0 : index
    %c0_201 = arith.constant 0 : index
    %239 = vector.load %arg9[%c0_200, %c0_201] : memref<286x128xf32, #tpu.memory_space<vmem>>, vector<286x128xf32>
    tpu.vector_store %arg9[%c0_200, %c0_201], %238 {strides = array<i32>} : memref<286x128xf32, #tpu.memory_space<vmem>>, vector<286x128xf32>,
    %c36 = arith.constant 36 : index
    %c0_202 = arith.constant 0 : index
    %240 = vector.load %arg8[%c36, %c0_202] : memref<324x128xf32, #tpu.memory_space<vmem>>, vector<286x128xf32>
    %241 = arith.truncf %240 : vector<286x128xf32> to vector<286x128xbf16>
    %c6_203 = arith.constant 6 : index
    %c0_204 = arith.constant 0 : index
    %c0_205 = arith.constant 0 : index
    %242 = vector.load %arg4[%c6_203, %c0_204, %c0_205] : memref<9x128x128xbf16, #tpu.memory_space<vmem>>, vector<1x128x128xbf16>
    %243 = vector.shape_cast %242 : vector<1x128x128xbf16> to vector<128x128xbf16>
    %cst_206 = arith.constant dense<0.000000e+00> : vector<286x128xf32>
    %244 = tpu.matmul %241, %243, %cst_206 {dimension_numbers = #tpu.dot_dimension_numbers<[1], [0], [0], [1], [0, 0, 1, 1], [], []>} : vector<286x128xbf16>, vector<128x128xbf16>, vector<286x128xf32> -> vector<286x128xf32>
    %c0_207 = arith.constant 0 : index
    %c0_208 = arith.constant 0 : index
    %245 = vector.load %arg9[%c0_207, %c0_208] : memref<286x128xf32, #tpu.memory_space<vmem>>, vector<286x128xf32>
    %246 = arith.addf %245, %244 : vector<286x128xf32>
    %c0_209 = arith.constant 0 : index
    %c0_210 = arith.constant 0 : index
    %247 = vector.load %arg9[%c0_209, %c0_210] : memref<286x128xf32, #tpu.memory_space<vmem>>, vector<286x128xf32>
    tpu.vector_store %arg9[%c0_209, %c0_210], %246 {strides = array<i32>} : memref<286x128xf32, #tpu.memory_space<vmem>>, vector<286x128xf32>,
    %c37_211 = arith.constant 37 : index
    %c0_212 = arith.constant 0 : index
    %248 = vector.load %arg8[%c37_211, %c0_212] : memref<324x128xf32, #tpu.memory_space<vmem>>, vector<286x128xf32>
    %249 = arith.truncf %248 : vector<286x128xf32> to vector<286x128xbf16>
    %c7_213 = arith.constant 7 : index
    %c0_214 = arith.constant 0 : index
    %c0_215 = arith.constant 0 : index
    %250 = vector.load %arg4[%c7_213, %c0_214, %c0_215] : memref<9x128x128xbf16, #tpu.memory_space<vmem>>, vector<1x128x128xbf16>
    %251 = vector.shape_cast %250 : vector<1x128x128xbf16> to vector<128x128xbf16>
    %cst_216 = arith.constant dense<0.000000e+00> : vector<286x128xf32>
    %252 = tpu.matmul %249, %251, %cst_216 {dimension_numbers = #tpu.dot_dimension_numbers<[1], [0], [0], [1], [0, 0, 1, 1], [], []>} : vector<286x128xbf16>, vector<128x128xbf16>, vector<286x128xf32> -> vector<286x128xf32>
    %c0_217 = arith.constant 0 : index
    %c0_218 = arith.constant 0 : index
    %253 = vector.load %arg9[%c0_217, %c0_218] : memref<286x128xf32, #tpu.memory_space<vmem>>, vector<286x128xf32>
    %254 = arith.addf %253, %252 : vector<286x128xf32>
    %c0_219 = arith.constant 0 : index
    %c0_220 = arith.constant 0 : index
    %255 = vector.load %arg9[%c0_219, %c0_220] : memref<286x128xf32, #tpu.memory_space<vmem>>, vector<286x128xf32>
    tpu.vector_store %arg9[%c0_219, %c0_220], %254 {strides = array<i32>} : memref<286x128xf32, #tpu.memory_space<vmem>>, vector<286x128xf32>,
    %c38 = arith.constant 38 : index
    %c0_221 = arith.constant 0 : index
    %256 = vector.load %arg8[%c38, %c0_221] : memref<324x128xf32, #tpu.memory_space<vmem>>, vector<286x128xf32>
    %257 = arith.truncf %256 : vector<286x128xf32> to vector<286x128xbf16>
    %c8_222 = arith.constant 8 : index
    %c0_223 = arith.constant 0 : index
    %c0_224 = arith.constant 0 : index
    %258 = vector.load %arg4[%c8_222, %c0_223, %c0_224] : memref<9x128x128xbf16, #tpu.memory_space<vmem>>, vector<1x128x128xbf16>
    %259 = vector.shape_cast %258 : vector<1x128x128xbf16> to vector<128x128xbf16>
    %cst_225 = arith.constant dense<0.000000e+00> : vector<286x128xf32>
    %260 = tpu.matmul %257, %259, %cst_225 {dimension_numbers = #tpu.dot_dimension_numbers<[1], [0], [0], [1], [0, 0, 1, 1], [], []>} : vector<286x128xbf16>, vector<128x128xbf16>, vector<286x128xf32> -> vector<286x128xf32>
    %c0_226 = arith.constant 0 : index
    %c0_227 = arith.constant 0 : index
    %261 = vector.load %arg9[%c0_226, %c0_227] : memref<286x128xf32, #tpu.memory_space<vmem>>, vector<286x128xf32>
    %262 = arith.addf %261, %260 : vector<286x128xf32>
    %c0_228 = arith.constant 0 : index
    %c0_229 = arith.constant 0 : index
    %263 = vector.load %arg9[%c0_228, %c0_229] : memref<286x128xf32, #tpu.memory_space<vmem>>, vector<286x128xf32>
    tpu.vector_store %arg9[%c0_228, %c0_229], %262 {strides = array<i32>} : memref<286x128xf32, #tpu.memory_space<vmem>>, vector<286x128xf32>,
    %264 = tpu.iota {dimensions = array<i32: 0>} : vector<8x15xi32>
    %265 = tpu.iota {dimensions = array<i32: 1>} : vector<8x15xi32>
    %c2_i32 = arith.constant 2 : i32
    %266 = vector.broadcast %c2_i32 : i32 to vector<8x15xi32>
    %267 = arith.muli %266, %264 : vector<8x15xi32>
    %268 = arith.cmpi eq, %265, %267 : vector<8x15xi32>
    %269 = arith.extui %268 : vector<8x15xi1> to vector<8x15xi32>
    %270 = arith.sitofp %269 : vector<8x15xi32> to vector<8x15xf32>
    %c0_230 = arith.constant 0 : index
    %c0_231 = arith.constant 0 : index
    %271 = vector.load %arg9[%c0_230, %c0_231] : memref<286x128xf32, #tpu.memory_space<vmem>>, vector<15x128xf32>
    %cst_232 = arith.constant dense<0.000000e+00> : vector<8x128xf32>
    %272 = tpu.matmul %270, %271, %cst_232 {dimension_numbers = #tpu.dot_dimension_numbers<[1], [0], [0], [1], [0, 0, 1, 1], [], []>} : vector<8x15xf32>, vector<15x128xf32>, vector<8x128xf32> -> vector<8x128xf32>
    %c36_233 = arith.constant 36 : index
    %c0_234 = arith.constant 0 : index
    %273 = vector.load %arg9[%c36_233, %c0_234] : memref<286x128xf32, #tpu.memory_space<vmem>>, vector<15x128xf32>
    %cst_235 = arith.constant dense<0.000000e+00> : vector<8x128xf32>
    %274 = tpu.matmul %270, %273, %cst_235 {dimension_numbers = #tpu.dot_dimension_numbers<[1], [0], [0], [1], [0, 0, 1, 1], [], []>} : vector<8x15xf32>, vector<15x128xf32>, vector<8x128xf32> -> vector<8x128xf32>
    %c72 = arith.constant 72 : index
    %c0_236 = arith.constant 0 : index
    %275 = vector.load %arg9[%c72, %c0_236] : memref<286x128xf32, #tpu.memory_space<vmem>>, vector<15x128xf32>
    %cst_237 = arith.constant dense<0.000000e+00> : vector<8x128xf32>
    %276 = tpu.matmul %270, %275, %cst_237 {dimension_numbers = #tpu.dot_dimension_numbers<[1], [0], [0], [1], [0, 0, 1, 1], [], []>} : vector<8x15xf32>, vector<15x128xf32>, vector<8x128xf32> -> vector<8x128xf32>
    %c108 = arith.constant 108 : index
    %c0_238 = arith.constant 0 : index
    %277 = vector.load %arg9[%c108, %c0_238] : memref<286x128xf32, #tpu.memory_space<vmem>>, vector<15x128xf32>
    %cst_239 = arith.constant dense<0.000000e+00> : vector<8x128xf32>
    %278 = tpu.matmul %270, %277, %cst_239 {dimension_numbers = #tpu.dot_dimension_numbers<[1], [0], [0], [1], [0, 0, 1, 1], [], []>} : vector<8x15xf32>, vector<15x128xf32>, vector<8x128xf32> -> vector<8x128xf32>
    %c144 = arith.constant 144 : index
    %c0_240 = arith.constant 0 : index
    %279 = vector.load %arg9[%c144, %c0_240] : memref<286x128xf32, #tpu.memory_space<vmem>>, vector<15x128xf32>
    %cst_241 = arith.constant dense<0.000000e+00> : vector<8x128xf32>
    %280 = tpu.matmul %270, %279, %cst_241 {dimension_numbers = #tpu.dot_dimension_numbers<[1], [0], [0], [1], [0, 0, 1, 1], [], []>} : vector<8x15xf32>, vector<15x128xf32>, vector<8x128xf32> -> vector<8x128xf32>
    %c180 = arith.constant 180 : index
    %c0_242 = arith.constant 0 : index
    %281 = vector.load %arg9[%c180, %c0_242] : memref<286x128xf32, #tpu.memory_space<vmem>>, vector<15x128xf32>
    %cst_243 = arith.constant dense<0.000000e+00> : vector<8x128xf32>
    %282 = tpu.matmul %270, %281, %cst_243 {dimension_numbers = #tpu.dot_dimension_numbers<[1], [0], [0], [1], [0, 0, 1, 1], [], []>} : vector<8x15xf32>, vector<15x128xf32>, vector<8x128xf32> -> vector<8x128xf32>
    %c216 = arith.constant 216 : index
    %c0_244 = arith.constant 0 : index
    %283 = vector.load %arg9[%c216, %c0_244] : memref<286x128xf32, #tpu.memory_space<vmem>>, vector<15x128xf32>
    %cst_245 = arith.constant dense<0.000000e+00> : vector<8x128xf32>
    %284 = tpu.matmul %270, %283, %cst_245 {dimension_numbers = #tpu.dot_dimension_numbers<[1], [0], [0], [1], [0, 0, 1, 1], [], []>} : vector<8x15xf32>, vector<15x128xf32>, vector<8x128xf32> -> vector<8x128xf32>
    %c252 = arith.constant 252 : index
    %c0_246 = arith.constant 0 : index
    %285 = vector.load %arg9[%c252, %c0_246] : memref<286x128xf32, #tpu.memory_space<vmem>>, vector<15x128xf32>
    %cst_247 = arith.constant dense<0.000000e+00> : vector<8x128xf32>
    %286 = tpu.matmul %270, %285, %cst_247 {dimension_numbers = #tpu.dot_dimension_numbers<[1], [0], [0], [1], [0, 0, 1, 1], [], []>} : vector<8x15xf32>, vector<15x128xf32>, vector<8x128xf32> -> vector<8x128xf32>
    %287 = tpu.concatenate %272, %274, %276, %278, %280, %282, %284, %286 in 0 : vector<8x128xf32>, vector<8x128xf32>, vector<8x128xf32>, vector<8x128xf32>, vector<8x128xf32>, vector<8x128xf32>, vector<8x128xf32>, vector<8x128xf32> -> vector<64x128xf32>
    %288 = arith.truncf %287 : vector<64x128xf32> to vector<64x128xbf16>
    %c0_248 = arith.constant 0 : index
    %c0_249 = arith.constant 0 : index
    %c0_250 = arith.constant 0 : index
    %289 = vector.load %arg5[%c0_248, %c0_249, %c0_250] : memref<1x64x128xbf16, #tpu.memory_space<vmem>>, vector<1x64x128xbf16>
    %290 = vector.shape_cast %289 : vector<1x64x128xbf16> to vector<64x128xbf16>
    %291 = vector.shape_cast %288 : vector<64x128xbf16> to vector<1x64x128xbf16>
    tpu.vector_store %arg5[%c0_248, %c0_249, %c0_250], %291 {strides = array<i32>} : memref<1x64x128xbf16, #tpu.memory_space<vmem>>, vector<1x64x128xbf16>,
    %cst_251 = arith.constant 1.000000e+00 : f32
    %292 = vector.broadcast %cst_251 : f32 to vector<64x1xf32>
    %293 = vector.broadcast %292 : vector<64x1xf32> to vector<64x128xf32>
    %294 = arith.mulf %287, %293 : vector<64x128xf32>
    %cst_252 = arith.constant dense<0.000000e+00> : vector<128xf32>
    %295 = vector.multi_reduction <add>, %294, %cst_252 [0] : vector<64x128xf32> to vector<128xf32>
    %296 = vector.shape_cast %295 : vector<128xf32> to vector<1x128xf32>
    %297 = vector.shape_cast %292 : vector<64x1xf32> to vector<1x64x1xf32>
    %cst_253 = arith.constant dense<0.000000e+00> : vector<1xf32>
    %298 = vector.multi_reduction <add>, %297, %cst_253 [1, 2] : vector<1x64x1xf32> to vector<1xf32>
    %299 = vector.shape_cast %298 : vector<1xf32> to vector<1x1x1xf32>
    %300 = vector.extract %299[0, 0, 0] : f32 from vector<1x1x1xf32>
    %cst_254 = arith.constant 1.000000e+00 : f32
    %301 = arith.maximumf %300, %cst_254 : f32
    %302 = vector.broadcast %301 : f32 to vector<1x128xf32>
    %303 = arith.divf %296, %302 : vector<1x128xf32>
    %304 = vector.broadcast %303 : vector<1x128xf32> to vector<64x128xf32>
    %305 = arith.subf %287, %304 : vector<64x128xf32>
    %306 = vector.broadcast %292 : vector<64x1xf32> to vector<64x128xf32>
    %307 = arith.mulf %305, %306 : vector<64x128xf32>
    %308 = arith.mulf %307, %307 : vector<64x128xf32>
    %cst_255 = arith.constant dense<0.000000e+00> : vector<128xf32>
    %309 = vector.multi_reduction <add>, %308, %cst_255 [0] : vector<64x128xf32> to vector<128xf32>
    %310 = vector.shape_cast %309 : vector<128xf32> to vector<1x128xf32>
    %311 = vector.shape_cast %296 : vector<1x128xf32> to vector<1x128xf32>
    %312 = vector.broadcast %311 : vector<1x128xf32> to vector<8x128xf32>
    %c0_256 = arith.constant 0 : index
    %c0_257 = arith.constant 0 : index
    %c0_258 = arith.constant 0 : index
    %313 = vector.load %arg6[%c0_256, %c0_257, %c0_258] : memref<1x8x128xf32, #tpu.memory_space<vmem>>, vector<1x8x128xf32>
    %314 = vector.shape_cast %313 : vector<1x8x128xf32> to vector<8x128xf32>
    %315 = vector.shape_cast %312 : vector<8x128xf32> to vector<1x8x128xf32>
    tpu.vector_store %arg6[%c0_256, %c0_257, %c0_258], %315 {strides = array<i32>} : memref<1x8x128xf32, #tpu.memory_space<vmem>>, vector<1x8x128xf32>,
    %316 = vector.shape_cast %310 : vector<1x128xf32> to vector<1x128xf32>
    %317 = vector.broadcast %316 : vector<1x128xf32> to vector<8x128xf32>
    %c0_259 = arith.constant 0 : index
    %c0_260 = arith.constant 0 : index
    %c0_261 = arith.constant 0 : index
    %318 = vector.load %arg7[%c0_259, %c0_260, %c0_261] : memref<1x8x128xf32, #tpu.memory_space<vmem>>, vector<1x8x128xf32>
    %319 = vector.shape_cast %318 : vector<1x8x128xf32> to vector<8x128xf32>
    %320 = vector.shape_cast %317 : vector<8x128xf32> to vector<1x8x128xf32>
    tpu.vector_store %arg7[%c0_259, %c0_260, %c0_261], %320 {strides = array<i32>} : memref<1x8x128xf32, #tpu.memory_space<vmem>>, vector<1x8x128xf32>,
    return
  }
  func.func @transform_0(%arg0: i32) -> (i32, i32, i32, i32) {
    %c0_i32 = arith.constant 0 : i32
    %c0_i32_0 = arith.constant 0 : i32
    %c0_i32_1 = arith.constant 0 : i32
    %c0_i32_2 = arith.constant 0 : i32
    return %arg0, %c0_i32, %c0_i32_0, %c0_i32_1 : i32, i32, i32, i32
  }
  func.func @transform_1(%arg0: i32) -> (i32, i32) {
    %c0_i32 = arith.constant 0 : i32
    %c0_i32_0 = arith.constant 0 : i32
    %c0_i32_1 = arith.constant 0 : i32
    return %c0_i32, %c0_i32_0 : i32, i32
  }
  func.func @transform_2(%arg0: i32) -> (i32, i32) {
    %c0_i32 = arith.constant 0 : i32
    %c0_i32_0 = arith.constant 0 : i32
    %c0_i32_1 = arith.constant 0 : i32
    return %c0_i32, %c0_i32_0 : i32, i32
  }
  func.func @transform_3(%arg0: i32) -> (i32, i32, i32) {
    %c0_i32 = arith.constant 0 : i32
    %c0_i32_0 = arith.constant 0 : i32
    %c0_i32_1 = arith.constant 0 : i32
    %c0_i32_2 = arith.constant 0 : i32
    return %c0_i32, %c0_i32_0, %c0_i32_1 : i32, i32, i32
  }
  func.func @transform_4(%arg0: i32) -> (i32, i32, i32) {
    %c0_i32 = arith.constant 0 : i32
    %c0_i32_0 = arith.constant 0 : i32
    %c0_i32_1 = arith.constant 0 : i32
    return %arg0, %c0_i32, %c0_i32_0 : i32, i32, i32
  }
  func.func @transform_5(%arg0: i32) -> (i32, i32, i32) {
    %c0_i32 = arith.constant 0 : i32
    %c0_i32_0 = arith.constant 0 : i32
    %c0_i32_1 = arith.constant 0 : i32
    return %arg0, %c0_i32, %c0_i32_0 : i32, i32, i32
  }
  func.func @transform_6(%arg0: i32) -> (i32, i32, i32) {
    %c0_i32 = arith.constant 0 : i32
    %c0_i32_0 = arith.constant 0 : i32
    %c0_i32_1 = arith.constant 0 : i32
    return %arg0, %c0_i32, %c0_i32_0 : i32, i32, i32
  }
}

module attributes {stable_mosaic.version = 11 : i64} {
  func.func @_conv3_kernel(%arg0: i32, %arg1: memref<64x128xbf16, #tpu.memory_space<vmem>>, %arg2: memref<1x128xf32, #tpu.memory_space<vmem>>, %arg3: memref<1x128xf32, #tpu.memory_space<vmem>>, %arg4: memref<128x128xbf16, #tpu.memory_space<vmem>>, %arg5: memref<64x128xbf16, #tpu.memory_space<vmem>>, %arg6: memref<1x128xf32, #tpu.memory_space<vmem>>, %arg7: memref<1x128xf32, #tpu.memory_space<vmem>>, %arg8: memref<64x128xf32, #tpu.memory_space<vmem>>) attributes {dimension_semantics = [#tpu.dimension_semantics<parallel>], iteration_bounds = array<i64: 2>, scalar_prefetch = 0 : i64, scratch_operands = 0 : i64, tpu.core_type = #tpu.core_type<tc>, window_params = [{transform_indices = @transform_0, window_bounds = array<i64: 64, 128>}, {pipeline_mode = #tpu.pipeline_mode<synchronous>, transform_indices = @transform_1, window_bounds = array<i64: 1, 128>}, {pipeline_mode = #tpu.pipeline_mode<synchronous>, transform_indices = @transform_2, window_bounds = array<i64: 1, 128>}, {pipeline_mode = #tpu.pipeline_mode<synchronous>, transform_indices = @transform_3, window_bounds = array<i64: 128, 128>}, {transform_indices = @transform_4, window_bounds = array<i64: 64, 128>}, {pipeline_mode = #tpu.pipeline_mode<synchronous>, transform_indices = @transform_5, window_bounds = array<i64: 1, 128>}, {pipeline_mode = #tpu.pipeline_mode<synchronous>, transform_indices = @transform_6, window_bounds = array<i64: 1, 128>}, {transform_indices = @transform_7, window_bounds = array<i64: 64, 128>}]} {
    %c0 = arith.constant 0 : index
    %c0_0 = arith.constant 0 : index
    %0 = vector.load %arg1[%c0, %c0_0] : memref<64x128xbf16, #tpu.memory_space<vmem>>, vector<64x128xbf16>
    %1 = arith.extf %0 : vector<64x128xbf16> to vector<64x128xf32>
    %c0_1 = arith.constant 0 : index
    %c0_2 = arith.constant 0 : index
    %2 = vector.load %arg2[%c0_1, %c0_2] : memref<1x128xf32, #tpu.memory_space<vmem>>, vector<1x128xf32>
    %3 = vector.broadcast %2 : vector<1x128xf32> to vector<64x128xf32>
    %4 = arith.mulf %1, %3 : vector<64x128xf32>
    %c0_3 = arith.constant 0 : index
    %c0_4 = arith.constant 0 : index
    %5 = vector.load %arg3[%c0_3, %c0_4] : memref<1x128xf32, #tpu.memory_space<vmem>>, vector<1x128xf32>
    %6 = vector.broadcast %5 : vector<1x128xf32> to vector<64x128xf32>
    %7 = arith.addf %4, %6 : vector<64x128xf32>
    %cst = arith.constant 0.000000e+00 : f32
    %8 = vector.broadcast %cst : f32 to vector<64x128xf32>
    %9 = arith.maximumf %7, %8 : vector<64x128xf32>
    %10 = arith.truncf %9 : vector<64x128xf32> to vector<64x128xbf16>
    %c0_5 = arith.constant 0 : index
    %c0_6 = arith.constant 0 : index
    %11 = vector.load %arg4[%c0_5, %c0_6] : memref<128x128xbf16, #tpu.memory_space<vmem>>, vector<128x128xbf16>
    %cst_7 = arith.constant dense<0.000000e+00> : vector<64x128xf32>
    %12 = tpu.matmul %10, %11, %cst_7 {dimension_numbers = #tpu.dot_dimension_numbers<[1], [0], [0], [1], [0, 0, 1, 1], [], []>} : vector<64x128xbf16>, vector<128x128xbf16>, vector<64x128xf32> -> vector<64x128xf32>
    %c0_8 = arith.constant 0 : index
    %c0_9 = arith.constant 0 : index
    %13 = vector.load %arg5[%c0_8, %c0_9] : memref<64x128xbf16, #tpu.memory_space<vmem>>, vector<64x128xbf16>
    %14 = arith.extf %13 : vector<64x128xbf16> to vector<64x128xf32>
    %c0_10 = arith.constant 0 : index
    %c0_11 = arith.constant 0 : index
    %15 = vector.load %arg6[%c0_10, %c0_11] : memref<1x128xf32, #tpu.memory_space<vmem>>, vector<1x128xf32>
    %16 = vector.broadcast %15 : vector<1x128xf32> to vector<64x128xf32>
    %17 = arith.mulf %14, %16 : vector<64x128xf32>
    %c0_12 = arith.constant 0 : index
    %c0_13 = arith.constant 0 : index
    %18 = vector.load %arg7[%c0_12, %c0_13] : memref<1x128xf32, #tpu.memory_space<vmem>>, vector<1x128xf32>
    %19 = vector.broadcast %18 : vector<1x128xf32> to vector<64x128xf32>
    %20 = arith.addf %17, %19 : vector<64x128xf32>
    %21 = arith.addf %12, %20 : vector<64x128xf32>
    %c0_14 = arith.constant 0 : index
    %c0_15 = arith.constant 0 : index
    %22 = vector.load %arg8[%c0_14, %c0_15] : memref<64x128xf32, #tpu.memory_space<vmem>>, vector<64x128xf32>
    tpu.vector_store %arg8[%c0_14, %c0_15], %21 {strides = array<i32>} : memref<64x128xf32, #tpu.memory_space<vmem>>, vector<64x128xf32>,
    return
  }
  func.func @transform_0(%arg0: i32) -> (i32, i32) {
    %c0_i32 = arith.constant 0 : i32
    %c0_i32_0 = arith.constant 0 : i32
    return %arg0, %c0_i32 : i32, i32
  }
  func.func @transform_1(%arg0: i32) -> (i32, i32) {
    %c0_i32 = arith.constant 0 : i32
    %c0_i32_0 = arith.constant 0 : i32
    %c0_i32_1 = arith.constant 0 : i32
    return %c0_i32, %c0_i32_0 : i32, i32
  }
  func.func @transform_2(%arg0: i32) -> (i32, i32) {
    %c0_i32 = arith.constant 0 : i32
    %c0_i32_0 = arith.constant 0 : i32
    %c0_i32_1 = arith.constant 0 : i32
    return %c0_i32, %c0_i32_0 : i32, i32
  }
  func.func @transform_3(%arg0: i32) -> (i32, i32) {
    %c0_i32 = arith.constant 0 : i32
    %c0_i32_0 = arith.constant 0 : i32
    %c0_i32_1 = arith.constant 0 : i32
    return %c0_i32, %c0_i32_0 : i32, i32
  }
  func.func @transform_4(%arg0: i32) -> (i32, i32) {
    %c0_i32 = arith.constant 0 : i32
    %c0_i32_0 = arith.constant 0 : i32
    return %arg0, %c0_i32 : i32, i32
  }
  func.func @transform_5(%arg0: i32) -> (i32, i32) {
    %c0_i32 = arith.constant 0 : i32
    %c0_i32_0 = arith.constant 0 : i32
    %c0_i32_1 = arith.constant 0 : i32
    return %c0_i32, %c0_i32_0 : i32, i32
  }
  func.func @transform_6(%arg0: i32) -> (i32, i32) {
    %c0_i32 = arith.constant 0 : i32
    %c0_i32_0 = arith.constant 0 : i32
    %c0_i32_1 = arith.constant 0 : i32
    return %c0_i32, %c0_i32_0 : i32, i32
  }
  func.func @transform_7(%arg0: i32) -> (i32, i32) {
    %c0_i32 = arith.constant 0 : i32
    %c0_i32_0 = arith.constant 0 : i32
    return %arg0, %c0_i32 : i32, i32
  }
}

</mosaic_0001>

<llo_original>
// kernel: resblock50_forward.8
$region0: #{resblock50_forward.8}
  #allocation0 [shape = 'u32[]', space=smem, size = 0x4, offset = 0x4, fixed_abs, tag = 'smem constant byte address 0x4 - core index']
  #allocation1 [shape = 'u32[72,128]{1,0:T(1,128)}', space=vmem, size = 0x9000, scoped, tag = 'internal scratch']
  %s0 = inlined_call_operand.vmem [shape: bf16[128,128], index: 0, kind: input, shape index: {}]
  %s1 = inlined_call_operand.vmem [shape: bf16[128,128], index: 1, kind: input, shape index: {}]
  %s2 = inlined_call_operand.vmem [shape: bf16[128,128], index: 2, kind: output, shape index: {0}]
  %s3 = inlined_call_operand.vmem [shape: f32[2,8,128], index: 3, kind: output, shape index: {1}]
  %s4 = inlined_call_operand.vmem [shape: f32[2,8,128], index: 4, kind: output, shape index: {2}]
  %5 = xla_tuple %s2, %s3, %s4
  %s6 = sld [smem:[#allocation0]]
  $region57: #{resblock50_forward.8} parent=0
    _
  %s8 = ssub.s32 1, %s6
  %s9 = scalar_select 0, %s8, %s6
  loop: start=0, step=1, limit=4
  $region2: #{resblock50_forward.8} parent=0 // loop_pre_header
    _
  $region3: #{resblock50_forward.8} parent=0 // loop_header
    %s11 = sphi 0, %s15
    %p12 = scmp.ge.s32.totalorder %s11, 4
    %s21 = sphi 0, %s23
    %s24 = sphi 0, %s21
    %s25 = sphi 0, %s24
    %s41 = sphi 0, %s25
    %s45 = sphi 0, %s45
    %s47 = sphi 0, %s45
    %s48 = sphi 0, %s47
    %s62 = sphi 0, %s48
    %s68 = sphi 0, %s70
    %s71 = sphi 0, %s68
    %s72 = sphi 0, %s71
    %s88 = sphi 0, %s72
    %s94 = sphi 0, %s96
    %s97 = sphi 0, %s94
    %s98 = sphi 0, %s97
    %s114 = sphi 0, %s98
    %s120 = sphi 0, %s122
    %s123 = sphi 0, %s120
    %s124 = sphi 0, %s123
    %s140 = sphi 0, %s124
  $region4: #{resblock50_forward.8} parent=0 // loop_header_branch
    %14 = sbr.rel (%p12) target = $region8
  $region5: #{resblock50_forward.8} parent=0 // loop_body
    %s16 = ssub.s32 %s11, 1
    %s17 = ssub.s32 %s11, 2
    %s18 = sadd.s32 %s11, 1
    %s19 = ssub.s32 %s11, %s18
    %p20 = scmp.eq.s32.totalorder %s19, 0
    %s22 = sadd.s32 %s21, 1
    %s23 = scalar_select %p20, %s21, %s22
    %p26 = pneg %p20
    %p27 = scmp.eq.s32.totalorder %s11, 1
    %p28 = por %p26, %p27
    %p29 = scmp.ne.s32.totalorder %s21, %s24
    %p30 = scmp.eq.s32.totalorder %s11, 0
    %p31 = por %p29, %p30
    %p32 = scmp.ne.s32.totalorder %s21, %s24
    %p33 = scmp.eq.s32.totalorder %s16, 1
    %p34 = por %p32, %p33
    %p35 = scmp.ne.s32.totalorder %s24, %s25
    %p36 = scmp.eq.s32.totalorder %s16, 0
    %p37 = por %p35, %p36
    %p38 = scmp.ne.s32.totalorder %s24, %s25
    %p39 = scmp.eq.s32.totalorder %s17, 1
    %p40 = por %p38, %p39
    %p42 = scmp.ne.s32.totalorder %s25, %s41
    %p43 = scmp.eq.s32.totalorder %s17, 0
    %p44 = por %p42, %p43
    %s46 = sadd.s32 %s45, 1
    %p49 = scmp.eq.s32.totalorder %s11, 1
    %p50 = scmp.ne.s32.totalorder %s45, %s47
    %p51 = scmp.eq.s32.totalorder %s11, 0
    %p52 = por %p50, %p51
    %p53 = scmp.ne.s32.totalorder %s45, %s47
    %p54 = scmp.eq.s32.totalorder %s16, 1
    %p55 = por %p53, %p54
    %p56 = scmp.ne.s32.totalorder %s47, %s48
    %p57 = scmp.eq.s32.totalorder %s16, 0
    %p58 = por %p56, %p57
    %p59 = scmp.ne.s32.totalorder %s47, %s48
    %p60 = scmp.eq.s32.totalorder %s17, 1
    %p61 = por %p59, %p60
    %p63 = scmp.ne.s32.totalorder %s48, %s62
    %p64 = scmp.eq.s32.totalorder %s17, 0
    %p65 = por %p63, %p64
    %s66 = ssub.s32 %s11, %s18
    %p67 = scmp.eq.s32.totalorder %s66, 0
    %s69 = sadd.s32 %s68, 1
    %s70 = scalar_select %p67, %s68, %s69
    %p73 = pneg %p67
    %p74 = scmp.eq.s32.totalorder %s11, 1
    %p75 = por %p73, %p74
    %p76 = scmp.ne.s32.totalorder %s68, %s71
    %p77 = scmp.eq.s32.totalorder %s11, 0
    %p78 = por %p76, %p77
    %p79 = scmp.ne.s32.totalorder %s68, %s71
    %p80 = scmp.eq.s32.totalorder %s16, 1
    %p81 = por %p79, %p80
    %p82 = scmp.ne.s32.totalorder %s71, %s72
    %p83 = scmp.eq.s32.totalorder %s16, 0
    %p84 = por %p82, %p83
    %p85 = scmp.ne.s32.totalorder %s71, %s72
    %p86 = scmp.eq.s32.totalorder %s17, 1
    %p87 = por %p85, %p86
    %p89 = scmp.ne.s32.totalorder %s72, %s88
    %p90 = scmp.eq.s32.totalorder %s17, 0
    %p91 = por %p89, %p90
    %s92 = ssub.s32 %s11, %s18
    %p93 = scmp.eq.s32.totalorder %s92, 0
    %s95 = sadd.s32 %s94, 1
    %s96 = scalar_select %p93, %s94, %s95
    %p99 = pneg %p93
    %p100 = scmp.eq.s32.totalorder %s11, 1
    %p101 = por %p99, %p100
    %p102 = scmp.ne.s32.totalorder %s94, %s97
    %p103 = scmp.eq.s32.totalorder %s11, 0
    %p104 = por %p102, %p103
    %p105 = scmp.ne.s32.totalorder %s94, %s97
    %p106 = scmp.eq.s32.totalorder %s16, 1
    %p107 = por %p105, %p106
    %p108 = scmp.ne.s32.totalorder %s97, %s98
    %p109 = scmp.eq.s32.totalorder %s16, 0
    %p110 = por %p108, %p109
    %p111 = scmp.ne.s32.totalorder %s97, %s98
    %p112 = scmp.eq.s32.totalorder %s17, 1
    %p113 = por %p111, %p112
    %p115 = scmp.ne.s32.totalorder %s98, %s114
    %p116 = scmp.eq.s32.totalorder %s17, 0
    %p117 = por %p115, %p116
    %s118 = ssub.s32 %s11, %s18
    %p119 = scmp.eq.s32.totalorder %s118, 0
    %s121 = sadd.s32 %s120, 1
    %s122 = scalar_select %p119, %s120, %s121
    %p125 = pneg %p119
    %p126 = scmp.eq.s32.totalorder %s11, 1
    %p127 = por %p125, %p126
    %p128 = scmp.ne.s32.totalorder %s120, %s123
    %p129 = scmp.eq.s32.totalorder %s11, 0
    %p130 = por %p128, %p129
    %p131 = scmp.ne.s32.totalorder %s120, %s123
    %p132 = scmp.eq.s32.totalorder %s16, 1
    %p133 = por %p131, %p132
    %p134 = scmp.ne.s32.totalorder %s123, %s124
    %p135 = scmp.eq.s32.totalorder %s16, 0
    %p136 = por %p134, %p135
    %p137 = scmp.ne.s32.totalorder %s123, %s124
    %p138 = scmp.eq.s32.totalorder %s17, 1
    %p139 = por %p137, %p138
    %p141 = scmp.ne.s32.totalorder %s124, %s140
    %p142 = scmp.eq.s32.totalorder %s17, 0
    %p143 = por %p141, %p142
    %p144 = scmp.le.s32.totalorder 1, %s11
    %p145 = scmp.lt.s32.totalorder %s11, 3
    %p146 = pnand %p144, %p145
    %p147 = pneg %p146
    // Predicated region
    $region9: #{resblock50_forward.8} parent=5 // pred_check
      _
    $region10: #{resblock50_forward.8} parent=5 // pred_check_branch
      %149 = sbr.rel (%p146) target = $region12
    $region11: #{resblock50_forward.8} parent=5 // pred_region
      %s150 = ssub.s32 %s11, 1
      // Predicated region
      $region13: #{resblock50_forward.8} parent=11 // pred_check
        %p151 = pneg %p58
      $region14: #{resblock50_forward.8} parent=11 // pred_check_branch
        %153 = sbr.rel (%p151) target = $region16
      $region15: #{resblock50_forward.8} parent=11 // pred_region
        _
      $region16: #{resblock50_forward.8} parent=11 // pred_fallthru
        _
    $region12: #{resblock50_forward.8} parent=5 // pred_fallthru
      _
    %p154 = scmp.lt.s32.totalorder %s11, 2
    // Predicated region
    $region17: #{resblock50_forward.8} parent=5 // pred_check
      %p155 = pneg %p154
    $region18: #{resblock50_forward.8} parent=5 // pred_check_branch
      %157 = sbr.rel (%p155) target = $region20
    $region19: #{resblock50_forward.8} parent=5 // pred_region
      // Predicated region
      $region21: #{resblock50_forward.8} parent=19 // pred_check
        %p158 = pneg %p31
      $region22: #{resblock50_forward.8} parent=19 // pred_check_branch
        %160 = sbr.rel (%p158) target = $region24
      $region23: #{resblock50_forward.8} parent=19 // pred_region
        %s161 = smul.u32 8, %s11
        %p162 = scmp.lt.s32.totalorder %s161, 15
        %s163 = scalar_select %p162, %s161, 15
        %s164 = smul.addr %s163, 4
        %s165 = scalar_lea.vmem %s0, %s164
        %s166 = smul.u32 8, %s11
      $region24: #{resblock50_forward.8} parent=19 // pred_fallthru
        _
    $region20: #{resblock50_forward.8} parent=5 // pred_fallthru
      _
    %p167 = scmp.le.s32.totalorder 1, %s11
    %p168 = scmp.lt.s32.totalorder %s11, 3
    %p169 = pnand %p167, %p168
    %p170 = pneg %p169
    // Predicated region
    $region25: #{resblock50_forward.8} parent=5 // pred_check
      _
    $region26: #{resblock50_forward.8} parent=5 // pred_check_branch
      %172 = sbr.rel (%p169) target = $region28
    $region27: #{resblock50_forward.8} parent=5 // pred_region
      %s173 = ssub.s32 %s11, 1
      %s174 = smul.u32 8, %s16
      %p175 = scmp.lt.s32.totalorder %s174, 15
      %s176 = scalar_select %p175, %s174, 15
      %s177 = smul.addr %s176, 4
      %s178 = scalar_lea.vmem %s0, %s177
      %p179 = pneg %p37
      %p180 = pneg %p34
      %p181 = pneg %p58
      %p182 = pneg %p55
      %p183 = pneg %p84
      %p184 = pneg %p81
      %s185 = smul.u32 8, %s16
      %p186 = scmp.lt.s32.totalorder %s185, 15
      %s187 = scalar_select %p186, %s185, 15
      %s188 = smul.addr %s187, 4
      %s189 = scalar_lea.vmem %s2, %s188
      %p190 = pneg %p110
      %p191 = pneg %p107
      %p192 = scmp.lt.s32.totalorder %s16, 1
      %s193 = scalar_select %p192, %s16, 1
      %s194 = smul.addr %s193, 8
      %s195 = scalar_lea.vmem %s3, %s194
      %p196 = pneg %p136
      %p197 = pneg %p133
      %p198 = scmp.lt.s32.totalorder %s16, 1
      %s199 = scalar_select %p198, %s16, 1
      %s200 = smul.addr %s199, 8
      %s201 = scalar_lea.vmem %s4, %s200
      %s202 = smul.u32 8, %s16
      %p203 = scmp.lt.s32.totalorder %s202, 15
      %s204 = scalar_select %p203, %s202, 15
      %s205 = smul.addr %s204, 4
      %s206 = scalar_lea.vmem %s0, %s205
      %s207 = smul.u32 8, %s16
      %s208 = smul.u32 8, %s16
      %p209 = scmp.lt.s32.totalorder %s208, 15
      %s210 = scalar_select %p209, %s208, 15
      %s211 = smul.addr %s210, 4
      %s212 = scalar_lea.vmem %s2, %s211
      %s213 = smul.u32 8, %s16
      %p214 = scmp.lt.s32.totalorder %s16, 1
      %s215 = scalar_select %p214, %s16, 1
      %s216 = smul.addr %s215, 8
      %s217 = scalar_lea.vmem %s3, %s216
      %p218 = scmp.lt.s32.totalorder %s16, 1
      %s219 = scalar_select %p218, %s16, 1
      %s220 = smul.addr %s219, 8
      %s221 = scalar_lea.vmem %s4, %s220
      %v222 = vld [vmem:[%s206] sm:$0xf]
      %v223 = vld [vmem:[%s206 + $0x4] sm:$0xf]
      %v224 = vld [vmem:[%s206 + $0x8] sm:$0xf]
      %v225 = vld [vmem:[%s206 + $0xc] sm:$0xf]
      %v226 = vld [vmem:[%s206 + $0x10] sm:$0xf]
      %v227 = vld [vmem:[%s206 + $0x14] sm:$0xf]
      %v228 = vld [vmem:[%s206 + $0x18] sm:$0xf]
      %v229 = vld [vmem:[%s206 + $0x1c] sm:$0xf]
      %v230 = vld [vmem:[%s1] sm:$0xf]
      %v231 = vld [vmem:[%s1 + $0x4] sm:$0xf]
      %v232 = vld [vmem:[%s1 + $0x8] sm:$0xf]
      %v233 = vld [vmem:[%s1 + $0xc] sm:$0xf]
      %v234 = vld [vmem:[%s1 + $0x10] sm:$0xf]
      %v235 = vld [vmem:[%s1 + $0x14] sm:$0xf]
      %v236 = vld [vmem:[%s1 + $0x18] sm:$0xf]
      %v237 = vld [vmem:[%s1 + $0x1c] sm:$0xf]
      %v238 = vld [vmem:[%s1 + $0x20] sm:$0xf]
      %v239 = vld [vmem:[%s1 + $0x24] sm:$0xf]
      %v240 = vld [vmem:[%s1 + $0x28] sm:$0xf]
      %v241 = vld [vmem:[%s1 + $0x2c] sm:$0xf]
      %v242 = vld [vmem:[%s1 + $0x30] sm:$0xf]
      %v243 = vld [vmem:[%s1 + $0x34] sm:$0xf]
      %v244 = vld [vmem:[%s1 + $0x38] sm:$0xf]
      %v245 = vld [vmem:[%s1 + $0x3c] sm:$0xf]
      %v254 = vunpack.c.l.b16 %v222
      %v255 = vunpack.c.l.b16 %v223
      %v256 = vunpack.c.l.b16 %v224
      %v257 = vunpack.c.l.b16 %v225
      %v258 = vunpack.c.l.b16 %v226
      %v259 = vunpack.c.l.b16 %v227
      %v260 = vunpack.c.l.b16 %v228
      %v261 = vunpack.c.l.b16 %v229
      %v262 = vpack.c.b16 %v255, %v254
      %v263 = vpack.c.b16 %v257, %v256
      %v264 = vpack.c.b16 %v259, %v258
      %v265 = vpack.c.b16 %v261, %v260
      %v286 = vunpack.c.l.b16 %v230
      %v287 = vunpack.c.l.b16 %v231
      %v288 = vunpack.c.l.b16 %v232
      %v289 = vunpack.c.l.b16 %v233
      %v290 = vunpack.c.l.b16 %v234
      %v291 = vunpack.c.l.b16 %v235
      %v292 = vunpack.c.l.b16 %v236
      %v293 = vunpack.c.l.b16 %v237
      %v294 = vunpack.c.l.b16 %v238
      %v295 = vunpack.c.l.b16 %v239
      %v296 = vunpack.c.l.b16 %v240
      %v297 = vunpack.c.l.b16 %v241
      %v298 = vunpack.c.l.b16 %v242
      %v299 = vunpack.c.l.b16 %v243
      %v300 = vunpack.c.l.b16 %v244
      %v301 = vunpack.c.l.b16 %v245
      %v302 = vpack.c.b16 %v287, %v286
      %v303 = vpack.c.b16 %v289, %v288
      %v304 = vpack.c.b16 %v291, %v290
      %v305 = vpack.c.b16 %v293, %v292
      %v306 = vpack.c.b16 %v295, %v294
      %v307 = vpack.c.b16 %v297, %v296
      %v308 = vpack.c.b16 %v299, %v298
      %v309 = vpack.c.b16 %v301, %v300
      %318 = vmatpush.bf16.msra.mxu0 %v309
      %319 = vmatpush.bf16.msra.mxu0 %v308
      %320 = vmatpush.bf16.msra.mxu0 %v307
      %321 = vmatpush.bf16.msra.mxu0 %v306
      %322 = vmatpush.bf16.msra.mxu0 %v305
      %323 = vmatpush.bf16.msra.mxu0 %v304
      %324 = vmatpush.bf16.msra.mxu0 %v303
      %325 = vmatpush.bf16.msra.mxu0 %v302
      %326 = vmatmul.bf16.gmra.mxu0 %v262
      %v327 = vpop.f32.mrf.mxu0
      %v328 = vadd.f32 0.0, %v327
      %v329 = vpop.f32.mrf.mxu0
      %v330 = vadd.f32 0.0, %v329
      %331 = vmatmul.bf16.gmra.mxu0 %v263
      %v332 = vpop.f32.mrf.mxu0
      %v333 = vadd.f32 0.0, %v332
      %v334 = vpop.f32.mrf.mxu0
      %v335 = vadd.f32 0.0, %v334
      %336 = vmatmul.bf16.gmra.mxu0 %v264
      %v337 = vpop.f32.mrf.mxu0
      %v338 = vadd.f32 0.0, %v337
      %v339 = vpop.f32.mrf.mxu0
      %v340 = vadd.f32 0.0, %v339
      %341 = vmatmul.bf16.gmra.mxu0 %v265
      %v342 = vpop.f32.mrf.mxu0
      %v343 = vadd.f32 0.0, %v342
      %v344 = vpop.f32.mrf.mxu0
      %v345 = vadd.f32 0.0, %v344
      %346 = vdwg.mxu0
      %v347 = vpack.c.bf16 %v328, %v328
      %v348 = vpack.c.bf16 %v330, %v330
      %v349 = vpack.c.bf16 %v333, %v333
      %v350 = vpack.c.bf16 %v335, %v335
      %v351 = vpack.c.bf16 %v338, %v338
      %v352 = vpack.c.bf16 %v340, %v340
      %v353 = vpack.c.bf16 %v343, %v343
      %v354 = vpack.c.bf16 %v345, %v345
      %355 = vst [vmem:[%s212] sm:$0xf] %v347
      %356 = vst [vmem:[%s212 + $0x4] sm:$0xf] %v348
      %357 = vst [vmem:[%s212 + $0x8] sm:$0xf] %v349
      %358 = vst [vmem:[%s212 + $0xc] sm:$0xf] %v350
      %359 = vst [vmem:[%s212 + $0x10] sm:$0xf] %v351
      %360 = vst [vmem:[%s212 + $0x14] sm:$0xf] %v352
      %361 = vst [vmem:[%s212 + $0x18] sm:$0xf] %v353
      %362 = vst [vmem:[%s212 + $0x1c] sm:$0xf] %v354
      %v363 = vlaneseq
      %v364 = vshrl.u32 %v363, 7
      %v365 = vadd.s32 %v364, 8
      %v366 = vadd.s32 %v364, 16
      %v367 = vadd.s32 %v364, 24
      %v368 = vadd.s32 %v364, 32
      %v369 = vadd.s32 %v364, 40
      %v370 = vadd.s32 %v364, 48
      %v371 = vadd.s32 %v364, 56
      %s372 = smul.u32 %s16, 64
      %v373 = vstv %s372
      %v374 = vadd.s32 %v364, %v373
      %v375 = vadd.s32 %v365, %v373
      %v376 = vadd.s32 %v366, %v373
      %v377 = vadd.s32 %v367, %v373
      %v378 = vadd.s32 %v368, %v373
      %v379 = vadd.s32 %v369, %v373
      %v380 = vadd.s32 %v370, %v373
      %v381 = vadd.s32 %v371, %v373
      %vm382 = vcmp.lt.s32.totalorder %v374, 128
      %vm383 = vcmp.lt.s32.totalorder %v375, 128
      %vm384 = vcmp.lt.s32.totalorder %v376, 128
      %vm385 = vcmp.lt.s32.totalorder %v377, 128
      %vm386 = vcmp.lt.s32.totalorder %v378, 128
      %vm387 = vcmp.lt.s32.totalorder %v379, 128
      %vm388 = vcmp.lt.s32.totalorder %v380, 128
      %vm389 = vcmp.lt.s32.totalorder %v381, 128
      %v390 = vsel %vm382, 1, 0
      %v391 = vsel %vm383, 1, 0
      %v392 = vsel %vm384, 1, 0
      %v393 = vsel %vm385, 1, 0
      %v394 = vsel %vm386, 1, 0
      %v395 = vsel %vm387, 1, 0
      %v396 = vsel %vm388, 1, 0
      %v397 = vsel %vm389, 1, 0
      %v398 = vcvt.s32.f32 %v390
      %v399 = vcvt.s32.f32 %v391
      %v400 = vcvt.s32.f32 %v392
      %v401 = vcvt.s32.f32 %v393
      %v402 = vcvt.s32.f32 %v394
      %v403 = vcvt.s32.f32 %v395
      %v404 = vcvt.s32.f32 %v396
      %v405 = vcvt.s32.f32 %v397
      %v406 = vmul.f32 %v328, %v398
      %v407 = vmul.f32 %v330, %v399
      %v408 = vmul.f32 %v333, %v400
      %v409 = vmul.f32 %v335, %v401
      %v410 = vmul.f32 %v338, %v402
      %v411 = vmul.f32 %v340, %v403
      %v412 = vmul.f32 %v343, %v404
      %v413 = vmul.f32 %v345, %v405
      %v414 = vadd.f32 %v406, %v407
      %v415 = vadd.f32 %v414, %v408
      %v416 = vadd.f32 %v415, %v409
      %v417 = vadd.f32 %v416, %v410
      %v418 = vadd.f32 %v417, %v411
      %v419 = vadd.f32 %v418, %v412
      %v420 = vadd.f32 %v419, %v413
      %v421 = vrot.slane %v420, 4
      %v422 = vadd.f32 %v420, %v421
      %v423 = vrot.slane %v422, 2
      %v424 = vadd.f32 %v422, %v423
      %v425 = vrot.slane %v424, 1
      %v426 = vadd.f32 %v424, %v425
      %vm427 = vcmask 7168
      %v428 = vsel %vm427, %v398, 0.0
      %v429 = vsel %vm427, %v399, 0.0
      %v430 = vadd.f32 %v428, %v429
      %v431 = vsel %vm427, %v400, 0.0
      %v432 = vadd.f32 %v430, %v431
      %v433 = vsel %vm427, %v401, 0.0
      %v434 = vadd.f32 %v432, %v433
      %v435 = vsel %vm427, %v402, 0.0
      %v436 = vadd.f32 %v434, %v435
      %v437 = vsel %vm427, %v403, 0.0
      %v438 = vadd.f32 %v436, %v437
      %v439 = vsel %vm427, %v404, 0.0
      %v440 = vadd.f32 %v438, %v439
      %v441 = vsel %vm427, %v405, 0.0
      %v442 = vadd.f32 %v440, %v441
      %443 = vadd.xlane.f32.xlu0 %v442
      %v444 = vpop.xlane.xlu0 %443
      %v445 = vrot.slane %v444, 4
      %v446 = vadd.f32 %v444, %v445
      %v447 = vrot.slane %v446, 2
      %v448 = vadd.f32 %v446, %v447
      %v449 = vrot.slane %v448, 1
      %v450 = vadd.f32 %v448, %v449
      %s451 = vtos %v450
      %s452 = smax.f32 %s451, 1.0
      %v453 = vstv %s452
      %v454 = vrcp.pop %v453
      %v455 = vmul.f32 %v453, %v454
      %v456 = vsub.f32 1.0, %v455
      %v457 = vmul.f32 %v454, %v456
      %v458 = vadd.f32 %v454, %v457
      %vm459 = vweird.f32 %v453
      %vm460 = vweird.f32 %v454
      %vm461 = vmor %vm459, %vm460
      %v462 = vsel %vm461, %v454, %v458
      %v463 = vand.u32 2147483647, %v453
      %vm464 = vcmp.eq.f32.partialorder %v463, 8.507059e+37
      %v465 = vand.u32 %v453, 2147483648
      %v466 = vor.u32 1.1754944e-38, %v465
      %v467 = vsel %vm464, %v466, %v462
      %v468 = vmul.f32 %v426, %v467
      %v469 = vsub.f32 %v328, %v468
      %v470 = vsub.f32 %v330, %v468
      %v471 = vsub.f32 %v333, %v468
      %v472 = vsub.f32 %v335, %v468
      %v473 = vsub.f32 %v338, %v468
      %v474 = vsub.f32 %v340, %v468
      %v475 = vsub.f32 %v343, %v468
      %v476 = vsub.f32 %v345, %v468
      %v477 = vmul.f32 %v469, %v398
      %v478 = vmul.f32 %v470, %v399
      %v479 = vmul.f32 %v471, %v400
      %v480 = vmul.f32 %v472, %v401
      %v481 = vmul.f32 %v473, %v402
      %v482 = vmul.f32 %v474, %v403
      %v483 = vmul.f32 %v475, %v404
      %v484 = vmul.f32 %v476, %v405
      %v485 = vmul.f32 %v477, %v477
      %v486 = vmul.f32 %v478, %v478
      %v487 = vmul.f32 %v479, %v479
      %v488 = vmul.f32 %v480, %v480
      %v489 = vmul.f32 %v481, %v481
      %v490 = vmul.f32 %v482, %v482
      %v491 = vmul.f32 %v483, %v483
      %v492 = vmul.f32 %v484, %v484
      %v493 = vadd.f32 %v485, %v486
      %v494 = vadd.f32 %v493, %v487
      %v495 = vadd.f32 %v494, %v488
      %v496 = vadd.f32 %v495, %v489
      %v497 = vadd.f32 %v496, %v490
      %v498 = vadd.f32 %v497, %v491
      %v499 = vadd.f32 %v498, %v492
      %v500 = vrot.slane %v499, 4
      %v501 = vadd.f32 %v499, %v500
      %v502 = vrot.slane %v501, 2
      %v503 = vadd.f32 %v501, %v502
      %v504 = vrot.slane %v503, 1
      %v505 = vadd.f32 %v503, %v504
      %506 = vst [vmem:[%s217] sm:$0xff] %v426
      %507 = vst [vmem:[%s221] sm:$0xff] %v505
      %s508 = smul.u32 8, %s16
      %p509 = scmp.lt.s32.totalorder %s508, 15
      %s510 = scalar_select %p509, %s508, 15
      %s511 = smul.addr %s510, 4
      %s512 = scalar_lea.vmem %s2, %s511
      %p513 = scmp.lt.s32.totalorder %s16, 1
      %s514 = scalar_select %p513, %s16, 1
      %s515 = smul.addr %s514, 8
      %s516 = scalar_lea.vmem %s3, %s515
      %p517 = scmp.lt.s32.totalorder %s16, 1
      %s518 = scalar_select %p517, %s16, 1
      %s519 = smul.addr %s518, 8
      %s520 = scalar_lea.vmem %s4, %s519
      // Predicated region
      $region29: #{resblock50_forward.8} parent=27 // pred_check
        %p521 = pneg %p81
      $region30: #{resblock50_forward.8} parent=27 // pred_check_branch
        %523 = sbr.rel (%p521) target = $region32
      $region31: #{resblock50_forward.8} parent=27 // pred_region
        %s524 = smul.u32 8, %s16
      $region32: #{resblock50_forward.8} parent=27 // pred_fallthru
        _
      // Predicated region
      $region33: #{resblock50_forward.8} parent=27 // pred_check
        %p525 = pneg %p107
      $region34: #{resblock50_forward.8} parent=27 // pred_check_branch
        %527 = sbr.rel (%p525) target = $region36
      $region35: #{resblock50_forward.8} parent=27 // pred_region
        _
      $region36: #{resblock50_forward.8} parent=27 // pred_fallthru
        _
      // Predicated region
      $region37: #{resblock50_forward.8} parent=27 // pred_check
        %p528 = pneg %p133
      $region38: #{resblock50_forward.8} parent=27 // pred_check_branch
        %530 = sbr.rel (%p528) target = $region40
      $region39: #{resblock50_forward.8} parent=27 // pred_region
        _
      $region40: #{resblock50_forward.8} parent=27 // pred_fallthru
        _
    $region28: #{resblock50_forward.8} parent=5 // pred_fallthru
      _
    %p531 = scmp.le.s32.totalorder 2, %s11
    // Predicated region
    $region41: #{resblock50_forward.8} parent=5 // pred_check
      %p532 = pneg %p531
    $region42: #{resblock50_forward.8} parent=5 // pred_check_branch
      %534 = sbr.rel (%p532) target = $region44
    $region43: #{resblock50_forward.8} parent=5 // pred_region
      %s535 = ssub.s32 %s11, 2
      // Predicated region
      $region45: #{resblock50_forward.8} parent=43 // pred_check
        %p536 = pneg %p87
      $region46: #{resblock50_forward.8} parent=43 // pred_check_branch
        %538 = sbr.rel (%p536) target = $region48
      $region47: #{resblock50_forward.8} parent=43 // pred_region
        %s539 = smul.u32 8, %s17
        %p540 = scmp.lt.s32.totalorder %s539, 15
        %s541 = scalar_select %p540, %s539, 15
        %s542 = smul.addr %s541, 4
        %s543 = scalar_lea.vmem %s2, %s542
      $region48: #{resblock50_forward.8} parent=43 // pred_fallthru
        _
      // Predicated region
      $region49: #{resblock50_forward.8} parent=43 // pred_check
        %p544 = pneg %p113
      $region50: #{resblock50_forward.8} parent=43 // pred_check_branch
        %546 = sbr.rel (%p544) target = $region52
      $region51: #{resblock50_forward.8} parent=43 // pred_region
        %p547 = scmp.lt.s32.totalorder %s17, 1
        %s548 = scalar_select %p547, %s17, 1
        %s549 = smul.addr %s548, 8
        %s550 = scalar_lea.vmem %s3, %s549
      $region52: #{resblock50_forward.8} parent=43 // pred_fallthru
        _
      // Predicated region
      $region53: #{resblock50_forward.8} parent=43 // pred_check
        %p551 = pneg %p139
      $region54: #{resblock50_forward.8} parent=43 // pred_check_branch
        %553 = sbr.rel (%p551) target = $region56
      $region55: #{resblock50_forward.8} parent=43 // pred_region
        %p554 = scmp.lt.s32.totalorder %s17, 1
        %s555 = scalar_select %p554, %s17, 1
        %s556 = smul.addr %s555, 8
        %s557 = scalar_lea.vmem %s4, %s556
      $region56: #{resblock50_forward.8} parent=43 // pred_fallthru
        _
    $region44: #{resblock50_forward.8} parent=5 // pred_fallthru
      _
  $region6: #{resblock50_forward.8} parent=0 // loop_footer
    %s15 = sadd.s32 1, %s11
  $region7: #{resblock50_forward.8} parent=0 // loop_footer_branch
    %10 = sbr.rel target = $region3
  $region8: #{resblock50_forward.8} parent=0 // loop_exit
    _

// kernel: resblock50_forward.5
$region0: #{resblock50_forward.5}
  #allocation0 [shape = 'u32[]', space=smem, size = 0x4, offset = 0x4, fixed_abs, tag = 'smem constant byte address 0x4 - core index']
  #allocation1 [shape = 'u32[72,128]{1,0:T(1,128)}', space=vmem, size = 0x9000, scoped, tag = 'internal scratch']
  %s0 = inlined_call_operand.vmem [shape: bf16[512,128], index: 0, kind: input, shape index: {}]
  %s1 = inlined_call_operand.vmem [shape: f32[2,8,128], index: 1, kind: output, shape index: {0}]
  %s2 = inlined_call_operand.vmem [shape: f32[2,8,128], index: 2, kind: output, shape index: {1}]
  %3 = xla_tuple %s1, %s2
  %s4 = sld [smem:[#allocation0]]
  $region45: #{resblock50_forward.5} parent=0
    _
  %s6 = ssub.s32 1, %s4
  %s7 = scalar_select 0, %s6, %s4
  loop: start=0, step=1, limit=4
  $region2: #{resblock50_forward.5} parent=0 // loop_pre_header
    _
  $region3: #{resblock50_forward.5} parent=0 // loop_header
    %s9 = sphi 0, %s13
    %p10 = scmp.ge.s32.totalorder %s9, 4
    %s19 = sphi 0, %s21
    %s22 = sphi 0, %s19
    %s23 = sphi 0, %s22
    %s39 = sphi 0, %s23
    %s45 = sphi 0, %s47
    %s48 = sphi 0, %s45
    %s49 = sphi 0, %s48
    %s65 = sphi 0, %s49
    %s71 = sphi 0, %s73
    %s74 = sphi 0, %s71
    %s75 = sphi 0, %s74
    %s91 = sphi 0, %s75
  $region4: #{resblock50_forward.5} parent=0 // loop_header_branch
    %12 = sbr.rel (%p10) target = $region8
  $region5: #{resblock50_forward.5} parent=0 // loop_body
    %s14 = ssub.s32 %s9, 1
    %s15 = ssub.s32 %s9, 2
    %s16 = sadd.s32 %s9, 1
    %s17 = ssub.s32 %s9, %s16
    %p18 = scmp.eq.s32.totalorder %s17, 0
    %s20 = sadd.s32 %s19, 1
    %s21 = scalar_select %p18, %s19, %s20
    %p24 = pneg %p18
    %p25 = scmp.eq.s32.totalorder %s9, 1
    %p26 = por %p24, %p25
    %p27 = scmp.ne.s32.totalorder %s19, %s22
    %p28 = scmp.eq.s32.totalorder %s9, 0
    %p29 = por %p27, %p28
    %p30 = scmp.ne.s32.totalorder %s19, %s22
    %p31 = scmp.eq.s32.totalorder %s14, 1
    %p32 = por %p30, %p31
    %p33 = scmp.ne.s32.totalorder %s22, %s23
    %p34 = scmp.eq.s32.totalorder %s14, 0
    %p35 = por %p33, %p34
    %p36 = scmp.ne.s32.totalorder %s22, %s23
    %p37 = scmp.eq.s32.totalorder %s15, 1
    %p38 = por %p36, %p37
    %p40 = scmp.ne.s32.totalorder %s23, %s39
    %p41 = scmp.eq.s32.totalorder %s15, 0
    %p42 = por %p40, %p41
    %s43 = ssub.s32 %s9, %s16
    %p44 = scmp.eq.s32.totalorder %s43, 0
    %s46 = sadd.s32 %s45, 1
    %s47 = scalar_select %p44, %s45, %s46
    %p50 = pneg %p44
    %p51 = scmp.eq.s32.totalorder %s9, 1
    %p52 = por %p50, %p51
    %p53 = scmp.ne.s32.totalorder %s45, %s48
    %p54 = scmp.eq.s32.totalorder %s9, 0
    %p55 = por %p53, %p54
    %p56 = scmp.ne.s32.totalorder %s45, %s48
    %p57 = scmp.eq.s32.totalorder %s14, 1
    %p58 = por %p56, %p57
    %p59 = scmp.ne.s32.totalorder %s48, %s49
    %p60 = scmp.eq.s32.totalorder %s14, 0
    %p61 = por %p59, %p60
    %p62 = scmp.ne.s32.totalorder %s48, %s49
    %p63 = scmp.eq.s32.totalorder %s15, 1
    %p64 = por %p62, %p63
    %p66 = scmp.ne.s32.totalorder %s49, %s65
    %p67 = scmp.eq.s32.totalorder %s15, 0
    %p68 = por %p66, %p67
    %s69 = ssub.s32 %s9, %s16
    %p70 = scmp.eq.s32.totalorder %s69, 0
    %s72 = sadd.s32 %s71, 1
    %s73 = scalar_select %p70, %s71, %s72
    %p76 = pneg %p70
    %p77 = scmp.eq.s32.totalorder %s9, 1
    %p78 = por %p76, %p77
    %p79 = scmp.ne.s32.totalorder %s71, %s74
    %p80 = scmp.eq.s32.totalorder %s9, 0
    %p81 = por %p79, %p80
    %p82 = scmp.ne.s32.totalorder %s71, %s74
    %p83 = scmp.eq.s32.totalorder %s14, 1
    %p84 = por %p82, %p83
    %p85 = scmp.ne.s32.totalorder %s74, %s75
    %p86 = scmp.eq.s32.totalorder %s14, 0
    %p87 = por %p85, %p86
    %p88 = scmp.ne.s32.totalorder %s74, %s75
    %p89 = scmp.eq.s32.totalorder %s15, 1
    %p90 = por %p88, %p89
    %p92 = scmp.ne.s32.totalorder %s75, %s91
    %p93 = scmp.eq.s32.totalorder %s15, 0
    %p94 = por %p92, %p93
    %p95 = scmp.le.s32.totalorder 1, %s9
    %p96 = scmp.lt.s32.totalorder %s9, 3
    %p97 = pnand %p95, %p96
    %p98 = pneg %p97
    // Predicated region
    $region9: #{resblock50_forward.5} parent=5 // pred_check
      _
    $region10: #{resblock50_forward.5} parent=5 // pred_check_branch
      %100 = sbr.rel (%p97) target = $region12
    $region11: #{resblock50_forward.5} parent=5 // pred_region
      %s101 = ssub.s32 %s9, 1
    $region12: #{resblock50_forward.5} parent=5 // pred_fallthru
      _
    %p102 = scmp.lt.s32.totalorder %s9, 2
    // Predicated region
    $region13: #{resblock50_forward.5} parent=5 // pred_check
      %p103 = pneg %p102
    $region14: #{resblock50_forward.5} parent=5 // pred_check_branch
      %105 = sbr.rel (%p103) target = $region16
    $region15: #{resblock50_forward.5} parent=5 // pred_region
      // Predicated region
      $region17: #{resblock50_forward.5} parent=15 // pred_check
        %p106 = pneg %p29
      $region18: #{resblock50_forward.5} parent=15 // pred_check_branch
        %108 = sbr.rel (%p106) target = $region20
      $region19: #{resblock50_forward.5} parent=15 // pred_region
        %s109 = smul.u32 32, %s9
        %p110 = scmp.lt.s32.totalorder %s109, 63
        %s111 = scalar_select %p110, %s109, 63
        %s112 = smul.addr %s111, 4
        %s113 = scalar_lea.vmem %s0, %s112
        %s114 = smul.u32 32, %s9
      $region20: #{resblock50_forward.5} parent=15 // pred_fallthru
        _
    $region16: #{resblock50_forward.5} parent=5 // pred_fallthru
      _
    %p115 = scmp.le.s32.totalorder 1, %s9
    %p116 = scmp.lt.s32.totalorder %s9, 3
    %p117 = pnand %p115, %p116
    %p118 = pneg %p117
    // Predicated region
    $region21: #{resblock50_forward.5} parent=5 // pred_check
      _
    $region22: #{resblock50_forward.5} parent=5 // pred_check_branch
      %120 = sbr.rel (%p117) target = $region24
    $region23: #{resblock50_forward.5} parent=5 // pred_region
      %s121 = ssub.s32 %s9, 1
      %s122 = smul.u32 32, %s14
      %p123 = scmp.lt.s32.totalorder %s122, 63
      %s124 = scalar_select %p123, %s122, 63
      %s125 = smul.addr %s124, 4
      %s126 = scalar_lea.vmem %s0, %s125
      %p127 = pneg %p35
      %p128 = pneg %p32
      %p129 = pneg %p61
      %p130 = pneg %p58
      %p131 = scmp.lt.s32.totalorder %s14, 1
      %s132 = scalar_select %p131, %s14, 1
      %s133 = smul.addr %s132, 8
      %s134 = scalar_lea.vmem %s1, %s133
      %p135 = pneg %p87
      %p136 = pneg %p84
      %p137 = scmp.lt.s32.totalorder %s14, 1
      %s138 = scalar_select %p137, %s14, 1
      %s139 = smul.addr %s138, 8
      %s140 = scalar_lea.vmem %s2, %s139
      %s141 = smul.u32 32, %s14
      %p142 = scmp.lt.s32.totalorder %s141, 63
      %s143 = scalar_select %p142, %s141, 63
      %s144 = smul.addr %s143, 4
      %s145 = scalar_lea.vmem %s0, %s144
      %s146 = smul.u32 32, %s14
      %p147 = scmp.lt.s32.totalorder %s14, 1
      %s148 = scalar_select %p147, %s14, 1
      %s149 = smul.addr %s148, 8
      %s150 = scalar_lea.vmem %s1, %s149
      %p151 = scmp.lt.s32.totalorder %s14, 1
      %s152 = scalar_select %p151, %s14, 1
      %s153 = smul.addr %s152, 8
      %s154 = scalar_lea.vmem %s2, %s153
      %v155 = vld [vmem:[%s145] sm:$0xf]
      %v156 = vld [vmem:[%s145 + $0x4] sm:$0xf]
      %v157 = vld [vmem:[%s145 + $0x8] sm:$0xf]
      %v158 = vld [vmem:[%s145 + $0xc] sm:$0xf]
      %v159 = vld [vmem:[%s145 + $0x10] sm:$0xf]
      %v160 = vld [vmem:[%s145 + $0x14] sm:$0xf]
      %v161 = vld [vmem:[%s145 + $0x18] sm:$0xf]
      %v162 = vld [vmem:[%s145 + $0x1c] sm:$0xf]
      %v163 = vld [vmem:[%s145 + $0x20] sm:$0xf]
      %v164 = vld [vmem:[%s145 + $0x24] sm:$0xf]
      %v165 = vld [vmem:[%s145 + $0x28] sm:$0xf]
      %v166 = vld [vmem:[%s145 + $0x2c] sm:$0xf]
      %v167 = vld [vmem:[%s145 + $0x30] sm:$0xf]
      %v168 = vld [vmem:[%s145 + $0x34] sm:$0xf]
      %v169 = vld [vmem:[%s145 + $0x38] sm:$0xf]
      %v170 = vld [vmem:[%s145 + $0x3c] sm:$0xf]
      %v171 = vld [vmem:[%s145 + $0x40] sm:$0xf]
      %v172 = vld [vmem:[%s145 + $0x44] sm:$0xf]
      %v173 = vld [vmem:[%s145 + $0x48] sm:$0xf]
      %v174 = vld [vmem:[%s145 + $0x4c] sm:$0xf]
      %v175 = vld [vmem:[%s145 + $0x50] sm:$0xf]
      %v176 = vld [vmem:[%s145 + $0x54] sm:$0xf]
      %v177 = vld [vmem:[%s145 + $0x58] sm:$0xf]
      %v178 = vld [vmem:[%s145 + $0x5c] sm:$0xf]
      %v179 = vld [vmem:[%s145 + $0x60] sm:$0xf]
      %v180 = vld [vmem:[%s145 + $0x64] sm:$0xf]
      %v181 = vld [vmem:[%s145 + $0x68] sm:$0xf]
      %v182 = vld [vmem:[%s145 + $0x6c] sm:$0xf]
      %v183 = vld [vmem:[%s145 + $0x70] sm:$0xf]
      %v184 = vld [vmem:[%s145 + $0x74] sm:$0xf]
      %v185 = vld [vmem:[%s145 + $0x78] sm:$0xf]
      %v186 = vld [vmem:[%s145 + $0x7c] sm:$0xf]
      %v187 = vunpack.c.l.bf16 %v155
      %v188 = vunpack.c.l.bf16 %v156
      %v189 = vunpack.c.l.bf16 %v157
      %v190 = vunpack.c.l.bf16 %v158
      %v191 = vunpack.c.l.bf16 %v159
      %v192 = vunpack.c.l.bf16 %v160
      %v193 = vunpack.c.l.bf16 %v161
      %v194 = vunpack.c.l.bf16 %v162
      %v195 = vunpack.c.l.bf16 %v163
      %v196 = vunpack.c.l.bf16 %v164
      %v197 = vunpack.c.l.bf16 %v165
      %v198 = vunpack.c.l.bf16 %v166
      %v199 = vunpack.c.l.bf16 %v167
      %v200 = vunpack.c.l.bf16 %v168
      %v201 = vunpack.c.l.bf16 %v169
      %v202 = vunpack.c.l.bf16 %v170
      %v203 = vunpack.c.l.bf16 %v171
      %v204 = vunpack.c.l.bf16 %v172
      %v205 = vunpack.c.l.bf16 %v173
      %v206 = vunpack.c.l.bf16 %v174
      %v207 = vunpack.c.l.bf16 %v175
      %v208 = vunpack.c.l.bf16 %v176
      %v209 = vunpack.c.l.bf16 %v177
      %v210 = vunpack.c.l.bf16 %v178
      %v211 = vunpack.c.l.bf16 %v179
      %v212 = vunpack.c.l.bf16 %v180
      %v213 = vunpack.c.l.bf16 %v181
      %v214 = vunpack.c.l.bf16 %v182
      %v215 = vunpack.c.l.bf16 %v183
      %v216 = vunpack.c.l.bf16 %v184
      %v217 = vunpack.c.l.bf16 %v185
      %v218 = vunpack.c.l.bf16 %v186
      %v219 = vlaneseq
      %v220 = vshrl.u32 %v219, 7
      %v221 = vadd.s32 %v220, 8
      %v222 = vadd.s32 %v220, 16
      %v223 = vadd.s32 %v220, 24
      %v224 = vadd.s32 %v220, 32
      %v225 = vadd.s32 %v220, 40
      %v226 = vadd.s32 %v220, 48
      %v227 = vadd.s32 %v220, 56
      %v228 = vadd.s32 %v220, 64
      %v229 = vadd.s32 %v220, 72
      %v230 = vadd.s32 %v220, 80
      %v231 = vadd.s32 %v220, 88
      %v232 = vadd.s32 %v220, 96
      %v233 = vadd.s32 %v220, 104
      %v234 = vadd.s32 %v220, 112
      %v235 = vadd.s32 %v220, 120
      %v236 = vadd.s32 %v220, 128
      %v237 = vadd.s32 %v220, 136
      %v238 = vadd.s32 %v220, 144
      %v239 = vadd.s32 %v220, 152
      %v240 = vadd.s32 %v220, 160
      %v241 = vadd.s32 %v220, 168
      %v242 = vadd.s32 %v220, 176
      %v243 = vadd.s32 %v220, 184
      %v244 = vadd.s32 %v220, 192
      %v245 = vadd.s32 %v220, 200
      %v246 = vadd.s32 %v220, 208
      %v247 = vadd.s32 %v220, 216
      %v248 = vadd.s32 %v220, 224
      %v249 = vadd.s32 %v220, 232
      %v250 = vadd.s32 %v220, 240
      %v251 = vadd.s32 %v220, 248
      %s252 = smul.u32 %s14, 256
      %v253 = vstv %s252
      %v254 = vadd.s32 %v220, %v253
      %v255 = vadd.s32 %v221, %v253
      %v256 = vadd.s32 %v222, %v253
      %v257 = vadd.s32 %v223, %v253
      %v258 = vadd.s32 %v224, %v253
      %v259 = vadd.s32 %v225, %v253
      %v260 = vadd.s32 %v226, %v253
      %v261 = vadd.s32 %v227, %v253
      %v262 = vadd.s32 %v228, %v253
      %v263 = vadd.s32 %v229, %v253
      %v264 = vadd.s32 %v230, %v253
      %v265 = vadd.s32 %v231, %v253
      %v266 = vadd.s32 %v232, %v253
      %v267 = vadd.s32 %v233, %v253
      %v268 = vadd.s32 %v234, %v253
      %v269 = vadd.s32 %v235, %v253
      %v270 = vadd.s32 %v236, %v253
      %v271 = vadd.s32 %v237, %v253
      %v272 = vadd.s32 %v238, %v253
      %v273 = vadd.s32 %v239, %v253
      %v274 = vadd.s32 %v240, %v253
      %v275 = vadd.s32 %v241, %v253
      %v276 = vadd.s32 %v242, %v253
      %v277 = vadd.s32 %v243, %v253
      %v278 = vadd.s32 %v244, %v253
      %v279 = vadd.s32 %v245, %v253
      %v280 = vadd.s32 %v246, %v253
      %v281 = vadd.s32 %v247, %v253
      %v282 = vadd.s32 %v248, %v253
      %v283 = vadd.s32 %v249, %v253
      %v284 = vadd.s32 %v250, %v253
      %v285 = vadd.s32 %v251, %v253
      %vm286 = vcmp.lt.s32.totalorder %v254, 512
      %vm287 = vcmp.lt.s32.totalorder %v255, 512
      %vm288 = vcmp.lt.s32.totalorder %v256, 512
      %vm289 = vcmp.lt.s32.totalorder %v257, 512
      %vm290 = vcmp.lt.s32.totalorder %v258, 512
      %vm291 = vcmp.lt.s32.totalorder %v259, 512
      %vm292 = vcmp.lt.s32.totalorder %v260, 512
      %vm293 = vcmp.lt.s32.totalorder %v261, 512
      %vm294 = vcmp.lt.s32.totalorder %v262, 512
      %vm295 = vcmp.lt.s32.totalorder %v263, 512
      %vm296 = vcmp.lt.s32.totalorder %v264, 512
      %vm297 = vcmp.lt.s32.totalorder %v265, 512
      %vm298 = vcmp.lt.s32.totalorder %v266, 512
      %vm299 = vcmp.lt.s32.totalorder %v267, 512
      %vm300 = vcmp.lt.s32.totalorder %v268, 512
      %vm301 = vcmp.lt.s32.totalorder %v269, 512
      %vm302 = vcmp.lt.s32.totalorder %v270, 512
      %vm303 = vcmp.lt.s32.totalorder %v271, 512
      %vm304 = vcmp.lt.s32.totalorder %v272, 512
      %vm305 = vcmp.lt.s32.totalorder %v273, 512
      %vm306 = vcmp.lt.s32.totalorder %v274, 512
      %vm307 = vcmp.lt.s32.totalorder %v275, 512
      %vm308 = vcmp.lt.s32.totalorder %v276, 512
      %vm309 = vcmp.lt.s32.totalorder %v277, 512
      %vm310 = vcmp.lt.s32.totalorder %v278, 512
      %vm311 = vcmp.lt.s32.totalorder %v279, 512
      %vm312 = vcmp.lt.s32.totalorder %v280, 512
      %vm313 = vcmp.lt.s32.totalorder %v281, 512
      %vm314 = vcmp.lt.s32.totalorder %v282, 512
      %vm315 = vcmp.lt.s32.totalorder %v283, 512
      %vm316 = vcmp.lt.s32.totalorder %v284, 512
      %vm317 = vcmp.lt.s32.totalorder %v285, 512
      %v318 = vsel %vm286, 1, 0
      %v319 = vsel %vm287, 1, 0
      %v320 = vsel %vm288, 1, 0
      %v321 = vsel %vm289, 1, 0
      %v322 = vsel %vm290, 1, 0
      %v323 = vsel %vm291, 1, 0
      %v324 = vsel %vm292, 1, 0
      %v325 = vsel %vm293, 1, 0
      %v326 = vsel %vm294, 1, 0
      %v327 = vsel %vm295, 1, 0
      %v328 = vsel %vm296, 1, 0
      %v329 = vsel %vm297, 1, 0
      %v330 = vsel %vm298, 1, 0
      %v331 = vsel %vm299, 1, 0
      %v332 = vsel %vm300, 1, 0
      %v333 = vsel %vm301, 1, 0
      %v334 = vsel %vm302, 1, 0
      %v335 = vsel %vm303, 1, 0
      %v336 = vsel %vm304, 1, 0
      %v337 = vsel %vm305, 1, 0
      %v338 = vsel %vm306, 1, 0
      %v339 = vsel %vm307, 1, 0
      %v340 = vsel %vm308, 1, 0
      %v341 = vsel %vm309, 1, 0
      %v342 = vsel %vm310, 1, 0
      %v343 = vsel %vm311, 1, 0
      %v344 = vsel %vm312, 1, 0
      %v345 = vsel %vm313, 1, 0
      %v346 = vsel %vm314, 1, 0
      %v347 = vsel %vm315, 1, 0
      %v348 = vsel %vm316, 1, 0
      %v349 = vsel %vm317, 1, 0
      %v350 = vcvt.s32.f32 %v318
      %v351 = vcvt.s32.f32 %v319
      %v352 = vcvt.s32.f32 %v320
      %v353 = vcvt.s32.f32 %v321
      %v354 = vcvt.s32.f32 %v322
      %v355 = vcvt.s32.f32 %v323
      %v356 = vcvt.s32.f32 %v324
      %v357 = vcvt.s32.f32 %v325
      %v358 = vcvt.s32.f32 %v326
      %v359 = vcvt.s32.f32 %v327
      %v360 = vcvt.s32.f32 %v328
      %v361 = vcvt.s32.f32 %v329
      %v362 = vcvt.s32.f32 %v330
      %v363 = vcvt.s32.f32 %v331
      %v364 = vcvt.s32.f32 %v332
      %v365 = vcvt.s32.f32 %v333
      %v366 = vcvt.s32.f32 %v334
      %v367 = vcvt.s32.f32 %v335
      %v368 = vcvt.s32.f32 %v336
      %v369 = vcvt.s32.f32 %v337
      %v370 = vcvt.s32.f32 %v338
      %v371 = vcvt.s32.f32 %v339
      %v372 = vcvt.s32.f32 %v340
      %v373 = vcvt.s32.f32 %v341
      %v374 = vcvt.s32.f32 %v342
      %v375 = vcvt.s32.f32 %v343
      %v376 = vcvt.s32.f32 %v344
      %v377 = vcvt.s32.f32 %v345
      %v378 = vcvt.s32.f32 %v346
      %v379 = vcvt.s32.f32 %v347
      %v380 = vcvt.s32.f32 %v348
      %v381 = vcvt.s32.f32 %v349
      %v382 = vmul.f32 %v187, %v350
      %v383 = vmul.f32 %v188, %v351
      %v384 = vmul.f32 %v189, %v352
      %v385 = vmul.f32 %v190, %v353
      %v386 = vmul.f32 %v191, %v354
      %v387 = vmul.f32 %v192, %v355
      %v388 = vmul.f32 %v193, %v356
      %v389 = vmul.f32 %v194, %v357
      %v390 = vmul.f32 %v195, %v358
      %v391 = vmul.f32 %v196, %v359
      %v392 = vmul.f32 %v197, %v360
      %v393 = vmul.f32 %v198, %v361
      %v394 = vmul.f32 %v199, %v362
      %v395 = vmul.f32 %v200, %v363
      %v396 = vmul.f32 %v201, %v364
      %v397 = vmul.f32 %v202, %v365
      %v398 = vmul.f32 %v203, %v366
      %v399 = vmul.f32 %v204, %v367
      %v400 = vmul.f32 %v205, %v368
      %v401 = vmul.f32 %v206, %v369
      %v402 = vmul.f32 %v207, %v370
      %v403 = vmul.f32 %v208, %v371
      %v404 = vmul.f32 %v209, %v372
      %v405 = vmul.f32 %v210, %v373
      %v406 = vmul.f32 %v211, %v374
      %v407 = vmul.f32 %v212, %v375
      %v408 = vmul.f32 %v213, %v376
      %v409 = vmul.f32 %v214, %v377
      %v410 = vmul.f32 %v215, %v378
      %v411 = vmul.f32 %v216, %v379
      %v412 = vmul.f32 %v217, %v380
      %v413 = vmul.f32 %v218, %v381
      %v414 = vadd.f32 %v382, %v383
      %v415 = vadd.f32 %v414, %v384
      %v416 = vadd.f32 %v415, %v385
      %v417 = vadd.f32 %v416, %v386
      %v418 = vadd.f32 %v417, %v387
      %v419 = vadd.f32 %v418, %v388
      %v420 = vadd.f32 %v419, %v389
      %v421 = vadd.f32 %v420, %v390
      %v422 = vadd.f32 %v421, %v391
      %v423 = vadd.f32 %v422, %v392
      %v424 = vadd.f32 %v423, %v393
      %v425 = vadd.f32 %v424, %v394
      %v426 = vadd.f32 %v425, %v395
      %v427 = vadd.f32 %v426, %v396
      %v428 = vadd.f32 %v427, %v397
      %v429 = vadd.f32 %v428, %v398
      %v430 = vadd.f32 %v429, %v399
      %v431 = vadd.f32 %v430, %v400
      %v432 = vadd.f32 %v431, %v401
      %v433 = vadd.f32 %v432, %v402
      %v434 = vadd.f32 %v433, %v403
      %v435 = vadd.f32 %v434, %v404
      %v436 = vadd.f32 %v435, %v405
      %v437 = vadd.f32 %v436, %v406
      %v438 = vadd.f32 %v437, %v407
      %v439 = vadd.f32 %v438, %v408
      %v440 = vadd.f32 %v439, %v409
      %v441 = vadd.f32 %v440, %v410
      %v442 = vadd.f32 %v441, %v411
      %v443 = vadd.f32 %v442, %v412
      %v444 = vadd.f32 %v443, %v413
      %v445 = vrot.slane %v444, 4
      %v446 = vadd.f32 %v444, %v445
      %v447 = vrot.slane %v446, 2
      %v448 = vadd.f32 %v446, %v447
      %v449 = vrot.slane %v448, 1
      %v450 = vadd.f32 %v448, %v449
      %vm451 = vcmask 7168
      %v452 = vsel %vm451, %v350, 0.0
      %v453 = vsel %vm451, %v351, 0.0
      %v454 = vadd.f32 %v452, %v453
      %v455 = vsel %vm451, %v352, 0.0
      %v456 = vadd.f32 %v454, %v455
      %v457 = vsel %vm451, %v353, 0.0
      %v458 = vadd.f32 %v456, %v457
      %v459 = vsel %vm451, %v354, 0.0
      %v460 = vadd.f32 %v458, %v459
      %v461 = vsel %vm451, %v355, 0.0
      %v462 = vadd.f32 %v460, %v461
      %v463 = vsel %vm451, %v356, 0.0
      %v464 = vadd.f32 %v462, %v463
      %v465 = vsel %vm451, %v357, 0.0
      %v466 = vadd.f32 %v464, %v465
      %v467 = vsel %vm451, %v358, 0.0
      %v468 = vadd.f32 %v466, %v467
      %v469 = vsel %vm451, %v359, 0.0
      %v470 = vadd.f32 %v468, %v469
      %v471 = vsel %vm451, %v360, 0.0
      %v472 = vadd.f32 %v470, %v471
      %v473 = vsel %vm451, %v361, 0.0
      %v474 = vadd.f32 %v472, %v473
      %v475 = vsel %vm451, %v362, 0.0
      %v476 = vadd.f32 %v474, %v475
      %v477 = vsel %vm451, %v363, 0.0
      %v478 = vadd.f32 %v476, %v477
      %v479 = vsel %vm451, %v364, 0.0
      %v480 = vadd.f32 %v478, %v479
      %v481 = vsel %vm451, %v365, 0.0
      %v482 = vadd.f32 %v480, %v481
      %v483 = vsel %vm451, %v366, 0.0
      %v484 = vadd.f32 %v482, %v483
      %v485 = vsel %vm451, %v367, 0.0
      %v486 = vadd.f32 %v484, %v485
      %v487 = vsel %vm451, %v368, 0.0
      %v488 = vadd.f32 %v486, %v487
      %v489 = vsel %vm451, %v369, 0.0
      %v490 = vadd.f32 %v488, %v489
      %v491 = vsel %vm451, %v370, 0.0
      %v492 = vadd.f32 %v490, %v491
      %v493 = vsel %vm451, %v371, 0.0
      %v494 = vadd.f32 %v492, %v493
      %v495 = vsel %vm451, %v372, 0.0
      %v496 = vadd.f32 %v494, %v495
      %v497 = vsel %vm451, %v373, 0.0
      %v498 = vadd.f32 %v496, %v497
      %v499 = vsel %vm451, %v374, 0.0
      %v500 = vadd.f32 %v498, %v499
      %v501 = vsel %vm451, %v375, 0.0
      %v502 = vadd.f32 %v500, %v501
      %v503 = vsel %vm451, %v376, 0.0
      %v504 = vadd.f32 %v502, %v503
      %v505 = vsel %vm451, %v377, 0.0
      %v506 = vadd.f32 %v504, %v505
      %v507 = vsel %vm451, %v378, 0.0
      %v508 = vadd.f32 %v506, %v507
      %v509 = vsel %vm451, %v379, 0.0
      %v510 = vadd.f32 %v508, %v509
      %v511 = vsel %vm451, %v380, 0.0
      %v512 = vadd.f32 %v510, %v511
      %v513 = vsel %vm451, %v381, 0.0
      %v514 = vadd.f32 %v512, %v513
      %515 = vadd.xlane.f32.xlu0 %v514
      %v516 = vpop.xlane.xlu0 %515
      %v517 = vrot.slane %v516, 4
      %v518 = vadd.f32 %v516, %v517
      %v519 = vrot.slane %v518, 2
      %v520 = vadd.f32 %v518, %v519
      %v521 = vrot.slane %v520, 1
      %v522 = vadd.f32 %v520, %v521
      %s523 = vtos %v522
      %s524 = smax.f32 %s523, 1.0
      %v525 = vstv %s524
      %v526 = vrcp.pop %v525
      %v527 = vmul.f32 %v525, %v526
      %v528 = vsub.f32 1.0, %v527
      %v529 = vmul.f32 %v526, %v528
      %v530 = vadd.f32 %v526, %v529
      %vm531 = vweird.f32 %v525
      %vm532 = vweird.f32 %v526
      %vm533 = vmor %vm531, %vm532
      %v534 = vsel %vm533, %v526, %v530
      %v535 = vand.u32 2147483647, %v525
      %vm536 = vcmp.eq.f32.partialorder %v535, 8.507059e+37
      %v537 = vand.u32 %v525, 2147483648
      %v538 = vor.u32 1.1754944e-38, %v537
      %v539 = vsel %vm536, %v538, %v534
      %v540 = vmul.f32 %v450, %v539
      %v541 = vsub.f32 %v187, %v540
      %v542 = vsub.f32 %v188, %v540
      %v543 = vsub.f32 %v189, %v540
      %v544 = vsub.f32 %v190, %v540
      %v545 = vsub.f32 %v191, %v540
      %v546 = vsub.f32 %v192, %v540
      %v547 = vsub.f32 %v193, %v540
      %v548 = vsub.f32 %v194, %v540
      %v549 = vsub.f32 %v195, %v540
      %v550 = vsub.f32 %v196, %v540
      %v551 = vsub.f32 %v197, %v540
      %v552 = vsub.f32 %v198, %v540
      %v553 = vsub.f32 %v199, %v540
      %v554 = vsub.f32 %v200, %v540
      %v555 = vsub.f32 %v201, %v540
      %v556 = vsub.f32 %v202, %v540
      %v557 = vsub.f32 %v203, %v540
      %v558 = vsub.f32 %v204, %v540
      %v559 = vsub.f32 %v205, %v540
      %v560 = vsub.f32 %v206, %v540
      %v561 = vsub.f32 %v207, %v540
      %v562 = vsub.f32 %v208, %v540
      %v563 = vsub.f32 %v209, %v540
      %v564 = vsub.f32 %v210, %v540
      %v565 = vsub.f32 %v211, %v540
      %v566 = vsub.f32 %v212, %v540
      %v567 = vsub.f32 %v213, %v540
      %v568 = vsub.f32 %v214, %v540
      %v569 = vsub.f32 %v215, %v540
      %v570 = vsub.f32 %v216, %v540
      %v571 = vsub.f32 %v217, %v540
      %v572 = vsub.f32 %v218, %v540
      %v573 = vmul.f32 %v541, %v350
      %v574 = vmul.f32 %v542, %v351
      %v575 = vmul.f32 %v543, %v352
      %v576 = vmul.f32 %v544, %v353
      %v577 = vmul.f32 %v545, %v354
      %v578 = vmul.f32 %v546, %v355
      %v579 = vmul.f32 %v547, %v356
      %v580 = vmul.f32 %v548, %v357
      %v581 = vmul.f32 %v549, %v358
      %v582 = vmul.f32 %v550, %v359
      %v583 = vmul.f32 %v551, %v360
      %v584 = vmul.f32 %v552, %v361
      %v585 = vmul.f32 %v553, %v362
      %v586 = vmul.f32 %v554, %v363
      %v587 = vmul.f32 %v555, %v364
      %v588 = vmul.f32 %v556, %v365
      %v589 = vmul.f32 %v557, %v366
      %v590 = vmul.f32 %v558, %v367
      %v591 = vmul.f32 %v559, %v368
      %v592 = vmul.f32 %v560, %v369
      %v593 = vmul.f32 %v561, %v370
      %v594 = vmul.f32 %v562, %v371
      %v595 = vmul.f32 %v563, %v372
      %v596 = vmul.f32 %v564, %v373
      %v597 = vmul.f32 %v565, %v374
      %v598 = vmul.f32 %v566, %v375
      %v599 = vmul.f32 %v567, %v376
      %v600 = vmul.f32 %v568, %v377
      %v601 = vmul.f32 %v569, %v378
      %v602 = vmul.f32 %v570, %v379
      %v603 = vmul.f32 %v571, %v380
      %v604 = vmul.f32 %v572, %v381
      %v605 = vmul.f32 %v573, %v573
      %v606 = vmul.f32 %v574, %v574
      %v607 = vmul.f32 %v575, %v575
      %v608 = vmul.f32 %v576, %v576
      %v609 = vmul.f32 %v577, %v577
      %v610 = vmul.f32 %v578, %v578
      %v611 = vmul.f32 %v579, %v579
      %v612 = vmul.f32 %v580, %v580
      %v613 = vmul.f32 %v581, %v581
      %v614 = vmul.f32 %v582, %v582
      %v615 = vmul.f32 %v583, %v583
      %v616 = vmul.f32 %v584, %v584
      %v617 = vmul.f32 %v585, %v585
      %v618 = vmul.f32 %v586, %v586
      %v619 = vmul.f32 %v587, %v587
      %v620 = vmul.f32 %v588, %v588
      %v621 = vmul.f32 %v589, %v589
      %v622 = vmul.f32 %v590, %v590
      %v623 = vmul.f32 %v591, %v591
      %v624 = vmul.f32 %v592, %v592
      %v625 = vmul.f32 %v593, %v593
      %v626 = vmul.f32 %v594, %v594
      %v627 = vmul.f32 %v595, %v595
      %v628 = vmul.f32 %v596, %v596
      %v629 = vmul.f32 %v597, %v597
      %v630 = vmul.f32 %v598, %v598
      %v631 = vmul.f32 %v599, %v599
      %v632 = vmul.f32 %v600, %v600
      %v633 = vmul.f32 %v601, %v601
      %v634 = vmul.f32 %v602, %v602
      %v635 = vmul.f32 %v603, %v603
      %v636 = vmul.f32 %v604, %v604
      %v637 = vadd.f32 %v605, %v606
      %v638 = vadd.f32 %v637, %v607
      %v639 = vadd.f32 %v638, %v608
      %v640 = vadd.f32 %v639, %v609
      %v641 = vadd.f32 %v640, %v610
      %v642 = vadd.f32 %v641, %v611
      %v643 = vadd.f32 %v642, %v612
      %v644 = vadd.f32 %v643, %v613
      %v645 = vadd.f32 %v644, %v614
      %v646 = vadd.f32 %v645, %v615
      %v647 = vadd.f32 %v646, %v616
      %v648 = vadd.f32 %v647, %v617
      %v649 = vadd.f32 %v648, %v618
      %v650 = vadd.f32 %v649, %v619
      %v651 = vadd.f32 %v650, %v620
      %v652 = vadd.f32 %v651, %v621
      %v653 = vadd.f32 %v652, %v622
      %v654 = vadd.f32 %v653, %v623
      %v655 = vadd.f32 %v654, %v624
      %v656 = vadd.f32 %v655, %v625
      %v657 = vadd.f32 %v656, %v626
      %v658 = vadd.f32 %v657, %v627
      %v659 = vadd.f32 %v658, %v628
      %v660 = vadd.f32 %v659, %v629
      %v661 = vadd.f32 %v660, %v630
      %v662 = vadd.f32 %v661, %v631
      %v663 = vadd.f32 %v662, %v632
      %v664 = vadd.f32 %v663, %v633
      %v665 = vadd.f32 %v664, %v634
      %v666 = vadd.f32 %v665, %v635
      %v667 = vadd.f32 %v666, %v636
      %v668 = vrot.slane %v667, 4
      %v669 = vadd.f32 %v667, %v668
      %v670 = vrot.slane %v669, 2
      %v671 = vadd.f32 %v669, %v670
      %v672 = vrot.slane %v671, 1
      %v673 = vadd.f32 %v671, %v672
      %674 = vst [vmem:[%s150] sm:$0xff] %v450
      %675 = vst [vmem:[%s154] sm:$0xff] %v673
      %p676 = scmp.lt.s32.totalorder %s14, 1
      %s677 = scalar_select %p676, %s14, 1
      %s678 = smul.addr %s677, 8
      %s679 = scalar_lea.vmem %s1, %s678
      %p680 = scmp.lt.s32.totalorder %s14, 1
      %s681 = scalar_select %p680, %s14, 1
      %s682 = smul.addr %s681, 8
      %s683 = scalar_lea.vmem %s2, %s682
      // Predicated region
      $region25: #{resblock50_forward.5} parent=23 // pred_check
        %p684 = pneg %p58
      $region26: #{resblock50_forward.5} parent=23 // pred_check_branch
        %686 = sbr.rel (%p684) target = $region28
      $region27: #{resblock50_forward.5} parent=23 // pred_region
        _
      $region28: #{resblock50_forward.5} parent=23 // pred_fallthru
        _
      // Predicated region
      $region29: #{resblock50_forward.5} parent=23 // pred_check
        %p687 = pneg %p84
      $region30: #{resblock50_forward.5} parent=23 // pred_check_branch
        %689 = sbr.rel (%p687) target = $region32
      $region31: #{resblock50_forward.5} parent=23 // pred_region
        _
      $region32: #{resblock50_forward.5} parent=23 // pred_fallthru
        _
    $region24: #{resblock50_forward.5} parent=5 // pred_fallthru
      _
    %p690 = scmp.le.s32.totalorder 2, %s9
    // Predicated region
    $region33: #{resblock50_forward.5} parent=5 // pred_check
      %p691 = pneg %p690
    $region34: #{resblock50_forward.5} parent=5 // pred_check_branch
      %693 = sbr.rel (%p691) target = $region36
    $region35: #{resblock50_forward.5} parent=5 // pred_region
      %s694 = ssub.s32 %s9, 2
      // Predicated region
      $region37: #{resblock50_forward.5} parent=35 // pred_check
        %p695 = pneg %p64
      $region38: #{resblock50_forward.5} parent=35 // pred_check_branch
        %697 = sbr.rel (%p695) target = $region40
      $region39: #{resblock50_forward.5} parent=35 // pred_region
        %p698 = scmp.lt.s32.totalorder %s15, 1
        %s699 = scalar_select %p698, %s15, 1
        %s700 = smul.addr %s699, 8
        %s701 = scalar_lea.vmem %s1, %s700
      $region40: #{resblock50_forward.5} parent=35 // pred_fallthru
        _
      // Predicated region
      $region41: #{resblock50_forward.5} parent=35 // pred_check
        %p702 = pneg %p90
      $region42: #{resblock50_forward.5} parent=35 // pred_check_branch
        %704 = sbr.rel (%p702) target = $region44
      $region43: #{resblock50_forward.5} parent=35 // pred_region
        %p705 = scmp.lt.s32.totalorder %s15, 1
        %s706 = scalar_select %p705, %s15, 1
        %s707 = smul.addr %s706, 8
        %s708 = scalar_lea.vmem %s2, %s707
      $region44: #{resblock50_forward.5} parent=35 // pred_fallthru
        _
    $region36: #{resblock50_forward.5} parent=5 // pred_fallthru
      _
  $region6: #{resblock50_forward.5} parent=0 // loop_footer
    %s13 = sadd.s32 1, %s9
  $region7: #{resblock50_forward.5} parent=0 // loop_footer_branch
    %8 = sbr.rel target = $region3
  $region8: #{resblock50_forward.5} parent=0 // loop_exit
    _

// kernel: resblock50_forward.6
$region0: #{resblock50_forward.6}
  #allocation0 [shape = 'u32[]', space=smem, size = 0x4, offset = 0x4, fixed_abs, tag = 'smem constant byte address 0x4 - core index']
  #allocation1 [shape = 'u32[72,128]{1,0:T(1,128)}', space=vmem, size = 0x9000, scoped, tag = 'internal scratch']
  %s0 = inlined_call_operand.vmem [shape: bf16[512,128], index: 0, kind: input, shape index: {}]
  %s1 = inlined_call_operand.vmem [shape: f32[1,128], index: 1, kind: input, shape index: {}]
  %s2 = inlined_call_operand.vmem [shape: f32[1,128], index: 2, kind: input, shape index: {}]
  %s3 = inlined_call_operand.vmem [shape: bf16[128,128], index: 3, kind: input, shape index: {}]
  %s4 = inlined_call_operand.vmem [shape: bf16[512,128], index: 4, kind: output, shape index: {0}]
  %s5 = inlined_call_operand.vmem [shape: f32[2,8,128], index: 5, kind: output, shape index: {1}]
  %s6 = inlined_call_operand.vmem [shape: f32[2,8,128], index: 6, kind: output, shape index: {2}]
  %7 = xla_tuple %s4, %s5, %s6
  %s8 = sld [smem:[#allocation0]]
  $region65: #{resblock50_forward.6} parent=0
    _
  %s10 = ssub.s32 1, %s8
  %s11 = scalar_select 0, %s10, %s8
  loop: start=0, step=1, limit=4
  $region2: #{resblock50_forward.6} parent=0 // loop_pre_header
    _
  $region3: #{resblock50_forward.6} parent=0 // loop_header
    %s13 = sphi 0, %s17
    %p14 = scmp.ge.s32.totalorder %s13, 4
    %s23 = sphi 0, %s25
    %s26 = sphi 0, %s23
    %s27 = sphi 0, %s26
    %s43 = sphi 0, %s27
    %s47 = sphi 0, %s47
    %s49 = sphi 0, %s47
    %s50 = sphi 0, %s49
    %s64 = sphi 0, %s50
    %s68 = sphi 0, %s68
    %s70 = sphi 0, %s68
    %s71 = sphi 0, %s70
    %s85 = sphi 0, %s71
    %s89 = sphi 0, %s89
    %s91 = sphi 0, %s89
    %s92 = sphi 0, %s91
    %s106 = sphi 0, %s92
    %s112 = sphi 0, %s114
    %s115 = sphi 0, %s112
    %s116 = sphi 0, %s115
    %s132 = sphi 0, %s116
    %s138 = sphi 0, %s140
    %s141 = sphi 0, %s138
    %s142 = sphi 0, %s141
    %s158 = sphi 0, %s142
    %s164 = sphi 0, %s166
    %s167 = sphi 0, %s164
    %s168 = sphi 0, %s167
    %s184 = sphi 0, %s168
  $region4: #{resblock50_forward.6} parent=0 // loop_header_branch
    %16 = sbr.rel (%p14) target = $region8
  $region5: #{resblock50_forward.6} parent=0 // loop_body
    %s18 = ssub.s32 %s13, 1
    %s19 = ssub.s32 %s13, 2
    %s20 = sadd.s32 %s13, 1
    %s21 = ssub.s32 %s13, %s20
    %p22 = scmp.eq.s32.totalorder %s21, 0
    %s24 = sadd.s32 %s23, 1
    %s25 = scalar_select %p22, %s23, %s24
    %p28 = pneg %p22
    %p29 = scmp.eq.s32.totalorder %s13, 1
    %p30 = por %p28, %p29
    %p31 = scmp.ne.s32.totalorder %s23, %s26
    %p32 = scmp.eq.s32.totalorder %s13, 0
    %p33 = por %p31, %p32
    %p34 = scmp.ne.s32.totalorder %s23, %s26
    %p35 = scmp.eq.s32.totalorder %s18, 1
    %p36 = por %p34, %p35
    %p37 = scmp.ne.s32.totalorder %s26, %s27
    %p38 = scmp.eq.s32.totalorder %s18, 0
    %p39 = por %p37, %p38
    %p40 = scmp.ne.s32.totalorder %s26, %s27
    %p41 = scmp.eq.s32.totalorder %s19, 1
    %p42 = por %p40, %p41
    %p44 = scmp.ne.s32.totalorder %s27, %s43
    %p45 = scmp.eq.s32.totalorder %s19, 0
    %p46 = por %p44, %p45
    %s48 = sadd.s32 %s47, 1
    %p51 = scmp.eq.s32.totalorder %s13, 1
    %p52 = scmp.ne.s32.totalorder %s47, %s49
    %p53 = scmp.eq.s32.totalorder %s13, 0
    %p54 = por %p52, %p53
    %p55 = scmp.ne.s32.totalorder %s47, %s49
    %p56 = scmp.eq.s32.totalorder %s18, 1
    %p57 = por %p55, %p56
    %p58 = scmp.ne.s32.totalorder %s49, %s50
    %p59 = scmp.eq.s32.totalorder %s18, 0
    %p60 = por %p58, %p59
    %p61 = scmp.ne.s32.totalorder %s49, %s50
    %p62 = scmp.eq.s32.totalorder %s19, 1
    %p63 = por %p61, %p62
    %p65 = scmp.ne.s32.totalorder %s50, %s64
    %p66 = scmp.eq.s32.totalorder %s19, 0
    %p67 = por %p65, %p66
    %s69 = sadd.s32 %s68, 1
    %p72 = scmp.eq.s32.totalorder %s13, 1
    %p73 = scmp.ne.s32.totalorder %s68, %s70
    %p74 = scmp.eq.s32.totalorder %s13, 0
    %p75 = por %p73, %p74
    %p76 = scmp.ne.s32.totalorder %s68, %s70
    %p77 = scmp.eq.s32.totalorder %s18, 1
    %p78 = por %p76, %p77
    %p79 = scmp.ne.s32.totalorder %s70, %s71
    %p80 = scmp.eq.s32.totalorder %s18, 0
    %p81 = por %p79, %p80
    %p82 = scmp.ne.s32.totalorder %s70, %s71
    %p83 = scmp.eq.s32.totalorder %s19, 1
    %p84 = por %p82, %p83
    %p86 = scmp.ne.s32.totalorder %s71, %s85
    %p87 = scmp.eq.s32.totalorder %s19, 0
    %p88 = por %p86, %p87
    %s90 = sadd.s32 %s89, 1
    %p93 = scmp.eq.s32.totalorder %s13, 1
    %p94 = scmp.ne.s32.totalorder %s89, %s91
    %p95 = scmp.eq.s32.totalorder %s13, 0
    %p96 = por %p94, %p95
    %p97 = scmp.ne.s32.totalorder %s89, %s91
    %p98 = scmp.eq.s32.totalorder %s18, 1
    %p99 = por %p97, %p98
    %p100 = scmp.ne.s32.totalorder %s91, %s92
    %p101 = scmp.eq.s32.totalorder %s18, 0
    %p102 = por %p100, %p101
    %p103 = scmp.ne.s32.totalorder %s91, %s92
    %p104 = scmp.eq.s32.totalorder %s19, 1
    %p105 = por %p103, %p104
    %p107 = scmp.ne.s32.totalorder %s92, %s106
    %p108 = scmp.eq.s32.totalorder %s19, 0
    %p109 = por %p107, %p108
    %s110 = ssub.s32 %s13, %s20
    %p111 = scmp.eq.s32.totalorder %s110, 0
    %s113 = sadd.s32 %s112, 1
    %s114 = scalar_select %p111, %s112, %s113
    %p117 = pneg %p111
    %p118 = scmp.eq.s32.totalorder %s13, 1
    %p119 = por %p117, %p118
    %p120 = scmp.ne.s32.totalorder %s112, %s115
    %p121 = scmp.eq.s32.totalorder %s13, 0
    %p122 = por %p120, %p121
    %p123 = scmp.ne.s32.totalorder %s112, %s115
    %p124 = scmp.eq.s32.totalorder %s18, 1
    %p125 = por %p123, %p124
    %p126 = scmp.ne.s32.totalorder %s115, %s116
    %p127 = scmp.eq.s32.totalorder %s18, 0
    %p128 = por %p126, %p127
    %p129 = scmp.ne.s32.totalorder %s115, %s116
    %p130 = scmp.eq.s32.totalorder %s19, 1
    %p131 = por %p129, %p130
    %p133 = scmp.ne.s32.totalorder %s116, %s132
    %p134 = scmp.eq.s32.totalorder %s19, 0
    %p135 = por %p133, %p134
    %s136 = ssub.s32 %s13, %s20
    %p137 = scmp.eq.s32.totalorder %s136, 0
    %s139 = sadd.s32 %s138, 1
    %s140 = scalar_select %p137, %s138, %s139
    %p143 = pneg %p137
    %p144 = scmp.eq.s32.totalorder %s13, 1
    %p145 = por %p143, %p144
    %p146 = scmp.ne.s32.totalorder %s138, %s141
    %p147 = scmp.eq.s32.totalorder %s13, 0
    %p148 = por %p146, %p147
    %p149 = scmp.ne.s32.totalorder %s138, %s141
    %p150 = scmp.eq.s32.totalorder %s18, 1
    %p151 = por %p149, %p150
    %p152 = scmp.ne.s32.totalorder %s141, %s142
    %p153 = scmp.eq.s32.totalorder %s18, 0
    %p154 = por %p152, %p153
    %p155 = scmp.ne.s32.totalorder %s141, %s142
    %p156 = scmp.eq.s32.totalorder %s19, 1
    %p157 = por %p155, %p156
    %p159 = scmp.ne.s32.totalorder %s142, %s158
    %p160 = scmp.eq.s32.totalorder %s19, 0
    %p161 = por %p159, %p160
    %s162 = ssub.s32 %s13, %s20
    %p163 = scmp.eq.s32.totalorder %s162, 0
    %s165 = sadd.s32 %s164, 1
    %s166 = scalar_select %p163, %s164, %s165
    %p169 = pneg %p163
    %p170 = scmp.eq.s32.totalorder %s13, 1
    %p171 = por %p169, %p170
    %p172 = scmp.ne.s32.totalorder %s164, %s167
    %p173 = scmp.eq.s32.totalorder %s13, 0
    %p174 = por %p172, %p173
    %p175 = scmp.ne.s32.totalorder %s164, %s167
    %p176 = scmp.eq.s32.totalorder %s18, 1
    %p177 = por %p175, %p176
    %p178 = scmp.ne.s32.totalorder %s167, %s168
    %p179 = scmp.eq.s32.totalorder %s18, 0
    %p180 = por %p178, %p179
    %p181 = scmp.ne.s32.totalorder %s167, %s168
    %p182 = scmp.eq.s32.totalorder %s19, 1
    %p183 = por %p181, %p182
    %p185 = scmp.ne.s32.totalorder %s168, %s184
    %p186 = scmp.eq.s32.totalorder %s19, 0
    %p187 = por %p185, %p186
    %p188 = scmp.le.s32.totalorder 1, %s13
    %p189 = scmp.lt.s32.totalorder %s13, 3
    %p190 = pnand %p188, %p189
    %p191 = pneg %p190
    // Predicated region
    $region9: #{resblock50_forward.6} parent=5 // pred_check
      _
    $region10: #{resblock50_forward.6} parent=5 // pred_check_branch
      %193 = sbr.rel (%p190) target = $region12
    $region11: #{resblock50_forward.6} parent=5 // pred_region
      %s194 = ssub.s32 %s13, 1
      // Predicated region
      $region13: #{resblock50_forward.6} parent=11 // pred_check
        %p195 = pneg %p60
      $region14: #{resblock50_forward.6} parent=11 // pred_check_branch
        %197 = sbr.rel (%p195) target = $region16
      $region15: #{resblock50_forward.6} parent=11 // pred_region
        _
      $region16: #{resblock50_forward.6} parent=11 // pred_fallthru
        _
      // Predicated region
      $region17: #{resblock50_forward.6} parent=11 // pred_check
        %p198 = pneg %p81
      $region18: #{resblock50_forward.6} parent=11 // pred_check_branch
        %200 = sbr.rel (%p198) target = $region20
      $region19: #{resblock50_forward.6} parent=11 // pred_region
        _
      $region20: #{resblock50_forward.6} parent=11 // pred_fallthru
        _
      // Predicated region
      $region21: #{resblock50_forward.6} parent=11 // pred_check
        %p201 = pneg %p102
      $region22: #{resblock50_forward.6} parent=11 // pred_check_branch
        %203 = sbr.rel (%p201) target = $region24
      $region23: #{resblock50_forward.6} parent=11 // pred_region
        _
      $region24: #{resblock50_forward.6} parent=11 // pred_fallthru
        _
    $region12: #{resblock50_forward.6} parent=5 // pred_fallthru
      _
    %p204 = scmp.lt.s32.totalorder %s13, 2
    // Predicated region
    $region25: #{resblock50_forward.6} parent=5 // pred_check
      %p205 = pneg %p204
    $region26: #{resblock50_forward.6} parent=5 // pred_check_branch
      %207 = sbr.rel (%p205) target = $region28
    $region27: #{resblock50_forward.6} parent=5 // pred_region
      // Predicated region
      $region29: #{resblock50_forward.6} parent=27 // pred_check
        %p208 = pneg %p33
      $region30: #{resblock50_forward.6} parent=27 // pred_check_branch
        %210 = sbr.rel (%p208) target = $region32
      $region31: #{resblock50_forward.6} parent=27 // pred_region
        %s211 = smul.u32 32, %s13
        %p212 = scmp.lt.s32.totalorder %s211, 63
        %s213 = scalar_select %p212, %s211, 63
        %s214 = smul.addr %s213, 4
        %s215 = scalar_lea.vmem %s0, %s214
        %s216 = smul.u32 32, %s13
      $region32: #{resblock50_forward.6} parent=27 // pred_fallthru
        _
    $region28: #{resblock50_forward.6} parent=5 // pred_fallthru
      _
    %p217 = scmp.le.s32.totalorder 1, %s13
    %p218 = scmp.lt.s32.totalorder %s13, 3
    %p219 = pnand %p217, %p218
    %p220 = pneg %p219
    // Predicated region
    $region33: #{resblock50_forward.6} parent=5 // pred_check
      _
    $region34: #{resblock50_forward.6} parent=5 // pred_check_branch
      %222 = sbr.rel (%p219) target = $region36
    $region35: #{resblock50_forward.6} parent=5 // pred_region
      %s223 = ssub.s32 %s13, 1
      %s224 = smul.u32 32, %s18
      %p225 = scmp.lt.s32.totalorder %s224, 63
      %s226 = scalar_select %p225, %s224, 63
      %s227 = smul.addr %s226, 4
      %s228 = scalar_lea.vmem %s0, %s227
      %p229 = pneg %p39
      %p230 = pneg %p36
      %p231 = pneg %p60
      %p232 = pneg %p57
      %p233 = pneg %p81
      %p234 = pneg %p78
      %p235 = pneg %p102
      %p236 = pneg %p99
      %p237 = pneg %p128
      %p238 = pneg %p125
      %s239 = smul.u32 32, %s18
      %p240 = scmp.lt.s32.totalorder %s239, 63
      %s241 = scalar_select %p240, %s239, 63
      %s242 = smul.addr %s241, 4
      %s243 = scalar_lea.vmem %s4, %s242
      %p244 = pneg %p154
      %p245 = pneg %p151
      %p246 = scmp.lt.s32.totalorder %s18, 1
      %s247 = scalar_select %p246, %s18, 1
      %s248 = smul.addr %s247, 8
      %s249 = scalar_lea.vmem %s5, %s248
      %p250 = pneg %p180
      %p251 = pneg %p177
      %p252 = scmp.lt.s32.totalorder %s18, 1
      %s253 = scalar_select %p252, %s18, 1
      %s254 = smul.addr %s253, 8
      %s255 = scalar_lea.vmem %s6, %s254
      %s256 = smul.u32 32, %s18
      %p257 = scmp.lt.s32.totalorder %s256, 63
      %s258 = scalar_select %p257, %s256, 63
      %s259 = smul.addr %s258, 4
      %s260 = scalar_lea.vmem %s0, %s259
      %s261 = smul.u32 32, %s18
      %s262 = smul.u32 32, %s18
      %p263 = scmp.lt.s32.totalorder %s262, 63
      %s264 = scalar_select %p263, %s262, 63
      %s265 = smul.addr %s264, 4
      %s266 = scalar_lea.vmem %s4, %s265
      %s267 = smul.u32 32, %s18
      %p268 = scmp.lt.s32.totalorder %s18, 1
      %s269 = scalar_select %p268, %s18, 1
      %s270 = smul.addr %s269, 8
      %s271 = scalar_lea.vmem %s5, %s270
      %p272 = scmp.lt.s32.totalorder %s18, 1
      %s273 = scalar_select %p272, %s18, 1
      %s274 = smul.addr %s273, 8
      %s275 = scalar_lea.vmem %s6, %s274
      %v276 = vld [vmem:[%s260] sm:$0xf]
      %v277 = vld [vmem:[%s260 + $0x4] sm:$0xf]
      %v278 = vld [vmem:[%s260 + $0x8] sm:$0xf]
      %v279 = vld [vmem:[%s260 + $0xc] sm:$0xf]
      %v280 = vld [vmem:[%s260 + $0x10] sm:$0xf]
      %v281 = vld [vmem:[%s260 + $0x14] sm:$0xf]
      %v282 = vld [vmem:[%s260 + $0x18] sm:$0xf]
      %v283 = vld [vmem:[%s260 + $0x1c] sm:$0xf]
      %v284 = vld [vmem:[%s260 + $0x20] sm:$0xf]
      %v285 = vld [vmem:[%s260 + $0x24] sm:$0xf]
      %v286 = vld [vmem:[%s260 + $0x28] sm:$0xf]
      %v287 = vld [vmem:[%s260 + $0x2c] sm:$0xf]
      %v288 = vld [vmem:[%s260 + $0x30] sm:$0xf]
      %v289 = vld [vmem:[%s260 + $0x34] sm:$0xf]
      %v290 = vld [vmem:[%s260 + $0x38] sm:$0xf]
      %v291 = vld [vmem:[%s260 + $0x3c] sm:$0xf]
      %v292 = vld [vmem:[%s260 + $0x40] sm:$0xf]
      %v293 = vld [vmem:[%s260 + $0x44] sm:$0xf]
      %v294 = vld [vmem:[%s260 + $0x48] sm:$0xf]
      %v295 = vld [vmem:[%s260 + $0x4c] sm:$0xf]
      %v296 = vld [vmem:[%s260 + $0x50] sm:$0xf]
      %v297 = vld [vmem:[%s260 + $0x54] sm:$0xf]
      %v298 = vld [vmem:[%s260 + $0x58] sm:$0xf]
      %v299 = vld [vmem:[%s260 + $0x5c] sm:$0xf]
      %v300 = vld [vmem:[%s260 + $0x60] sm:$0xf]
      %v301 = vld [vmem:[%s260 + $0x64] sm:$0xf]
      %v302 = vld [vmem:[%s260 + $0x68] sm:$0xf]
      %v303 = vld [vmem:[%s260 + $0x6c] sm:$0xf]
      %v304 = vld [vmem:[%s260 + $0x70] sm:$0xf]
      %v305 = vld [vmem:[%s260 + $0x74] sm:$0xf]
      %v306 = vld [vmem:[%s260 + $0x78] sm:$0xf]
      %v307 = vld [vmem:[%s260 + $0x7c] sm:$0xf]
      %v308 = vunpack.c.l.bf16 %v276
      %v309 = vunpack.c.l.bf16 %v277
      %v310 = vunpack.c.l.bf16 %v278
      %v311 = vunpack.c.l.bf16 %v279
      %v312 = vunpack.c.l.bf16 %v280
      %v313 = vunpack.c.l.bf16 %v281
      %v314 = vunpack.c.l.bf16 %v282
      %v315 = vunpack.c.l.bf16 %v283
      %v316 = vunpack.c.l.bf16 %v284
      %v317 = vunpack.c.l.bf16 %v285
      %v318 = vunpack.c.l.bf16 %v286
      %v319 = vunpack.c.l.bf16 %v287
      %v320 = vunpack.c.l.bf16 %v288
      %v321 = vunpack.c.l.bf16 %v289
      %v322 = vunpack.c.l.bf16 %v290
      %v323 = vunpack.c.l.bf16 %v291
      %v324 = vunpack.c.l.bf16 %v292
      %v325 = vunpack.c.l.bf16 %v293
      %v326 = vunpack.c.l.bf16 %v294
      %v327 = vunpack.c.l.bf16 %v295
      %v328 = vunpack.c.l.bf16 %v296
      %v329 = vunpack.c.l.bf16 %v297
      %v330 = vunpack.c.l.bf16 %v298
      %v331 = vunpack.c.l.bf16 %v299
      %v332 = vunpack.c.l.bf16 %v300
      %v333 = vunpack.c.l.bf16 %v301
      %v334 = vunpack.c.l.bf16 %v302
      %v335 = vunpack.c.l.bf16 %v303
      %v336 = vunpack.c.l.bf16 %v304
      %v337 = vunpack.c.l.bf16 %v305
      %v338 = vunpack.c.l.bf16 %v306
      %v339 = vunpack.c.l.bf16 %v307
      %v340 = vld [vmem:[%s1] sm:$0x1]
      %v342 = vperm.slane %v340, 0
      %v344 = vmul.f32 %v308, %v342
      %v345 = vmul.f32 %v309, %v342
      %v346 = vmul.f32 %v310, %v342
      %v347 = vmul.f32 %v311, %v342
      %v348 = vmul.f32 %v312, %v342
      %v349 = vmul.f32 %v313, %v342
      %v350 = vmul.f32 %v314, %v342
      %v351 = vmul.f32 %v315, %v342
      %v352 = vmul.f32 %v316, %v342
      %v353 = vmul.f32 %v317, %v342
      %v354 = vmul.f32 %v318, %v342
      %v355 = vmul.f32 %v319, %v342
      %v356 = vmul.f32 %v320, %v342
      %v357 = vmul.f32 %v321, %v342
      %v358 = vmul.f32 %v322, %v342
      %v359 = vmul.f32 %v323, %v342
      %v360 = vmul.f32 %v324, %v342
      %v361 = vmul.f32 %v325, %v342
      %v362 = vmul.f32 %v326, %v342
      %v363 = vmul.f32 %v327, %v342
      %v364 = vmul.f32 %v328, %v342
      %v365 = vmul.f32 %v329, %v342
      %v366 = vmul.f32 %v330, %v342
      %v367 = vmul.f32 %v331, %v342
      %v368 = vmul.f32 %v332, %v342
      %v369 = vmul.f32 %v333, %v342
      %v370 = vmul.f32 %v334, %v342
      %v371 = vmul.f32 %v335, %v342
      %v372 = vmul.f32 %v336, %v342
      %v373 = vmul.f32 %v337, %v342
      %v374 = vmul.f32 %v338, %v342
      %v375 = vmul.f32 %v339, %v342
      %v376 = vld [vmem:[%s2] sm:$0x1]
      %v378 = vperm.slane %v376, 0
      %v380 = vadd.f32 %v344, %v378
      %v381 = vadd.f32 %v345, %v378
      %v382 = vadd.f32 %v346, %v378
      %v383 = vadd.f32 %v347, %v378
      %v384 = vadd.f32 %v348, %v378
      %v385 = vadd.f32 %v349, %v378
      %v386 = vadd.f32 %v350, %v378
      %v387 = vadd.f32 %v351, %v378
      %v388 = vadd.f32 %v352, %v378
      %v389 = vadd.f32 %v353, %v378
      %v390 = vadd.f32 %v354, %v378
      %v391 = vadd.f32 %v355, %v378
      %v392 = vadd.f32 %v356, %v378
      %v393 = vadd.f32 %v357, %v378
      %v394 = vadd.f32 %v358, %v378
      %v395 = vadd.f32 %v359, %v378
      %v396 = vadd.f32 %v360, %v378
      %v397 = vadd.f32 %v361, %v378
      %v398 = vadd.f32 %v362, %v378
      %v399 = vadd.f32 %v363, %v378
      %v400 = vadd.f32 %v364, %v378
      %v401 = vadd.f32 %v365, %v378
      %v402 = vadd.f32 %v366, %v378
      %v403 = vadd.f32 %v367, %v378
      %v404 = vadd.f32 %v368, %v378
      %v405 = vadd.f32 %v369, %v378
      %v406 = vadd.f32 %v370, %v378
      %v407 = vadd.f32 %v371, %v378
      %v408 = vadd.f32 %v372, %v378
      %v409 = vadd.f32 %v373, %v378
      %v410 = vadd.f32 %v374, %v378
      %v411 = vadd.f32 %v375, %v378
      %v412 = vmax.f32 %v380, 0.0
      %v413 = vmax.f32 %v381, 0.0
      %v414 = vmax.f32 %v382, 0.0
      %v415 = vmax.f32 %v383, 0.0
      %v416 = vmax.f32 %v384, 0.0
      %v417 = vmax.f32 %v385, 0.0
      %v418 = vmax.f32 %v386, 0.0
      %v419 = vmax.f32 %v387, 0.0
      %v420 = vmax.f32 %v388, 0.0
      %v421 = vmax.f32 %v389, 0.0
      %v422 = vmax.f32 %v390, 0.0
      %v423 = vmax.f32 %v391, 0.0
      %v424 = vmax.f32 %v392, 0.0
      %v425 = vmax.f32 %v393, 0.0
      %v426 = vmax.f32 %v394, 0.0
      %v427 = vmax.f32 %v395, 0.0
      %v428 = vmax.f32 %v396, 0.0
      %v429 = vmax.f32 %v397, 0.0
      %v430 = vmax.f32 %v398, 0.0
      %v431 = vmax.f32 %v399, 0.0
      %v432 = vmax.f32 %v400, 0.0
      %v433 = vmax.f32 %v401, 0.0
      %v434 = vmax.f32 %v402, 0.0
      %v435 = vmax.f32 %v403, 0.0
      %v436 = vmax.f32 %v404, 0.0
      %v437 = vmax.f32 %v405, 0.0
      %v438 = vmax.f32 %v406, 0.0
      %v439 = vmax.f32 %v407, 0.0
      %v440 = vmax.f32 %v408, 0.0
      %v441 = vmax.f32 %v409, 0.0
      %v442 = vmax.f32 %v410, 0.0
      %v443 = vmax.f32 %v411, 0.0
      %v444 = vpack.c.bf16 %v413, %v412
      %v445 = vpack.c.bf16 %v415, %v414
      %v446 = vpack.c.bf16 %v417, %v416
      %v447 = vpack.c.bf16 %v419, %v418
      %v448 = vpack.c.bf16 %v421, %v420
      %v449 = vpack.c.bf16 %v423, %v422
      %v450 = vpack.c.bf16 %v425, %v424
      %v451 = vpack.c.bf16 %v427, %v426
      %v452 = vpack.c.bf16 %v429, %v428
      %v453 = vpack.c.bf16 %v431, %v430
      %v454 = vpack.c.bf16 %v433, %v432
      %v455 = vpack.c.bf16 %v435, %v434
      %v456 = vpack.c.bf16 %v437, %v436
      %v457 = vpack.c.bf16 %v439, %v438
      %v458 = vpack.c.bf16 %v441, %v440
      %v459 = vpack.c.bf16 %v443, %v442
      %v460 = vld [vmem:[%s3] sm:$0xf]
      %v461 = vld [vmem:[%s3 + $0x4] sm:$0xf]
      %v462 = vld [vmem:[%s3 + $0x8] sm:$0xf]
      %v463 = vld [vmem:[%s3 + $0xc] sm:$0xf]
      %v464 = vld [vmem:[%s3 + $0x10] sm:$0xf]
      %v465 = vld [vmem:[%s3 + $0x14] sm:$0xf]
      %v466 = vld [vmem:[%s3 + $0x18] sm:$0xf]
      %v467 = vld [vmem:[%s3 + $0x1c] sm:$0xf]
      %v468 = vld [vmem:[%s3 + $0x20] sm:$0xf]
      %v469 = vld [vmem:[%s3 + $0x24] sm:$0xf]
      %v470 = vld [vmem:[%s3 + $0x28] sm:$0xf]
      %v471 = vld [vmem:[%s3 + $0x2c] sm:$0xf]
      %v472 = vld [vmem:[%s3 + $0x30] sm:$0xf]
      %v473 = vld [vmem:[%s3 + $0x34] sm:$0xf]
      %v474 = vld [vmem:[%s3 + $0x38] sm:$0xf]
      %v475 = vld [vmem:[%s3 + $0x3c] sm:$0xf]
      %v492 = vunpack.c.l.b16 %v460
      %v493 = vunpack.c.l.b16 %v461
      %v494 = vunpack.c.l.b16 %v462
      %v495 = vunpack.c.l.b16 %v463
      %v496 = vunpack.c.l.b16 %v464
      %v497 = vunpack.c.l.b16 %v465
      %v498 = vunpack.c.l.b16 %v466
      %v499 = vunpack.c.l.b16 %v467
      %v500 = vunpack.c.l.b16 %v468
      %v501 = vunpack.c.l.b16 %v469
      %v502 = vunpack.c.l.b16 %v470
      %v503 = vunpack.c.l.b16 %v471
      %v504 = vunpack.c.l.b16 %v472
      %v505 = vunpack.c.l.b16 %v473
      %v506 = vunpack.c.l.b16 %v474
      %v507 = vunpack.c.l.b16 %v475
      %v508 = vpack.c.b16 %v493, %v492
      %v509 = vpack.c.b16 %v495, %v494
      %v510 = vpack.c.b16 %v497, %v496
      %v511 = vpack.c.b16 %v499, %v498
      %v512 = vpack.c.b16 %v501, %v500
      %v513 = vpack.c.b16 %v503, %v502
      %v514 = vpack.c.b16 %v505, %v504
      %v515 = vpack.c.b16 %v507, %v506
      %524 = vmatpush.bf16.msra.mxu0 %v515
      %525 = vmatpush.bf16.msra.mxu0 %v514
      %526 = vmatpush.bf16.msra.mxu0 %v513
      %527 = vmatpush.bf16.msra.mxu0 %v512
      %528 = vmatpush.bf16.msra.mxu0 %v511
      %529 = vmatpush.bf16.msra.mxu0 %v510
      %530 = vmatpush.bf16.msra.mxu0 %v509
      %531 = vmatpush.bf16.msra.mxu0 %v508
      %532 = vmatmul.bf16.gmra.mxu0 %v444
      %v533 = vpop.f32.mrf.mxu0
      %v534 = vadd.f32 0.0, %v533
      %v535 = vpop.f32.mrf.mxu0
      %v536 = vadd.f32 0.0, %v535
      %537 = vmatmul.bf16.gmra.mxu0 %v445
      %v538 = vpop.f32.mrf.mxu0
      %v539 = vadd.f32 0.0, %v538
      %v540 = vpop.f32.mrf.mxu0
      %v541 = vadd.f32 0.0, %v540
      %542 = vmatmul.bf16.gmra.mxu0 %v446
      %v543 = vpop.f32.mrf.mxu0
      %v544 = vadd.f32 0.0, %v543
      %v545 = vpop.f32.mrf.mxu0
      %v546 = vadd.f32 0.0, %v545
      %547 = vmatmul.bf16.gmra.mxu0 %v447
      %v548 = vpop.f32.mrf.mxu0
      %v549 = vadd.f32 0.0, %v548
      %v550 = vpop.f32.mrf.mxu0
      %v551 = vadd.f32 0.0, %v550
      %552 = vmatmul.bf16.gmra.mxu0 %v448
      %v553 = vpop.f32.mrf.mxu0
      %v554 = vadd.f32 0.0, %v553
      %v555 = vpop.f32.mrf.mxu0
      %v556 = vadd.f32 0.0, %v555
      %557 = vmatmul.bf16.gmra.mxu0 %v449
      %v558 = vpop.f32.mrf.mxu0
      %v559 = vadd.f32 0.0, %v558
      %v560 = vpop.f32.mrf.mxu0
      %v561 = vadd.f32 0.0, %v560
      %562 = vmatmul.bf16.gmra.mxu0 %v450
      %v563 = vpop.f32.mrf.mxu0
      %v564 = vadd.f32 0.0, %v563
      %v565 = vpop.f32.mrf.mxu0
      %v566 = vadd.f32 0.0, %v565
      %567 = vmatmul.bf16.gmra.mxu0 %v451
      %v568 = vpop.f32.mrf.mxu0
      %v569 = vadd.f32 0.0, %v568
      %v570 = vpop.f32.mrf.mxu0
      %v571 = vadd.f32 0.0, %v570
      %572 = vmatmul.bf16.gmra.mxu0 %v452
      %v573 = vpop.f32.mrf.mxu0
      %v574 = vadd.f32 0.0, %v573
      %v575 = vpop.f32.mrf.mxu0
      %v576 = vadd.f32 0.0, %v575
      %577 = vmatmul.bf16.gmra.mxu0 %v453
      %v578 = vpop.f32.mrf.mxu0
      %v579 = vadd.f32 0.0, %v578
      %v580 = vpop.f32.mrf.mxu0
      %v581 = vadd.f32 0.0, %v580
      %582 = vmatmul.bf16.gmra.mxu0 %v454
      %v583 = vpop.f32.mrf.mxu0
      %v584 = vadd.f32 0.0, %v583
      %v585 = vpop.f32.mrf.mxu0
      %v586 = vadd.f32 0.0, %v585
      %587 = vmatmul.bf16.gmra.mxu0 %v455
      %v588 = vpop.f32.mrf.mxu0
      %v589 = vadd.f32 0.0, %v588
      %v590 = vpop.f32.mrf.mxu0
      %v591 = vadd.f32 0.0, %v590
      %592 = vmatmul.bf16.gmra.mxu0 %v456
      %v593 = vpop.f32.mrf.mxu0
      %v594 = vadd.f32 0.0, %v593
      %v595 = vpop.f32.mrf.mxu0
      %v596 = vadd.f32 0.0, %v595
      %597 = vmatmul.bf16.gmra.mxu0 %v457
      %v598 = vpop.f32.mrf.mxu0
      %v599 = vadd.f32 0.0, %v598
      %v600 = vpop.f32.mrf.mxu0
      %v601 = vadd.f32 0.0, %v600
      %602 = vmatmul.bf16.gmra.mxu0 %v458
      %v603 = vpop.f32.mrf.mxu0
      %v604 = vadd.f32 0.0, %v603
      %v605 = vpop.f32.mrf.mxu0
      %v606 = vadd.f32 0.0, %v605
      %607 = vmatmul.bf16.gmra.mxu0 %v459
      %v608 = vpop.f32.mrf.mxu0
      %v609 = vadd.f32 0.0, %v608
      %v610 = vpop.f32.mrf.mxu0
      %v611 = vadd.f32 0.0, %v610
      %612 = vdwg.mxu0
      %v613 = vpack.c.bf16 %v534, %v534
      %v614 = vpack.c.bf16 %v536, %v536
      %v615 = vpack.c.bf16 %v539, %v539
      %v616 = vpack.c.bf16 %v541, %v541
      %v617 = vpack.c.bf16 %v544, %v544
      %v618 = vpack.c.bf16 %v546, %v546
      %v619 = vpack.c.bf16 %v549, %v549
      %v620 = vpack.c.bf16 %v551, %v551
      %v621 = vpack.c.bf16 %v554, %v554
      %v622 = vpack.c.bf16 %v556, %v556
      %v623 = vpack.c.bf16 %v559, %v559
      %v624 = vpack.c.bf16 %v561, %v561
      %v625 = vpack.c.bf16 %v564, %v564
      %v626 = vpack.c.bf16 %v566, %v566
      %v627 = vpack.c.bf16 %v569, %v569
      %v628 = vpack.c.bf16 %v571, %v571
      %v629 = vpack.c.bf16 %v574, %v574
      %v630 = vpack.c.bf16 %v576, %v576
      %v631 = vpack.c.bf16 %v579, %v579
      %v632 = vpack.c.bf16 %v581, %v581
      %v633 = vpack.c.bf16 %v584, %v584
      %v634 = vpack.c.bf16 %v586, %v586
      %v635 = vpack.c.bf16 %v589, %v589
      %v636 = vpack.c.bf16 %v591, %v591
      %v637 = vpack.c.bf16 %v594, %v594
      %v638 = vpack.c.bf16 %v596, %v596
      %v639 = vpack.c.bf16 %v599, %v599
      %v640 = vpack.c.bf16 %v601, %v601
      %v641 = vpack.c.bf16 %v604, %v604
      %v642 = vpack.c.bf16 %v606, %v606
      %v643 = vpack.c.bf16 %v609, %v609
      %v644 = vpack.c.bf16 %v611, %v611
      %645 = vst [vmem:[%s266] sm:$0xf] %v613
      %646 = vst [vmem:[%s266 + $0x4] sm:$0xf] %v614
      %647 = vst [vmem:[%s266 + $0x8] sm:$0xf] %v615
      %648 = vst [vmem:[%s266 + $0xc] sm:$0xf] %v616
      %649 = vst [vmem:[%s266 + $0x10] sm:$0xf] %v617
      %650 = vst [vmem:[%s266 + $0x14] sm:$0xf] %v618
      %651 = vst [vmem:[%s266 + $0x18] sm:$0xf] %v619
      %652 = vst [vmem:[%s266 + $0x1c] sm:$0xf] %v620
      %653 = vst [vmem:[%s266 + $0x20] sm:$0xf] %v621
      %654 = vst [vmem:[%s266 + $0x24] sm:$0xf] %v622
      %655 = vst [vmem:[%s266 + $0x28] sm:$0xf] %v623
      %656 = vst [vmem:[%s266 + $0x2c] sm:$0xf] %v624
      %657 = vst [vmem:[%s266 + $0x30] sm:$0xf] %v625
      %658 = vst [vmem:[%s266 + $0x34] sm:$0xf] %v626
      %659 = vst [vmem:[%s266 + $0x38] sm:$0xf] %v627
      %660 = vst [vmem:[%s266 + $0x3c] sm:$0xf] %v628
      %661 = vst [vmem:[%s266 + $0x40] sm:$0xf] %v629
      %662 = vst [vmem:[%s266 + $0x44] sm:$0xf] %v630
      %663 = vst [vmem:[%s266 + $0x48] sm:$0xf] %v631
      %664 = vst [vmem:[%s266 + $0x4c] sm:$0xf] %v632
      %665 = vst [vmem:[%s266 + $0x50] sm:$0xf] %v633
      %666 = vst [vmem:[%s266 + $0x54] sm:$0xf] %v634
      %667 = vst [vmem:[%s266 + $0x58] sm:$0xf] %v635
      %668 = vst [vmem:[%s266 + $0x5c] sm:$0xf] %v636
      %669 = vst [vmem:[%s266 + $0x60] sm:$0xf] %v637
      %670 = vst [vmem:[%s266 + $0x64] sm:$0xf] %v638
      %671 = vst [vmem:[%s266 + $0x68] sm:$0xf] %v639
      %672 = vst [vmem:[%s266 + $0x6c] sm:$0xf] %v640
      %673 = vst [vmem:[%s266 + $0x70] sm:$0xf] %v641
      %674 = vst [vmem:[%s266 + $0x74] sm:$0xf] %v642
      %675 = vst [vmem:[%s266 + $0x78] sm:$0xf] %v643
      %676 = vst [vmem:[%s266 + $0x7c] sm:$0xf] %v644
      %v677 = vlaneseq
      %v678 = vshrl.u32 %v677, 7
      %v679 = vadd.s32 %v678, 8
      %v680 = vadd.s32 %v678, 16
      %v681 = vadd.s32 %v678, 24
      %v682 = vadd.s32 %v678, 32
      %v683 = vadd.s32 %v678, 40
      %v684 = vadd.s32 %v678, 48
      %v685 = vadd.s32 %v678, 56
      %v686 = vadd.s32 %v678, 64
      %v687 = vadd.s32 %v678, 72
      %v688 = vadd.s32 %v678, 80
      %v689 = vadd.s32 %v678, 88
      %v690 = vadd.s32 %v678, 96
      %v691 = vadd.s32 %v678, 104
      %v692 = vadd.s32 %v678, 112
      %v693 = vadd.s32 %v678, 120
      %v694 = vadd.s32 %v678, 128
      %v695 = vadd.s32 %v678, 136
      %v696 = vadd.s32 %v678, 144
      %v697 = vadd.s32 %v678, 152
      %v698 = vadd.s32 %v678, 160
      %v699 = vadd.s32 %v678, 168
      %v700 = vadd.s32 %v678, 176
      %v701 = vadd.s32 %v678, 184
      %v702 = vadd.s32 %v678, 192
      %v703 = vadd.s32 %v678, 200
      %v704 = vadd.s32 %v678, 208
      %v705 = vadd.s32 %v678, 216
      %v706 = vadd.s32 %v678, 224
      %v707 = vadd.s32 %v678, 232
      %v708 = vadd.s32 %v678, 240
      %v709 = vadd.s32 %v678, 248
      %s710 = smul.u32 %s18, 256
      %v711 = vstv %s710
      %v712 = vadd.s32 %v678, %v711
      %v713 = vadd.s32 %v679, %v711
      %v714 = vadd.s32 %v680, %v711
      %v715 = vadd.s32 %v681, %v711
      %v716 = vadd.s32 %v682, %v711
      %v717 = vadd.s32 %v683, %v711
      %v718 = vadd.s32 %v684, %v711
      %v719 = vadd.s32 %v685, %v711
      %v720 = vadd.s32 %v686, %v711
      %v721 = vadd.s32 %v687, %v711
      %v722 = vadd.s32 %v688, %v711
      %v723 = vadd.s32 %v689, %v711
      %v724 = vadd.s32 %v690, %v711
      %v725 = vadd.s32 %v691, %v711
      %v726 = vadd.s32 %v692, %v711
      %v727 = vadd.s32 %v693, %v711
      %v728 = vadd.s32 %v694, %v711
      %v729 = vadd.s32 %v695, %v711
      %v730 = vadd.s32 %v696, %v711
      %v731 = vadd.s32 %v697, %v711
      %v732 = vadd.s32 %v698, %v711
      %v733 = vadd.s32 %v699, %v711
      %v734 = vadd.s32 %v700, %v711
      %v735 = vadd.s32 %v701, %v711
      %v736 = vadd.s32 %v702, %v711
      %v737 = vadd.s32 %v703, %v711
      %v738 = vadd.s32 %v704, %v711
      %v739 = vadd.s32 %v705, %v711
      %v740 = vadd.s32 %v706, %v711
      %v741 = vadd.s32 %v707, %v711
      %v742 = vadd.s32 %v708, %v711
      %v743 = vadd.s32 %v709, %v711
      %vm744 = vcmp.lt.s32.totalorder %v712, 512
      %vm745 = vcmp.lt.s32.totalorder %v713, 512
      %vm746 = vcmp.lt.s32.totalorder %v714, 512
      %vm747 = vcmp.lt.s32.totalorder %v715, 512
      %vm748 = vcmp.lt.s32.totalorder %v716, 512
      %vm749 = vcmp.lt.s32.totalorder %v717, 512
      %vm750 = vcmp.lt.s32.totalorder %v718, 512
      %vm751 = vcmp.lt.s32.totalorder %v719, 512
      %vm752 = vcmp.lt.s32.totalorder %v720, 512
      %vm753 = vcmp.lt.s32.totalorder %v721, 512
      %vm754 = vcmp.lt.s32.totalorder %v722, 512
      %vm755 = vcmp.lt.s32.totalorder %v723, 512
      %vm756 = vcmp.lt.s32.totalorder %v724, 512
      %vm757 = vcmp.lt.s32.totalorder %v725, 512
      %vm758 = vcmp.lt.s32.totalorder %v726, 512
      %vm759 = vcmp.lt.s32.totalorder %v727, 512
      %vm760 = vcmp.lt.s32.totalorder %v728, 512
      %vm761 = vcmp.lt.s32.totalorder %v729, 512
      %vm762 = vcmp.lt.s32.totalorder %v730, 512
      %vm763 = vcmp.lt.s32.totalorder %v731, 512
      %vm764 = vcmp.lt.s32.totalorder %v732, 512
      %vm765 = vcmp.lt.s32.totalorder %v733, 512
      %vm766 = vcmp.lt.s32.totalorder %v734, 512
      %vm767 = vcmp.lt.s32.totalorder %v735, 512
      %vm768 = vcmp.lt.s32.totalorder %v736, 512
      %vm769 = vcmp.lt.s32.totalorder %v737, 512
      %vm770 = vcmp.lt.s32.totalorder %v738, 512
      %vm771 = vcmp.lt.s32.totalorder %v739, 512
      %vm772 = vcmp.lt.s32.totalorder %v740, 512
      %vm773 = vcmp.lt.s32.totalorder %v741, 512
      %vm774 = vcmp.lt.s32.totalorder %v742, 512
      %vm775 = vcmp.lt.s32.totalorder %v743, 512
      %v776 = vsel %vm744, 1, 0
      %v777 = vsel %vm745, 1, 0
      %v778 = vsel %vm746, 1, 0
      %v779 = vsel %vm747, 1, 0
      %v780 = vsel %vm748, 1, 0
      %v781 = vsel %vm749, 1, 0
      %v782 = vsel %vm750, 1, 0
      %v783 = vsel %vm751, 1, 0
      %v784 = vsel %vm752, 1, 0
      %v785 = vsel %vm753, 1, 0
      %v786 = vsel %vm754, 1, 0
      %v787 = vsel %vm755, 1, 0
      %v788 = vsel %vm756, 1, 0
      %v789 = vsel %vm757, 1, 0
      %v790 = vsel %vm758, 1, 0
      %v791 = vsel %vm759, 1, 0
      %v792 = vsel %vm760, 1, 0
      %v793 = vsel %vm761, 1, 0
      %v794 = vsel %vm762, 1, 0
      %v795 = vsel %vm763, 1, 0
      %v796 = vsel %vm764, 1, 0
      %v797 = vsel %vm765, 1, 0
      %v798 = vsel %vm766, 1, 0
      %v799 = vsel %vm767, 1, 0
      %v800 = vsel %vm768, 1, 0
      %v801 = vsel %vm769, 1, 0
      %v802 = vsel %vm770, 1, 0
      %v803 = vsel %vm771, 1, 0
      %v804 = vsel %vm772, 1, 0
      %v805 = vsel %vm773, 1, 0
      %v806 = vsel %vm774, 1, 0
      %v807 = vsel %vm775, 1, 0
      %v808 = vcvt.s32.f32 %v776
      %v809 = vcvt.s32.f32 %v777
      %v810 = vcvt.s32.f32 %v778
      %v811 = vcvt.s32.f32 %v779
      %v812 = vcvt.s32.f32 %v780
      %v813 = vcvt.s32.f32 %v781
      %v814 = vcvt.s32.f32 %v782
      %v815 = vcvt.s32.f32 %v783
      %v816 = vcvt.s32.f32 %v784
      %v817 = vcvt.s32.f32 %v785
      %v818 = vcvt.s32.f32 %v786
      %v819 = vcvt.s32.f32 %v787
      %v820 = vcvt.s32.f32 %v788
      %v821 = vcvt.s32.f32 %v789
      %v822 = vcvt.s32.f32 %v790
      %v823 = vcvt.s32.f32 %v791
      %v824 = vcvt.s32.f32 %v792
      %v825 = vcvt.s32.f32 %v793
      %v826 = vcvt.s32.f32 %v794
      %v827 = vcvt.s32.f32 %v795
      %v828 = vcvt.s32.f32 %v796
      %v829 = vcvt.s32.f32 %v797
      %v830 = vcvt.s32.f32 %v798
      %v831 = vcvt.s32.f32 %v799
      %v832 = vcvt.s32.f32 %v800
      %v833 = vcvt.s32.f32 %v801
      %v834 = vcvt.s32.f32 %v802
      %v835 = vcvt.s32.f32 %v803
      %v836 = vcvt.s32.f32 %v804
      %v837 = vcvt.s32.f32 %v805
      %v838 = vcvt.s32.f32 %v806
      %v839 = vcvt.s32.f32 %v807
      %v840 = vmul.f32 %v534, %v808
      %v841 = vmul.f32 %v536, %v809
      %v842 = vmul.f32 %v539, %v810
      %v843 = vmul.f32 %v541, %v811
      %v844 = vmul.f32 %v544, %v812
      %v845 = vmul.f32 %v546, %v813
      %v846 = vmul.f32 %v549, %v814
      %v847 = vmul.f32 %v551, %v815
      %v848 = vmul.f32 %v554, %v816
      %v849 = vmul.f32 %v556, %v817
      %v850 = vmul.f32 %v559, %v818
      %v851 = vmul.f32 %v561, %v819
      %v852 = vmul.f32 %v564, %v820
      %v853 = vmul.f32 %v566, %v821
      %v854 = vmul.f32 %v569, %v822
      %v855 = vmul.f32 %v571, %v823
      %v856 = vmul.f32 %v574, %v824
      %v857 = vmul.f32 %v576, %v825
      %v858 = vmul.f32 %v579, %v826
      %v859 = vmul.f32 %v581, %v827
      %v860 = vmul.f32 %v584, %v828
      %v861 = vmul.f32 %v586, %v829
      %v862 = vmul.f32 %v589, %v830
      %v863 = vmul.f32 %v591, %v831
      %v864 = vmul.f32 %v594, %v832
      %v865 = vmul.f32 %v596, %v833
      %v866 = vmul.f32 %v599, %v834
      %v867 = vmul.f32 %v601, %v835
      %v868 = vmul.f32 %v604, %v836
      %v869 = vmul.f32 %v606, %v837
      %v870 = vmul.f32 %v609, %v838
      %v871 = vmul.f32 %v611, %v839
      %v872 = vadd.f32 %v840, %v841
      %v873 = vadd.f32 %v872, %v842
      %v874 = vadd.f32 %v873, %v843
      %v875 = vadd.f32 %v874, %v844
      %v876 = vadd.f32 %v875, %v845
      %v877 = vadd.f32 %v876, %v846
      %v878 = vadd.f32 %v877, %v847
      %v879 = vadd.f32 %v878, %v848
      %v880 = vadd.f32 %v879, %v849
      %v881 = vadd.f32 %v880, %v850
      %v882 = vadd.f32 %v881, %v851
      %v883 = vadd.f32 %v882, %v852
      %v884 = vadd.f32 %v883, %v853
      %v885 = vadd.f32 %v884, %v854
      %v886 = vadd.f32 %v885, %v855
      %v887 = vadd.f32 %v886, %v856
      %v888 = vadd.f32 %v887, %v857
      %v889 = vadd.f32 %v888, %v858
      %v890 = vadd.f32 %v889, %v859
      %v891 = vadd.f32 %v890, %v860
      %v892 = vadd.f32 %v891, %v861
      %v893 = vadd.f32 %v892, %v862
      %v894 = vadd.f32 %v893, %v863
      %v895 = vadd.f32 %v894, %v864
      %v896 = vadd.f32 %v895, %v865
      %v897 = vadd.f32 %v896, %v866
      %v898 = vadd.f32 %v897, %v867
      %v899 = vadd.f32 %v898, %v868
      %v900 = vadd.f32 %v899, %v869
      %v901 = vadd.f32 %v900, %v870
      %v902 = vadd.f32 %v901, %v871
      %v903 = vrot.slane %v902, 4
      %v904 = vadd.f32 %v902, %v903
      %v905 = vrot.slane %v904, 2
      %v906 = vadd.f32 %v904, %v905
      %v907 = vrot.slane %v906, 1
      %v908 = vadd.f32 %v906, %v907
      %vm909 = vcmask 7168
      %v910 = vsel %vm909, %v808, 0.0
      %v911 = vsel %vm909, %v809, 0.0
      %v912 = vadd.f32 %v910, %v911
      %v913 = vsel %vm909, %v810, 0.0
      %v914 = vadd.f32 %v912, %v913
      %v915 = vsel %vm909, %v811, 0.0
      %v916 = vadd.f32 %v914, %v915
      %v917 = vsel %vm909, %v812, 0.0
      %v918 = vadd.f32 %v916, %v917
      %v919 = vsel %vm909, %v813, 0.0
      %v920 = vadd.f32 %v918, %v919
      %v921 = vsel %vm909, %v814, 0.0
      %v922 = vadd.f32 %v920, %v921
      %v923 = vsel %vm909, %v815, 0.0
      %v924 = vadd.f32 %v922, %v923
      %v925 = vsel %vm909, %v816, 0.0
      %v926 = vadd.f32 %v924, %v925
      %v927 = vsel %vm909, %v817, 0.0
      %v928 = vadd.f32 %v926, %v927
      %v929 = vsel %vm909, %v818, 0.0
      %v930 = vadd.f32 %v928, %v929
      %v931 = vsel %vm909, %v819, 0.0
      %v932 = vadd.f32 %v930, %v931
      %v933 = vsel %vm909, %v820, 0.0
      %v934 = vadd.f32 %v932, %v933
      %v935 = vsel %vm909, %v821, 0.0
      %v936 = vadd.f32 %v934, %v935
      %v937 = vsel %vm909, %v822, 0.0
      %v938 = vadd.f32 %v936, %v937
      %v939 = vsel %vm909, %v823, 0.0
      %v940 = vadd.f32 %v938, %v939
      %v941 = vsel %vm909, %v824, 0.0
      %v942 = vadd.f32 %v940, %v941
      %v943 = vsel %vm909, %v825, 0.0
      %v944 = vadd.f32 %v942, %v943
      %v945 = vsel %vm909, %v826, 0.0
      %v946 = vadd.f32 %v944, %v945
      %v947 = vsel %vm909, %v827, 0.0
      %v948 = vadd.f32 %v946, %v947
      %v949 = vsel %vm909, %v828, 0.0
      %v950 = vadd.f32 %v948, %v949
      %v951 = vsel %vm909, %v829, 0.0
      %v952 = vadd.f32 %v950, %v951
      %v953 = vsel %vm909, %v830, 0.0
      %v954 = vadd.f32 %v952, %v953
      %v955 = vsel %vm909, %v831, 0.0
      %v956 = vadd.f32 %v954, %v955
      %v957 = vsel %vm909, %v832, 0.0
      %v958 = vadd.f32 %v956, %v957
      %v959 = vsel %vm909, %v833, 0.0
      %v960 = vadd.f32 %v958, %v959
      %v961 = vsel %vm909, %v834, 0.0
      %v962 = vadd.f32 %v960, %v961
      %v963 = vsel %vm909, %v835, 0.0
      %v964 = vadd.f32 %v962, %v963
      %v965 = vsel %vm909, %v836, 0.0
      %v966 = vadd.f32 %v964, %v965
      %v967 = vsel %vm909, %v837, 0.0
      %v968 = vadd.f32 %v966, %v967
      %v969 = vsel %vm909, %v838, 0.0
      %v970 = vadd.f32 %v968, %v969
      %v971 = vsel %vm909, %v839, 0.0
      %v972 = vadd.f32 %v970, %v971
      %973 = vadd.xlane.f32.xlu0 %v972
      %v974 = vpop.xlane.xlu0 %973
      %v975 = vrot.slane %v974, 4
      %v976 = vadd.f32 %v974, %v975
      %v977 = vrot.slane %v976, 2
      %v978 = vadd.f32 %v976, %v977
      %v979 = vrot.slane %v978, 1
      %v980 = vadd.f32 %v978, %v979
      %s981 = vtos %v980
      %s982 = smax.f32 %s981, 1.0
      %v983 = vstv %s982
      %v984 = vrcp.pop %v983
      %v985 = vmul.f32 %v983, %v984
      %v986 = vsub.f32 1.0, %v985
      %v987 = vmul.f32 %v984, %v986
      %v988 = vadd.f32 %v984, %v987
      %vm989 = vweird.f32 %v983
      %vm990 = vweird.f32 %v984
      %vm991 = vmor %vm989, %vm990
      %v992 = vsel %vm991, %v984, %v988
      %v993 = vand.u32 2147483647, %v983
      %vm994 = vcmp.eq.f32.partialorder %v993, 8.507059e+37
      %v995 = vand.u32 %v983, 2147483648
      %v996 = vor.u32 1.1754944e-38, %v995
      %v997 = vsel %vm994, %v996, %v992
      %v998 = vmul.f32 %v908, %v997
      %v999 = vsub.f32 %v534, %v998
      %v1000 = vsub.f32 %v536, %v998
      %v1001 = vsub.f32 %v539, %v998
      %v1002 = vsub.f32 %v541, %v998
      %v1003 = vsub.f32 %v544, %v998
      %v1004 = vsub.f32 %v546, %v998
      %v1005 = vsub.f32 %v549, %v998
      %v1006 = vsub.f32 %v551, %v998
      %v1007 = vsub.f32 %v554, %v998
      %v1008 = vsub.f32 %v556, %v998
      %v1009 = vsub.f32 %v559, %v998
      %v1010 = vsub.f32 %v561, %v998
      %v1011 = vsub.f32 %v564, %v998
      %v1012 = vsub.f32 %v566, %v998
      %v1013 = vsub.f32 %v569, %v998
      %v1014 = vsub.f32 %v571, %v998
      %v1015 = vsub.f32 %v574, %v998
      %v1016 = vsub.f32 %v576, %v998
      %v1017 = vsub.f32 %v579, %v998
      %v1018 = vsub.f32 %v581, %v998
      %v1019 = vsub.f32 %v584, %v998
      %v1020 = vsub.f32 %v586, %v998
      %v1021 = vsub.f32 %v589, %v998
      %v1022 = vsub.f32 %v591, %v998
      %v1023 = vsub.f32 %v594, %v998
      %v1024 = vsub.f32 %v596, %v998
      %v1025 = vsub.f32 %v599, %v998
      %v1026 = vsub.f32 %v601, %v998
      %v1027 = vsub.f32 %v604, %v998
      %v1028 = vsub.f32 %v606, %v998
      %v1029 = vsub.f32 %v609, %v998
      %v1030 = vsub.f32 %v611, %v998
      %v1031 = vmul.f32 %v999, %v808
      %v1032 = vmul.f32 %v1000, %v809
      %v1033 = vmul.f32 %v1001, %v810
      %v1034 = vmul.f32 %v1002, %v811
      %v1035 = vmul.f32 %v1003, %v812
      %v1036 = vmul.f32 %v1004, %v813
      %v1037 = vmul.f32 %v1005, %v814
      %v1038 = vmul.f32 %v1006, %v815
      %v1039 = vmul.f32 %v1007, %v816
      %v1040 = vmul.f32 %v1008, %v817
      %v1041 = vmul.f32 %v1009, %v818
      %v1042 = vmul.f32 %v1010, %v819
      %v1043 = vmul.f32 %v1011, %v820
      %v1044 = vmul.f32 %v1012, %v821
      %v1045 = vmul.f32 %v1013, %v822
      %v1046 = vmul.f32 %v1014, %v823
      %v1047 = vmul.f32 %v1015, %v824
      %v1048 = vmul.f32 %v1016, %v825
      %v1049 = vmul.f32 %v1017, %v826
      %v1050 = vmul.f32 %v1018, %v827
      %v1051 = vmul.f32 %v1019, %v828
      %v1052 = vmul.f32 %v1020, %v829
      %v1053 = vmul.f32 %v1021, %v830
      %v1054 = vmul.f32 %v1022, %v831
      %v1055 = vmul.f32 %v1023, %v832
      %v1056 = vmul.f32 %v1024, %v833
      %v1057 = vmul.f32 %v1025, %v834
      %v1058 = vmul.f32 %v1026, %v835
      %v1059 = vmul.f32 %v1027, %v836
      %v1060 = vmul.f32 %v1028, %v837
      %v1061 = vmul.f32 %v1029, %v838
      %v1062 = vmul.f32 %v1030, %v839
      %v1063 = vmul.f32 %v1031, %v1031
      %v1064 = vmul.f32 %v1032, %v1032
      %v1065 = vmul.f32 %v1033, %v1033
      %v1066 = vmul.f32 %v1034, %v1034
      %v1067 = vmul.f32 %v1035, %v1035
      %v1068 = vmul.f32 %v1036, %v1036
      %v1069 = vmul.f32 %v1037, %v1037
      %v1070 = vmul.f32 %v1038, %v1038
      %v1071 = vmul.f32 %v1039, %v1039
      %v1072 = vmul.f32 %v1040, %v1040
      %v1073 = vmul.f32 %v1041, %v1041
      %v1074 = vmul.f32 %v1042, %v1042
      %v1075 = vmul.f32 %v1043, %v1043
      %v1076 = vmul.f32 %v1044, %v1044
      %v1077 = vmul.f32 %v1045, %v1045
      %v1078 = vmul.f32 %v1046, %v1046
      %v1079 = vmul.f32 %v1047, %v1047
      %v1080 = vmul.f32 %v1048, %v1048
      %v1081 = vmul.f32 %v1049, %v1049
      %v1082 = vmul.f32 %v1050, %v1050
      %v1083 = vmul.f32 %v1051, %v1051
      %v1084 = vmul.f32 %v1052, %v1052
      %v1085 = vmul.f32 %v1053, %v1053
      %v1086 = vmul.f32 %v1054, %v1054
      %v1087 = vmul.f32 %v1055, %v1055
      %v1088 = vmul.f32 %v1056, %v1056
      %v1089 = vmul.f32 %v1057, %v1057
      %v1090 = vmul.f32 %v1058, %v1058
      %v1091 = vmul.f32 %v1059, %v1059
      %v1092 = vmul.f32 %v1060, %v1060
      %v1093 = vmul.f32 %v1061, %v1061
      %v1094 = vmul.f32 %v1062, %v1062
      %v1095 = vadd.f32 %v1063, %v1064
      %v1096 = vadd.f32 %v1095, %v1065
      %v1097 = vadd.f32 %v1096, %v1066
      %v1098 = vadd.f32 %v1097, %v1067
      %v1099 = vadd.f32 %v1098, %v1068
      %v1100 = vadd.f32 %v1099, %v1069
      %v1101 = vadd.f32 %v1100, %v1070
      %v1102 = vadd.f32 %v1101, %v1071
      %v1103 = vadd.f32 %v1102, %v1072
      %v1104 = vadd.f32 %v1103, %v1073
      %v1105 = vadd.f32 %v1104, %v1074
      %v1106 = vadd.f32 %v1105, %v1075
      %v1107 = vadd.f32 %v1106, %v1076
      %v1108 = vadd.f32 %v1107, %v1077
      %v1109 = vadd.f32 %v1108, %v1078
      %v1110 = vadd.f32 %v1109, %v1079
      %v1111 = vadd.f32 %v1110, %v1080
      %v1112 = vadd.f32 %v1111, %v1081
      %v1113 = vadd.f32 %v1112, %v1082
      %v1114 = vadd.f32 %v1113, %v1083
      %v1115 = vadd.f32 %v1114, %v1084
      %v1116 = vadd.f32 %v1115, %v1085
      %v1117 = vadd.f32 %v1116, %v1086
      %v1118 = vadd.f32 %v1117, %v1087
      %v1119 = vadd.f32 %v1118, %v1088
      %v1120 = vadd.f32 %v1119, %v1089
      %v1121 = vadd.f32 %v1120, %v1090
      %v1122 = vadd.f32 %v1121, %v1091
      %v1123 = vadd.f32 %v1122, %v1092
      %v1124 = vadd.f32 %v1123, %v1093
      %v1125 = vadd.f32 %v1124, %v1094
      %v1126 = vrot.slane %v1125, 4
      %v1127 = vadd.f32 %v1125, %v1126
      %v1128 = vrot.slane %v1127, 2
      %v1129 = vadd.f32 %v1127, %v1128
      %v1130 = vrot.slane %v1129, 1
      %v1131 = vadd.f32 %v1129, %v1130
      %1132 = vst [vmem:[%s271] sm:$0xff] %v908
      %1133 = vst [vmem:[%s275] sm:$0xff] %v1131
      %s1134 = smul.u32 32, %s18
      %p1135 = scmp.lt.s32.totalorder %s1134, 63
      %s1136 = scalar_select %p1135, %s1134, 63
      %s1137 = smul.addr %s1136, 4
      %s1138 = scalar_lea.vmem %s4, %s1137
      %p1139 = scmp.lt.s32.totalorder %s18, 1
      %s1140 = scalar_select %p1139, %s18, 1
      %s1141 = smul.addr %s1140, 8
      %s1142 = scalar_lea.vmem %s5, %s1141
      %p1143 = scmp.lt.s32.totalorder %s18, 1
      %s1144 = scalar_select %p1143, %s18, 1
      %s1145 = smul.addr %s1144, 8
      %s1146 = scalar_lea.vmem %s6, %s1145
      // Predicated region
      $region37: #{resblock50_forward.6} parent=35 // pred_check
        %p1147 = pneg %p125
      $region38: #{resblock50_forward.6} parent=35 // pred_check_branch
        %1149 = sbr.rel (%p1147) target = $region40
      $region39: #{resblock50_forward.6} parent=35 // pred_region
        %s1150 = smul.u32 32, %s18
      $region40: #{resblock50_forward.6} parent=35 // pred_fallthru
        _
      // Predicated region
      $region41: #{resblock50_forward.6} parent=35 // pred_check
        %p1151 = pneg %p151
      $region42: #{resblock50_forward.6} parent=35 // pred_check_branch
        %1153 = sbr.rel (%p1151) target = $region44
      $region43: #{resblock50_forward.6} parent=35 // pred_region
        _
      $region44: #{resblock50_forward.6} parent=35 // pred_fallthru
        _
      // Predicated region
      $region45: #{resblock50_forward.6} parent=35 // pred_check
        %p1154 = pneg %p177
      $region46: #{resblock50_forward.6} parent=35 // pred_check_branch
        %1156 = sbr.rel (%p1154) target = $region48
      $region47: #{resblock50_forward.6} parent=35 // pred_region
        _
      $region48: #{resblock50_forward.6} parent=35 // pred_fallthru
        _
    $region36: #{resblock50_forward.6} parent=5 // pred_fallthru
      _
    %p1157 = scmp.le.s32.totalorder 2, %s13
    // Predicated region
    $region49: #{resblock50_forward.6} parent=5 // pred_check
      %p1158 = pneg %p1157
    $region50: #{resblock50_forward.6} parent=5 // pred_check_branch
      %1160 = sbr.rel (%p1158) target = $region52
    $region51: #{resblock50_forward.6} parent=5 // pred_region
      %s1161 = ssub.s32 %s13, 2
      // Predicated region
      $region53: #{resblock50_forward.6} parent=51 // pred_check
        %p1162 = pneg %p131
      $region54: #{resblock50_forward.6} parent=51 // pred_check_branch
        %1164 = sbr.rel (%p1162) target = $region56
      $region55: #{resblock50_forward.6} parent=51 // pred_region
        %s1165 = smul.u32 32, %s19
        %p1166 = scmp.lt.s32.totalorder %s1165, 63
        %s1167 = scalar_select %p1166, %s1165, 63
        %s1168 = smul.addr %s1167, 4
        %s1169 = scalar_lea.vmem %s4, %s1168
      $region56: #{resblock50_forward.6} parent=51 // pred_fallthru
        _
      // Predicated region
      $region57: #{resblock50_forward.6} parent=51 // pred_check
        %p1170 = pneg %p157
      $region58: #{resblock50_forward.6} parent=51 // pred_check_branch
        %1172 = sbr.rel (%p1170) target = $region60
      $region59: #{resblock50_forward.6} parent=51 // pred_region
        %p1173 = scmp.lt.s32.totalorder %s19, 1
        %s1174 = scalar_select %p1173, %s19, 1
        %s1175 = smul.addr %s1174, 8
        %s1176 = scalar_lea.vmem %s5, %s1175
      $region60: #{resblock50_forward.6} parent=51 // pred_fallthru
        _
      // Predicated region
      $region61: #{resblock50_forward.6} parent=51 // pred_check
        %p1177 = pneg %p183
      $region62: #{resblock50_forward.6} parent=51 // pred_check_branch
        %1179 = sbr.rel (%p1177) target = $region64
      $region63: #{resblock50_forward.6} parent=51 // pred_region
        %p1180 = scmp.lt.s32.totalorder %s19, 1
        %s1181 = scalar_select %p1180, %s19, 1
        %s1182 = smul.addr %s1181, 8
        %s1183 = scalar_lea.vmem %s6, %s1182
      $region64: #{resblock50_forward.6} parent=51 // pred_fallthru
        _
    $region52: #{resblock50_forward.6} parent=5 // pred_fallthru
      _
  $region6: #{resblock50_forward.6} parent=0 // loop_footer
    %s17 = sadd.s32 1, %s13
  $region7: #{resblock50_forward.6} parent=0 // loop_footer_branch
    %12 = sbr.rel target = $region3
  $region8: #{resblock50_forward.6} parent=0 // loop_exit
    _

// kernel: resblock50_forward.9
$region0: #{resblock50_forward.9}
  #allocation0 [shape = 'u32[]', space=smem, size = 0x4, offset = 0x4, fixed_abs, tag = 'smem constant byte address 0x4 - core index']
  #allocation1 [shape = 'u32[72,128]{1,0:T(1,128)}', space=vmem, size = 0x9000, scoped, tag = 'internal scratch']
  %s0 = inlined_call_operand.vmem [shape: bf16[128,128], index: 0, kind: input, shape index: {}]
  %s1 = inlined_call_operand.vmem [shape: f32[1,128], index: 1, kind: input, shape index: {}]
  %s2 = inlined_call_operand.vmem [shape: f32[1,128], index: 2, kind: input, shape index: {}]
  %s3 = inlined_call_operand.vmem [shape: bf16[128,128], index: 3, kind: input, shape index: {}]
  %s4 = inlined_call_operand.vmem [shape: bf16[128,128], index: 4, kind: input, shape index: {}]
  %s5 = inlined_call_operand.vmem [shape: f32[1,128], index: 5, kind: input, shape index: {}]
  %s6 = inlined_call_operand.vmem [shape: f32[1,128], index: 6, kind: input, shape index: {}]
  %s7 = inlined_call_operand.hbm [shape: f32[128,128], index: 7, kind: output, shape index: {}]
  %s8 = sld [smem:[#allocation0]]
  $region61: #{resblock50_forward.9} parent=0
    _
  %s10 = ssub.s32 1, %s8
  %s11 = scalar_select 0, %s10, %s8
  $region1: #{resblock50_forward.9} parent=0
    #allocation2 [shape = 'u8[65536]{0}', space=vmem, size = 0x10000, scoped, tag = 'output window, operand 0']
    #allocation3 [shape = 's32[2]{0}', space=sflag, size = 0x8, scoped, tag = 'scoped memory for resblock50_forward.9']
    %12 = vsyncpa [#allocation3], 0
    %s13 = scalar_lea.sflag [#allocation3], 1
    %14 = vsyncpa %s13, 0
    loop: start=0, step=1, limit=4
    $region2: #{resblock50_forward.9} parent=1 // loop_pre_header
      _
    $region3: #{resblock50_forward.9} parent=1 // loop_header
      %s16 = sphi 0, %s20
      %p17 = scmp.ge.s32.totalorder %s16, 4
      %s26 = sphi 0, %s28
      %s29 = sphi 0, %s26
      %s30 = sphi 0, %s29
      %s46 = sphi 0, %s30
      %s50 = sphi 0, %s50
      %s52 = sphi 0, %s50
      %s53 = sphi 0, %s52
      %s67 = sphi 0, %s53
      %s71 = sphi 0, %s71
      %s73 = sphi 0, %s71
      %s74 = sphi 0, %s73
      %s88 = sphi 0, %s74
      %s92 = sphi 0, %s92
      %s94 = sphi 0, %s92
      %s95 = sphi 0, %s94
      %s109 = sphi 0, %s95
      %s115 = sphi 0, %s117
      %s118 = sphi 0, %s115
      %s119 = sphi 0, %s118
      %s135 = sphi 0, %s119
      %s139 = sphi 0, %s139
      %s141 = sphi 0, %s139
      %s142 = sphi 0, %s141
      %s156 = sphi 0, %s142
      %s160 = sphi 0, %s160
      %s162 = sphi 0, %s160
      %s163 = sphi 0, %s162
      %s177 = sphi 0, %s163
      %s183 = sphi 0, %s185
      %s186 = sphi 0, %s183
      %s187 = sphi 0, %s186
      %s203 = sphi 0, %s187
    $region4: #{resblock50_forward.9} parent=1 // loop_header_branch
      %19 = sbr.rel (%p17) target = $region8
    $region5: #{resblock50_forward.9} parent=1 // loop_body
      %s21 = ssub.s32 %s16, 1
      %s22 = ssub.s32 %s16, 2
      %s23 = sadd.s32 %s16, 1
      %s24 = ssub.s32 %s16, %s23
      %p25 = scmp.eq.s32.totalorder %s24, 0
      %s27 = sadd.s32 %s26, 1
      %s28 = scalar_select %p25, %s26, %s27
      %p31 = pneg %p25
      %p32 = scmp.eq.s32.totalorder %s16, 1
      %p33 = por %p31, %p32
      %p34 = scmp.ne.s32.totalorder %s26, %s29
      %p35 = scmp.eq.s32.totalorder %s16, 0
      %p36 = por %p34, %p35
      %p37 = scmp.ne.s32.totalorder %s26, %s29
      %p38 = scmp.eq.s32.totalorder %s21, 1
      %p39 = por %p37, %p38
      %p40 = scmp.ne.s32.totalorder %s29, %s30
      %p41 = scmp.eq.s32.totalorder %s21, 0
      %p42 = por %p40, %p41
      %p43 = scmp.ne.s32.totalorder %s29, %s30
      %p44 = scmp.eq.s32.totalorder %s22, 1
      %p45 = por %p43, %p44
      %p47 = scmp.ne.s32.totalorder %s30, %s46
      %p48 = scmp.eq.s32.totalorder %s22, 0
      %p49 = por %p47, %p48
      %s51 = sadd.s32 %s50, 1
      %p54 = scmp.eq.s32.totalorder %s16, 1
      %p55 = scmp.ne.s32.totalorder %s50, %s52
      %p56 = scmp.eq.s32.totalorder %s16, 0
      %p57 = por %p55, %p56
      %p58 = scmp.ne.s32.totalorder %s50, %s52
      %p59 = scmp.eq.s32.totalorder %s21, 1
      %p60 = por %p58, %p59
      %p61 = scmp.ne.s32.totalorder %s52, %s53
      %p62 = scmp.eq.s32.totalorder %s21, 0
      %p63 = por %p61, %p62
      %p64 = scmp.ne.s32.totalorder %s52, %s53
      %p65 = scmp.eq.s32.totalorder %s22, 1
      %p66 = por %p64, %p65
      %p68 = scmp.ne.s32.totalorder %s53, %s67
      %p69 = scmp.eq.s32.totalorder %s22, 0
      %p70 = por %p68, %p69
      %s72 = sadd.s32 %s71, 1
      %p75 = scmp.eq.s32.totalorder %s16, 1
      %p76 = scmp.ne.s32.totalorder %s71, %s73
      %p77 = scmp.eq.s32.totalorder %s16, 0
      %p78 = por %p76, %p77
      %p79 = scmp.ne.s32.totalorder %s71, %s73
      %p80 = scmp.eq.s32.totalorder %s21, 1
      %p81 = por %p79, %p80
      %p82 = scmp.ne.s32.totalorder %s73, %s74
      %p83 = scmp.eq.s32.totalorder %s21, 0
      %p84 = por %p82, %p83
      %p85 = scmp.ne.s32.totalorder %s73, %s74
      %p86 = scmp.eq.s32.totalorder %s22, 1
      %p87 = por %p85, %p86
      %p89 = scmp.ne.s32.totalorder %s74, %s88
      %p90 = scmp.eq.s32.totalorder %s22, 0
      %p91 = por %p89, %p90
      %s93 = sadd.s32 %s92, 1
      %p96 = scmp.eq.s32.totalorder %s16, 1
      %p97 = scmp.ne.s32.totalorder %s92, %s94
      %p98 = scmp.eq.s32.totalorder %s16, 0
      %p99 = por %p97, %p98
      %p100 = scmp.ne.s32.totalorder %s92, %s94
      %p101 = scmp.eq.s32.totalorder %s21, 1
      %p102 = por %p100, %p101
      %p103 = scmp.ne.s32.totalorder %s94, %s95
      %p104 = scmp.eq.s32.totalorder %s21, 0
      %p105 = por %p103, %p104
      %p106 = scmp.ne.s32.totalorder %s94, %s95
      %p107 = scmp.eq.s32.totalorder %s22, 1
      %p108 = por %p106, %p107
      %p110 = scmp.ne.s32.totalorder %s95, %s109
      %p111 = scmp.eq.s32.totalorder %s22, 0
      %p112 = por %p110, %p111
      %s113 = ssub.s32 %s16, %s23
      %p114 = scmp.eq.s32.totalorder %s113, 0
      %s116 = sadd.s32 %s115, 1
      %s117 = scalar_select %p114, %s115, %s116
      %p120 = pneg %p114
      %p121 = scmp.eq.s32.totalorder %s16, 1
      %p122 = por %p120, %p121
      %p123 = scmp.ne.s32.totalorder %s115, %s118
      %p124 = scmp.eq.s32.totalorder %s16, 0
      %p125 = por %p123, %p124
      %p126 = scmp.ne.s32.totalorder %s115, %s118
      %p127 = scmp.eq.s32.totalorder %s21, 1
      %p128 = por %p126, %p127
      %p129 = scmp.ne.s32.totalorder %s118, %s119
      %p130 = scmp.eq.s32.totalorder %s21, 0
      %p131 = por %p129, %p130
      %p132 = scmp.ne.s32.totalorder %s118, %s119
      %p133 = scmp.eq.s32.totalorder %s22, 1
      %p134 = por %p132, %p133
      %p136 = scmp.ne.s32.totalorder %s119, %s135
      %p137 = scmp.eq.s32.totalorder %s22, 0
      %p138 = por %p136, %p137
      %s140 = sadd.s32 %s139, 1
      %p143 = scmp.eq.s32.totalorder %s16, 1
      %p144 = scmp.ne.s32.totalorder %s139, %s141
      %p145 = scmp.eq.s32.totalorder %s16, 0
      %p146 = por %p144, %p145
      %p147 = scmp.ne.s32.totalorder %s139, %s141
      %p148 = scmp.eq.s32.totalorder %s21, 1
      %p149 = por %p147, %p148
      %p150 = scmp.ne.s32.totalorder %s141, %s142
      %p151 = scmp.eq.s32.totalorder %s21, 0
      %p152 = por %p150, %p151
      %p153 = scmp.ne.s32.totalorder %s141, %s142
      %p154 = scmp.eq.s32.totalorder %s22, 1
      %p155 = por %p153, %p154
      %p157 = scmp.ne.s32.totalorder %s142, %s156
      %p158 = scmp.eq.s32.totalorder %s22, 0
      %p159 = por %p157, %p158
      %s161 = sadd.s32 %s160, 1
      %p164 = scmp.eq.s32.totalorder %s16, 1
      %p165 = scmp.ne.s32.totalorder %s160, %s162
      %p166 = scmp.eq.s32.totalorder %s16, 0
      %p167 = por %p165, %p166
      %p168 = scmp.ne.s32.totalorder %s160, %s162
      %p169 = scmp.eq.s32.totalorder %s21, 1
      %p170 = por %p168, %p169
      %p171 = scmp.ne.s32.totalorder %s162, %s163
      %p172 = scmp.eq.s32.totalorder %s21, 0
      %p173 = por %p171, %p172
      %p174 = scmp.ne.s32.totalorder %s162, %s163
      %p175 = scmp.eq.s32.totalorder %s22, 1
      %p176 = por %p174, %p175
      %p178 = scmp.ne.s32.totalorder %s163, %s177
      %p179 = scmp.eq.s32.totalorder %s22, 0
      %p180 = por %p178, %p179
      %s181 = ssub.s32 %s16, %s23
      %p182 = scmp.eq.s32.totalorder %s181, 0
      %s184 = sadd.s32 %s183, 1
      %s185 = scalar_select %p182, %s183, %s184
      %p188 = pneg %p182
      %p189 = scmp.eq.s32.totalorder %s16, 1
      %p190 = por %p188, %p189
      %p191 = scmp.ne.s32.totalorder %s183, %s186
      %p192 = scmp.eq.s32.totalorder %s16, 0
      %p193 = por %p191, %p192
      %p194 = scmp.ne.s32.totalorder %s183, %s186
      %p195 = scmp.eq.s32.totalorder %s21, 1
      %p196 = por %p194, %p195
      %p197 = scmp.ne.s32.totalorder %s186, %s187
      %p198 = scmp.eq.s32.totalorder %s21, 0
      %p199 = por %p197, %p198
      %p200 = scmp.ne.s32.totalorder %s186, %s187
      %p201 = scmp.eq.s32.totalorder %s22, 1
      %p202 = por %p200, %p201
      %p204 = scmp.ne.s32.totalorder %s187, %s203
      %p205 = scmp.eq.s32.totalorder %s22, 0
      %p206 = por %p204, %p205
      %p207 = scmp.le.s32.totalorder 1, %s16
      %p208 = scmp.lt.s32.totalorder %s16, 3
      %p209 = pnand %p207, %p208
      %p210 = pneg %p209
      // Predicated region
      $region9: #{resblock50_forward.9} parent=5 // pred_check
        _
      $region10: #{resblock50_forward.9} parent=5 // pred_check_branch
        %212 = sbr.rel (%p209) target = $region12
      $region11: #{resblock50_forward.9} parent=5 // pred_region
        %s213 = ssub.s32 %s16, 1
        // Predicated region
        $region13: #{resblock50_forward.9} parent=11 // pred_check
          %p214 = pneg %p63
        $region14: #{resblock50_forward.9} parent=11 // pred_check_branch
          %216 = sbr.rel (%p214) target = $region16
        $region15: #{resblock50_forward.9} parent=11 // pred_region
          _
        $region16: #{resblock50_forward.9} parent=11 // pred_fallthru
          _
        // Predicated region
        $region17: #{resblock50_forward.9} parent=11 // pred_check
          %p217 = pneg %p84
        $region18: #{resblock50_forward.9} parent=11 // pred_check_branch
          %219 = sbr.rel (%p217) target = $region20
        $region19: #{resblock50_forward.9} parent=11 // pred_region
          _
        $region20: #{resblock50_forward.9} parent=11 // pred_fallthru
          _
        // Predicated region
        $region21: #{resblock50_forward.9} parent=11 // pred_check
          %p220 = pneg %p105
        $region22: #{resblock50_forward.9} parent=11 // pred_check_branch
          %222 = sbr.rel (%p220) target = $region24
        $region23: #{resblock50_forward.9} parent=11 // pred_region
          _
        $region24: #{resblock50_forward.9} parent=11 // pred_fallthru
          _
        // Predicated region
        $region25: #{resblock50_forward.9} parent=11 // pred_check
          %p223 = pneg %p152
        $region26: #{resblock50_forward.9} parent=11 // pred_check_branch
          %225 = sbr.rel (%p223) target = $region28
        $region27: #{resblock50_forward.9} parent=11 // pred_region
          _
        $region28: #{resblock50_forward.9} parent=11 // pred_fallthru
          _
        // Predicated region
        $region29: #{resblock50_forward.9} parent=11 // pred_check
          %p226 = pneg %p173
        $region30: #{resblock50_forward.9} parent=11 // pred_check_branch
          %228 = sbr.rel (%p226) target = $region32
        $region31: #{resblock50_forward.9} parent=11 // pred_region
          _
        $region32: #{resblock50_forward.9} parent=11 // pred_fallthru
          _
      $region12: #{resblock50_forward.9} parent=5 // pred_fallthru
        _
      %p229 = scmp.lt.s32.totalorder %s16, 2
      // Predicated region
      $region33: #{resblock50_forward.9} parent=5 // pred_check
        %p230 = pneg %p229
      $region34: #{resblock50_forward.9} parent=5 // pred_check_branch
        %232 = sbr.rel (%p230) target = $region36
      $region35: #{resblock50_forward.9} parent=5 // pred_region
        // Predicated region
        $region37: #{resblock50_forward.9} parent=35 // pred_check
          %p233 = pneg %p36
        $region38: #{resblock50_forward.9} parent=35 // pred_check_branch
          %235 = sbr.rel (%p233) target = $region40
        $region39: #{resblock50_forward.9} parent=35 // pred_region
          %s236 = smul.u32 8, %s16
          %p237 = scmp.lt.s32.totalorder %s236, 15
          %s238 = scalar_select %p237, %s236, 15
          %s239 = smul.addr %s238, 4
          %s240 = scalar_lea.vmem %s0, %s239
          %s241 = smul.u32 8, %s16
        $region40: #{resblock50_forward.9} parent=35 // pred_fallthru
          _
        // Predicated region
        $region41: #{resblock50_forward.9} parent=35 // pred_check
          %p242 = pneg %p125
        $region42: #{resblock50_forward.9} parent=35 // pred_check_branch
          %244 = sbr.rel (%p242) target = $region44
        $region43: #{resblock50_forward.9} parent=35 // pred_region
          %s245 = smul.u32 8, %s16
          %p246 = scmp.lt.s32.totalorder %s245, 15
          %s247 = scalar_select %p246, %s245, 15
          %s248 = smul.addr %s247, 4
          %s249 = scalar_lea.vmem %s4, %s248
          %s250 = smul.u32 8, %s16
        $region44: #{resblock50_forward.9} parent=35 // pred_fallthru
          _
      $region36: #{resblock50_forward.9} parent=5 // pred_fallthru
        _
      %p251 = scmp.le.s32.totalorder 1, %s16
      %p252 = scmp.lt.s32.totalorder %s16, 3
      %p253 = pnand %p251, %p252
      %p254 = pneg %p253
      // Predicated region
      $region45: #{resblock50_forward.9} parent=5 // pred_check
        _
      $region46: #{resblock50_forward.9} parent=5 // pred_check_branch
        %256 = sbr.rel (%p253) target = $region48
      $region47: #{resblock50_forward.9} parent=5 // pred_region
        %s257 = ssub.s32 %s16, 1
        %s258 = smul.u32 8, %s21
        %p259 = scmp.lt.s32.totalorder %s258, 15
        %s260 = scalar_select %p259, %s258, 15
        %s261 = smul.addr %s260, 4
        %s262 = scalar_lea.vmem %s0, %s261
        %p263 = pneg %p42
        %p264 = pneg %p39
        %p265 = pneg %p63
        %p266 = pneg %p60
        %p267 = pneg %p84
        %p268 = pneg %p81
        %p269 = pneg %p105
        %p270 = pneg %p102
        %s271 = smul.u32 8, %s21
        %p272 = scmp.lt.s32.totalorder %s271, 15
        %s273 = scalar_select %p272, %s271, 15
        %s274 = smul.addr %s273, 4
        %s275 = scalar_lea.vmem %s4, %s274
        %p276 = pneg %p131
        %p277 = pneg %p128
        %p278 = pneg %p152
        %p279 = pneg %p149
        %p280 = pneg %p173
        %p281 = pneg %p170
        %p282 = pneg %p199
        %p283 = pneg %p196
        %s284 = sand.u32 %s186, 1
        %s285 = scalar_lea.sflag [#allocation3], %s284
        %s286 = sand.u32 %s186, 1
        %s287 = smul.addr %s286, 64
        %s288 = scalar_lea.vmem [#allocation2], %s287
        %s289 = smul.u32 8, %s21
        %p290 = scmp.lt.s32.totalorder %s289, 15
        %s291 = scalar_select %p290, %s289, 15
        %s292 = smul.addr %s291, 4
        %s293 = scalar_lea.vmem %s0, %s292
        %s294 = smul.u32 8, %s21
        %s295 = smul.u32 8, %s21
        %p296 = scmp.lt.s32.totalorder %s295, 15
        %s297 = scalar_select %p296, %s295, 15
        %s298 = smul.addr %s297, 4
        %s299 = scalar_lea.vmem %s4, %s298
        %s300 = smul.u32 8, %s21
        %s301 = smul.u32 8, %s21
        %v302 = vld [vmem:[%s293] sm:$0xf]
        %v303 = vld [vmem:[%s293 + $0x4] sm:$0xf]
        %v304 = vld [vmem:[%s293 + $0x8] sm:$0xf]
        %v305 = vld [vmem:[%s293 + $0xc] sm:$0xf]
        %v306 = vld [vmem:[%s293 + $0x10] sm:$0xf]
        %v307 = vld [vmem:[%s293 + $0x14] sm:$0xf]
        %v308 = vld [vmem:[%s293 + $0x18] sm:$0xf]
        %v309 = vld [vmem:[%s293 + $0x1c] sm:$0xf]
        %v310 = vunpack.c.l.bf16 %v302
        %v311 = vunpack.c.l.bf16 %v303
        %v312 = vunpack.c.l.bf16 %v304
        %v313 = vunpack.c.l.bf16 %v305
        %v314 = vunpack.c.l.bf16 %v306
        %v315 = vunpack.c.l.bf16 %v307
        %v316 = vunpack.c.l.bf16 %v308
        %v317 = vunpack.c.l.bf16 %v309
        %v318 = vld [vmem:[%s1] sm:$0x1]
        %v320 = vperm.slane %v318, 0
        %v322 = vmul.f32 %v310, %v320
        %v323 = vmul.f32 %v311, %v320
        %v324 = vmul.f32 %v312, %v320
        %v325 = vmul.f32 %v313, %v320
        %v326 = vmul.f32 %v314, %v320
        %v327 = vmul.f32 %v315, %v320
        %v328 = vmul.f32 %v316, %v320
        %v329 = vmul.f32 %v317, %v320
        %v330 = vld [vmem:[%s2] sm:$0x1]
        %v332 = vperm.slane %v330, 0
        %v334 = vadd.f32 %v322, %v332
        %v335 = vadd.f32 %v323, %v332
        %v336 = vadd.f32 %v324, %v332
        %v337 = vadd.f32 %v325, %v332
        %v338 = vadd.f32 %v326, %v332
        %v339 = vadd.f32 %v327, %v332
        %v340 = vadd.f32 %v328, %v332
        %v341 = vadd.f32 %v329, %v332
        %v342 = vmax.f32 %v334, 0.0
        %v343 = vmax.f32 %v335, 0.0
        %v344 = vmax.f32 %v336, 0.0
        %v345 = vmax.f32 %v337, 0.0
        %v346 = vmax.f32 %v338, 0.0
        %v347 = vmax.f32 %v339, 0.0
        %v348 = vmax.f32 %v340, 0.0
        %v349 = vmax.f32 %v341, 0.0
        %v350 = vpack.c.bf16 %v343, %v342
        %v351 = vpack.c.bf16 %v345, %v344
        %v352 = vpack.c.bf16 %v347, %v346
        %v353 = vpack.c.bf16 %v349, %v348
        %v354 = vld [vmem:[%s3] sm:$0xf]
        %v355 = vld [vmem:[%s3 + $0x4] sm:$0xf]
        %v356 = vld [vmem:[%s3 + $0x8] sm:$0xf]
        %v357 = vld [vmem:[%s3 + $0xc] sm:$0xf]
        %v358 = vld [vmem:[%s3 + $0x10] sm:$0xf]
        %v359 = vld [vmem:[%s3 + $0x14] sm:$0xf]
        %v360 = vld [vmem:[%s3 + $0x18] sm:$0xf]
        %v361 = vld [vmem:[%s3 + $0x1c] sm:$0xf]
        %v362 = vld [vmem:[%s3 + $0x20] sm:$0xf]
        %v363 = vld [vmem:[%s3 + $0x24] sm:$0xf]
        %v364 = vld [vmem:[%s3 + $0x28] sm:$0xf]
        %v365 = vld [vmem:[%s3 + $0x2c] sm:$0xf]
        %v366 = vld [vmem:[%s3 + $0x30] sm:$0xf]
        %v367 = vld [vmem:[%s3 + $0x34] sm:$0xf]
        %v368 = vld [vmem:[%s3 + $0x38] sm:$0xf]
        %v369 = vld [vmem:[%s3 + $0x3c] sm:$0xf]
        %v370 = vld [vmem:[%s299] sm:$0xf]
        %v371 = vld [vmem:[%s299 + $0x4] sm:$0xf]
        %v372 = vld [vmem:[%s299 + $0x8] sm:$0xf]
        %v373 = vld [vmem:[%s299 + $0xc] sm:$0xf]
        %v374 = vld [vmem:[%s299 + $0x10] sm:$0xf]
        %v375 = vld [vmem:[%s299 + $0x14] sm:$0xf]
        %v376 = vld [vmem:[%s299 + $0x18] sm:$0xf]
        %v377 = vld [vmem:[%s299 + $0x1c] sm:$0xf]
        %v378 = vunpack.c.l.bf16 %v370
        %v379 = vunpack.c.l.bf16 %v371
        %v380 = vunpack.c.l.bf16 %v372
        %v381 = vunpack.c.l.bf16 %v373
        %v382 = vunpack.c.l.bf16 %v374
        %v383 = vunpack.c.l.bf16 %v375
        %v384 = vunpack.c.l.bf16 %v376
        %v385 = vunpack.c.l.bf16 %v377
        %v386 = vld [vmem:[%s5] sm:$0x1]
        %v388 = vperm.slane %v386, 0
        %v390 = vmul.f32 %v378, %v388
        %v391 = vmul.f32 %v379, %v388
        %v392 = vmul.f32 %v380, %v388
        %v393 = vmul.f32 %v381, %v388
        %v394 = vmul.f32 %v382, %v388
        %v395 = vmul.f32 %v383, %v388
        %v396 = vmul.f32 %v384, %v388
        %v397 = vmul.f32 %v385, %v388
        %v398 = vld [vmem:[%s6] sm:$0x1]
        %v400 = vperm.slane %v398, 0
        %v402 = vadd.f32 %v390, %v400
        %v403 = vadd.f32 %v391, %v400
        %v404 = vadd.f32 %v392, %v400
        %v405 = vadd.f32 %v393, %v400
        %v406 = vadd.f32 %v394, %v400
        %v407 = vadd.f32 %v395, %v400
        %v408 = vadd.f32 %v396, %v400
        %v409 = vadd.f32 %v397, %v400
        %v426 = vunpack.c.l.b16 %v354
        %v427 = vunpack.c.l.b16 %v355
        %v428 = vunpack.c.l.b16 %v356
        %v429 = vunpack.c.l.b16 %v357
        %v430 = vunpack.c.l.b16 %v358
        %v431 = vunpack.c.l.b16 %v359
        %v432 = vunpack.c.l.b16 %v360
        %v433 = vunpack.c.l.b16 %v361
        %v434 = vunpack.c.l.b16 %v362
        %v435 = vunpack.c.l.b16 %v363
        %v436 = vunpack.c.l.b16 %v364
        %v437 = vunpack.c.l.b16 %v365
        %v438 = vunpack.c.l.b16 %v366
        %v439 = vunpack.c.l.b16 %v367
        %v440 = vunpack.c.l.b16 %v368
        %v441 = vunpack.c.l.b16 %v369
        %v442 = vpack.c.b16 %v427, %v426
        %v443 = vpack.c.b16 %v429, %v428
        %v444 = vpack.c.b16 %v431, %v430
        %v445 = vpack.c.b16 %v433, %v432
        %v446 = vpack.c.b16 %v435, %v434
        %v447 = vpack.c.b16 %v437, %v436
        %v448 = vpack.c.b16 %v439, %v438
        %v449 = vpack.c.b16 %v441, %v440
        %458 = vmatpush.bf16.msra.mxu0 %v449
        %459 = vmatpush.bf16.msra.mxu0 %v448
        %460 = vmatpush.bf16.msra.mxu0 %v447
        %461 = vmatpush.bf16.msra.mxu0 %v446
        %462 = vmatpush.bf16.msra.mxu0 %v445
        %463 = vmatpush.bf16.msra.mxu0 %v444
        %464 = vmatpush.bf16.msra.mxu0 %v443
        %465 = vmatpush.bf16.msra.mxu0 %v442
        %466 = vmatmul.bf16.gmra.mxu0 %v350
        %v467 = vpop.f32.mrf.mxu0
        %v468 = vadd.f32 %v402, %v467
        %v469 = vpop.f32.mrf.mxu0
        %v470 = vadd.f32 %v403, %v469
        %471 = vmatmul.bf16.gmra.mxu0 %v351
        %v472 = vpop.f32.mrf.mxu0
        %v473 = vadd.f32 %v404, %v472
        %v474 = vpop.f32.mrf.mxu0
        %v475 = vadd.f32 %v405, %v474
        %476 = vmatmul.bf16.gmra.mxu0 %v352
        %v477 = vpop.f32.mrf.mxu0
        %v478 = vadd.f32 %v406, %v477
        %v479 = vpop.f32.mrf.mxu0
        %v480 = vadd.f32 %v407, %v479
        %481 = vmatmul.bf16.gmra.mxu0 %v353
        %v482 = vpop.f32.mrf.mxu0
        %v483 = vadd.f32 %v408, %v482
        %v484 = vpop.f32.mrf.mxu0
        %v485 = vadd.f32 %v409, %v484
        %486 = vdwg.mxu0
        %487 = vst [vmem:[%s288] sm:$0xff] %v468
        %488 = vst [vmem:[%s288 + $0x8] sm:$0xff] %v470
        %489 = vst [vmem:[%s288 + $0x10] sm:$0xff] %v473
        %490 = vst [vmem:[%s288 + $0x18] sm:$0xff] %v475
        %491 = vst [vmem:[%s288 + $0x20] sm:$0xff] %v478
        %492 = vst [vmem:[%s288 + $0x28] sm:$0xff] %v480
        %493 = vst [vmem:[%s288 + $0x30] sm:$0xff] %v483
        %494 = vst [vmem:[%s288 + $0x38] sm:$0xff] %v485
        %s495 = sand.u32 %s186, 1
        %s496 = scalar_lea.sflag [#allocation3], %s495
        %s497 = sand.u32 %s186, 1
        %s498 = smul.addr %s497, 64
        %s499 = scalar_lea.vmem [#allocation2], %s498
        // Predicated region
        $region49: #{resblock50_forward.9} parent=47 // pred_check
          %p500 = pneg %p196
        $region50: #{resblock50_forward.9} parent=47 // pred_check_branch
          %502 = sbr.rel (%p500) target = $region52
        $region51: #{resblock50_forward.9} parent=47 // pred_region
          %s503 = smul.u32 8, %s21
          %505 = vsyncadd %s496, 0
          %s506 = smul.addr %s503, 8
          %s507 = scalar_lea.hbm %s7, %s506
          %s508 = sshll.u32 %s499, 4
          %s509 = int_to_ptr.vmem [resolvable:$true] %s508
          %s510 = sshll.u32 %s507, 4
          %s511 = int_to_ptr.hbm [resolvable:$true] %s510
          %516 = dma.vmem_to_hbm [thread:$0]  %s509, 1024, %s511, %s496, 128, 128, 8
        $region52: #{resblock50_forward.9} parent=47 // pred_fallthru
          _
      $region48: #{resblock50_forward.9} parent=5 // pred_fallthru
        _
      %p517 = scmp.le.s32.totalorder 2, %s16
      // Predicated region
      $region53: #{resblock50_forward.9} parent=5 // pred_check
        %p518 = pneg %p517
      $region54: #{resblock50_forward.9} parent=5 // pred_check_branch
        %520 = sbr.rel (%p518) target = $region56
      $region55: #{resblock50_forward.9} parent=5 // pred_region
        %s521 = ssub.s32 %s16, 2
        // Predicated region
        $region57: #{resblock50_forward.9} parent=55 // pred_check
          %p522 = pneg %p202
        $region58: #{resblock50_forward.9} parent=55 // pred_check_branch
          %524 = sbr.rel (%p522) target = $region60
        $region59: #{resblock50_forward.9} parent=55 // pred_region
          %s525 = sand.u32 %s187, 1
          %s526 = scalar_lea.sflag [#allocation3], %s525
          %s527 = sand.u32 %s187, 1
          %s528 = smul.addr %s527, 64
          %s529 = scalar_lea.vmem [#allocation2], %s528
          %531 = dma.done %s526, 1024
        $region60: #{resblock50_forward.9} parent=55 // pred_fallthru
          _
      $region56: #{resblock50_forward.9} parent=5 // pred_fallthru
        _
    $region6: #{resblock50_forward.9} parent=1 // loop_footer
      %s20 = sadd.s32 1, %s16
    $region7: #{resblock50_forward.9} parent=1 // loop_footer_branch
      %15 = sbr.rel target = $region3
    $region8: #{resblock50_forward.9} parent=1 // loop_exit
      _
    %532 = vsyncpa [#allocation3], 1
    %s533 = scalar_lea.sflag [#allocation3], 1
    %534 = vsyncpa %s533, 1

// kernel: resblock50_forward.7
$region0: #{resblock50_forward.7}
  #allocation0 [shape = 'u32[]', space=smem, size = 0x4, offset = 0x4, fixed_abs, tag = 'smem constant byte address 0x4 - core index']
  #allocation1 [shape = 'u32[72,128]{1,0:T(1,128)}', space=vmem, size = 0x9000, scoped, tag = 'internal scratch']
  #allocation2 [shape = 'f32[324,128]{1,0:T(8,128)}', space=vmem, size = 0x29000, scoped, tag = 'scratch operand']
  #allocation3 [shape = 'f32[286,128]{1,0:T(8,128)}', space=vmem, size = 0x24000, scoped, tag = 'scratch operand']
  %s0 = inlined_call_operand.vmem [shape: bf16[2,16,16,128], index: 0, kind: input, shape index: {}]
  %s1 = inlined_call_operand.vmem [shape: f32[1,128], index: 1, kind: input, shape index: {}]
  %s2 = inlined_call_operand.vmem [shape: f32[1,128], index: 2, kind: input, shape index: {}]
  %s3 = inlined_call_operand.vmem [shape: bf16[9,128,128], index: 3, kind: input, shape index: {}]
  %s4 = inlined_call_operand.vmem [shape: bf16[2,64,128], index: 4, kind: output, shape index: {0}]
  %s5 = inlined_call_operand.vmem [shape: f32[2,8,128], index: 5, kind: output, shape index: {1}]
  %s6 = inlined_call_operand.vmem [shape: f32[2,8,128], index: 6, kind: output, shape index: {2}]
  %7 = xla_tuple %s4, %s5, %s6
  %s8 = sld [smem:[#allocation0]]
  $region65: #{resblock50_forward.7} parent=0
    _
  %s10 = ssub.s32 1, %s8
  %s11 = scalar_select 0, %s10, %s8
  loop: start=0, step=1, limit=4
  $region2: #{resblock50_forward.7} parent=0 // loop_pre_header
    _
  $region3: #{resblock50_forward.7} parent=0 // loop_header
    %s13 = sphi 0, %s17
    %p14 = scmp.ge.s32.totalorder %s13, 4
    %s23 = sphi 0, %s25
    %s26 = sphi 0, %s23
    %s27 = sphi 0, %s26
    %s43 = sphi 0, %s27
    %s47 = sphi 0, %s47
    %s49 = sphi 0, %s47
    %s50 = sphi 0, %s49
    %s64 = sphi 0, %s50
    %s68 = sphi 0, %s68
    %s70 = sphi 0, %s68
    %s71 = sphi 0, %s70
    %s85 = sphi 0, %s71
    %s89 = sphi 0, %s89
    %s91 = sphi 0, %s89
    %s92 = sphi 0, %s91
    %s106 = sphi 0, %s92
    %s112 = sphi 0, %s114
    %s115 = sphi 0, %s112
    %s116 = sphi 0, %s115
    %s132 = sphi 0, %s116
    %s138 = sphi 0, %s140
    %s141 = sphi 0, %s138
    %s142 = sphi 0, %s141
    %s158 = sphi 0, %s142
    %s164 = sphi 0, %s166
    %s167 = sphi 0, %s164
    %s168 = sphi 0, %s167
    %s184 = sphi 0, %s168
  $region4: #{resblock50_forward.7} parent=0 // loop_header_branch
    %16 = sbr.rel (%p14) target = $region8
  $region5: #{resblock50_forward.7} parent=0 // loop_body
    %s18 = ssub.s32 %s13, 1
    %s19 = ssub.s32 %s13, 2
    %s20 = sadd.s32 %s13, 1
    %s21 = ssub.s32 %s13, %s20
    %p22 = scmp.eq.s32.totalorder %s21, 0
    %s24 = sadd.s32 %s23, 1
    %s25 = scalar_select %p22, %s23, %s24
    %p28 = pneg %p22
    %p29 = scmp.eq.s32.totalorder %s13, 1
    %p30 = por %p28, %p29
    %p31 = scmp.ne.s32.totalorder %s23, %s26
    %p32 = scmp.eq.s32.totalorder %s13, 0
    %p33 = por %p31, %p32
    %p34 = scmp.ne.s32.totalorder %s23, %s26
    %p35 = scmp.eq.s32.totalorder %s18, 1
    %p36 = por %p34, %p35
    %p37 = scmp.ne.s32.totalorder %s26, %s27
    %p38 = scmp.eq.s32.totalorder %s18, 0
    %p39 = por %p37, %p38
    %p40 = scmp.ne.s32.totalorder %s26, %s27
    %p41 = scmp.eq.s32.totalorder %s19, 1
    %p42 = por %p40, %p41
    %p44 = scmp.ne.s32.totalorder %s27, %s43
    %p45 = scmp.eq.s32.totalorder %s19, 0
    %p46 = por %p44, %p45
    %s48 = sadd.s32 %s47, 1
    %p51 = scmp.eq.s32.totalorder %s13, 1
    %p52 = scmp.ne.s32.totalorder %s47, %s49
    %p53 = scmp.eq.s32.totalorder %s13, 0
    %p54 = por %p52, %p53
    %p55 = scmp.ne.s32.totalorder %s47, %s49
    %p56 = scmp.eq.s32.totalorder %s18, 1
    %p57 = por %p55, %p56
    %p58 = scmp.ne.s32.totalorder %s49, %s50
    %p59 = scmp.eq.s32.totalorder %s18, 0
    %p60 = por %p58, %p59
    %p61 = scmp.ne.s32.totalorder %s49, %s50
    %p62 = scmp.eq.s32.totalorder %s19, 1
    %p63 = por %p61, %p62
    %p65 = scmp.ne.s32.totalorder %s50, %s64
    %p66 = scmp.eq.s32.totalorder %s19, 0
    %p67 = por %p65, %p66
    %s69 = sadd.s32 %s68, 1
    %p72 = scmp.eq.s32.totalorder %s13, 1
    %p73 = scmp.ne.s32.totalorder %s68, %s70
    %p74 = scmp.eq.s32.totalorder %s13, 0
    %p75 = por %p73, %p74
    %p76 = scmp.ne.s32.totalorder %s68, %s70
    %p77 = scmp.eq.s32.totalorder %s18, 1
    %p78 = por %p76, %p77
    %p79 = scmp.ne.s32.totalorder %s70, %s71
    %p80 = scmp.eq.s32.totalorder %s18, 0
    %p81 = por %p79, %p80
    %p82 = scmp.ne.s32.totalorder %s70, %s71
    %p83 = scmp.eq.s32.totalorder %s19, 1
    %p84 = por %p82, %p83
    %p86 = scmp.ne.s32.totalorder %s71, %s85
    %p87 = scmp.eq.s32.totalorder %s19, 0
    %p88 = por %p86, %p87
    %s90 = sadd.s32 %s89, 1
    %p93 = scmp.eq.s32.totalorder %s13, 1
    %p94 = scmp.ne.s32.totalorder %s89, %s91
    %p95 = scmp.eq.s32.totalorder %s13, 0
    %p96 = por %p94, %p95
    %p97 = scmp.ne.s32.totalorder %s89, %s91
    %p98 = scmp.eq.s32.totalorder %s18, 1
    %p99 = por %p97, %p98
    %p100 = scmp.ne.s32.totalorder %s91, %s92
    %p101 = scmp.eq.s32.totalorder %s18, 0
    %p102 = por %p100, %p101
    %p103 = scmp.ne.s32.totalorder %s91, %s92
    %p104 = scmp.eq.s32.totalorder %s19, 1
    %p105 = por %p103, %p104
    %p107 = scmp.ne.s32.totalorder %s92, %s106
    %p108 = scmp.eq.s32.totalorder %s19, 0
    %p109 = por %p107, %p108
    %s110 = ssub.s32 %s13, %s20
    %p111 = scmp.eq.s32.totalorder %s110, 0
    %s113 = sadd.s32 %s112, 1
    %s114 = scalar_select %p111, %s112, %s113
    %p117 = pneg %p111
    %p118 = scmp.eq.s32.totalorder %s13, 1
    %p119 = por %p117, %p118
    %p120 = scmp.ne.s32.totalorder %s112, %s115
    %p121 = scmp.eq.s32.totalorder %s13, 0
    %p122 = por %p120, %p121
    %p123 = scmp.ne.s32.totalorder %s112, %s115
    %p124 = scmp.eq.s32.totalorder %s18, 1
    %p125 = por %p123, %p124
    %p126 = scmp.ne.s32.totalorder %s115, %s116
    %p127 = scmp.eq.s32.totalorder %s18, 0
    %p128 = por %p126, %p127
    %p129 = scmp.ne.s32.totalorder %s115, %s116
    %p130 = scmp.eq.s32.totalorder %s19, 1
    %p131 = por %p129, %p130
    %p133 = scmp.ne.s32.totalorder %s116, %s132
    %p134 = scmp.eq.s32.totalorder %s19, 0
    %p135 = por %p133, %p134
    %s136 = ssub.s32 %s13, %s20
    %p137 = scmp.eq.s32.totalorder %s136, 0
    %s139 = sadd.s32 %s138, 1
    %s140 = scalar_select %p137, %s138, %s139
    %p143 = pneg %p137
    %p144 = scmp.eq.s32.totalorder %s13, 1
    %p145 = por %p143, %p144
    %p146 = scmp.ne.s32.totalorder %s138, %s141
    %p147 = scmp.eq.s32.totalorder %s13, 0
    %p148 = por %p146, %p147
    %p149 = scmp.ne.s32.totalorder %s138, %s141
    %p150 = scmp.eq.s32.totalorder %s18, 1
    %p151 = por %p149, %p150
    %p152 = scmp.ne.s32.totalorder %s141, %s142
    %p153 = scmp.eq.s32.totalorder %s18, 0
    %p154 = por %p152, %p153
    %p155 = scmp.ne.s32.totalorder %s141, %s142
    %p156 = scmp.eq.s32.totalorder %s19, 1
    %p157 = por %p155, %p156
    %p159 = scmp.ne.s32.totalorder %s142, %s158
    %p160 = scmp.eq.s32.totalorder %s19, 0
    %p161 = por %p159, %p160
    %s162 = ssub.s32 %s13, %s20
    %p163 = scmp.eq.s32.totalorder %s162, 0
    %s165 = sadd.s32 %s164, 1
    %s166 = scalar_select %p163, %s164, %s165
    %p169 = pneg %p163
    %p170 = scmp.eq.s32.totalorder %s13, 1
    %p171 = por %p169, %p170
    %p172 = scmp.ne.s32.totalorder %s164, %s167
    %p173 = scmp.eq.s32.totalorder %s13, 0
    %p174 = por %p172, %p173
    %p175 = scmp.ne.s32.totalorder %s164, %s167
    %p176 = scmp.eq.s32.totalorder %s18, 1
    %p177 = por %p175, %p176
    %p178 = scmp.ne.s32.totalorder %s167, %s168
    %p179 = scmp.eq.s32.totalorder %s18, 0
    %p180 = por %p178, %p179
    %p181 = scmp.ne.s32.totalorder %s167, %s168
    %p182 = scmp.eq.s32.totalorder %s19, 1
    %p183 = por %p181, %p182
    %p185 = scmp.ne.s32.totalorder %s168, %s184
    %p186 = scmp.eq.s32.totalorder %s19, 0
    %p187 = por %p185, %p186
    %p188 = scmp.le.s32.totalorder 1, %s13
    %p189 = scmp.lt.s32.totalorder %s13, 3
    %p190 = pnand %p188, %p189
    %p191 = pneg %p190
    // Predicated region
    $region9: #{resblock50_forward.7} parent=5 // pred_check
      _
    $region10: #{resblock50_forward.7} parent=5 // pred_check_branch
      %193 = sbr.rel (%p190) target = $region12
    $region11: #{resblock50_forward.7} parent=5 // pred_region
      %s194 = ssub.s32 %s13, 1
      // Predicated region
      $region13: #{resblock50_forward.7} parent=11 // pred_check
        %p195 = pneg %p60
      $region14: #{resblock50_forward.7} parent=11 // pred_check_branch
        %197 = sbr.rel (%p195) target = $region16
      $region15: #{resblock50_forward.7} parent=11 // pred_region
        _
      $region16: #{resblock50_forward.7} parent=11 // pred_fallthru
        _
      // Predicated region
      $region17: #{resblock50_forward.7} parent=11 // pred_check
        %p198 = pneg %p81
      $region18: #{resblock50_forward.7} parent=11 // pred_check_branch
        %200 = sbr.rel (%p198) target = $region20
      $region19: #{resblock50_forward.7} parent=11 // pred_region
        _
      $region20: #{resblock50_forward.7} parent=11 // pred_fallthru
        _
      // Predicated region
      $region21: #{resblock50_forward.7} parent=11 // pred_check
        %p201 = pneg %p102
      $region22: #{resblock50_forward.7} parent=11 // pred_check_branch
        %203 = sbr.rel (%p201) target = $region24
      $region23: #{resblock50_forward.7} parent=11 // pred_region
        _
      $region24: #{resblock50_forward.7} parent=11 // pred_fallthru
        _
    $region12: #{resblock50_forward.7} parent=5 // pred_fallthru
      _
    %p204 = scmp.lt.s32.totalorder %s13, 2
    // Predicated region
    $region25: #{resblock50_forward.7} parent=5 // pred_check
      %p205 = pneg %p204
    $region26: #{resblock50_forward.7} parent=5 // pred_check_branch
      %207 = sbr.rel (%p205) target = $region28
    $region27: #{resblock50_forward.7} parent=5 // pred_region
      // Predicated region
      $region29: #{resblock50_forward.7} parent=27 // pred_check
        %p208 = pneg %p33
      $region30: #{resblock50_forward.7} parent=27 // pred_check_branch
        %210 = sbr.rel (%p208) target = $region32
      $region31: #{resblock50_forward.7} parent=27 // pred_region
        %p211 = scmp.lt.s32.totalorder %s13, 1
        %s212 = scalar_select %p211, %s13, 1
        %s213 = smul.addr %s212, 32
        %s214 = smul.addr %s213, 4
        %s215 = scalar_lea.vmem %s0, %s214
      $region32: #{resblock50_forward.7} parent=27 // pred_fallthru
        _
    $region28: #{resblock50_forward.7} parent=5 // pred_fallthru
      _
    %p216 = scmp.le.s32.totalorder 1, %s13
    %p217 = scmp.lt.s32.totalorder %s13, 3
    %p218 = pnand %p216, %p217
    %p219 = pneg %p218
    // Predicated region
    $region33: #{resblock50_forward.7} parent=5 // pred_check
      _
    $region34: #{resblock50_forward.7} parent=5 // pred_check_branch
      %221 = sbr.rel (%p218) target = $region36
    $region35: #{resblock50_forward.7} parent=5 // pred_region
      %s222 = ssub.s32 %s13, 1
      %p223 = scmp.lt.s32.totalorder %s18, 1
      %s224 = scalar_select %p223, %s18, 1
      %s225 = smul.addr %s224, 32
      %s226 = smul.addr %s225, 4
      %s227 = scalar_lea.vmem %s0, %s226
      %p228 = pneg %p39
      %p229 = pneg %p36
      %p230 = pneg %p60
      %p231 = pneg %p57
      %p232 = pneg %p81
      %p233 = pneg %p78
      %p234 = pneg %p102
      %p235 = pneg %p99
      %p236 = pneg %p128
      %p237 = pneg %p125
      %p238 = scmp.lt.s32.totalorder %s18, 1
      %s239 = scalar_select %p238, %s18, 1
      %s240 = smul.addr %s239, 8
      %s241 = smul.addr %s240, 4
      %s242 = scalar_lea.vmem %s4, %s241
      %p243 = pneg %p154
      %p244 = pneg %p151
      %p245 = scmp.lt.s32.totalorder %s18, 1
      %s246 = scalar_select %p245, %s18, 1
      %s247 = smul.addr %s246, 8
      %s248 = scalar_lea.vmem %s5, %s247
      %p249 = pneg %p180
      %p250 = pneg %p177
      %p251 = scmp.lt.s32.totalorder %s18, 1
      %s252 = scalar_select %p251, %s18, 1
      %s253 = smul.addr %s252, 8
      %s254 = scalar_lea.vmem %s6, %s253
      %p255 = scmp.lt.s32.totalorder %s18, 1
      %s256 = scalar_select %p255, %s18, 1
      %s257 = smul.addr %s256, 32
      %s258 = smul.addr %s257, 4
      %s259 = scalar_lea.vmem %s0, %s258
      %p260 = scmp.lt.s32.totalorder %s18, 1
      %s261 = scalar_select %p260, %s18, 1
      %s262 = smul.addr %s261, 8
      %s263 = smul.addr %s262, 4
      %s264 = scalar_lea.vmem %s4, %s263
      %p265 = scmp.lt.s32.totalorder %s18, 1
      %s266 = scalar_select %p265, %s18, 1
      %s267 = smul.addr %s266, 8
      %s268 = scalar_lea.vmem %s5, %s267
      %p269 = scmp.lt.s32.totalorder %s18, 1
      %s270 = scalar_select %p269, %s18, 1
      %s271 = smul.addr %s270, 8
      %s272 = scalar_lea.vmem %s6, %s271
      %273 = vst [vmem:[#allocation2] sm:$0xff] 0.0
      %274 = vst [vmem:[#allocation2 + $0x8] sm:$0xff] 0.0
      %275 = vst [vmem:[#allocation2 + $0x10] sm:$0xff] 0.0
      %276 = vst [vmem:[#allocation2 + $0x18] sm:$0xff] 0.0
      %277 = vst [vmem:[#allocation2 + $0x20] sm:$0xff] 0.0
      %278 = vst [vmem:[#allocation2 + $0x28] sm:$0xff] 0.0
      %279 = vst [vmem:[#allocation2 + $0x30] sm:$0xff] 0.0
      %280 = vst [vmem:[#allocation2 + $0x38] sm:$0xff] 0.0
      %281 = vst [vmem:[#allocation2 + $0x40] sm:$0xff] 0.0
      %282 = vst [vmem:[#allocation2 + $0x48] sm:$0xff] 0.0
      %283 = vst [vmem:[#allocation2 + $0x50] sm:$0xff] 0.0
      %284 = vst [vmem:[#allocation2 + $0x58] sm:$0xff] 0.0
      %285 = vst [vmem:[#allocation2 + $0x60] sm:$0xff] 0.0
      %286 = vst [vmem:[#allocation2 + $0x68] sm:$0xff] 0.0
      %287 = vst [vmem:[#allocation2 + $0x70] sm:$0xff] 0.0
      %288 = vst [vmem:[#allocation2 + $0x78] sm:$0xff] 0.0
      %289 = vst [vmem:[#allocation2 + $0x80] sm:$0xff] 0.0
      %290 = vst [vmem:[#allocation2 + $0x88] sm:$0xff] 0.0
      %291 = vst [vmem:[#allocation2 + $0x90] sm:$0xff] 0.0
      %292 = vst [vmem:[#allocation2 + $0x98] sm:$0xff] 0.0
      %293 = vst [vmem:[#allocation2 + $0xa0] sm:$0xff] 0.0
      %294 = vst [vmem:[#allocation2 + $0xa8] sm:$0xff] 0.0
      %295 = vst [vmem:[#allocation2 + $0xb0] sm:$0xff] 0.0
      %296 = vst [vmem:[#allocation2 + $0xb8] sm:$0xff] 0.0
      %297 = vst [vmem:[#allocation2 + $0xc0] sm:$0xff] 0.0
      %298 = vst [vmem:[#allocation2 + $0xc8] sm:$0xff] 0.0
      %299 = vst [vmem:[#allocation2 + $0xd0] sm:$0xff] 0.0
      %300 = vst [vmem:[#allocation2 + $0xd8] sm:$0xff] 0.0
      %301 = vst [vmem:[#allocation2 + $0xe0] sm:$0xff] 0.0
      %302 = vst [vmem:[#allocation2 + $0xe8] sm:$0xff] 0.0
      %303 = vst [vmem:[#allocation2 + $0xf0] sm:$0xff] 0.0
      %304 = vst [vmem:[#allocation2 + $0xf8] sm:$0xff] 0.0
      %305 = vst [vmem:[#allocation2 + $0x100] sm:$0xff] 0.0
      %306 = vst [vmem:[#allocation2 + $0x108] sm:$0xff] 0.0
      %307 = vst [vmem:[#allocation2 + $0x110] sm:$0xff] 0.0
      %308 = vst [vmem:[#allocation2 + $0x118] sm:$0xff] 0.0
      %309 = vst [vmem:[#allocation2 + $0x120] sm:$0xff] 0.0
      %310 = vst [vmem:[#allocation2 + $0x128] sm:$0xff] 0.0
      %311 = vst [vmem:[#allocation2 + $0x130] sm:$0xff] 0.0
      %312 = vst [vmem:[#allocation2 + $0x138] sm:$0xff] 0.0
      %313 = vst [vmem:[#allocation2 + $0x140] sm:$0xf] 0.0
      %v314 = vld [vmem:[%s259] sm:$0xf]
      %v315 = vld [vmem:[%s259 + $0x4] sm:$0xf]
      %v316 = vunpack.c.l.bf16 %v314
      %v317 = vunpack.c.l.bf16 %v315
      %v318 = vld [vmem:[%s1] sm:$0x1]
      %v320 = vperm.slane %v318, 0
      %v322 = vmul.f32 %v316, %v320
      %v323 = vmul.f32 %v317, %v320
      %v324 = vld [vmem:[%s2] sm:$0x1]
      %v326 = vperm.slane %v324, 0
      %v328 = vadd.f32 %v322, %v326
      %v329 = vadd.f32 %v323, %v326
      %v330 = vmax.f32 %v328, 0.0
      %v331 = vmax.f32 %v329, 0.0
      %332 = vst [vmem:[#allocation2 + $0x13] sm:$0xff] %v330
      %333 = vst [vmem:[#allocation2 + $0x1b] sm:$0xff] %v331
      %s334 = scalar_lea.vmem %s259, 8
      %v335 = vld [vmem:[%s334] sm:$0xf]
      %v336 = vld [vmem:[%s334 + $0x4] sm:$0xf]
      %v337 = vunpack.c.l.bf16 %v335
      %v338 = vunpack.c.l.bf16 %v336
      %v339 = vld [vmem:[%s1] sm:$0x1]
      %v341 = vperm.slane %v339, 0
      %v343 = vmul.f32 %v337, %v341
      %v344 = vmul.f32 %v338, %v341
      %v345 = vld [vmem:[%s2] sm:$0x1]
      %v347 = vperm.slane %v345, 0
      %v349 = vadd.f32 %v343, %v347
      %v350 = vadd.f32 %v344, %v347
      %v351 = vmax.f32 %v349, 0.0
      %v352 = vmax.f32 %v350, 0.0
      %353 = vst [vmem:[#allocation2 + $0x25] sm:$0xff] %v351
      %354 = vst [vmem:[#allocation2 + $0x2d] sm:$0xff] %v352
      %s355 = scalar_lea.vmem %s259, 16
      %v356 = vld [vmem:[%s355] sm:$0xf]
      %v357 = vld [vmem:[%s355 + $0x4] sm:$0xf]
      %v358 = vunpack.c.l.bf16 %v356
      %v359 = vunpack.c.l.bf16 %v357
      %v360 = vld [vmem:[%s1] sm:$0x1]
      %v362 = vperm.slane %v360, 0
      %v364 = vmul.f32 %v358, %v362
      %v365 = vmul.f32 %v359, %v362
      %v366 = vld [vmem:[%s2] sm:$0x1]
      %v368 = vperm.slane %v366, 0
      %v370 = vadd.f32 %v364, %v368
      %v371 = vadd.f32 %v365, %v368
      %v372 = vmax.f32 %v370, 0.0
      %v373 = vmax.f32 %v371, 0.0
      %374 = vst [vmem:[#allocation2 + $0x37] sm:$0xff] %v372
      %375 = vst [vmem:[#allocation2 + $0x3f] sm:$0xff] %v373
      %s376 = scalar_lea.vmem %s259, 24
      %v377 = vld [vmem:[%s376] sm:$0xf]
      %v378 = vld [vmem:[%s376 + $0x4] sm:$0xf]
      %v379 = vunpack.c.l.bf16 %v377
      %v380 = vunpack.c.l.bf16 %v378
      %v381 = vld [vmem:[%s1] sm:$0x1]
      %v383 = vperm.slane %v381, 0
      %v385 = vmul.f32 %v379, %v383
      %v386 = vmul.f32 %v380, %v383
      %v387 = vld [vmem:[%s2] sm:$0x1]
      %v389 = vperm.slane %v387, 0
      %v391 = vadd.f32 %v385, %v389
      %v392 = vadd.f32 %v386, %v389
      %v393 = vmax.f32 %v391, 0.0
      %v394 = vmax.f32 %v392, 0.0
      %395 = vst [vmem:[#allocation2 + $0x49] sm:$0xff] %v393
      %396 = vst [vmem:[#allocation2 + $0x51] sm:$0xff] %v394
      %s397 = scalar_lea.vmem %s259, 32
      %v398 = vld [vmem:[%s397] sm:$0xf]
      %v399 = vld [vmem:[%s397 + $0x4] sm:$0xf]
      %v400 = vunpack.c.l.bf16 %v398
      %v401 = vunpack.c.l.bf16 %v399
      %v402 = vld [vmem:[%s1] sm:$0x1]
      %v404 = vperm.slane %v402, 0
      %v406 = vmul.f32 %v400, %v404
      %v407 = vmul.f32 %v401, %v404
      %v408 = vld [vmem:[%s2] sm:$0x1]
      %v410 = vperm.slane %v408, 0
      %v412 = vadd.f32 %v406, %v410
      %v413 = vadd.f32 %v407, %v410
      %v414 = vmax.f32 %v412, 0.0
      %v415 = vmax.f32 %v413, 0.0
      %416 = vst [vmem:[#allocation2 + $0x5b] sm:$0xff] %v414
      %417 = vst [vmem:[#allocation2 + $0x63] sm:$0xff] %v415
      %s418 = scalar_lea.vmem %s259, 40
      %v419 = vld [vmem:[%s418] sm:$0xf]
      %v420 = vld [vmem:[%s418 + $0x4] sm:$0xf]
      %v421 = vunpack.c.l.bf16 %v419
      %v422 = vunpack.c.l.bf16 %v420
      %v423 = vld [vmem:[%s1] sm:$0x1]
      %v425 = vperm.slane %v423, 0
      %v427 = vmul.f32 %v421, %v425
      %v428 = vmul.f32 %v422, %v425
      %v429 = vld [vmem:[%s2] sm:$0x1]
      %v431 = vperm.slane %v429, 0
      %v433 = vadd.f32 %v427, %v431
      %v434 = vadd.f32 %v428, %v431
      %v435 = vmax.f32 %v433, 0.0
      %v436 = vmax.f32 %v434, 0.0
      %437 = vst [vmem:[#allocation2 + $0x6d] sm:$0xff] %v435
      %438 = vst [vmem:[#allocation2 + $0x75] sm:$0xff] %v436
      %s439 = scalar_lea.vmem %s259, 48
      %v440 = vld [vmem:[%s439] sm:$0xf]
      %v441 = vld [vmem:[%s439 + $0x4] sm:$0xf]
      %v442 = vunpack.c.l.bf16 %v440
      %v443 = vunpack.c.l.bf16 %v441
      %v444 = vld [vmem:[%s1] sm:$0x1]
      %v446 = vperm.slane %v444, 0
      %v448 = vmul.f32 %v442, %v446
      %v449 = vmul.f32 %v443, %v446
      %v450 = vld [vmem:[%s2] sm:$0x1]
      %v452 = vperm.slane %v450, 0
      %v454 = vadd.f32 %v448, %v452
      %v455 = vadd.f32 %v449, %v452
      %v456 = vmax.f32 %v454, 0.0
      %v457 = vmax.f32 %v455, 0.0
      %458 = vst [vmem:[#allocation2 + $0x7f] sm:$0xff] %v456
      %459 = vst [vmem:[#allocation2 + $0x87] sm:$0xff] %v457
      %s460 = scalar_lea.vmem %s259, 56
      %v461 = vld [vmem:[%s460] sm:$0xf]
      %v462 = vld [vmem:[%s460 + $0x4] sm:$0xf]
      %v463 = vunpack.c.l.bf16 %v461
      %v464 = vunpack.c.l.bf16 %v462
      %v465 = vld [vmem:[%s1] sm:$0x1]
      %v467 = vperm.slane %v465, 0
      %v469 = vmul.f32 %v463, %v467
      %v470 = vmul.f32 %v464, %v467
      %v471 = vld [vmem:[%s2] sm:$0x1]
      %v473 = vperm.slane %v471, 0
      %v475 = vadd.f32 %v469, %v473
      %v476 = vadd.f32 %v470, %v473
      %v477 = vmax.f32 %v475, 0.0
      %v478 = vmax.f32 %v476, 0.0
      %479 = vst [vmem:[#allocation2 + $0x91] sm:$0xff] %v477
      %480 = vst [vmem:[#allocation2 + $0x99] sm:$0xff] %v478
      %s481 = scalar_lea.vmem %s259, 64
      %v482 = vld [vmem:[%s481] sm:$0xf]
      %v483 = vld [vmem:[%s481 + $0x4] sm:$0xf]
      %v484 = vunpack.c.l.bf16 %v482
      %v485 = vunpack.c.l.bf16 %v483
      %v486 = vld [vmem:[%s1] sm:$0x1]
      %v488 = vperm.slane %v486, 0
      %v490 = vmul.f32 %v484, %v488
      %v491 = vmul.f32 %v485, %v488
      %v492 = vld [vmem:[%s2] sm:$0x1]
      %v494 = vperm.slane %v492, 0
      %v496 = vadd.f32 %v490, %v494
      %v497 = vadd.f32 %v491, %v494
      %v498 = vmax.f32 %v496, 0.0
      %v499 = vmax.f32 %v497, 0.0
      %500 = vst [vmem:[#allocation2 + $0xa3] sm:$0xff] %v498
      %501 = vst [vmem:[#allocation2 + $0xab] sm:$0xff] %v499
      %s502 = scalar_lea.vmem %s259, 72
      %v503 = vld [vmem:[%s502] sm:$0xf]
      %v504 = vld [vmem:[%s502 + $0x4] sm:$0xf]
      %v505 = vunpack.c.l.bf16 %v503
      %v506 = vunpack.c.l.bf16 %v504
      %v507 = vld [vmem:[%s1] sm:$0x1]
      %v509 = vperm.slane %v507, 0
      %v511 = vmul.f32 %v505, %v509
      %v512 = vmul.f32 %v506, %v509
      %v513 = vld [vmem:[%s2] sm:$0x1]
      %v515 = vperm.slane %v513, 0
      %v517 = vadd.f32 %v511, %v515
      %v518 = vadd.f32 %v512, %v515
      %v519 = vmax.f32 %v517, 0.0
      %v520 = vmax.f32 %v518, 0.0
      %521 = vst [vmem:[#allocation2 + $0xb5] sm:$0xff] %v519
      %522 = vst [vmem:[#allocation2 + $0xbd] sm:$0xff] %v520
      %s523 = scalar_lea.vmem %s259, 80
      %v524 = vld [vmem:[%s523] sm:$0xf]
      %v525 = vld [vmem:[%s523 + $0x4] sm:$0xf]
      %v526 = vunpack.c.l.bf16 %v524
      %v527 = vunpack.c.l.bf16 %v525
      %v528 = vld [vmem:[%s1] sm:$0x1]
      %v530 = vperm.slane %v528, 0
      %v532 = vmul.f32 %v526, %v530
      %v533 = vmul.f32 %v527, %v530
      %v534 = vld [vmem:[%s2] sm:$0x1]
      %v536 = vperm.slane %v534, 0
      %v538 = vadd.f32 %v532, %v536
      %v539 = vadd.f32 %v533, %v536
      %v540 = vmax.f32 %v538, 0.0
      %v541 = vmax.f32 %v539, 0.0
      %542 = vst [vmem:[#allocation2 + $0xc7] sm:$0xff] %v540
      %543 = vst [vmem:[#allocation2 + $0xcf] sm:$0xff] %v541
      %s544 = scalar_lea.vmem %s259, 88
      %v545 = vld [vmem:[%s544] sm:$0xf]
      %v546 = vld [vmem:[%s544 + $0x4] sm:$0xf]
      %v547 = vunpack.c.l.bf16 %v545
      %v548 = vunpack.c.l.bf16 %v546
      %v549 = vld [vmem:[%s1] sm:$0x1]
      %v551 = vperm.slane %v549, 0
      %v553 = vmul.f32 %v547, %v551
      %v554 = vmul.f32 %v548, %v551
      %v555 = vld [vmem:[%s2] sm:$0x1]
      %v557 = vperm.slane %v555, 0
      %v559 = vadd.f32 %v553, %v557
      %v560 = vadd.f32 %v554, %v557
      %v561 = vmax.f32 %v559, 0.0
      %v562 = vmax.f32 %v560, 0.0
      %563 = vst [vmem:[#allocation2 + $0xd9] sm:$0xff] %v561
      %564 = vst [vmem:[#allocation2 + $0xe1] sm:$0xff] %v562
      %s565 = scalar_lea.vmem %s259, 96
      %v566 = vld [vmem:[%s565] sm:$0xf]
      %v567 = vld [vmem:[%s565 + $0x4] sm:$0xf]
      %v568 = vunpack.c.l.bf16 %v566
      %v569 = vunpack.c.l.bf16 %v567
      %v570 = vld [vmem:[%s1] sm:$0x1]
      %v572 = vperm.slane %v570, 0
      %v574 = vmul.f32 %v568, %v572
      %v575 = vmul.f32 %v569, %v572
      %v576 = vld [vmem:[%s2] sm:$0x1]
      %v578 = vperm.slane %v576, 0
      %v580 = vadd.f32 %v574, %v578
      %v581 = vadd.f32 %v575, %v578
      %v582 = vmax.f32 %v580, 0.0
      %v583 = vmax.f32 %v581, 0.0
      %584 = vst [vmem:[#allocation2 + $0xeb] sm:$0xff] %v582
      %585 = vst [vmem:[#allocation2 + $0xf3] sm:$0xff] %v583
      %s586 = scalar_lea.vmem %s259, 104
      %v587 = vld [vmem:[%s586] sm:$0xf]
      %v588 = vld [vmem:[%s586 + $0x4] sm:$0xf]
      %v589 = vunpack.c.l.bf16 %v587
      %v590 = vunpack.c.l.bf16 %v588
      %v591 = vld [vmem:[%s1] sm:$0x1]
      %v593 = vperm.slane %v591, 0
      %v595 = vmul.f32 %v589, %v593
      %v596 = vmul.f32 %v590, %v593
      %v597 = vld [vmem:[%s2] sm:$0x1]
      %v599 = vperm.slane %v597, 0
      %v601 = vadd.f32 %v595, %v599
      %v602 = vadd.f32 %v596, %v599
      %v603 = vmax.f32 %v601, 0.0
      %v604 = vmax.f32 %v602, 0.0
      %605 = vst [vmem:[#allocation2 + $0xfd] sm:$0xff] %v603
      %606 = vst [vmem:[#allocation2 + $0x105] sm:$0xff] %v604
      %s607 = scalar_lea.vmem %s259, 112
      %v608 = vld [vmem:[%s607] sm:$0xf]
      %v609 = vld [vmem:[%s607 + $0x4] sm:$0xf]
      %v610 = vunpack.c.l.bf16 %v608
      %v611 = vunpack.c.l.bf16 %v609
      %v612 = vld [vmem:[%s1] sm:$0x1]
      %v614 = vperm.slane %v612, 0
      %v616 = vmul.f32 %v610, %v614
      %v617 = vmul.f32 %v611, %v614
      %v618 = vld [vmem:[%s2] sm:$0x1]
      %v620 = vperm.slane %v618, 0
      %v622 = vadd.f32 %v616, %v620
      %v623 = vadd.f32 %v617, %v620
      %v624 = vmax.f32 %v622, 0.0
      %v625 = vmax.f32 %v623, 0.0
      %626 = vst [vmem:[#allocation2 + $0x10f] sm:$0xff] %v624
      %627 = vst [vmem:[#allocation2 + $0x117] sm:$0xff] %v625
      %s628 = scalar_lea.vmem %s259, 120
      %v629 = vld [vmem:[%s628] sm:$0xf]
      %v630 = vld [vmem:[%s628 + $0x4] sm:$0xf]
      %v631 = vunpack.c.l.bf16 %v629
      %v632 = vunpack.c.l.bf16 %v630
      %v633 = vld [vmem:[%s1] sm:$0x1]
      %v635 = vperm.slane %v633, 0
      %v637 = vmul.f32 %v631, %v635
      %v638 = vmul.f32 %v632, %v635
      %v639 = vld [vmem:[%s2] sm:$0x1]
      %v641 = vperm.slane %v639, 0
      %v643 = vadd.f32 %v637, %v641
      %v644 = vadd.f32 %v638, %v641
      %v645 = vmax.f32 %v643, 0.0
      %v646 = vmax.f32 %v644, 0.0
      %647 = vst [vmem:[#allocation2 + $0x121] sm:$0xff] %v645
      %648 = vst [vmem:[#allocation2 + $0x129] sm:$0xff] %v646
      %v649 = vld [vmem:[#allocation2] sm:$0xff]
      %v650 = vld [vmem:[#allocation2 + $0x8] sm:$0xff]
      %v651 = vld [vmem:[#allocation2 + $0x10] sm:$0xff]
      %v652 = vld [vmem:[#allocation2 + $0x18] sm:$0xff]
      %v653 = vld [vmem:[#allocation2 + $0x20] sm:$0xff]
      %v654 = vld [vmem:[#allocation2 + $0x28] sm:$0xff]
      %v655 = vld [vmem:[#allocation2 + $0x30] sm:$0xff]
      %v656 = vld [vmem:[#allocation2 + $0x38] sm:$0xff]
      %v657 = vld [vmem:[#allocation2 + $0x40] sm:$0xff]
      %v658 = vld [vmem:[#allocation2 + $0x48] sm:$0xff]
      %v659 = vld [vmem:[#allocation2 + $0x50] sm:$0xff]
      %v660 = vld [vmem:[#allocation2 + $0x58] sm:$0xff]
      %v661 = vld [vmem:[#allocation2 + $0x60] sm:$0xff]
      %v662 = vld [vmem:[#allocation2 + $0x68] sm:$0xff]
      %v663 = vld [vmem:[#allocation2 + $0x70] sm:$0xff]
      %v664 = vld [vmem:[#allocation2 + $0x78] sm:$0xff]
      %v665 = vld [vmem:[#allocation2 + $0x80] sm:$0xff]
      %v666 = vld [vmem:[#allocation2 + $0x88] sm:$0xff]
      %v667 = vld [vmem:[#allocation2 + $0x90] sm:$0xff]
      %v668 = vld [vmem:[#allocation2 + $0x98] sm:$0xff]
      %v669 = vld [vmem:[#allocation2 + $0xa0] sm:$0xff]
      %v670 = vld [vmem:[#allocation2 + $0xa8] sm:$0xff]
      %v671 = vld [vmem:[#allocation2 + $0xb0] sm:$0xff]
      %v672 = vld [vmem:[#allocation2 + $0xb8] sm:$0xff]
      %v673 = vld [vmem:[#allocation2 + $0xc0] sm:$0xff]
      %v674 = vld [vmem:[#allocation2 + $0xc8] sm:$0xff]
      %v675 = vld [vmem:[#allocation2 + $0xd0] sm:$0xff]
      %v676 = vld [vmem:[#allocation2 + $0xd8] sm:$0xff]
      %v677 = vld [vmem:[#allocation2 + $0xe0] sm:$0xff]
      %v678 = vld [vmem:[#allocation2 + $0xe8] sm:$0xff]
      %v679 = vld [vmem:[#allocation2 + $0xf0] sm:$0xff]
      %v680 = vld [vmem:[#allocation2 + $0xf8] sm:$0xff]
      %v681 = vld [vmem:[#allocation2 + $0x100] sm:$0xff]
      %v682 = vld [vmem:[#allocation2 + $0x108] sm:$0xff]
      %v683 = vld [vmem:[#allocation2 + $0x110] sm:$0xff]
      %v684 = vld [vmem:[#allocation2 + $0x118] sm:$0x3f]
      %v685 = vpack.c.bf16 %v650, %v649
      %v686 = vpack.c.bf16 %v652, %v651
      %v687 = vpack.c.bf16 %v654, %v653
      %v688 = vpack.c.bf16 %v656, %v655
      %v689 = vpack.c.bf16 %v658, %v657
      %v690 = vpack.c.bf16 %v660, %v659
      %v691 = vpack.c.bf16 %v662, %v661
      %v692 = vpack.c.bf16 %v664, %v663
      %v693 = vpack.c.bf16 %v666, %v665
      %v694 = vpack.c.bf16 %v668, %v667
      %v695 = vpack.c.bf16 %v670, %v669
      %v696 = vpack.c.bf16 %v672, %v671
      %v697 = vpack.c.bf16 %v674, %v673
      %v698 = vpack.c.bf16 %v676, %v675
      %v699 = vpack.c.bf16 %v678, %v677
      %v700 = vpack.c.bf16 %v680, %v679
      %v701 = vpack.c.bf16 %v682, %v681
      %v702 = vpack.c.bf16 %v684, %v683
      %v703 = vld [vmem:[%s3] sm:$0xf]
      %v704 = vld [vmem:[%s3 + $0x4] sm:$0xf]
      %v705 = vld [vmem:[%s3 + $0x8] sm:$0xf]
      %v706 = vld [vmem:[%s3 + $0xc] sm:$0xf]
      %v707 = vld [vmem:[%s3 + $0x10] sm:$0xf]
      %v708 = vld [vmem:[%s3 + $0x14] sm:$0xf]
      %v709 = vld [vmem:[%s3 + $0x18] sm:$0xf]
      %v710 = vld [vmem:[%s3 + $0x1c] sm:$0xf]
      %v711 = vld [vmem:[%s3 + $0x20] sm:$0xf]
      %v712 = vld [vmem:[%s3 + $0x24] sm:$0xf]
      %v713 = vld [vmem:[%s3 + $0x28] sm:$0xf]
      %v714 = vld [vmem:[%s3 + $0x2c] sm:$0xf]
      %v715 = vld [vmem:[%s3 + $0x30] sm:$0xf]
      %v716 = vld [vmem:[%s3 + $0x34] sm:$0xf]
      %v717 = vld [vmem:[%s3 + $0x38] sm:$0xf]
      %v718 = vld [vmem:[%s3 + $0x3c] sm:$0xf]
      %v735 = vunpack.c.l.b16 %v703
      %v736 = vunpack.c.l.b16 %v704
      %v737 = vunpack.c.l.b16 %v705
      %v738 = vunpack.c.l.b16 %v706
      %v739 = vunpack.c.l.b16 %v707
      %v740 = vunpack.c.l.b16 %v708
      %v741 = vunpack.c.l.b16 %v709
      %v742 = vunpack.c.l.b16 %v710
      %v743 = vunpack.c.l.b16 %v711
      %v744 = vunpack.c.l.b16 %v712
      %v745 = vunpack.c.l.b16 %v713
      %v746 = vunpack.c.l.b16 %v714
      %v747 = vunpack.c.l.b16 %v715
      %v748 = vunpack.c.l.b16 %v716
      %v749 = vunpack.c.l.b16 %v717
      %v750 = vunpack.c.l.b16 %v718
      %v751 = vpack.c.b16 %v736, %v735
      %v752 = vpack.c.b16 %v738, %v737
      %v753 = vpack.c.b16 %v740, %v739
      %v754 = vpack.c.b16 %v742, %v741
      %v755 = vpack.c.b16 %v744, %v743
      %v756 = vpack.c.b16 %v746, %v745
      %v757 = vpack.c.b16 %v748, %v747
      %v758 = vpack.c.b16 %v750, %v749
      %767 = vmatpush.bf16.msra.mxu0 %v758
      %768 = vmatpush.bf16.msra.mxu0 %v757
      %769 = vmatpush.bf16.msra.mxu0 %v756
      %770 = vmatpush.bf16.msra.mxu0 %v755
      %771 = vmatpush.bf16.msra.mxu0 %v754
      %772 = vmatpush.bf16.msra.mxu0 %v753
      %773 = vmatpush.bf16.msra.mxu0 %v752
      %774 = vmatpush.bf16.msra.mxu0 %v751
      %775 = vmatmul.bf16.gmra.mxu0 %v685
      %v776 = vpop.f32.mrf.mxu0
      %v777 = vadd.f32 0.0, %v776
      %v778 = vpop.f32.mrf.mxu0
      %v779 = vadd.f32 0.0, %v778
      %780 = vmatmul.bf16.gmra.mxu0 %v686
      %v781 = vpop.f32.mrf.mxu0
      %v782 = vadd.f32 0.0, %v781
      %v783 = vpop.f32.mrf.mxu0
      %v784 = vadd.f32 0.0, %v783
      %785 = vmatmul.bf16.gmra.mxu0 %v687
      %v786 = vpop.f32.mrf.mxu0
      %v787 = vadd.f32 0.0, %v786
      %v788 = vpop.f32.mrf.mxu0
      %v789 = vadd.f32 0.0, %v788
      %790 = vmatmul.bf16.gmra.mxu0 %v688
      %v791 = vpop.f32.mrf.mxu0
      %v792 = vadd.f32 0.0, %v791
      %v793 = vpop.f32.mrf.mxu0
      %v794 = vadd.f32 0.0, %v793
      %795 = vmatmul.bf16.gmra.mxu0 %v689
      %v796 = vpop.f32.mrf.mxu0
      %v797 = vadd.f32 0.0, %v796
      %v798 = vpop.f32.mrf.mxu0
      %v799 = vadd.f32 0.0, %v798
      %800 = vmatmul.bf16.gmra.mxu0 %v690
      %v801 = vpop.f32.mrf.mxu0
      %v802 = vadd.f32 0.0, %v801
      %v803 = vpop.f32.mrf.mxu0
      %v804 = vadd.f32 0.0, %v803
      %805 = vmatmul.bf16.gmra.mxu0 %v691
      %v806 = vpop.f32.mrf.mxu0
      %v807 = vadd.f32 0.0, %v806
      %v808 = vpop.f32.mrf.mxu0
      %v809 = vadd.f32 0.0, %v808
      %810 = vmatmul.bf16.gmra.mxu0 %v692
      %v811 = vpop.f32.mrf.mxu0
      %v812 = vadd.f32 0.0, %v811
      %v813 = vpop.f32.mrf.mxu0
      %v814 = vadd.f32 0.0, %v813
      %815 = vmatmul.bf16.gmra.mxu0 %v693
      %v816 = vpop.f32.mrf.mxu0
      %v817 = vadd.f32 0.0, %v816
      %v818 = vpop.f32.mrf.mxu0
      %v819 = vadd.f32 0.0, %v818
      %820 = vmatmul.bf16.gmra.mxu0 %v694
      %v821 = vpop.f32.mrf.mxu0
      %v822 = vadd.f32 0.0, %v821
      %v823 = vpop.f32.mrf.mxu0
      %v824 = vadd.f32 0.0, %v823
      %825 = vmatmul.bf16.gmra.mxu0 %v695
      %v826 = vpop.f32.mrf.mxu0
      %v827 = vadd.f32 0.0, %v826
      %v828 = vpop.f32.mrf.mxu0
      %v829 = vadd.f32 0.0, %v828
      %830 = vmatmul.bf16.gmra.mxu0 %v696
      %v831 = vpop.f32.mrf.mxu0
      %v832 = vadd.f32 0.0, %v831
      %v833 = vpop.f32.mrf.mxu0
      %v834 = vadd.f32 0.0, %v833
      %835 = vmatmul.bf16.gmra.mxu0 %v697
      %v836 = vpop.f32.mrf.mxu0
      %v837 = vadd.f32 0.0, %v836
      %v838 = vpop.f32.mrf.mxu0
      %v839 = vadd.f32 0.0, %v838
      %840 = vmatmul.bf16.gmra.mxu0 %v698
      %v841 = vpop.f32.mrf.mxu0
      %v842 = vadd.f32 0.0, %v841
      %v843 = vpop.f32.mrf.mxu0
      %v844 = vadd.f32 0.0, %v843
      %845 = vmatmul.bf16.gmra.mxu0 %v699
      %v846 = vpop.f32.mrf.mxu0
      %v847 = vadd.f32 0.0, %v846
      %v848 = vpop.f32.mrf.mxu0
      %v849 = vadd.f32 0.0, %v848
      %850 = vmatmul.bf16.gmra.mxu0 %v700
      %v851 = vpop.f32.mrf.mxu0
      %v852 = vadd.f32 0.0, %v851
      %v853 = vpop.f32.mrf.mxu0
      %v854 = vadd.f32 0.0, %v853
      %855 = vmatmul.bf16.gmra.mxu0 %v701
      %v856 = vpop.f32.mrf.mxu0
      %v857 = vadd.f32 0.0, %v856
      %v858 = vpop.f32.mrf.mxu0
      %v859 = vadd.f32 0.0, %v858
      %860 = vmatmul.bf16.gmra.mxu0 %v702
      %v861 = vpop.f32.mrf.mxu0
      %v862 = vadd.f32 0.0, %v861
      %v863 = vpop.f32.mrf.mxu0
      %v864 = vadd.f32 0.0, %v863
      %865 = vdwg.mxu0
      %866 = vst [vmem:[#allocation3] sm:$0xff] %v777
      %867 = vst [vmem:[#allocation3 + $0x8] sm:$0xff] %v779
      %868 = vst [vmem:[#allocation3 + $0x10] sm:$0xff] %v782
      %869 = vst [vmem:[#allocation3 + $0x18] sm:$0xff] %v784
      %870 = vst [vmem:[#allocation3 + $0x20] sm:$0xff] %v787
      %871 = vst [vmem:[#allocation3 + $0x28] sm:$0xff] %v789
      %872 = vst [vmem:[#allocation3 + $0x30] sm:$0xff] %v792
      %873 = vst [vmem:[#allocation3 + $0x38] sm:$0xff] %v794
      %874 = vst [vmem:[#allocation3 + $0x40] sm:$0xff] %v797
      %875 = vst [vmem:[#allocation3 + $0x48] sm:$0xff] %v799
      %876 = vst [vmem:[#allocation3 + $0x50] sm:$0xff] %v802
      %877 = vst [vmem:[#allocation3 + $0x58] sm:$0xff] %v804
      %878 = vst [vmem:[#allocation3 + $0x60] sm:$0xff] %v807
      %879 = vst [vmem:[#allocation3 + $0x68] sm:$0xff] %v809
      %880 = vst [vmem:[#allocation3 + $0x70] sm:$0xff] %v812
      %881 = vst [vmem:[#allocation3 + $0x78] sm:$0xff] %v814
      %882 = vst [vmem:[#allocation3 + $0x80] sm:$0xff] %v817
      %883 = vst [vmem:[#allocation3 + $0x88] sm:$0xff] %v819
      %884 = vst [vmem:[#allocation3 + $0x90] sm:$0xff] %v822
      %885 = vst [vmem:[#allocation3 + $0x98] sm:$0xff] %v824
      %886 = vst [vmem:[#allocation3 + $0xa0] sm:$0xff] %v827
      %887 = vst [vmem:[#allocation3 + $0xa8] sm:$0xff] %v829
      %888 = vst [vmem:[#allocation3 + $0xb0] sm:$0xff] %v832
      %889 = vst [vmem:[#allocation3 + $0xb8] sm:$0xff] %v834
      %890 = vst [vmem:[#allocation3 + $0xc0] sm:$0xff] %v837
      %891 = vst [vmem:[#allocation3 + $0xc8] sm:$0xff] %v839
      %892 = vst [vmem:[#allocation3 + $0xd0] sm:$0xff] %v842
      %893 = vst [vmem:[#allocation3 + $0xd8] sm:$0xff] %v844
      %894 = vst [vmem:[#allocation3 + $0xe0] sm:$0xff] %v847
      %895 = vst [vmem:[#allocation3 + $0xe8] sm:$0xff] %v849
      %896 = vst [vmem:[#allocation3 + $0xf0] sm:$0xff] %v852
      %897 = vst [vmem:[#allocation3 + $0xf8] sm:$0xff] %v854
      %898 = vst [vmem:[#allocation3 + $0x100] sm:$0xff] %v857
      %899 = vst [vmem:[#allocation3 + $0x108] sm:$0xff] %v859
      %900 = vst [vmem:[#allocation3 + $0x110] sm:$0xff] %v862
      %901 = vst [vmem:[#allocation3 + $0x118] sm:$0x3f] %v864
      %v902 = vld [vmem:[#allocation2 + $0x1] sm:$0xff]
      %v903 = vld [vmem:[#allocation2 + $0x9] sm:$0xff]
      %v904 = vld [vmem:[#allocation2 + $0x11] sm:$0xff]
      %v905 = vld [vmem:[#allocation2 + $0x19] sm:$0xff]
      %v906 = vld [vmem:[#allocation2 + $0x21] sm:$0xff]
      %v907 = vld [vmem:[#allocation2 + $0x29] sm:$0xff]
      %v908 = vld [vmem:[#allocation2 + $0x31] sm:$0xff]
      %v909 = vld [vmem:[#allocation2 + $0x39] sm:$0xff]
      %v910 = vld [vmem:[#allocation2 + $0x41] sm:$0xff]
      %v911 = vld [vmem:[#allocation2 + $0x49] sm:$0xff]
      %v912 = vld [vmem:[#allocation2 + $0x51] sm:$0xff]
      %v913 = vld [vmem:[#allocation2 + $0x59] sm:$0xff]
      %v914 = vld [vmem:[#allocation2 + $0x61] sm:$0xff]
      %v915 = vld [vmem:[#allocation2 + $0x69] sm:$0xff]
      %v916 = vld [vmem:[#allocation2 + $0x71] sm:$0xff]
      %v917 = vld [vmem:[#allocation2 + $0x79] sm:$0xff]
      %v918 = vld [vmem:[#allocation2 + $0x81] sm:$0xff]
      %v919 = vld [vmem:[#allocation2 + $0x89] sm:$0xff]
      %v920 = vld [vmem:[#allocation2 + $0x91] sm:$0xff]
      %v921 = vld [vmem:[#allocation2 + $0x99] sm:$0xff]
      %v922 = vld [vmem:[#allocation2 + $0xa1] sm:$0xff]
      %v923 = vld [vmem:[#allocation2 + $0xa9] sm:$0xff]
      %v924 = vld [vmem:[#allocation2 + $0xb1] sm:$0xff]
      %v925 = vld [vmem:[#allocation2 + $0xb9] sm:$0xff]
      %v926 = vld [vmem:[#allocation2 + $0xc1] sm:$0xff]
      %v927 = vld [vmem:[#allocation2 + $0xc9] sm:$0xff]
      %v928 = vld [vmem:[#allocation2 + $0xd1] sm:$0xff]
      %v929 = vld [vmem:[#allocation2 + $0xd9] sm:$0xff]
      %v930 = vld [vmem:[#allocation2 + $0xe1] sm:$0xff]
      %v931 = vld [vmem:[#allocation2 + $0xe9] sm:$0xff]
      %v932 = vld [vmem:[#allocation2 + $0xf1] sm:$0xff]
      %v933 = vld [vmem:[#allocation2 + $0xf9] sm:$0xff]
      %v934 = vld [vmem:[#allocation2 + $0x101] sm:$0xff]
      %v935 = vld [vmem:[#allocation2 + $0x109] sm:$0xff]
      %v936 = vld [vmem:[#allocation2 + $0x111] sm:$0xff]
      %v937 = vld [vmem:[#allocation2 + $0x119] sm:$0x3f]
      %v938 = vpack.c.bf16 %v903, %v902
      %v939 = vpack.c.bf16 %v905, %v904
      %v940 = vpack.c.bf16 %v907, %v906
      %v941 = vpack.c.bf16 %v909, %v908
      %v942 = vpack.c.bf16 %v911, %v910
      %v943 = vpack.c.bf16 %v913, %v912
      %v944 = vpack.c.bf16 %v915, %v914
      %v945 = vpack.c.bf16 %v917, %v916
      %v946 = vpack.c.bf16 %v919, %v918
      %v947 = vpack.c.bf16 %v921, %v920
      %v948 = vpack.c.bf16 %v923, %v922
      %v949 = vpack.c.bf16 %v925, %v924
      %v950 = vpack.c.bf16 %v927, %v926
      %v951 = vpack.c.bf16 %v929, %v928
      %v952 = vpack.c.bf16 %v931, %v930
      %v953 = vpack.c.bf16 %v933, %v932
      %v954 = vpack.c.bf16 %v935, %v934
      %v955 = vpack.c.bf16 %v937, %v936
      %s956 = scalar_lea.vmem %s3, 64
      %v957 = vld [vmem:[%s956] sm:$0xf]
      %v958 = vld [vmem:[%s956 + $0x4] sm:$0xf]
      %v959 = vld [vmem:[%s956 + $0x8] sm:$0xf]
      %v960 = vld [vmem:[%s956 + $0xc] sm:$0xf]
      %v961 = vld [vmem:[%s956 + $0x10] sm:$0xf]
      %v962 = vld [vmem:[%s956 + $0x14] sm:$0xf]
      %v963 = vld [vmem:[%s956 + $0x18] sm:$0xf]
      %v964 = vld [vmem:[%s956 + $0x1c] sm:$0xf]
      %v965 = vld [vmem:[%s956 + $0x20] sm:$0xf]
      %v966 = vld [vmem:[%s956 + $0x24] sm:$0xf]
      %v967 = vld [vmem:[%s956 + $0x28] sm:$0xf]
      %v968 = vld [vmem:[%s956 + $0x2c] sm:$0xf]
      %v969 = vld [vmem:[%s956 + $0x30] sm:$0xf]
      %v970 = vld [vmem:[%s956 + $0x34] sm:$0xf]
      %v971 = vld [vmem:[%s956 + $0x38] sm:$0xf]
      %v972 = vld [vmem:[%s956 + $0x3c] sm:$0xf]
      %v989 = vunpack.c.l.b16 %v957
      %v990 = vunpack.c.l.b16 %v958
      %v991 = vunpack.c.l.b16 %v959
      %v992 = vunpack.c.l.b16 %v960
      %v993 = vunpack.c.l.b16 %v961
      %v994 = vunpack.c.l.b16 %v962
      %v995 = vunpack.c.l.b16 %v963
      %v996 = vunpack.c.l.b16 %v964
      %v997 = vunpack.c.l.b16 %v965
      %v998 = vunpack.c.l.b16 %v966
      %v999 = vunpack.c.l.b16 %v967
      %v1000 = vunpack.c.l.b16 %v968
      %v1001 = vunpack.c.l.b16 %v969
      %v1002 = vunpack.c.l.b16 %v970
      %v1003 = vunpack.c.l.b16 %v971
      %v1004 = vunpack.c.l.b16 %v972
      %v1005 = vpack.c.b16 %v990, %v989
      %v1006 = vpack.c.b16 %v992, %v991
      %v1007 = vpack.c.b16 %v994, %v993
      %v1008 = vpack.c.b16 %v996, %v995
      %v1009 = vpack.c.b16 %v998, %v997
      %v1010 = vpack.c.b16 %v1000, %v999
      %v1011 = vpack.c.b16 %v1002, %v1001
      %v1012 = vpack.c.b16 %v1004, %v1003
      %1021 = vmatpush.bf16.msra.mxu0 %v1012
      %1022 = vmatpush.bf16.msra.mxu0 %v1011
      %1023 = vmatpush.bf16.msra.mxu0 %v1010
      %1024 = vmatpush.bf16.msra.mxu0 %v1009
      %1025 = vmatpush.bf16.msra.mxu0 %v1008
      %1026 = vmatpush.bf16.msra.mxu0 %v1007
      %1027 = vmatpush.bf16.msra.mxu0 %v1006
      %1028 = vmatpush.bf16.msra.mxu0 %v1005
      %1029 = vmatmul.bf16.gmra.mxu0 %v938
      %v1030 = vpop.f32.mrf.mxu0
      %v1031 = vadd.f32 0.0, %v1030
      %v1032 = vpop.f32.mrf.mxu0
      %v1033 = vadd.f32 0.0, %v1032
      %1034 = vmatmul.bf16.gmra.mxu0 %v939
      %v1035 = vpop.f32.mrf.mxu0
      %v1036 = vadd.f32 0.0, %v1035
      %v1037 = vpop.f32.mrf.mxu0
      %v1038 = vadd.f32 0.0, %v1037
      %1039 = vmatmul.bf16.gmra.mxu0 %v940
      %v1040 = vpop.f32.mrf.mxu0
      %v1041 = vadd.f32 0.0, %v1040
      %v1042 = vpop.f32.mrf.mxu0
      %v1043 = vadd.f32 0.0, %v1042
      %1044 = vmatmul.bf16.gmra.mxu0 %v941
      %v1045 = vpop.f32.mrf.mxu0
      %v1046 = vadd.f32 0.0, %v1045
      %v1047 = vpop.f32.mrf.mxu0
      %v1048 = vadd.f32 0.0, %v1047
      %1049 = vmatmul.bf16.gmra.mxu0 %v942
      %v1050 = vpop.f32.mrf.mxu0
      %v1051 = vadd.f32 0.0, %v1050
      %v1052 = vpop.f32.mrf.mxu0
      %v1053 = vadd.f32 0.0, %v1052
      %1054 = vmatmul.bf16.gmra.mxu0 %v943
      %v1055 = vpop.f32.mrf.mxu0
      %v1056 = vadd.f32 0.0, %v1055
      %v1057 = vpop.f32.mrf.mxu0
      %v1058 = vadd.f32 0.0, %v1057
      %1059 = vmatmul.bf16.gmra.mxu0 %v944
      %v1060 = vpop.f32.mrf.mxu0
      %v1061 = vadd.f32 0.0, %v1060
      %v1062 = vpop.f32.mrf.mxu0
      %v1063 = vadd.f32 0.0, %v1062
      %1064 = vmatmul.bf16.gmra.mxu0 %v945
      %v1065 = vpop.f32.mrf.mxu0
      %v1066 = vadd.f32 0.0, %v1065
      %v1067 = vpop.f32.mrf.mxu0
      %v1068 = vadd.f32 0.0, %v1067
      %1069 = vmatmul.bf16.gmra.mxu0 %v946
      %v1070 = vpop.f32.mrf.mxu0
      %v1071 = vadd.f32 0.0, %v1070
      %v1072 = vpop.f32.mrf.mxu0
      %v1073 = vadd.f32 0.0, %v1072
      %1074 = vmatmul.bf16.gmra.mxu0 %v947
      %v1075 = vpop.f32.mrf.mxu0
      %v1076 = vadd.f32 0.0, %v1075
      %v1077 = vpop.f32.mrf.mxu0
      %v1078 = vadd.f32 0.0, %v1077
      %1079 = vmatmul.bf16.gmra.mxu0 %v948
      %v1080 = vpop.f32.mrf.mxu0
      %v1081 = vadd.f32 0.0, %v1080
      %v1082 = vpop.f32.mrf.mxu0
      %v1083 = vadd.f32 0.0, %v1082
      %1084 = vmatmul.bf16.gmra.mxu0 %v949
      %v1085 = vpop.f32.mrf.mxu0
      %v1086 = vadd.f32 0.0, %v1085
      %v1087 = vpop.f32.mrf.mxu0
      %v1088 = vadd.f32 0.0, %v1087
      %1089 = vmatmul.bf16.gmra.mxu0 %v950
      %v1090 = vpop.f32.mrf.mxu0
      %v1091 = vadd.f32 0.0, %v1090
      %v1092 = vpop.f32.mrf.mxu0
      %v1093 = vadd.f32 0.0, %v1092
      %1094 = vmatmul.bf16.gmra.mxu0 %v951
      %v1095 = vpop.f32.mrf.mxu0
      %v1096 = vadd.f32 0.0, %v1095
      %v1097 = vpop.f32.mrf.mxu0
      %v1098 = vadd.f32 0.0, %v1097
      %1099 = vmatmul.bf16.gmra.mxu0 %v952
      %v1100 = vpop.f32.mrf.mxu0
      %v1101 = vadd.f32 0.0, %v1100
      %v1102 = vpop.f32.mrf.mxu0
      %v1103 = vadd.f32 0.0, %v1102
      %1104 = vmatmul.bf16.gmra.mxu0 %v953
      %v1105 = vpop.f32.mrf.mxu0
      %v1106 = vadd.f32 0.0, %v1105
      %v1107 = vpop.f32.mrf.mxu0
      %v1108 = vadd.f32 0.0, %v1107
      %1109 = vmatmul.bf16.gmra.mxu0 %v954
      %v1110 = vpop.f32.mrf.mxu0
      %v1111 = vadd.f32 0.0, %v1110
      %v1112 = vpop.f32.mrf.mxu0
      %v1113 = vadd.f32 0.0, %v1112
      %1114 = vmatmul.bf16.gmra.mxu0 %v955
      %v1115 = vpop.f32.mrf.mxu0
      %v1116 = vadd.f32 0.0, %v1115
      %v1117 = vpop.f32.mrf.mxu0
      %v1118 = vadd.f32 0.0, %v1117
      %1119 = vdwg.mxu0
      %v1120 = vld [vmem:[#allocation3] sm:$0xff]
      %v1121 = vld [vmem:[#allocation3 + $0x8] sm:$0xff]
      %v1122 = vld [vmem:[#allocation3 + $0x10] sm:$0xff]
      %v1123 = vld [vmem:[#allocation3 + $0x18] sm:$0xff]
      %v1124 = vld [vmem:[#allocation3 + $0x20] sm:$0xff]
      %v1125 = vld [vmem:[#allocation3 + $0x28] sm:$0xff]
      %v1126 = vld [vmem:[#allocation3 + $0x30] sm:$0xff]
      %v1127 = vld [vmem:[#allocation3 + $0x38] sm:$0xff]
      %v1128 = vld [vmem:[#allocation3 + $0x40] sm:$0xff]
      %v1129 = vld [vmem:[#allocation3 + $0x48] sm:$0xff]
      %v1130 = vld [vmem:[#allocation3 + $0x50] sm:$0xff]
      %v1131 = vld [vmem:[#allocation3 + $0x58] sm:$0xff]
      %v1132 = vld [vmem:[#allocation3 + $0x60] sm:$0xff]
      %v1133 = vld [vmem:[#allocation3 + $0x68] sm:$0xff]
      %v1134 = vld [vmem:[#allocation3 + $0x70] sm:$0xff]
      %v1135 = vld [vmem:[#allocation3 + $0x78] sm:$0xff]
      %v1136 = vld [vmem:[#allocation3 + $0x80] sm:$0xff]
      %v1137 = vld [vmem:[#allocation3 + $0x88] sm:$0xff]
      %v1138 = vld [vmem:[#allocation3 + $0x90] sm:$0xff]
      %v1139 = vld [vmem:[#allocation3 + $0x98] sm:$0xff]
      %v1140 = vld [vmem:[#allocation3 + $0xa0] sm:$0xff]
      %v1141 = vld [vmem:[#allocation3 + $0xa8] sm:$0xff]
      %v1142 = vld [vmem:[#allocation3 + $0xb0] sm:$0xff]
      %v1143 = vld [vmem:[#allocation3 + $0xb8] sm:$0xff]
      %v1144 = vld [vmem:[#allocation3 + $0xc0] sm:$0xff]
      %v1145 = vld [vmem:[#allocation3 + $0xc8] sm:$0xff]
      %v1146 = vld [vmem:[#allocation3 + $0xd0] sm:$0xff]
      %v1147 = vld [vmem:[#allocation3 + $0xd8] sm:$0xff]
      %v1148 = vld [vmem:[#allocation3 + $0xe0] sm:$0xff]
      %v1149 = vld [vmem:[#allocation3 + $0xe8] sm:$0xff]
      %v1150 = vld [vmem:[#allocation3 + $0xf0] sm:$0xff]
      %v1151 = vld [vmem:[#allocation3 + $0xf8] sm:$0xff]
      %v1152 = vld [vmem:[#allocation3 + $0x100] sm:$0xff]
      %v1153 = vld [vmem:[#allocation3 + $0x108] sm:$0xff]
      %v1154 = vld [vmem:[#allocation3 + $0x110] sm:$0xff]
      %v1155 = vld [vmem:[#allocation3 + $0x118] sm:$0x3f]
      %v1156 = vadd.f32 %v1120, %v1031
      %v1157 = vadd.f32 %v1121, %v1033
      %v1158 = vadd.f32 %v1122, %v1036
      %v1159 = vadd.f32 %v1123, %v1038
      %v1160 = vadd.f32 %v1124, %v1041
      %v1161 = vadd.f32 %v1125, %v1043
      %v1162 = vadd.f32 %v1126, %v1046
      %v1163 = vadd.f32 %v1127, %v1048
      %v1164 = vadd.f32 %v1128, %v1051
      %v1165 = vadd.f32 %v1129, %v1053
      %v1166 = vadd.f32 %v1130, %v1056
      %v1167 = vadd.f32 %v1131, %v1058
      %v1168 = vadd.f32 %v1132, %v1061
      %v1169 = vadd.f32 %v1133, %v1063
      %v1170 = vadd.f32 %v1134, %v1066
      %v1171 = vadd.f32 %v1135, %v1068
      %v1172 = vadd.f32 %v1136, %v1071
      %v1173 = vadd.f32 %v1137, %v1073
      %v1174 = vadd.f32 %v1138, %v1076
      %v1175 = vadd.f32 %v1139, %v1078
      %v1176 = vadd.f32 %v1140, %v1081
      %v1177 = vadd.f32 %v1141, %v1083
      %v1178 = vadd.f32 %v1142, %v1086
      %v1179 = vadd.f32 %v1143, %v1088
      %v1180 = vadd.f32 %v1144, %v1091
      %v1181 = vadd.f32 %v1145, %v1093
      %v1182 = vadd.f32 %v1146, %v1096
      %v1183 = vadd.f32 %v1147, %v1098
      %v1184 = vadd.f32 %v1148, %v1101
      %v1185 = vadd.f32 %v1149, %v1103
      %v1186 = vadd.f32 %v1150, %v1106
      %v1187 = vadd.f32 %v1151, %v1108
      %v1188 = vadd.f32 %v1152, %v1111
      %v1189 = vadd.f32 %v1153, %v1113
      %v1190 = vadd.f32 %v1154, %v1116
      %v1191 = vadd.f32 %v1155, %v1118
      %1192 = vst [vmem:[#allocation3] sm:$0xff] %v1156
      %1193 = vst [vmem:[#allocation3 + $0x8] sm:$0xff] %v1157
      %1194 = vst [vmem:[#allocation3 + $0x10] sm:$0xff] %v1158
      %1195 = vst [vmem:[#allocation3 + $0x18] sm:$0xff] %v1159
      %1196 = vst [vmem:[#allocation3 + $0x20] sm:$0xff] %v1160
      %1197 = vst [vmem:[#allocation3 + $0x28] sm:$0xff] %v1161
      %1198 = vst [vmem:[#allocation3 + $0x30] sm:$0xff] %v1162
      %1199 = vst [vmem:[#allocation3 + $0x38] sm:$0xff] %v1163
      %1200 = vst [vmem:[#allocation3 + $0x40] sm:$0xff] %v1164
      %1201 = vst [vmem:[#allocation3 + $0x48] sm:$0xff] %v1165
      %1202 = vst [vmem:[#allocation3 + $0x50] sm:$0xff] %v1166
      %1203 = vst [vmem:[#allocation3 + $0x58] sm:$0xff] %v1167
      %1204 = vst [vmem:[#allocation3 + $0x60] sm:$0xff] %v1168
      %1205 = vst [vmem:[#allocation3 + $0x68] sm:$0xff] %v1169
      %1206 = vst [vmem:[#allocation3 + $0x70] sm:$0xff] %v1170
      %1207 = vst [vmem:[#allocation3 + $0x78] sm:$0xff] %v1171
      %1208 = vst [vmem:[#allocation3 + $0x80] sm:$0xff] %v1172
      %1209 = vst [vmem:[#allocation3 + $0x88] sm:$0xff] %v1173
      %1210 = vst [vmem:[#allocation3 + $0x90] sm:$0xff] %v1174
      %1211 = vst [vmem:[#allocation3 + $0x98] sm:$0xff] %v1175
      %1212 = vst [vmem:[#allocation3 + $0xa0] sm:$0xff] %v1176
      %1213 = vst [vmem:[#allocation3 + $0xa8] sm:$0xff] %v1177
      %1214 = vst [vmem:[#allocation3 + $0xb0] sm:$0xff] %v1178
      %1215 = vst [vmem:[#allocation3 + $0xb8] sm:$0xff] %v1179
      %1216 = vst [vmem:[#allocation3 + $0xc0] sm:$0xff] %v1180
      %1217 = vst [vmem:[#allocation3 + $0xc8] sm:$0xff] %v1181
      %1218 = vst [vmem:[#allocation3 + $0xd0] sm:$0xff] %v1182
      %1219 = vst [vmem:[#allocation3 + $0xd8] sm:$0xff] %v1183
      %1220 = vst [vmem:[#allocation3 + $0xe0] sm:$0xff] %v1184
      %1221 = vst [vmem:[#allocation3 + $0xe8] sm:$0xff] %v1185
      %1222 = vst [vmem:[#allocation3 + $0xf0] sm:$0xff] %v1186
      %1223 = vst [vmem:[#allocation3 + $0xf8] sm:$0xff] %v1187
      %1224 = vst [vmem:[#allocation3 + $0x100] sm:$0xff] %v1188
      %1225 = vst [vmem:[#allocation3 + $0x108] sm:$0xff] %v1189
      %1226 = vst [vmem:[#allocation3 + $0x110] sm:$0xff] %v1190
      %1227 = vst [vmem:[#allocation3 + $0x118] sm:$0x3f] %v1191
      %v1228 = vld [vmem:[#allocation2 + $0x2] sm:$0xff]
      %v1229 = vld [vmem:[#allocation2 + $0xa] sm:$0xff]
      %v1230 = vld [vmem:[#allocation2 + $0x12] sm:$0xff]
      %v1231 = vld [vmem:[#allocation2 + $0x1a] sm:$0xff]
      %v1232 = vld [vmem:[#allocation2 + $0x22] sm:$0xff]
      %v1233 = vld [vmem:[#allocation2 + $0x2a] sm:$0xff]
      %v1234 = vld [vmem:[#allocation2 + $0x32] sm:$0xff]
      %v1235 = vld [vmem:[#allocation2 + $0x3a] sm:$0xff]
      %v1236 = vld [vmem:[#allocation2 + $0x42] sm:$0xff]
      %v1237 = vld [vmem:[#allocation2 + $0x4a] sm:$0xff]
      %v1238 = vld [vmem:[#allocation2 + $0x52] sm:$0xff]
      %v1239 = vld [vmem:[#allocation2 + $0x5a] sm:$0xff]
      %v1240 = vld [vmem:[#allocation2 + $0x62] sm:$0xff]
      %v1241 = vld [vmem:[#allocation2 + $0x6a] sm:$0xff]
      %v1242 = vld [vmem:[#allocation2 + $0x72] sm:$0xff]
      %v1243 = vld [vmem:[#allocation2 + $0x7a] sm:$0xff]
      %v1244 = vld [vmem:[#allocation2 + $0x82] sm:$0xff]
      %v1245 = vld [vmem:[#allocation2 + $0x8a] sm:$0xff]
      %v1246 = vld [vmem:[#allocation2 + $0x92] sm:$0xff]
      %v1247 = vld [vmem:[#allocation2 + $0x9a] sm:$0xff]
      %v1248 = vld [vmem:[#allocation2 + $0xa2] sm:$0xff]
      %v1249 = vld [vmem:[#allocation2 + $0xaa] sm:$0xff]
      %v1250 = vld [vmem:[#allocation2 + $0xb2] sm:$0xff]
      %v1251 = vld [vmem:[#allocation2 + $0xba] sm:$0xff]
      %v1252 = vld [vmem:[#allocation2 + $0xc2] sm:$0xff]
      %v1253 = vld [vmem:[#allocation2 + $0xca] sm:$0xff]
      %v1254 = vld [vmem:[#allocation2 + $0xd2] sm:$0xff]
      %v1255 = vld [vmem:[#allocation2 + $0xda] sm:$0xff]
      %v1256 = vld [vmem:[#allocation2 + $0xe2] sm:$0xff]
      %v1257 = vld [vmem:[#allocation2 + $0xea] sm:$0xff]
      %v1258 = vld [vmem:[#allocation2 + $0xf2] sm:$0xff]
      %v1259 = vld [vmem:[#allocation2 + $0xfa] sm:$0xff]
      %v1260 = vld [vmem:[#allocation2 + $0x102] sm:$0xff]
      %v1261 = vld [vmem:[#allocation2 + $0x10a] sm:$0xff]
      %v1262 = vld [vmem:[#allocation2 + $0x112] sm:$0xff]
      %v1263 = vld [vmem:[#allocation2 + $0x11a] sm:$0x3f]
      %v1264 = vpack.c.bf16 %v1229, %v1228
      %v1265 = vpack.c.bf16 %v1231, %v1230
      %v1266 = vpack.c.bf16 %v1233, %v1232
      %v1267 = vpack.c.bf16 %v1235, %v1234
      %v1268 = vpack.c.bf16 %v1237, %v1236
      %v1269 = vpack.c.bf16 %v1239, %v1238
      %v1270 = vpack.c.bf16 %v1241, %v1240
      %v1271 = vpack.c.bf16 %v1243, %v1242
      %v1272 = vpack.c.bf16 %v1245, %v1244
      %v1273 = vpack.c.bf16 %v1247, %v1246
      %v1274 = vpack.c.bf16 %v1249, %v1248
      %v1275 = vpack.c.bf16 %v1251, %v1250
      %v1276 = vpack.c.bf16 %v1253, %v1252
      %v1277 = vpack.c.bf16 %v1255, %v1254
      %v1278 = vpack.c.bf16 %v1257, %v1256
      %v1279 = vpack.c.bf16 %v1259, %v1258
      %v1280 = vpack.c.bf16 %v1261, %v1260
      %v1281 = vpack.c.bf16 %v1263, %v1262
      %s1282 = scalar_lea.vmem %s3, 128
      %v1283 = vld [vmem:[%s1282] sm:$0xf]
      %v1284 = vld [vmem:[%s1282 + $0x4] sm:$0xf]
      %v1285 = vld [vmem:[%s1282 + $0x8] sm:$0xf]
      %v1286 = vld [vmem:[%s1282 + $0xc] sm:$0xf]
      %v1287 = vld [vmem:[%s1282 + $0x10] sm:$0xf]
      %v1288 = vld [vmem:[%s1282 + $0x14] sm:$0xf]
      %v1289 = vld [vmem:[%s1282 + $0x18] sm:$0xf]
      %v1290 = vld [vmem:[%s1282 + $0x1c] sm:$0xf]
      %v1291 = vld [vmem:[%s1282 + $0x20] sm:$0xf]
      %v1292 = vld [vmem:[%s1282 + $0x24] sm:$0xf]
      %v1293 = vld [vmem:[%s1282 + $0x28] sm:$0xf]
      %v1294 = vld [vmem:[%s1282 + $0x2c] sm:$0xf]
      %v1295 = vld [vmem:[%s1282 + $0x30] sm:$0xf]
      %v1296 = vld [vmem:[%s1282 + $0x34] sm:$0xf]
      %v1297 = vld [vmem:[%s1282 + $0x38] sm:$0xf]
      %v1298 = vld [vmem:[%s1282 + $0x3c] sm:$0xf]
      %v1315 = vunpack.c.l.b16 %v1283
      %v1316 = vunpack.c.l.b16 %v1284
      %v1317 = vunpack.c.l.b16 %v1285
      %v1318 = vunpack.c.l.b16 %v1286
      %v1319 = vunpack.c.l.b16 %v1287
      %v1320 = vunpack.c.l.b16 %v1288
      %v1321 = vunpack.c.l.b16 %v1289
      %v1322 = vunpack.c.l.b16 %v1290
      %v1323 = vunpack.c.l.b16 %v1291
      %v1324 = vunpack.c.l.b16 %v1292
      %v1325 = vunpack.c.l.b16 %v1293
      %v1326 = vunpack.c.l.b16 %v1294
      %v1327 = vunpack.c.l.b16 %v1295
      %v1328 = vunpack.c.l.b16 %v1296
      %v1329 = vunpack.c.l.b16 %v1297
      %v1330 = vunpack.c.l.b16 %v1298
      %v1331 = vpack.c.b16 %v1316, %v1315
      %v1332 = vpack.c.b16 %v1318, %v1317
      %v1333 = vpack.c.b16 %v1320, %v1319
      %v1334 = vpack.c.b16 %v1322, %v1321
      %v1335 = vpack.c.b16 %v1324, %v1323
      %v1336 = vpack.c.b16 %v1326, %v1325
      %v1337 = vpack.c.b16 %v1328, %v1327
      %v1338 = vpack.c.b16 %v1330, %v1329
      %1347 = vmatpush.bf16.msra.mxu0 %v1338
      %1348 = vmatpush.bf16.msra.mxu0 %v1337
      %1349 = vmatpush.bf16.msra.mxu0 %v1336
      %1350 = vmatpush.bf16.msra.mxu0 %v1335
      %1351 = vmatpush.bf16.msra.mxu0 %v1334
      %1352 = vmatpush.bf16.msra.mxu0 %v1333
      %1353 = vmatpush.bf16.msra.mxu0 %v1332
      %1354 = vmatpush.bf16.msra.mxu0 %v1331
      %1355 = vmatmul.bf16.gmra.mxu0 %v1264
      %v1356 = vpop.f32.mrf.mxu0
      %v1357 = vadd.f32 0.0, %v1356
      %v1358 = vpop.f32.mrf.mxu0
      %v1359 = vadd.f32 0.0, %v1358
      %1360 = vmatmul.bf16.gmra.mxu0 %v1265
      %v1361 = vpop.f32.mrf.mxu0
      %v1362 = vadd.f32 0.0, %v1361
      %v1363 = vpop.f32.mrf.mxu0
      %v1364 = vadd.f32 0.0, %v1363
      %1365 = vmatmul.bf16.gmra.mxu0 %v1266
      %v1366 = vpop.f32.mrf.mxu0
      %v1367 = vadd.f32 0.0, %v1366
      %v1368 = vpop.f32.mrf.mxu0
      %v1369 = vadd.f32 0.0, %v1368
      %1370 = vmatmul.bf16.gmra.mxu0 %v1267
      %v1371 = vpop.f32.mrf.mxu0
      %v1372 = vadd.f32 0.0, %v1371
      %v1373 = vpop.f32.mrf.mxu0
      %v1374 = vadd.f32 0.0, %v1373
      %1375 = vmatmul.bf16.gmra.mxu0 %v1268
      %v1376 = vpop.f32.mrf.mxu0
      %v1377 = vadd.f32 0.0, %v1376
      %v1378 = vpop.f32.mrf.mxu0
      %v1379 = vadd.f32 0.0, %v1378
      %1380 = vmatmul.bf16.gmra.mxu0 %v1269
      %v1381 = vpop.f32.mrf.mxu0
      %v1382 = vadd.f32 0.0, %v1381
      %v1383 = vpop.f32.mrf.mxu0
      %v1384 = vadd.f32 0.0, %v1383
      %1385 = vmatmul.bf16.gmra.mxu0 %v1270
      %v1386 = vpop.f32.mrf.mxu0
      %v1387 = vadd.f32 0.0, %v1386
      %v1388 = vpop.f32.mrf.mxu0
      %v1389 = vadd.f32 0.0, %v1388
      %1390 = vmatmul.bf16.gmra.mxu0 %v1271
      %v1391 = vpop.f32.mrf.mxu0
      %v1392 = vadd.f32 0.0, %v1391
      %v1393 = vpop.f32.mrf.mxu0
      %v1394 = vadd.f32 0.0, %v1393
      %1395 = vmatmul.bf16.gmra.mxu0 %v1272
      %v1396 = vpop.f32.mrf.mxu0
      %v1397 = vadd.f32 0.0, %v1396
      %v1398 = vpop.f32.mrf.mxu0
      %v1399 = vadd.f32 0.0, %v1398
      %1400 = vmatmul.bf16.gmra.mxu0 %v1273
      %v1401 = vpop.f32.mrf.mxu0
      %v1402 = vadd.f32 0.0, %v1401
      %v1403 = vpop.f32.mrf.mxu0
      %v1404 = vadd.f32 0.0, %v1403
      %1405 = vmatmul.bf16.gmra.mxu0 %v1274
      %v1406 = vpop.f32.mrf.mxu0
      %v1407 = vadd.f32 0.0, %v1406
      %v1408 = vpop.f32.mrf.mxu0
      %v1409 = vadd.f32 0.0, %v1408
      %1410 = vmatmul.bf16.gmra.mxu0 %v1275
      %v1411 = vpop.f32.mrf.mxu0
      %v1412 = vadd.f32 0.0, %v1411
      %v1413 = vpop.f32.mrf.mxu0
      %v1414 = vadd.f32 0.0, %v1413
      %1415 = vmatmul.bf16.gmra.mxu0 %v1276
      %v1416 = vpop.f32.mrf.mxu0
      %v1417 = vadd.f32 0.0, %v1416
      %v1418 = vpop.f32.mrf.mxu0
      %v1419 = vadd.f32 0.0, %v1418
      %1420 = vmatmul.bf16.gmra.mxu0 %v1277
      %v1421 = vpop.f32.mrf.mxu0
      %v1422 = vadd.f32 0.0, %v1421
      %v1423 = vpop.f32.mrf.mxu0
      %v1424 = vadd.f32 0.0, %v1423
      %1425 = vmatmul.bf16.gmra.mxu0 %v1278
      %v1426 = vpop.f32.mrf.mxu0
      %v1427 = vadd.f32 0.0, %v1426
      %v1428 = vpop.f32.mrf.mxu0
      %v1429 = vadd.f32 0.0, %v1428
      %1430 = vmatmul.bf16.gmra.mxu0 %v1279
      %v1431 = vpop.f32.mrf.mxu0
      %v1432 = vadd.f32 0.0, %v1431
      %v1433 = vpop.f32.mrf.mxu0
      %v1434 = vadd.f32 0.0, %v1433
      %1435 = vmatmul.bf16.gmra.mxu0 %v1280
      %v1436 = vpop.f32.mrf.mxu0
      %v1437 = vadd.f32 0.0, %v1436
      %v1438 = vpop.f32.mrf.mxu0
      %v1439 = vadd.f32 0.0, %v1438
      %1440 = vmatmul.bf16.gmra.mxu0 %v1281
      %v1441 = vpop.f32.mrf.mxu0
      %v1442 = vadd.f32 0.0, %v1441
      %v1443 = vpop.f32.mrf.mxu0
      %v1444 = vadd.f32 0.0, %v1443
      %1445 = vdwg.mxu0
      %v1446 = vld [vmem:[#allocation3] sm:$0xff]
      %v1447 = vld [vmem:[#allocation3 + $0x8] sm:$0xff]
      %v1448 = vld [vmem:[#allocation3 + $0x10] sm:$0xff]
      %v1449 = vld [vmem:[#allocation3 + $0x18] sm:$0xff]
      %v1450 = vld [vmem:[#allocation3 + $0x20] sm:$0xff]
      %v1451 = vld [vmem:[#allocation3 + $0x28] sm:$0xff]
      %v1452 = vld [vmem:[#allocation3 + $0x30] sm:$0xff]
      %v1453 = vld [vmem:[#allocation3 + $0x38] sm:$0xff]
      %v1454 = vld [vmem:[#allocation3 + $0x40] sm:$0xff]
      %v1455 = vld [vmem:[#allocation3 + $0x48] sm:$0xff]
      %v1456 = vld [vmem:[#allocation3 + $0x50] sm:$0xff]
      %v1457 = vld [vmem:[#allocation3 + $0x58] sm:$0xff]
      %v1458 = vld [vmem:[#allocation3 + $0x60] sm:$0xff]
      %v1459 = vld [vmem:[#allocation3 + $0x68] sm:$0xff]
      %v1460 = vld [vmem:[#allocation3 + $0x70] sm:$0xff]
      %v1461 = vld [vmem:[#allocation3 + $0x78] sm:$0xff]
      %v1462 = vld [vmem:[#allocation3 + $0x80] sm:$0xff]
      %v1463 = vld [vmem:[#allocation3 + $0x88] sm:$0xff]
      %v1464 = vld [vmem:[#allocation3 + $0x90] sm:$0xff]
      %v1465 = vld [vmem:[#allocation3 + $0x98] sm:$0xff]
      %v1466 = vld [vmem:[#allocation3 + $0xa0] sm:$0xff]
      %v1467 = vld [vmem:[#allocation3 + $0xa8] sm:$0xff]
      %v1468 = vld [vmem:[#allocation3 + $0xb0] sm:$0xff]
      %v1469 = vld [vmem:[#allocation3 + $0xb8] sm:$0xff]
      %v1470 = vld [vmem:[#allocation3 + $0xc0] sm:$0xff]
      %v1471 = vld [vmem:[#allocation3 + $0xc8] sm:$0xff]
      %v1472 = vld [vmem:[#allocation3 + $0xd0] sm:$0xff]
      %v1473 = vld [vmem:[#allocation3 + $0xd8] sm:$0xff]
      %v1474 = vld [vmem:[#allocation3 + $0xe0] sm:$0xff]
      %v1475 = vld [vmem:[#allocation3 + $0xe8] sm:$0xff]
      %v1476 = vld [vmem:[#allocation3 + $0xf0] sm:$0xff]
      %v1477 = vld [vmem:[#allocation3 + $0xf8] sm:$0xff]
      %v1478 = vld [vmem:[#allocation3 + $0x100] sm:$0xff]
      %v1479 = vld [vmem:[#allocation3 + $0x108] sm:$0xff]
      %v1480 = vld [vmem:[#allocation3 + $0x110] sm:$0xff]
      %v1481 = vld [vmem:[#allocation3 + $0x118] sm:$0x3f]
      %v1482 = vadd.f32 %v1446, %v1357
      %v1483 = vadd.f32 %v1447, %v1359
      %v1484 = vadd.f32 %v1448, %v1362
      %v1485 = vadd.f32 %v1449, %v1364
      %v1486 = vadd.f32 %v1450, %v1367
      %v1487 = vadd.f32 %v1451, %v1369
      %v1488 = vadd.f32 %v1452, %v1372
      %v1489 = vadd.f32 %v1453, %v1374
      %v1490 = vadd.f32 %v1454, %v1377
      %v1491 = vadd.f32 %v1455, %v1379
      %v1492 = vadd.f32 %v1456, %v1382
      %v1493 = vadd.f32 %v1457, %v1384
      %v1494 = vadd.f32 %v1458, %v1387
      %v1495 = vadd.f32 %v1459, %v1389
      %v1496 = vadd.f32 %v1460, %v1392
      %v1497 = vadd.f32 %v1461, %v1394
      %v1498 = vadd.f32 %v1462, %v1397
      %v1499 = vadd.f32 %v1463, %v1399
      %v1500 = vadd.f32 %v1464, %v1402
      %v1501 = vadd.f32 %v1465, %v1404
      %v1502 = vadd.f32 %v1466, %v1407
      %v1503 = vadd.f32 %v1467, %v1409
      %v1504 = vadd.f32 %v1468, %v1412
      %v1505 = vadd.f32 %v1469, %v1414
      %v1506 = vadd.f32 %v1470, %v1417
      %v1507 = vadd.f32 %v1471, %v1419
      %v1508 = vadd.f32 %v1472, %v1422
      %v1509 = vadd.f32 %v1473, %v1424
      %v1510 = vadd.f32 %v1474, %v1427
      %v1511 = vadd.f32 %v1475, %v1429
      %v1512 = vadd.f32 %v1476, %v1432
      %v1513 = vadd.f32 %v1477, %v1434
      %v1514 = vadd.f32 %v1478, %v1437
      %v1515 = vadd.f32 %v1479, %v1439
      %v1516 = vadd.f32 %v1480, %v1442
      %v1517 = vadd.f32 %v1481, %v1444
      %1518 = vst [vmem:[#allocation3] sm:$0xff] %v1482
      %1519 = vst [vmem:[#allocation3 + $0x8] sm:$0xff] %v1483
      %1520 = vst [vmem:[#allocation3 + $0x10] sm:$0xff] %v1484
      %1521 = vst [vmem:[#allocation3 + $0x18] sm:$0xff] %v1485
      %1522 = vst [vmem:[#allocation3 + $0x20] sm:$0xff] %v1486
      %1523 = vst [vmem:[#allocation3 + $0x28] sm:$0xff] %v1487
      %1524 = vst [vmem:[#allocation3 + $0x30] sm:$0xff] %v1488
      %1525 = vst [vmem:[#allocation3 + $0x38] sm:$0xff] %v1489
      %1526 = vst [vmem:[#allocation3 + $0x40] sm:$0xff] %v1490
      %1527 = vst [vmem:[#allocation3 + $0x48] sm:$0xff] %v1491
      %1528 = vst [vmem:[#allocation3 + $0x50] sm:$0xff] %v1492
      %1529 = vst [vmem:[#allocation3 + $0x58] sm:$0xff] %v1493
      %1530 = vst [vmem:[#allocation3 + $0x60] sm:$0xff] %v1494
      %1531 = vst [vmem:[#allocation3 + $0x68] sm:$0xff] %v1495
      %1532 = vst [vmem:[#allocation3 + $0x70] sm:$0xff] %v1496
      %1533 = vst [vmem:[#allocation3 + $0x78] sm:$0xff] %v1497
      %1534 = vst [vmem:[#allocation3 + $0x80] sm:$0xff] %v1498
      %1535 = vst [vmem:[#allocation3 + $0x88] sm:$0xff] %v1499
      %1536 = vst [vmem:[#allocation3 + $0x90] sm:$0xff] %v1500
      %1537 = vst [vmem:[#allocation3 + $0x98] sm:$0xff] %v1501
      %1538 = vst [vmem:[#allocation3 + $0xa0] sm:$0xff] %v1502
      %1539 = vst [vmem:[#allocation3 + $0xa8] sm:$0xff] %v1503
      %1540 = vst [vmem:[#allocation3 + $0xb0] sm:$0xff] %v1504
      %1541 = vst [vmem:[#allocation3 + $0xb8] sm:$0xff] %v1505
      %1542 = vst [vmem:[#allocation3 + $0xc0] sm:$0xff] %v1506
      %1543 = vst [vmem:[#allocation3 + $0xc8] sm:$0xff] %v1507
      %1544 = vst [vmem:[#allocation3 + $0xd0] sm:$0xff] %v1508
      %1545 = vst [vmem:[#allocation3 + $0xd8] sm:$0xff] %v1509
      %1546 = vst [vmem:[#allocation3 + $0xe0] sm:$0xff] %v1510
      %1547 = vst [vmem:[#allocation3 + $0xe8] sm:$0xff] %v1511
      %1548 = vst [vmem:[#allocation3 + $0xf0] sm:$0xff] %v1512
      %1549 = vst [vmem:[#allocation3 + $0xf8] sm:$0xff] %v1513
      %1550 = vst [vmem:[#allocation3 + $0x100] sm:$0xff] %v1514
      %1551 = vst [vmem:[#allocation3 + $0x108] sm:$0xff] %v1515
      %1552 = vst [vmem:[#allocation3 + $0x110] sm:$0xff] %v1516
      %1553 = vst [vmem:[#allocation3 + $0x118] sm:$0x3f] %v1517
      %v1554 = vld [vmem:[#allocation2 + $0x12] sm:$0xff]
      %v1555 = vld [vmem:[#allocation2 + $0x1a] sm:$0xff]
      %v1556 = vld [vmem:[#allocation2 + $0x22] sm:$0xff]
      %v1557 = vld [vmem:[#allocation2 + $0x2a] sm:$0xff]
      %v1558 = vld [vmem:[#allocation2 + $0x32] sm:$0xff]
      %v1559 = vld [vmem:[#allocation2 + $0x3a] sm:$0xff]
      %v1560 = vld [vmem:[#allocation2 + $0x42] sm:$0xff]
      %v1561 = vld [vmem:[#allocation2 + $0x4a] sm:$0xff]
      %v1562 = vld [vmem:[#allocation2 + $0x52] sm:$0xff]
      %v1563 = vld [vmem:[#allocation2 + $0x5a] sm:$0xff]
      %v1564 = vld [vmem:[#allocation2 + $0x62] sm:$0xff]
      %v1565 = vld [vmem:[#allocation2 + $0x6a] sm:$0xff]
      %v1566 = vld [vmem:[#allocation2 + $0x72] sm:$0xff]
      %v1567 = vld [vmem:[#allocation2 + $0x7a] sm:$0xff]
      %v1568 = vld [vmem:[#allocation2 + $0x82] sm:$0xff]
      %v1569 = vld [vmem:[#allocation2 + $0x8a] sm:$0xff]
      %v1570 = vld [vmem:[#allocation2 + $0x92] sm:$0xff]
      %v1571 = vld [vmem:[#allocation2 + $0x9a] sm:$0xff]
      %v1572 = vld [vmem:[#allocation2 + $0xa2] sm:$0xff]
      %v1573 = vld [vmem:[#allocation2 + $0xaa] sm:$0xff]
      %v1574 = vld [vmem:[#allocation2 + $0xb2] sm:$0xff]
      %v1575 = vld [vmem:[#allocation2 + $0xba] sm:$0xff]
      %v1576 = vld [vmem:[#allocation2 + $0xc2] sm:$0xff]
      %v1577 = vld [vmem:[#allocation2 + $0xca] sm:$0xff]
      %v1578 = vld [vmem:[#allocation2 + $0xd2] sm:$0xff]
      %v1579 = vld [vmem:[#allocation2 + $0xda] sm:$0xff]
      %v1580 = vld [vmem:[#allocation2 + $0xe2] sm:$0xff]
      %v1581 = vld [vmem:[#allocation2 + $0xea] sm:$0xff]
      %v1582 = vld [vmem:[#allocation2 + $0xf2] sm:$0xff]
      %v1583 = vld [vmem:[#allocation2 + $0xfa] sm:$0xff]
      %v1584 = vld [vmem:[#allocation2 + $0x102] sm:$0xff]
      %v1585 = vld [vmem:[#allocation2 + $0x10a] sm:$0xff]
      %v1586 = vld [vmem:[#allocation2 + $0x112] sm:$0xff]
      %v1587 = vld [vmem:[#allocation2 + $0x11a] sm:$0xff]
      %v1588 = vld [vmem:[#allocation2 + $0x122] sm:$0xff]
      %v1589 = vld [vmem:[#allocation2 + $0x12a] sm:$0x3f]
      %v1590 = vpack.c.bf16 %v1555, %v1554
      %v1591 = vpack.c.bf16 %v1557, %v1556
      %v1592 = vpack.c.bf16 %v1559, %v1558
      %v1593 = vpack.c.bf16 %v1561, %v1560
      %v1594 = vpack.c.bf16 %v1563, %v1562
      %v1595 = vpack.c.bf16 %v1565, %v1564
      %v1596 = vpack.c.bf16 %v1567, %v1566
      %v1597 = vpack.c.bf16 %v1569, %v1568
      %v1598 = vpack.c.bf16 %v1571, %v1570
      %v1599 = vpack.c.bf16 %v1573, %v1572
      %v1600 = vpack.c.bf16 %v1575, %v1574
      %v1601 = vpack.c.bf16 %v1577, %v1576
      %v1602 = vpack.c.bf16 %v1579, %v1578
      %v1603 = vpack.c.bf16 %v1581, %v1580
      %v1604 = vpack.c.bf16 %v1583, %v1582
      %v1605 = vpack.c.bf16 %v1585, %v1584
      %v1606 = vpack.c.bf16 %v1587, %v1586
      %v1607 = vpack.c.bf16 %v1589, %v1588
      %s1608 = scalar_lea.vmem %s3, 192
      %v1609 = vld [vmem:[%s1608] sm:$0xf]
      %v1610 = vld [vmem:[%s1608 + $0x4] sm:$0xf]
      %v1611 = vld [vmem:[%s1608 + $0x8] sm:$0xf]
      %v1612 = vld [vmem:[%s1608 + $0xc] sm:$0xf]
      %v1613 = vld [vmem:[%s1608 + $0x10] sm:$0xf]
      %v1614 = vld [vmem:[%s1608 + $0x14] sm:$0xf]
      %v1615 = vld [vmem:[%s1608 + $0x18] sm:$0xf]
      %v1616 = vld [vmem:[%s1608 + $0x1c] sm:$0xf]
      %v1617 = vld [vmem:[%s1608 + $0x20] sm:$0xf]
      %v1618 = vld [vmem:[%s1608 + $0x24] sm:$0xf]
      %v1619 = vld [vmem:[%s1608 + $0x28] sm:$0xf]
      %v1620 = vld [vmem:[%s1608 + $0x2c] sm:$0xf]
      %v1621 = vld [vmem:[%s1608 + $0x30] sm:$0xf]
      %v1622 = vld [vmem:[%s1608 + $0x34] sm:$0xf]
      %v1623 = vld [vmem:[%s1608 + $0x38] sm:$0xf]
      %v1624 = vld [vmem:[%s1608 + $0x3c] sm:$0xf]
      %v1641 = vunpack.c.l.b16 %v1609
      %v1642 = vunpack.c.l.b16 %v1610
      %v1643 = vunpack.c.l.b16 %v1611
      %v1644 = vunpack.c.l.b16 %v1612
      %v1645 = vunpack.c.l.b16 %v1613
      %v1646 = vunpack.c.l.b16 %v1614
      %v1647 = vunpack.c.l.b16 %v1615
      %v1648 = vunpack.c.l.b16 %v1616
      %v1649 = vunpack.c.l.b16 %v1617
      %v1650 = vunpack.c.l.b16 %v1618
      %v1651 = vunpack.c.l.b16 %v1619
      %v1652 = vunpack.c.l.b16 %v1620
      %v1653 = vunpack.c.l.b16 %v1621
      %v1654 = vunpack.c.l.b16 %v1622
      %v1655 = vunpack.c.l.b16 %v1623
      %v1656 = vunpack.c.l.b16 %v1624
      %v1657 = vpack.c.b16 %v1642, %v1641
      %v1658 = vpack.c.b16 %v1644, %v1643
      %v1659 = vpack.c.b16 %v1646, %v1645
      %v1660 = vpack.c.b16 %v1648, %v1647
      %v1661 = vpack.c.b16 %v1650, %v1649
      %v1662 = vpack.c.b16 %v1652, %v1651
      %v1663 = vpack.c.b16 %v1654, %v1653
      %v1664 = vpack.c.b16 %v1656, %v1655
      %1673 = vmatpush.bf16.msra.mxu0 %v1664
      %1674 = vmatpush.bf16.msra.mxu0 %v1663
      %1675 = vmatpush.bf16.msra.mxu0 %v1662
      %1676 = vmatpush.bf16.msra.mxu0 %v1661
      %1677 = vmatpush.bf16.msra.mxu0 %v1660
      %1678 = vmatpush.bf16.msra.mxu0 %v1659
      %1679 = vmatpush.bf16.msra.mxu0 %v1658
      %1680 = vmatpush.bf16.msra.mxu0 %v1657
      %1681 = vmatmul.bf16.gmra.mxu0 %v1590
      %v1682 = vpop.f32.mrf.mxu0
      %v1683 = vadd.f32 0.0, %v1682
      %v1684 = vpop.f32.mrf.mxu0
      %v1685 = vadd.f32 0.0, %v1684
      %1686 = vmatmul.bf16.gmra.mxu0 %v1591
      %v1687 = vpop.f32.mrf.mxu0
      %v1688 = vadd.f32 0.0, %v1687
      %v1689 = vpop.f32.mrf.mxu0
      %v1690 = vadd.f32 0.0, %v1689
      %1691 = vmatmul.bf16.gmra.mxu0 %v1592
      %v1692 = vpop.f32.mrf.mxu0
      %v1693 = vadd.f32 0.0, %v1692
      %v1694 = vpop.f32.mrf.mxu0
      %v1695 = vadd.f32 0.0, %v1694
      %1696 = vmatmul.bf16.gmra.mxu0 %v1593
      %v1697 = vpop.f32.mrf.mxu0
      %v1698 = vadd.f32 0.0, %v1697
      %v1699 = vpop.f32.mrf.mxu0
      %v1700 = vadd.f32 0.0, %v1699
      %1701 = vmatmul.bf16.gmra.mxu0 %v1594
      %v1702 = vpop.f32.mrf.mxu0
      %v1703 = vadd.f32 0.0, %v1702
      %v1704 = vpop.f32.mrf.mxu0
      %v1705 = vadd.f32 0.0, %v1704
      %1706 = vmatmul.bf16.gmra.mxu0 %v1595
      %v1707 = vpop.f32.mrf.mxu0
      %v1708 = vadd.f32 0.0, %v1707
      %v1709 = vpop.f32.mrf.mxu0
      %v1710 = vadd.f32 0.0, %v1709
      %1711 = vmatmul.bf16.gmra.mxu0 %v1596
      %v1712 = vpop.f32.mrf.mxu0
      %v1713 = vadd.f32 0.0, %v1712
      %v1714 = vpop.f32.mrf.mxu0
      %v1715 = vadd.f32 0.0, %v1714
      %1716 = vmatmul.bf16.gmra.mxu0 %v1597
      %v1717 = vpop.f32.mrf.mxu0
      %v1718 = vadd.f32 0.0, %v1717
      %v1719 = vpop.f32.mrf.mxu0
      %v1720 = vadd.f32 0.0, %v1719
      %1721 = vmatmul.bf16.gmra.mxu0 %v1598
      %v1722 = vpop.f32.mrf.mxu0
      %v1723 = vadd.f32 0.0, %v1722
      %v1724 = vpop.f32.mrf.mxu0
      %v1725 = vadd.f32 0.0, %v1724
      %1726 = vmatmul.bf16.gmra.mxu0 %v1599
      %v1727 = vpop.f32.mrf.mxu0
      %v1728 = vadd.f32 0.0, %v1727
      %v1729 = vpop.f32.mrf.mxu0
      %v1730 = vadd.f32 0.0, %v1729
      %1731 = vmatmul.bf16.gmra.mxu0 %v1600
      %v1732 = vpop.f32.mrf.mxu0
      %v1733 = vadd.f32 0.0, %v1732
      %v1734 = vpop.f32.mrf.mxu0
      %v1735 = vadd.f32 0.0, %v1734
      %1736 = vmatmul.bf16.gmra.mxu0 %v1601
      %v1737 = vpop.f32.mrf.mxu0
      %v1738 = vadd.f32 0.0, %v1737
      %v1739 = vpop.f32.mrf.mxu0
      %v1740 = vadd.f32 0.0, %v1739
      %1741 = vmatmul.bf16.gmra.mxu0 %v1602
      %v1742 = vpop.f32.mrf.mxu0
      %v1743 = vadd.f32 0.0, %v1742
      %v1744 = vpop.f32.mrf.mxu0
      %v1745 = vadd.f32 0.0, %v1744
      %1746 = vmatmul.bf16.gmra.mxu0 %v1603
      %v1747 = vpop.f32.mrf.mxu0
      %v1748 = vadd.f32 0.0, %v1747
      %v1749 = vpop.f32.mrf.mxu0
      %v1750 = vadd.f32 0.0, %v1749
      %1751 = vmatmul.bf16.gmra.mxu0 %v1604
      %v1752 = vpop.f32.mrf.mxu0
      %v1753 = vadd.f32 0.0, %v1752
      %v1754 = vpop.f32.mrf.mxu0
      %v1755 = vadd.f32 0.0, %v1754
      %1756 = vmatmul.bf16.gmra.mxu0 %v1605
      %v1757 = vpop.f32.mrf.mxu0
      %v1758 = vadd.f32 0.0, %v1757
      %v1759 = vpop.f32.mrf.mxu0
      %v1760 = vadd.f32 0.0, %v1759
      %1761 = vmatmul.bf16.gmra.mxu0 %v1606
      %v1762 = vpop.f32.mrf.mxu0
      %v1763 = vadd.f32 0.0, %v1762
      %v1764 = vpop.f32.mrf.mxu0
      %v1765 = vadd.f32 0.0, %v1764
      %1766 = vmatmul.bf16.gmra.mxu0 %v1607
      %v1767 = vpop.f32.mrf.mxu0
      %v1768 = vadd.f32 0.0, %v1767
      %v1769 = vpop.f32.mrf.mxu0
      %v1770 = vadd.f32 0.0, %v1769
      %1771 = vdwg.mxu0
      %v1772 = vld [vmem:[#allocation3] sm:$0xff]
      %v1773 = vld [vmem:[#allocation3 + $0x8] sm:$0xff]
      %v1774 = vld [vmem:[#allocation3 + $0x10] sm:$0xff]
      %v1775 = vld [vmem:[#allocation3 + $0x18] sm:$0xff]
      %v1776 = vld [vmem:[#allocation3 + $0x20] sm:$0xff]
      %v1777 = vld [vmem:[#allocation3 + $0x28] sm:$0xff]
      %v1778 = vld [vmem:[#allocation3 + $0x30] sm:$0xff]
      %v1779 = vld [vmem:[#allocation3 + $0x38] sm:$0xff]
      %v1780 = vld [vmem:[#allocation3 + $0x40] sm:$0xff]
      %v1781 = vld [vmem:[#allocation3 + $0x48] sm:$0xff]
      %v1782 = vld [vmem:[#allocation3 + $0x50] sm:$0xff]
      %v1783 = vld [vmem:[#allocation3 + $0x58] sm:$0xff]
      %v1784 = vld [vmem:[#allocation3 + $0x60] sm:$0xff]
      %v1785 = vld [vmem:[#allocation3 + $0x68] sm:$0xff]
      %v1786 = vld [vmem:[#allocation3 + $0x70] sm:$0xff]
      %v1787 = vld [vmem:[#allocation3 + $0x78] sm:$0xff]
      %v1788 = vld [vmem:[#allocation3 + $0x80] sm:$0xff]
      %v1789 = vld [vmem:[#allocation3 + $0x88] sm:$0xff]
      %v1790 = vld [vmem:[#allocation3 + $0x90] sm:$0xff]
      %v1791 = vld [vmem:[#allocation3 + $0x98] sm:$0xff]
      %v1792 = vld [vmem:[#allocation3 + $0xa0] sm:$0xff]
      %v1793 = vld [vmem:[#allocation3 + $0xa8] sm:$0xff]
      %v1794 = vld [vmem:[#allocation3 + $0xb0] sm:$0xff]
      %v1795 = vld [vmem:[#allocation3 + $0xb8] sm:$0xff]
      %v1796 = vld [vmem:[#allocation3 + $0xc0] sm:$0xff]
      %v1797 = vld [vmem:[#allocation3 + $0xc8] sm:$0xff]
      %v1798 = vld [vmem:[#allocation3 + $0xd0] sm:$0xff]
      %v1799 = vld [vmem:[#allocation3 + $0xd8] sm:$0xff]
      %v1800 = vld [vmem:[#allocation3 + $0xe0] sm:$0xff]
      %v1801 = vld [vmem:[#allocation3 + $0xe8] sm:$0xff]
      %v1802 = vld [vmem:[#allocation3 + $0xf0] sm:$0xff]
      %v1803 = vld [vmem:[#allocation3 + $0xf8] sm:$0xff]
      %v1804 = vld [vmem:[#allocation3 + $0x100] sm:$0xff]
      %v1805 = vld [vmem:[#allocation3 + $0x108] sm:$0xff]
      %v1806 = vld [vmem:[#allocation3 + $0x110] sm:$0xff]
      %v1807 = vld [vmem:[#allocation3 + $0x118] sm:$0x3f]
      %v1808 = vadd.f32 %v1772, %v1683
      %v1809 = vadd.f32 %v1773, %v1685
      %v1810 = vadd.f32 %v1774, %v1688
      %v1811 = vadd.f32 %v1775, %v1690
      %v1812 = vadd.f32 %v1776, %v1693
      %v1813 = vadd.f32 %v1777, %v1695
      %v1814 = vadd.f32 %v1778, %v1698
      %v1815 = vadd.f32 %v1779, %v1700
      %v1816 = vadd.f32 %v1780, %v1703
      %v1817 = vadd.f32 %v1781, %v1705
      %v1818 = vadd.f32 %v1782, %v1708
      %v1819 = vadd.f32 %v1783, %v1710
      %v1820 = vadd.f32 %v1784, %v1713
      %v1821 = vadd.f32 %v1785, %v1715
      %v1822 = vadd.f32 %v1786, %v1718
      %v1823 = vadd.f32 %v1787, %v1720
      %v1824 = vadd.f32 %v1788, %v1723
      %v1825 = vadd.f32 %v1789, %v1725
      %v1826 = vadd.f32 %v1790, %v1728
      %v1827 = vadd.f32 %v1791, %v1730
      %v1828 = vadd.f32 %v1792, %v1733
      %v1829 = vadd.f32 %v1793, %v1735
      %v1830 = vadd.f32 %v1794, %v1738
      %v1831 = vadd.f32 %v1795, %v1740
      %v1832 = vadd.f32 %v1796, %v1743
      %v1833 = vadd.f32 %v1797, %v1745
      %v1834 = vadd.f32 %v1798, %v1748
      %v1835 = vadd.f32 %v1799, %v1750
      %v1836 = vadd.f32 %v1800, %v1753
      %v1837 = vadd.f32 %v1801, %v1755
      %v1838 = vadd.f32 %v1802, %v1758
      %v1839 = vadd.f32 %v1803, %v1760
      %v1840 = vadd.f32 %v1804, %v1763
      %v1841 = vadd.f32 %v1805, %v1765
      %v1842 = vadd.f32 %v1806, %v1768
      %v1843 = vadd.f32 %v1807, %v1770
      %1844 = vst [vmem:[#allocation3] sm:$0xff] %v1808
      %1845 = vst [vmem:[#allocation3 + $0x8] sm:$0xff] %v1809
      %1846 = vst [vmem:[#allocation3 + $0x10] sm:$0xff] %v1810
      %1847 = vst [vmem:[#allocation3 + $0x18] sm:$0xff] %v1811
      %1848 = vst [vmem:[#allocation3 + $0x20] sm:$0xff] %v1812
      %1849 = vst [vmem:[#allocation3 + $0x28] sm:$0xff] %v1813
      %1850 = vst [vmem:[#allocation3 + $0x30] sm:$0xff] %v1814
      %1851 = vst [vmem:[#allocation3 + $0x38] sm:$0xff] %v1815
      %1852 = vst [vmem:[#allocation3 + $0x40] sm:$0xff] %v1816
      %1853 = vst [vmem:[#allocation3 + $0x48] sm:$0xff] %v1817
      %1854 = vst [vmem:[#allocation3 + $0x50] sm:$0xff] %v1818
      %1855 = vst [vmem:[#allocation3 + $0x58] sm:$0xff] %v1819
      %1856 = vst [vmem:[#allocation3 + $0x60] sm:$0xff] %v1820
      %1857 = vst [vmem:[#allocation3 + $0x68] sm:$0xff] %v1821
      %1858 = vst [vmem:[#allocation3 + $0x70] sm:$0xff] %v1822
      %1859 = vst [vmem:[#allocation3 + $0x78] sm:$0xff] %v1823
      %1860 = vst [vmem:[#allocation3 + $0x80] sm:$0xff] %v1824
      %1861 = vst [vmem:[#allocation3 + $0x88] sm:$0xff] %v1825
      %1862 = vst [vmem:[#allocation3 + $0x90] sm:$0xff] %v1826
      %1863 = vst [vmem:[#allocation3 + $0x98] sm:$0xff] %v1827
      %1864 = vst [vmem:[#allocation3 + $0xa0] sm:$0xff] %v1828
      %1865 = vst [vmem:[#allocation3 + $0xa8] sm:$0xff] %v1829
      %1866 = vst [vmem:[#allocation3 + $0xb0] sm:$0xff] %v1830
      %1867 = vst [vmem:[#allocation3 + $0xb8] sm:$0xff] %v1831
      %1868 = vst [vmem:[#allocation3 + $0xc0] sm:$0xff] %v1832
      %1869 = vst [vmem:[#allocation3 + $0xc8] sm:$0xff] %v1833
      %1870 = vst [vmem:[#allocation3 + $0xd0] sm:$0xff] %v1834
      %1871 = vst [vmem:[#allocation3 + $0xd8] sm:$0xff] %v1835
      %1872 = vst [vmem:[#allocation3 + $0xe0] sm:$0xff] %v1836
      %1873 = vst [vmem:[#allocation3 + $0xe8] sm:$0xff] %v1837
      %1874 = vst [vmem:[#allocation3 + $0xf0] sm:$0xff] %v1838
      %1875 = vst [vmem:[#allocation3 + $0xf8] sm:$0xff] %v1839
      %1876 = vst [vmem:[#allocation3 + $0x100] sm:$0xff] %v1840
      %1877 = vst [vmem:[#allocation3 + $0x108] sm:$0xff] %v1841
      %1878 = vst [vmem:[#allocation3 + $0x110] sm:$0xff] %v1842
      %1879 = vst [vmem:[#allocation3 + $0x118] sm:$0x3f] %v1843
      %v1880 = vld [vmem:[#allocation2 + $0x13] sm:$0xff]
      %v1881 = vld [vmem:[#allocation2 + $0x1b] sm:$0xff]
      %v1882 = vld [vmem:[#allocation2 + $0x23] sm:$0xff]
      %v1883 = vld [vmem:[#allocation2 + $0x2b] sm:$0xff]
      %v1884 = vld [vmem:[#allocation2 + $0x33] sm:$0xff]
      %v1885 = vld [vmem:[#allocation2 + $0x3b] sm:$0xff]
      %v1886 = vld [vmem:[#allocation2 + $0x43] sm:$0xff]
      %v1887 = vld [vmem:[#allocation2 + $0x4b] sm:$0xff]
      %v1888 = vld [vmem:[#allocation2 + $0x53] sm:$0xff]
      %v1889 = vld [vmem:[#allocation2 + $0x5b] sm:$0xff]
      %v1890 = vld [vmem:[#allocation2 + $0x63] sm:$0xff]
      %v1891 = vld [vmem:[#allocation2 + $0x6b] sm:$0xff]
      %v1892 = vld [vmem:[#allocation2 + $0x73] sm:$0xff]
      %v1893 = vld [vmem:[#allocation2 + $0x7b] sm:$0xff]
      %v1894 = vld [vmem:[#allocation2 + $0x83] sm:$0xff]
      %v1895 = vld [vmem:[#allocation2 + $0x8b] sm:$0xff]
      %v1896 = vld [vmem:[#allocation2 + $0x93] sm:$0xff]
      %v1897 = vld [vmem:[#allocation2 + $0x9b] sm:$0xff]
      %v1898 = vld [vmem:[#allocation2 + $0xa3] sm:$0xff]
      %v1899 = vld [vmem:[#allocation2 + $0xab] sm:$0xff]
      %v1900 = vld [vmem:[#allocation2 + $0xb3] sm:$0xff]
      %v1901 = vld [vmem:[#allocation2 + $0xbb] sm:$0xff]
      %v1902 = vld [vmem:[#allocation2 + $0xc3] sm:$0xff]
      %v1903 = vld [vmem:[#allocation2 + $0xcb] sm:$0xff]
      %v1904 = vld [vmem:[#allocation2 + $0xd3] sm:$0xff]
      %v1905 = vld [vmem:[#allocation2 + $0xdb] sm:$0xff]
      %v1906 = vld [vmem:[#allocation2 + $0xe3] sm:$0xff]
      %v1907 = vld [vmem:[#allocation2 + $0xeb] sm:$0xff]
      %v1908 = vld [vmem:[#allocation2 + $0xf3] sm:$0xff]
      %v1909 = vld [vmem:[#allocation2 + $0xfb] sm:$0xff]
      %v1910 = vld [vmem:[#allocation2 + $0x103] sm:$0xff]
      %v1911 = vld [vmem:[#allocation2 + $0x10b] sm:$0xff]
      %v1912 = vld [vmem:[#allocation2 + $0x113] sm:$0xff]
      %v1913 = vld [vmem:[#allocation2 + $0x11b] sm:$0xff]
      %v1914 = vld [vmem:[#allocation2 + $0x123] sm:$0xff]
      %v1915 = vld [vmem:[#allocation2 + $0x12b] sm:$0x3f]
      %v1916 = vpack.c.bf16 %v1881, %v1880
      %v1917 = vpack.c.bf16 %v1883, %v1882
      %v1918 = vpack.c.bf16 %v1885, %v1884
      %v1919 = vpack.c.bf16 %v1887, %v1886
      %v1920 = vpack.c.bf16 %v1889, %v1888
      %v1921 = vpack.c.bf16 %v1891, %v1890
      %v1922 = vpack.c.bf16 %v1893, %v1892
      %v1923 = vpack.c.bf16 %v1895, %v1894
      %v1924 = vpack.c.bf16 %v1897, %v1896
      %v1925 = vpack.c.bf16 %v1899, %v1898
      %v1926 = vpack.c.bf16 %v1901, %v1900
      %v1927 = vpack.c.bf16 %v1903, %v1902
      %v1928 = vpack.c.bf16 %v1905, %v1904
      %v1929 = vpack.c.bf16 %v1907, %v1906
      %v1930 = vpack.c.bf16 %v1909, %v1908
      %v1931 = vpack.c.bf16 %v1911, %v1910
      %v1932 = vpack.c.bf16 %v1913, %v1912
      %v1933 = vpack.c.bf16 %v1915, %v1914
      %s1934 = scalar_lea.vmem %s3, 256
      %v1935 = vld [vmem:[%s1934] sm:$0xf]
      %v1936 = vld [vmem:[%s1934 + $0x4] sm:$0xf]
      %v1937 = vld [vmem:[%s1934 + $0x8] sm:$0xf]
      %v1938 = vld [vmem:[%s1934 + $0xc] sm:$0xf]
      %v1939 = vld [vmem:[%s1934 + $0x10] sm:$0xf]
      %v1940 = vld [vmem:[%s1934 + $0x14] sm:$0xf]
      %v1941 = vld [vmem:[%s1934 + $0x18] sm:$0xf]
      %v1942 = vld [vmem:[%s1934 + $0x1c] sm:$0xf]
      %v1943 = vld [vmem:[%s1934 + $0x20] sm:$0xf]
      %v1944 = vld [vmem:[%s1934 + $0x24] sm:$0xf]
      %v1945 = vld [vmem:[%s1934 + $0x28] sm:$0xf]
      %v1946 = vld [vmem:[%s1934 + $0x2c] sm:$0xf]
      %v1947 = vld [vmem:[%s1934 + $0x30] sm:$0xf]
      %v1948 = vld [vmem:[%s1934 + $0x34] sm:$0xf]
      %v1949 = vld [vmem:[%s1934 + $0x38] sm:$0xf]
      %v1950 = vld [vmem:[%s1934 + $0x3c] sm:$0xf]
      %v1967 = vunpack.c.l.b16 %v1935
      %v1968 = vunpack.c.l.b16 %v1936
      %v1969 = vunpack.c.l.b16 %v1937
      %v1970 = vunpack.c.l.b16 %v1938
      %v1971 = vunpack.c.l.b16 %v1939
      %v1972 = vunpack.c.l.b16 %v1940
      %v1973 = vunpack.c.l.b16 %v1941
      %v1974 = vunpack.c.l.b16 %v1942
      %v1975 = vunpack.c.l.b16 %v1943
      %v1976 = vunpack.c.l.b16 %v1944
      %v1977 = vunpack.c.l.b16 %v1945
      %v1978 = vunpack.c.l.b16 %v1946
      %v1979 = vunpack.c.l.b16 %v1947
      %v1980 = vunpack.c.l.b16 %v1948
      %v1981 = vunpack.c.l.b16 %v1949
      %v1982 = vunpack.c.l.b16 %v1950
      %v1983 = vpack.c.b16 %v1968, %v1967
      %v1984 = vpack.c.b16 %v1970, %v1969
      %v1985 = vpack.c.b16 %v1972, %v1971
      %v1986 = vpack.c.b16 %v1974, %v1973
      %v1987 = vpack.c.b16 %v1976, %v1975
      %v1988 = vpack.c.b16 %v1978, %v1977
      %v1989 = vpack.c.b16 %v1980, %v1979
      %v1990 = vpack.c.b16 %v1982, %v1981
      %1999 = vmatpush.bf16.msra.mxu0 %v1990
      %2000 = vmatpush.bf16.msra.mxu0 %v1989
      %2001 = vmatpush.bf16.msra.mxu0 %v1988
      %2002 = vmatpush.bf16.msra.mxu0 %v1987
      %2003 = vmatpush.bf16.msra.mxu0 %v1986
      %2004 = vmatpush.bf16.msra.mxu0 %v1985
      %2005 = vmatpush.bf16.msra.mxu0 %v1984
      %2006 = vmatpush.bf16.msra.mxu0 %v1983
      %2007 = vmatmul.bf16.gmra.mxu0 %v1916
      %v2008 = vpop.f32.mrf.mxu0
      %v2009 = vadd.f32 0.0, %v2008
      %v2010 = vpop.f32.mrf.mxu0
      %v2011 = vadd.f32 0.0, %v2010
      %2012 = vmatmul.bf16.gmra.mxu0 %v1917
      %v2013 = vpop.f32.mrf.mxu0
      %v2014 = vadd.f32 0.0, %v2013
      %v2015 = vpop.f32.mrf.mxu0
      %v2016 = vadd.f32 0.0, %v2015
      %2017 = vmatmul.bf16.gmra.mxu0 %v1918
      %v2018 = vpop.f32.mrf.mxu0
      %v2019 = vadd.f32 0.0, %v2018
      %v2020 = vpop.f32.mrf.mxu0
      %v2021 = vadd.f32 0.0, %v2020
      %2022 = vmatmul.bf16.gmra.mxu0 %v1919
      %v2023 = vpop.f32.mrf.mxu0
      %v2024 = vadd.f32 0.0, %v2023
      %v2025 = vpop.f32.mrf.mxu0
      %v2026 = vadd.f32 0.0, %v2025
      %2027 = vmatmul.bf16.gmra.mxu0 %v1920
      %v2028 = vpop.f32.mrf.mxu0
      %v2029 = vadd.f32 0.0, %v2028
      %v2030 = vpop.f32.mrf.mxu0
      %v2031 = vadd.f32 0.0, %v2030
      %2032 = vmatmul.bf16.gmra.mxu0 %v1921
      %v2033 = vpop.f32.mrf.mxu0
      %v2034 = vadd.f32 0.0, %v2033
      %v2035 = vpop.f32.mrf.mxu0
      %v2036 = vadd.f32 0.0, %v2035
      %2037 = vmatmul.bf16.gmra.mxu0 %v1922
      %v2038 = vpop.f32.mrf.mxu0
      %v2039 = vadd.f32 0.0, %v2038
      %v2040 = vpop.f32.mrf.mxu0
      %v2041 = vadd.f32 0.0, %v2040
      %2042 = vmatmul.bf16.gmra.mxu0 %v1923
      %v2043 = vpop.f32.mrf.mxu0
      %v2044 = vadd.f32 0.0, %v2043
      %v2045 = vpop.f32.mrf.mxu0
      %v2046 = vadd.f32 0.0, %v2045
      %2047 = vmatmul.bf16.gmra.mxu0 %v1924
      %v2048 = vpop.f32.mrf.mxu0
      %v2049 = vadd.f32 0.0, %v2048
      %v2050 = vpop.f32.mrf.mxu0
      %v2051 = vadd.f32 0.0, %v2050
      %2052 = vmatmul.bf16.gmra.mxu0 %v1925
      %v2053 = vpop.f32.mrf.mxu0
      %v2054 = vadd.f32 0.0, %v2053
      %v2055 = vpop.f32.mrf.mxu0
      %v2056 = vadd.f32 0.0, %v2055
      %2057 = vmatmul.bf16.gmra.mxu0 %v1926
      %v2058 = vpop.f32.mrf.mxu0
      %v2059 = vadd.f32 0.0, %v2058
      %v2060 = vpop.f32.mrf.mxu0
      %v2061 = vadd.f32 0.0, %v2060
      %2062 = vmatmul.bf16.gmra.mxu0 %v1927
      %v2063 = vpop.f32.mrf.mxu0
      %v2064 = vadd.f32 0.0, %v2063
      %v2065 = vpop.f32.mrf.mxu0
      %v2066 = vadd.f32 0.0, %v2065
      %2067 = vmatmul.bf16.gmra.mxu0 %v1928
      %v2068 = vpop.f32.mrf.mxu0
      %v2069 = vadd.f32 0.0, %v2068
      %v2070 = vpop.f32.mrf.mxu0
      %v2071 = vadd.f32 0.0, %v2070
      %2072 = vmatmul.bf16.gmra.mxu0 %v1929
      %v2073 = vpop.f32.mrf.mxu0
      %v2074 = vadd.f32 0.0, %v2073
      %v2075 = vpop.f32.mrf.mxu0
      %v2076 = vadd.f32 0.0, %v2075
      %2077 = vmatmul.bf16.gmra.mxu0 %v1930
      %v2078 = vpop.f32.mrf.mxu0
      %v2079 = vadd.f32 0.0, %v2078
      %v2080 = vpop.f32.mrf.mxu0
      %v2081 = vadd.f32 0.0, %v2080
      %2082 = vmatmul.bf16.gmra.mxu0 %v1931
      %v2083 = vpop.f32.mrf.mxu0
      %v2084 = vadd.f32 0.0, %v2083
      %v2085 = vpop.f32.mrf.mxu0
      %v2086 = vadd.f32 0.0, %v2085
      %2087 = vmatmul.bf16.gmra.mxu0 %v1932
      %v2088 = vpop.f32.mrf.mxu0
      %v2089 = vadd.f32 0.0, %v2088
      %v2090 = vpop.f32.mrf.mxu0
      %v2091 = vadd.f32 0.0, %v2090
      %2092 = vmatmul.bf16.gmra.mxu0 %v1933
      %v2093 = vpop.f32.mrf.mxu0
      %v2094 = vadd.f32 0.0, %v2093
      %v2095 = vpop.f32.mrf.mxu0
      %v2096 = vadd.f32 0.0, %v2095
      %2097 = vdwg.mxu0
      %v2098 = vld [vmem:[#allocation3] sm:$0xff]
      %v2099 = vld [vmem:[#allocation3 + $0x8] sm:$0xff]
      %v2100 = vld [vmem:[#allocation3 + $0x10] sm:$0xff]
      %v2101 = vld [vmem:[#allocation3 + $0x18] sm:$0xff]
      %v2102 = vld [vmem:[#allocation3 + $0x20] sm:$0xff]
      %v2103 = vld [vmem:[#allocation3 + $0x28] sm:$0xff]
      %v2104 = vld [vmem:[#allocation3 + $0x30] sm:$0xff]
      %v2105 = vld [vmem:[#allocation3 + $0x38] sm:$0xff]
      %v2106 = vld [vmem:[#allocation3 + $0x40] sm:$0xff]
      %v2107 = vld [vmem:[#allocation3 + $0x48] sm:$0xff]
      %v2108 = vld [vmem:[#allocation3 + $0x50] sm:$0xff]
      %v2109 = vld [vmem:[#allocation3 + $0x58] sm:$0xff]
      %v2110 = vld [vmem:[#allocation3 + $0x60] sm:$0xff]
      %v2111 = vld [vmem:[#allocation3 + $0x68] sm:$0xff]
      %v2112 = vld [vmem:[#allocation3 + $0x70] sm:$0xff]
      %v2113 = vld [vmem:[#allocation3 + $0x78] sm:$0xff]
      %v2114 = vld [vmem:[#allocation3 + $0x80] sm:$0xff]
      %v2115 = vld [vmem:[#allocation3 + $0x88] sm:$0xff]
      %v2116 = vld [vmem:[#allocation3 + $0x90] sm:$0xff]
      %v2117 = vld [vmem:[#allocation3 + $0x98] sm:$0xff]
      %v2118 = vld [vmem:[#allocation3 + $0xa0] sm:$0xff]
      %v2119 = vld [vmem:[#allocation3 + $0xa8] sm:$0xff]
      %v2120 = vld [vmem:[#allocation3 + $0xb0] sm:$0xff]
      %v2121 = vld [vmem:[#allocation3 + $0xb8] sm:$0xff]
      %v2122 = vld [vmem:[#allocation3 + $0xc0] sm:$0xff]
      %v2123 = vld [vmem:[#allocation3 + $0xc8] sm:$0xff]
      %v2124 = vld [vmem:[#allocation3 + $0xd0] sm:$0xff]
      %v2125 = vld [vmem:[#allocation3 + $0xd8] sm:$0xff]
      %v2126 = vld [vmem:[#allocation3 + $0xe0] sm:$0xff]
      %v2127 = vld [vmem:[#allocation3 + $0xe8] sm:$0xff]
      %v2128 = vld [vmem:[#allocation3 + $0xf0] sm:$0xff]
      %v2129 = vld [vmem:[#allocation3 + $0xf8] sm:$0xff]
      %v2130 = vld [vmem:[#allocation3 + $0x100] sm:$0xff]
      %v2131 = vld [vmem:[#allocation3 + $0x108] sm:$0xff]
      %v2132 = vld [vmem:[#allocation3 + $0x110] sm:$0xff]
      %v2133 = vld [vmem:[#allocation3 + $0x118] sm:$0x3f]
      %v2134 = vadd.f32 %v2098, %v2009
      %v2135 = vadd.f32 %v2099, %v2011
      %v2136 = vadd.f32 %v2100, %v2014
      %v2137 = vadd.f32 %v2101, %v2016
      %v2138 = vadd.f32 %v2102, %v2019
      %v2139 = vadd.f32 %v2103, %v2021
      %v2140 = vadd.f32 %v2104, %v2024
      %v2141 = vadd.f32 %v2105, %v2026
      %v2142 = vadd.f32 %v2106, %v2029
      %v2143 = vadd.f32 %v2107, %v2031
      %v2144 = vadd.f32 %v2108, %v2034
      %v2145 = vadd.f32 %v2109, %v2036
      %v2146 = vadd.f32 %v2110, %v2039
      %v2147 = vadd.f32 %v2111, %v2041
      %v2148 = vadd.f32 %v2112, %v2044
      %v2149 = vadd.f32 %v2113, %v2046
      %v2150 = vadd.f32 %v2114, %v2049
      %v2151 = vadd.f32 %v2115, %v2051
      %v2152 = vadd.f32 %v2116, %v2054
      %v2153 = vadd.f32 %v2117, %v2056
      %v2154 = vadd.f32 %v2118, %v2059
      %v2155 = vadd.f32 %v2119, %v2061
      %v2156 = vadd.f32 %v2120, %v2064
      %v2157 = vadd.f32 %v2121, %v2066
      %v2158 = vadd.f32 %v2122, %v2069
      %v2159 = vadd.f32 %v2123, %v2071
      %v2160 = vadd.f32 %v2124, %v2074
      %v2161 = vadd.f32 %v2125, %v2076
      %v2162 = vadd.f32 %v2126, %v2079
      %v2163 = vadd.f32 %v2127, %v2081
      %v2164 = vadd.f32 %v2128, %v2084
      %v2165 = vadd.f32 %v2129, %v2086
      %v2166 = vadd.f32 %v2130, %v2089
      %v2167 = vadd.f32 %v2131, %v2091
      %v2168 = vadd.f32 %v2132, %v2094
      %v2169 = vadd.f32 %v2133, %v2096
      %2170 = vst [vmem:[#allocation3] sm:$0xff] %v2134
      %2171 = vst [vmem:[#allocation3 + $0x8] sm:$0xff] %v2135
      %2172 = vst [vmem:[#allocation3 + $0x10] sm:$0xff] %v2136
      %2173 = vst [vmem:[#allocation3 + $0x18] sm:$0xff] %v2137
      %2174 = vst [vmem:[#allocation3 + $0x20] sm:$0xff] %v2138
      %2175 = vst [vmem:[#allocation3 + $0x28] sm:$0xff] %v2139
      %2176 = vst [vmem:[#allocation3 + $0x30] sm:$0xff] %v2140
      %2177 = vst [vmem:[#allocation3 + $0x38] sm:$0xff] %v2141
      %2178 = vst [vmem:[#allocation3 + $0x40] sm:$0xff] %v2142
      %2179 = vst [vmem:[#allocation3 + $0x48] sm:$0xff] %v2143
      %2180 = vst [vmem:[#allocation3 + $0x50] sm:$0xff] %v2144
      %2181 = vst [vmem:[#allocation3 + $0x58] sm:$0xff] %v2145
      %2182 = vst [vmem:[#allocation3 + $0x60] sm:$0xff] %v2146
      %2183 = vst [vmem:[#allocation3 + $0x68] sm:$0xff] %v2147
      %2184 = vst [vmem:[#allocation3 + $0x70] sm:$0xff] %v2148
      %2185 = vst [vmem:[#allocation3 + $0x78] sm:$0xff] %v2149
      %2186 = vst [vmem:[#allocation3 + $0x80] sm:$0xff] %v2150
      %2187 = vst [vmem:[#allocation3 + $0x88] sm:$0xff] %v2151
      %2188 = vst [vmem:[#allocation3 + $0x90] sm:$0xff] %v2152
      %2189 = vst [vmem:[#allocation3 + $0x98] sm:$0xff] %v2153
      %2190 = vst [vmem:[#allocation3 + $0xa0] sm:$0xff] %v2154
      %2191 = vst [vmem:[#allocation3 + $0xa8] sm:$0xff] %v2155
      %2192 = vst [vmem:[#allocation3 + $0xb0] sm:$0xff] %v2156
      %2193 = vst [vmem:[#allocation3 + $0xb8] sm:$0xff] %v2157
      %2194 = vst [vmem:[#allocation3 + $0xc0] sm:$0xff] %v2158
      %2195 = vst [vmem:[#allocation3 + $0xc8] sm:$0xff] %v2159
      %2196 = vst [vmem:[#allocation3 + $0xd0] sm:$0xff] %v2160
      %2197 = vst [vmem:[#allocation3 + $0xd8] sm:$0xff] %v2161
      %2198 = vst [vmem:[#allocation3 + $0xe0] sm:$0xff] %v2162
      %2199 = vst [vmem:[#allocation3 + $0xe8] sm:$0xff] %v2163
      %2200 = vst [vmem:[#allocation3 + $0xf0] sm:$0xff] %v2164
      %2201 = vst [vmem:[#allocation3 + $0xf8] sm:$0xff] %v2165
      %2202 = vst [vmem:[#allocation3 + $0x100] sm:$0xff] %v2166
      %2203 = vst [vmem:[#allocation3 + $0x108] sm:$0xff] %v2167
      %2204 = vst [vmem:[#allocation3 + $0x110] sm:$0xff] %v2168
      %2205 = vst [vmem:[#allocation3 + $0x118] sm:$0x3f] %v2169
      %v2206 = vld [vmem:[#allocation2 + $0x14] sm:$0xff]
      %v2207 = vld [vmem:[#allocation2 + $0x1c] sm:$0xff]
      %v2208 = vld [vmem:[#allocation2 + $0x24] sm:$0xff]
      %v2209 = vld [vmem:[#allocation2 + $0x2c] sm:$0xff]
      %v2210 = vld [vmem:[#allocation2 + $0x34] sm:$0xff]
      %v2211 = vld [vmem:[#allocation2 + $0x3c] sm:$0xff]
      %v2212 = vld [vmem:[#allocation2 + $0x44] sm:$0xff]
      %v2213 = vld [vmem:[#allocation2 + $0x4c] sm:$0xff]
      %v2214 = vld [vmem:[#allocation2 + $0x54] sm:$0xff]
      %v2215 = vld [vmem:[#allocation2 + $0x5c] sm:$0xff]
      %v2216 = vld [vmem:[#allocation2 + $0x64] sm:$0xff]
      %v2217 = vld [vmem:[#allocation2 + $0x6c] sm:$0xff]
      %v2218 = vld [vmem:[#allocation2 + $0x74] sm:$0xff]
      %v2219 = vld [vmem:[#allocation2 + $0x7c] sm:$0xff]
      %v2220 = vld [vmem:[#allocation2 + $0x84] sm:$0xff]
      %v2221 = vld [vmem:[#allocation2 + $0x8c] sm:$0xff]
      %v2222 = vld [vmem:[#allocation2 + $0x94] sm:$0xff]
      %v2223 = vld [vmem:[#allocation2 + $0x9c] sm:$0xff]
      %v2224 = vld [vmem:[#allocation2 + $0xa4] sm:$0xff]
      %v2225 = vld [vmem:[#allocation2 + $0xac] sm:$0xff]
      %v2226 = vld [vmem:[#allocation2 + $0xb4] sm:$0xff]
      %v2227 = vld [vmem:[#allocation2 + $0xbc] sm:$0xff]
      %v2228 = vld [vmem:[#allocation2 + $0xc4] sm:$0xff]
      %v2229 = vld [vmem:[#allocation2 + $0xcc] sm:$0xff]
      %v2230 = vld [vmem:[#allocation2 + $0xd4] sm:$0xff]
      %v2231 = vld [vmem:[#allocation2 + $0xdc] sm:$0xff]
      %v2232 = vld [vmem:[#allocation2 + $0xe4] sm:$0xff]
      %v2233 = vld [vmem:[#allocation2 + $0xec] sm:$0xff]
      %v2234 = vld [vmem:[#allocation2 + $0xf4] sm:$0xff]
      %v2235 = vld [vmem:[#allocation2 + $0xfc] sm:$0xff]
      %v2236 = vld [vmem:[#allocation2 + $0x104] sm:$0xff]
      %v2237 = vld [vmem:[#allocation2 + $0x10c] sm:$0xff]
      %v2238 = vld [vmem:[#allocation2 + $0x114] sm:$0xff]
      %v2239 = vld [vmem:[#allocation2 + $0x11c] sm:$0xff]
      %v2240 = vld [vmem:[#allocation2 + $0x124] sm:$0xff]
      %v2241 = vld [vmem:[#allocation2 + $0x12c] sm:$0x3f]
      %v2242 = vpack.c.bf16 %v2207, %v2206
      %v2243 = vpack.c.bf16 %v2209, %v2208
      %v2244 = vpack.c.bf16 %v2211, %v2210
      %v2245 = vpack.c.bf16 %v2213, %v2212
      %v2246 = vpack.c.bf16 %v2215, %v2214
      %v2247 = vpack.c.bf16 %v2217, %v2216
      %v2248 = vpack.c.bf16 %v2219, %v2218
      %v2249 = vpack.c.bf16 %v2221, %v2220
      %v2250 = vpack.c.bf16 %v2223, %v2222
      %v2251 = vpack.c.bf16 %v2225, %v2224
      %v2252 = vpack.c.bf16 %v2227, %v2226
      %v2253 = vpack.c.bf16 %v2229, %v2228
      %v2254 = vpack.c.bf16 %v2231, %v2230
      %v2255 = vpack.c.bf16 %v2233, %v2232
      %v2256 = vpack.c.bf16 %v2235, %v2234
      %v2257 = vpack.c.bf16 %v2237, %v2236
      %v2258 = vpack.c.bf16 %v2239, %v2238
      %v2259 = vpack.c.bf16 %v2241, %v2240
      %s2260 = scalar_lea.vmem %s3, 320
      %v2261 = vld [vmem:[%s2260] sm:$0xf]
      %v2262 = vld [vmem:[%s2260 + $0x4] sm:$0xf]
      %v2263 = vld [vmem:[%s2260 + $0x8] sm:$0xf]
      %v2264 = vld [vmem:[%s2260 + $0xc] sm:$0xf]
      %v2265 = vld [vmem:[%s2260 + $0x10] sm:$0xf]
      %v2266 = vld [vmem:[%s2260 + $0x14] sm:$0xf]
      %v2267 = vld [vmem:[%s2260 + $0x18] sm:$0xf]
      %v2268 = vld [vmem:[%s2260 + $0x1c] sm:$0xf]
      %v2269 = vld [vmem:[%s2260 + $0x20] sm:$0xf]
      %v2270 = vld [vmem:[%s2260 + $0x24] sm:$0xf]
      %v2271 = vld [vmem:[%s2260 + $0x28] sm:$0xf]
      %v2272 = vld [vmem:[%s2260 + $0x2c] sm:$0xf]
      %v2273 = vld [vmem:[%s2260 + $0x30] sm:$0xf]
      %v2274 = vld [vmem:[%s2260 + $0x34] sm:$0xf]
      %v2275 = vld [vmem:[%s2260 + $0x38] sm:$0xf]
      %v2276 = vld [vmem:[%s2260 + $0x3c] sm:$0xf]
      %v2293 = vunpack.c.l.b16 %v2261
      %v2294 = vunpack.c.l.b16 %v2262
      %v2295 = vunpack.c.l.b16 %v2263
      %v2296 = vunpack.c.l.b16 %v2264
      %v2297 = vunpack.c.l.b16 %v2265
      %v2298 = vunpack.c.l.b16 %v2266
      %v2299 = vunpack.c.l.b16 %v2267
      %v2300 = vunpack.c.l.b16 %v2268
      %v2301 = vunpack.c.l.b16 %v2269
      %v2302 = vunpack.c.l.b16 %v2270
      %v2303 = vunpack.c.l.b16 %v2271
      %v2304 = vunpack.c.l.b16 %v2272
      %v2305 = vunpack.c.l.b16 %v2273
      %v2306 = vunpack.c.l.b16 %v2274
      %v2307 = vunpack.c.l.b16 %v2275
      %v2308 = vunpack.c.l.b16 %v2276
      %v2309 = vpack.c.b16 %v2294, %v2293
      %v2310 = vpack.c.b16 %v2296, %v2295
      %v2311 = vpack.c.b16 %v2298, %v2297
      %v2312 = vpack.c.b16 %v2300, %v2299
      %v2313 = vpack.c.b16 %v2302, %v2301
      %v2314 = vpack.c.b16 %v2304, %v2303
      %v2315 = vpack.c.b16 %v2306, %v2305
      %v2316 = vpack.c.b16 %v2308, %v2307
      %2325 = vmatpush.bf16.msra.mxu0 %v2316
      %2326 = vmatpush.bf16.msra.mxu0 %v2315
      %2327 = vmatpush.bf16.msra.mxu0 %v2314
      %2328 = vmatpush.bf16.msra.mxu0 %v2313
      %2329 = vmatpush.bf16.msra.mxu0 %v2312
      %2330 = vmatpush.bf16.msra.mxu0 %v2311
      %2331 = vmatpush.bf16.msra.mxu0 %v2310
      %2332 = vmatpush.bf16.msra.mxu0 %v2309
      %2333 = vmatmul.bf16.gmra.mxu0 %v2242
      %v2334 = vpop.f32.mrf.mxu0
      %v2335 = vadd.f32 0.0, %v2334
      %v2336 = vpop.f32.mrf.mxu0
      %v2337 = vadd.f32 0.0, %v2336
      %2338 = vmatmul.bf16.gmra.mxu0 %v2243
      %v2339 = vpop.f32.mrf.mxu0
      %v2340 = vadd.f32 0.0, %v2339
      %v2341 = vpop.f32.mrf.mxu0
      %v2342 = vadd.f32 0.0, %v2341
      %2343 = vmatmul.bf16.gmra.mxu0 %v2244
      %v2344 = vpop.f32.mrf.mxu0
      %v2345 = vadd.f32 0.0, %v2344
      %v2346 = vpop.f32.mrf.mxu0
      %v2347 = vadd.f32 0.0, %v2346
      %2348 = vmatmul.bf16.gmra.mxu0 %v2245
      %v2349 = vpop.f32.mrf.mxu0
      %v2350 = vadd.f32 0.0, %v2349
      %v2351 = vpop.f32.mrf.mxu0
      %v2352 = vadd.f32 0.0, %v2351
      %2353 = vmatmul.bf16.gmra.mxu0 %v2246
      %v2354 = vpop.f32.mrf.mxu0
      %v2355 = vadd.f32 0.0, %v2354
      %v2356 = vpop.f32.mrf.mxu0
      %v2357 = vadd.f32 0.0, %v2356
      %2358 = vmatmul.bf16.gmra.mxu0 %v2247
      %v2359 = vpop.f32.mrf.mxu0
      %v2360 = vadd.f32 0.0, %v2359
      %v2361 = vpop.f32.mrf.mxu0
      %v2362 = vadd.f32 0.0, %v2361
      %2363 = vmatmul.bf16.gmra.mxu0 %v2248
      %v2364 = vpop.f32.mrf.mxu0
      %v2365 = vadd.f32 0.0, %v2364
      %v2366 = vpop.f32.mrf.mxu0
      %v2367 = vadd.f32 0.0, %v2366
      %2368 = vmatmul.bf16.gmra.mxu0 %v2249
      %v2369 = vpop.f32.mrf.mxu0
      %v2370 = vadd.f32 0.0, %v2369
      %v2371 = vpop.f32.mrf.mxu0
      %v2372 = vadd.f32 0.0, %v2371
      %2373 = vmatmul.bf16.gmra.mxu0 %v2250
      %v2374 = vpop.f32.mrf.mxu0
      %v2375 = vadd.f32 0.0, %v2374
      %v2376 = vpop.f32.mrf.mxu0
      %v2377 = vadd.f32 0.0, %v2376
      %2378 = vmatmul.bf16.gmra.mxu0 %v2251
      %v2379 = vpop.f32.mrf.mxu0
      %v2380 = vadd.f32 0.0, %v2379
      %v2381 = vpop.f32.mrf.mxu0
      %v2382 = vadd.f32 0.0, %v2381
      %2383 = vmatmul.bf16.gmra.mxu0 %v2252
      %v2384 = vpop.f32.mrf.mxu0
      %v2385 = vadd.f32 0.0, %v2384
      %v2386 = vpop.f32.mrf.mxu0
      %v2387 = vadd.f32 0.0, %v2386
      %2388 = vmatmul.bf16.gmra.mxu0 %v2253
      %v2389 = vpop.f32.mrf.mxu0
      %v2390 = vadd.f32 0.0, %v2389
      %v2391 = vpop.f32.mrf.mxu0
      %v2392 = vadd.f32 0.0, %v2391
      %2393 = vmatmul.bf16.gmra.mxu0 %v2254
      %v2394 = vpop.f32.mrf.mxu0
      %v2395 = vadd.f32 0.0, %v2394
      %v2396 = vpop.f32.mrf.mxu0
      %v2397 = vadd.f32 0.0, %v2396
      %2398 = vmatmul.bf16.gmra.mxu0 %v2255
      %v2399 = vpop.f32.mrf.mxu0
      %v2400 = vadd.f32 0.0, %v2399
      %v2401 = vpop.f32.mrf.mxu0
      %v2402 = vadd.f32 0.0, %v2401
      %2403 = vmatmul.bf16.gmra.mxu0 %v2256
      %v2404 = vpop.f32.mrf.mxu0
      %v2405 = vadd.f32 0.0, %v2404
      %v2406 = vpop.f32.mrf.mxu0
      %v2407 = vadd.f32 0.0, %v2406
      %2408 = vmatmul.bf16.gmra.mxu0 %v2257
      %v2409 = vpop.f32.mrf.mxu0
      %v2410 = vadd.f32 0.0, %v2409
      %v2411 = vpop.f32.mrf.mxu0
      %v2412 = vadd.f32 0.0, %v2411
      %2413 = vmatmul.bf16.gmra.mxu0 %v2258
      %v2414 = vpop.f32.mrf.mxu0
      %v2415 = vadd.f32 0.0, %v2414
      %v2416 = vpop.f32.mrf.mxu0
      %v2417 = vadd.f32 0.0, %v2416
      %2418 = vmatmul.bf16.gmra.mxu0 %v2259
      %v2419 = vpop.f32.mrf.mxu0
      %v2420 = vadd.f32 0.0, %v2419
      %v2421 = vpop.f32.mrf.mxu0
      %v2422 = vadd.f32 0.0, %v2421
      %2423 = vdwg.mxu0
      %v2424 = vld [vmem:[#allocation3] sm:$0xff]
      %v2425 = vld [vmem:[#allocation3 + $0x8] sm:$0xff]
      %v2426 = vld [vmem:[#allocation3 + $0x10] sm:$0xff]
      %v2427 = vld [vmem:[#allocation3 + $0x18] sm:$0xff]
      %v2428 = vld [vmem:[#allocation3 + $0x20] sm:$0xff]
      %v2429 = vld [vmem:[#allocation3 + $0x28] sm:$0xff]
      %v2430 = vld [vmem:[#allocation3 + $0x30] sm:$0xff]
      %v2431 = vld [vmem:[#allocation3 + $0x38] sm:$0xff]
      %v2432 = vld [vmem:[#allocation3 + $0x40] sm:$0xff]
      %v2433 = vld [vmem:[#allocation3 + $0x48] sm:$0xff]
      %v2434 = vld [vmem:[#allocation3 + $0x50] sm:$0xff]
      %v2435 = vld [vmem:[#allocation3 + $0x58] sm:$0xff]
      %v2436 = vld [vmem:[#allocation3 + $0x60] sm:$0xff]
      %v2437 = vld [vmem:[#allocation3 + $0x68] sm:$0xff]
      %v2438 = vld [vmem:[#allocation3 + $0x70] sm:$0xff]
      %v2439 = vld [vmem:[#allocation3 + $0x78] sm:$0xff]
      %v2440 = vld [vmem:[#allocation3 + $0x80] sm:$0xff]
      %v2441 = vld [vmem:[#allocation3 + $0x88] sm:$0xff]
      %v2442 = vld [vmem:[#allocation3 + $0x90] sm:$0xff]
      %v2443 = vld [vmem:[#allocation3 + $0x98] sm:$0xff]
      %v2444 = vld [vmem:[#allocation3 + $0xa0] sm:$0xff]
      %v2445 = vld [vmem:[#allocation3 + $0xa8] sm:$0xff]
      %v2446 = vld [vmem:[#allocation3 + $0xb0] sm:$0xff]
      %v2447 = vld [vmem:[#allocation3 + $0xb8] sm:$0xff]
      %v2448 = vld [vmem:[#allocation3 + $0xc0] sm:$0xff]
      %v2449 = vld [vmem:[#allocation3 + $0xc8] sm:$0xff]
      %v2450 = vld [vmem:[#allocation3 + $0xd0] sm:$0xff]
      %v2451 = vld [vmem:[#allocation3 + $0xd8] sm:$0xff]
      %v2452 = vld [vmem:[#allocation3 + $0xe0] sm:$0xff]
      %v2453 = vld [vmem:[#allocation3 + $0xe8] sm:$0xff]
      %v2454 = vld [vmem:[#allocation3 + $0xf0] sm:$0xff]
      %v2455 = vld [vmem:[#allocation3 + $0xf8] sm:$0xff]
      %v2456 = vld [vmem:[#allocation3 + $0x100] sm:$0xff]
      %v2457 = vld [vmem:[#allocation3 + $0x108] sm:$0xff]
      %v2458 = vld [vmem:[#allocation3 + $0x110] sm:$0xff]
      %v2459 = vld [vmem:[#allocation3 + $0x118] sm:$0x3f]
      %v2460 = vadd.f32 %v2424, %v2335
      %v2461 = vadd.f32 %v2425, %v2337
      %v2462 = vadd.f32 %v2426, %v2340
      %v2463 = vadd.f32 %v2427, %v2342
      %v2464 = vadd.f32 %v2428, %v2345
      %v2465 = vadd.f32 %v2429, %v2347
      %v2466 = vadd.f32 %v2430, %v2350
      %v2467 = vadd.f32 %v2431, %v2352
      %v2468 = vadd.f32 %v2432, %v2355
      %v2469 = vadd.f32 %v2433, %v2357
      %v2470 = vadd.f32 %v2434, %v2360
      %v2471 = vadd.f32 %v2435, %v2362
      %v2472 = vadd.f32 %v2436, %v2365
      %v2473 = vadd.f32 %v2437, %v2367
      %v2474 = vadd.f32 %v2438, %v2370
      %v2475 = vadd.f32 %v2439, %v2372
      %v2476 = vadd.f32 %v2440, %v2375
      %v2477 = vadd.f32 %v2441, %v2377
      %v2478 = vadd.f32 %v2442, %v2380
      %v2479 = vadd.f32 %v2443, %v2382
      %v2480 = vadd.f32 %v2444, %v2385
      %v2481 = vadd.f32 %v2445, %v2387
      %v2482 = vadd.f32 %v2446, %v2390
      %v2483 = vadd.f32 %v2447, %v2392
      %v2484 = vadd.f32 %v2448, %v2395
      %v2485 = vadd.f32 %v2449, %v2397
      %v2486 = vadd.f32 %v2450, %v2400
      %v2487 = vadd.f32 %v2451, %v2402
      %v2488 = vadd.f32 %v2452, %v2405
      %v2489 = vadd.f32 %v2453, %v2407
      %v2490 = vadd.f32 %v2454, %v2410
      %v2491 = vadd.f32 %v2455, %v2412
      %v2492 = vadd.f32 %v2456, %v2415
      %v2493 = vadd.f32 %v2457, %v2417
      %v2494 = vadd.f32 %v2458, %v2420
      %v2495 = vadd.f32 %v2459, %v2422
      %2496 = vst [vmem:[#allocation3] sm:$0xff] %v2460
      %2497 = vst [vmem:[#allocation3 + $0x8] sm:$0xff] %v2461
      %2498 = vst [vmem:[#allocation3 + $0x10] sm:$0xff] %v2462
      %2499 = vst [vmem:[#allocation3 + $0x18] sm:$0xff] %v2463
      %2500 = vst [vmem:[#allocation3 + $0x20] sm:$0xff] %v2464
      %2501 = vst [vmem:[#allocation3 + $0x28] sm:$0xff] %v2465
      %2502 = vst [vmem:[#allocation3 + $0x30] sm:$0xff] %v2466
      %2503 = vst [vmem:[#allocation3 + $0x38] sm:$0xff] %v2467
      %2504 = vst [vmem:[#allocation3 + $0x40] sm:$0xff] %v2468
      %2505 = vst [vmem:[#allocation3 + $0x48] sm:$0xff] %v2469
      %2506 = vst [vmem:[#allocation3 + $0x50] sm:$0xff] %v2470
      %2507 = vst [vmem:[#allocation3 + $0x58] sm:$0xff] %v2471
      %2508 = vst [vmem:[#allocation3 + $0x60] sm:$0xff] %v2472
      %2509 = vst [vmem:[#allocation3 + $0x68] sm:$0xff] %v2473
      %2510 = vst [vmem:[#allocation3 + $0x70] sm:$0xff] %v2474
      %2511 = vst [vmem:[#allocation3 + $0x78] sm:$0xff] %v2475
      %2512 = vst [vmem:[#allocation3 + $0x80] sm:$0xff] %v2476
      %2513 = vst [vmem:[#allocation3 + $0x88] sm:$0xff] %v2477
      %2514 = vst [vmem:[#allocation3 + $0x90] sm:$0xff] %v2478
      %2515 = vst [vmem:[#allocation3 + $0x98] sm:$0xff] %v2479
      %2516 = vst [vmem:[#allocation3 + $0xa0] sm:$0xff] %v2480
      %2517 = vst [vmem:[#allocation3 + $0xa8] sm:$0xff] %v2481
      %2518 = vst [vmem:[#allocation3 + $0xb0] sm:$0xff] %v2482
      %2519 = vst [vmem:[#allocation3 + $0xb8] sm:$0xff] %v2483
      %2520 = vst [vmem:[#allocation3 + $0xc0] sm:$0xff] %v2484
      %2521 = vst [vmem:[#allocation3 + $0xc8] sm:$0xff] %v2485
      %2522 = vst [vmem:[#allocation3 + $0xd0] sm:$0xff] %v2486
      %2523 = vst [vmem:[#allocation3 + $0xd8] sm:$0xff] %v2487
      %2524 = vst [vmem:[#allocation3 + $0xe0] sm:$0xff] %v2488
      %2525 = vst [vmem:[#allocation3 + $0xe8] sm:$0xff] %v2489
      %2526 = vst [vmem:[#allocation3 + $0xf0] sm:$0xff] %v2490
      %2527 = vst [vmem:[#allocation3 + $0xf8] sm:$0xff] %v2491
      %2528 = vst [vmem:[#allocation3 + $0x100] sm:$0xff] %v2492
      %2529 = vst [vmem:[#allocation3 + $0x108] sm:$0xff] %v2493
      %2530 = vst [vmem:[#allocation3 + $0x110] sm:$0xff] %v2494
      %2531 = vst [vmem:[#allocation3 + $0x118] sm:$0x3f] %v2495
      %v2532 = vld [vmem:[#allocation2 + $0x24] sm:$0xff]
      %v2533 = vld [vmem:[#allocation2 + $0x2c] sm:$0xff]
      %v2534 = vld [vmem:[#allocation2 + $0x34] sm:$0xff]
      %v2535 = vld [vmem:[#allocation2 + $0x3c] sm:$0xff]
      %v2536 = vld [vmem:[#allocation2 + $0x44] sm:$0xff]
      %v2537 = vld [vmem:[#allocation2 + $0x4c] sm:$0xff]
      %v2538 = vld [vmem:[#allocation2 + $0x54] sm:$0xff]
      %v2539 = vld [vmem:[#allocation2 + $0x5c] sm:$0xff]
      %v2540 = vld [vmem:[#allocation2 + $0x64] sm:$0xff]
      %v2541 = vld [vmem:[#allocation2 + $0x6c] sm:$0xff]
      %v2542 = vld [vmem:[#allocation2 + $0x74] sm:$0xff]
      %v2543 = vld [vmem:[#allocation2 + $0x7c] sm:$0xff]
      %v2544 = vld [vmem:[#allocation2 + $0x84] sm:$0xff]
      %v2545 = vld [vmem:[#allocation2 + $0x8c] sm:$0xff]
      %v2546 = vld [vmem:[#allocation2 + $0x94] sm:$0xff]
      %v2547 = vld [vmem:[#allocation2 + $0x9c] sm:$0xff]
      %v2548 = vld [vmem:[#allocation2 + $0xa4] sm:$0xff]
      %v2549 = vld [vmem:[#allocation2 + $0xac] sm:$0xff]
      %v2550 = vld [vmem:[#allocation2 + $0xb4] sm:$0xff]
      %v2551 = vld [vmem:[#allocation2 + $0xbc] sm:$0xff]
      %v2552 = vld [vmem:[#allocation2 + $0xc4] sm:$0xff]
      %v2553 = vld [vmem:[#allocation2 + $0xcc] sm:$0xff]
      %v2554 = vld [vmem:[#allocation2 + $0xd4] sm:$0xff]
      %v2555 = vld [vmem:[#allocation2 + $0xdc] sm:$0xff]
      %v2556 = vld [vmem:[#allocation2 + $0xe4] sm:$0xff]
      %v2557 = vld [vmem:[#allocation2 + $0xec] sm:$0xff]
      %v2558 = vld [vmem:[#allocation2 + $0xf4] sm:$0xff]
      %v2559 = vld [vmem:[#allocation2 + $0xfc] sm:$0xff]
      %v2560 = vld [vmem:[#allocation2 + $0x104] sm:$0xff]
      %v2561 = vld [vmem:[#allocation2 + $0x10c] sm:$0xff]
      %v2562 = vld [vmem:[#allocation2 + $0x114] sm:$0xff]
      %v2563 = vld [vmem:[#allocation2 + $0x11c] sm:$0xff]
      %v2564 = vld [vmem:[#allocation2 + $0x124] sm:$0xff]
      %v2565 = vld [vmem:[#allocation2 + $0x12c] sm:$0xff]
      %v2566 = vld [vmem:[#allocation2 + $0x134] sm:$0xff]
      %v2567 = vld [vmem:[#allocation2 + $0x13c] sm:$0x3f]
      %v2568 = vpack.c.bf16 %v2533, %v2532
      %v2569 = vpack.c.bf16 %v2535, %v2534
      %v2570 = vpack.c.bf16 %v2537, %v2536
      %v2571 = vpack.c.bf16 %v2539, %v2538
      %v2572 = vpack.c.bf16 %v2541, %v2540
      %v2573 = vpack.c.bf16 %v2543, %v2542
      %v2574 = vpack.c.bf16 %v2545, %v2544
      %v2575 = vpack.c.bf16 %v2547, %v2546
      %v2576 = vpack.c.bf16 %v2549, %v2548
      %v2577 = vpack.c.bf16 %v2551, %v2550
      %v2578 = vpack.c.bf16 %v2553, %v2552
      %v2579 = vpack.c.bf16 %v2555, %v2554
      %v2580 = vpack.c.bf16 %v2557, %v2556
      %v2581 = vpack.c.bf16 %v2559, %v2558
      %v2582 = vpack.c.bf16 %v2561, %v2560
      %v2583 = vpack.c.bf16 %v2563, %v2562
      %v2584 = vpack.c.bf16 %v2565, %v2564
      %v2585 = vpack.c.bf16 %v2567, %v2566
      %s2586 = scalar_lea.vmem %s3, 384
      %v2587 = vld [vmem:[%s2586] sm:$0xf]
      %v2588 = vld [vmem:[%s2586 + $0x4] sm:$0xf]
      %v2589 = vld [vmem:[%s2586 + $0x8] sm:$0xf]
      %v2590 = vld [vmem:[%s2586 + $0xc] sm:$0xf]
      %v2591 = vld [vmem:[%s2586 + $0x10] sm:$0xf]
      %v2592 = vld [vmem:[%s2586 + $0x14] sm:$0xf]
      %v2593 = vld [vmem:[%s2586 + $0x18] sm:$0xf]
      %v2594 = vld [vmem:[%s2586 + $0x1c] sm:$0xf]
      %v2595 = vld [vmem:[%s2586 + $0x20] sm:$0xf]
      %v2596 = vld [vmem:[%s2586 + $0x24] sm:$0xf]
      %v2597 = vld [vmem:[%s2586 + $0x28] sm:$0xf]
      %v2598 = vld [vmem:[%s2586 + $0x2c] sm:$0xf]
      %v2599 = vld [vmem:[%s2586 + $0x30] sm:$0xf]
      %v2600 = vld [vmem:[%s2586 + $0x34] sm:$0xf]
      %v2601 = vld [vmem:[%s2586 + $0x38] sm:$0xf]
      %v2602 = vld [vmem:[%s2586 + $0x3c] sm:$0xf]
      %v2619 = vunpack.c.l.b16 %v2587
      %v2620 = vunpack.c.l.b16 %v2588
      %v2621 = vunpack.c.l.b16 %v2589
      %v2622 = vunpack.c.l.b16 %v2590
      %v2623 = vunpack.c.l.b16 %v2591
      %v2624 = vunpack.c.l.b16 %v2592
      %v2625 = vunpack.c.l.b16 %v2593
      %v2626 = vunpack.c.l.b16 %v2594
      %v2627 = vunpack.c.l.b16 %v2595
      %v2628 = vunpack.c.l.b16 %v2596
      %v2629 = vunpack.c.l.b16 %v2597
      %v2630 = vunpack.c.l.b16 %v2598
      %v2631 = vunpack.c.l.b16 %v2599
      %v2632 = vunpack.c.l.b16 %v2600
      %v2633 = vunpack.c.l.b16 %v2601
      %v2634 = vunpack.c.l.b16 %v2602
      %v2635 = vpack.c.b16 %v2620, %v2619
      %v2636 = vpack.c.b16 %v2622, %v2621
      %v2637 = vpack.c.b16 %v2624, %v2623
      %v2638 = vpack.c.b16 %v2626, %v2625
      %v2639 = vpack.c.b16 %v2628, %v2627
      %v2640 = vpack.c.b16 %v2630, %v2629
      %v2641 = vpack.c.b16 %v2632, %v2631
      %v2642 = vpack.c.b16 %v2634, %v2633
      %2651 = vmatpush.bf16.msra.mxu0 %v2642
      %2652 = vmatpush.bf16.msra.mxu0 %v2641
      %2653 = vmatpush.bf16.msra.mxu0 %v2640
      %2654 = vmatpush.bf16.msra.mxu0 %v2639
      %2655 = vmatpush.bf16.msra.mxu0 %v2638
      %2656 = vmatpush.bf16.msra.mxu0 %v2637
      %2657 = vmatpush.bf16.msra.mxu0 %v2636
      %2658 = vmatpush.bf16.msra.mxu0 %v2635
      %2659 = vmatmul.bf16.gmra.mxu0 %v2568
      %v2660 = vpop.f32.mrf.mxu0
      %v2661 = vadd.f32 0.0, %v2660
      %v2662 = vpop.f32.mrf.mxu0
      %v2663 = vadd.f32 0.0, %v2662
      %2664 = vmatmul.bf16.gmra.mxu0 %v2569
      %v2665 = vpop.f32.mrf.mxu0
      %v2666 = vadd.f32 0.0, %v2665
      %v2667 = vpop.f32.mrf.mxu0
      %v2668 = vadd.f32 0.0, %v2667
      %2669 = vmatmul.bf16.gmra.mxu0 %v2570
      %v2670 = vpop.f32.mrf.mxu0
      %v2671 = vadd.f32 0.0, %v2670
      %v2672 = vpop.f32.mrf.mxu0
      %v2673 = vadd.f32 0.0, %v2672
      %2674 = vmatmul.bf16.gmra.mxu0 %v2571
      %v2675 = vpop.f32.mrf.mxu0
      %v2676 = vadd.f32 0.0, %v2675
      %v2677 = vpop.f32.mrf.mxu0
      %v2678 = vadd.f32 0.0, %v2677
      %2679 = vmatmul.bf16.gmra.mxu0 %v2572
      %v2680 = vpop.f32.mrf.mxu0
      %v2681 = vadd.f32 0.0, %v2680
      %v2682 = vpop.f32.mrf.mxu0
      %v2683 = vadd.f32 0.0, %v2682
      %2684 = vmatmul.bf16.gmra.mxu0 %v2573
      %v2685 = vpop.f32.mrf.mxu0
      %v2686 = vadd.f32 0.0, %v2685
      %v2687 = vpop.f32.mrf.mxu0
      %v2688 = vadd.f32 0.0, %v2687
      %2689 = vmatmul.bf16.gmra.mxu0 %v2574
      %v2690 = vpop.f32.mrf.mxu0
      %v2691 = vadd.f32 0.0, %v2690
      %v2692 = vpop.f32.mrf.mxu0
      %v2693 = vadd.f32 0.0, %v2692
      %2694 = vmatmul.bf16.gmra.mxu0 %v2575
      %v2695 = vpop.f32.mrf.mxu0
      %v2696 = vadd.f32 0.0, %v2695
      %v2697 = vpop.f32.mrf.mxu0
      %v2698 = vadd.f32 0.0, %v2697
      %2699 = vmatmul.bf16.gmra.mxu0 %v2576
      %v2700 = vpop.f32.mrf.mxu0
      %v2701 = vadd.f32 0.0, %v2700
      %v2702 = vpop.f32.mrf.mxu0
      %v2703 = vadd.f32 0.0, %v2702
      %2704 = vmatmul.bf16.gmra.mxu0 %v2577
      %v2705 = vpop.f32.mrf.mxu0
      %v2706 = vadd.f32 0.0, %v2705
      %v2707 = vpop.f32.mrf.mxu0
      %v2708 = vadd.f32 0.0, %v2707
      %2709 = vmatmul.bf16.gmra.mxu0 %v2578
      %v2710 = vpop.f32.mrf.mxu0
      %v2711 = vadd.f32 0.0, %v2710
      %v2712 = vpop.f32.mrf.mxu0
      %v2713 = vadd.f32 0.0, %v2712
      %2714 = vmatmul.bf16.gmra.mxu0 %v2579
      %v2715 = vpop.f32.mrf.mxu0
      %v2716 = vadd.f32 0.0, %v2715
      %v2717 = vpop.f32.mrf.mxu0
      %v2718 = vadd.f32 0.0, %v2717
      %2719 = vmatmul.bf16.gmra.mxu0 %v2580
      %v2720 = vpop.f32.mrf.mxu0
      %v2721 = vadd.f32 0.0, %v2720
      %v2722 = vpop.f32.mrf.mxu0
      %v2723 = vadd.f32 0.0, %v2722
      %2724 = vmatmul.bf16.gmra.mxu0 %v2581
      %v2725 = vpop.f32.mrf.mxu0
      %v2726 = vadd.f32 0.0, %v2725
      %v2727 = vpop.f32.mrf.mxu0
      %v2728 = vadd.f32 0.0, %v2727
      %2729 = vmatmul.bf16.gmra.mxu0 %v2582
      %v2730 = vpop.f32.mrf.mxu0
      %v2731 = vadd.f32 0.0, %v2730
      %v2732 = vpop.f32.mrf.mxu0
      %v2733 = vadd.f32 0.0, %v2732
      %2734 = vmatmul.bf16.gmra.mxu0 %v2583
      %v2735 = vpop.f32.mrf.mxu0
      %v2736 = vadd.f32 0.0, %v2735
      %v2737 = vpop.f32.mrf.mxu0
      %v2738 = vadd.f32 0.0, %v2737
      %2739 = vmatmul.bf16.gmra.mxu0 %v2584
      %v2740 = vpop.f32.mrf.mxu0
      %v2741 = vadd.f32 0.0, %v2740
      %v2742 = vpop.f32.mrf.mxu0
      %v2743 = vadd.f32 0.0, %v2742
      %2744 = vmatmul.bf16.gmra.mxu0 %v2585
      %v2745 = vpop.f32.mrf.mxu0
      %v2746 = vadd.f32 0.0, %v2745
      %v2747 = vpop.f32.mrf.mxu0
      %v2748 = vadd.f32 0.0, %v2747
      %2749 = vdwg.mxu0
      %v2750 = vld [vmem:[#allocation3] sm:$0xff]
      %v2751 = vld [vmem:[#allocation3 + $0x8] sm:$0xff]
      %v2752 = vld [vmem:[#allocation3 + $0x10] sm:$0xff]
      %v2753 = vld [vmem:[#allocation3 + $0x18] sm:$0xff]
      %v2754 = vld [vmem:[#allocation3 + $0x20] sm:$0xff]
      %v2755 = vld [vmem:[#allocation3 + $0x28] sm:$0xff]
      %v2756 = vld [vmem:[#allocation3 + $0x30] sm:$0xff]
      %v2757 = vld [vmem:[#allocation3 + $0x38] sm:$0xff]
      %v2758 = vld [vmem:[#allocation3 + $0x40] sm:$0xff]
      %v2759 = vld [vmem:[#allocation3 + $0x48] sm:$0xff]
      %v2760 = vld [vmem:[#allocation3 + $0x50] sm:$0xff]
      %v2761 = vld [vmem:[#allocation3 + $0x58] sm:$0xff]
      %v2762 = vld [vmem:[#allocation3 + $0x60] sm:$0xff]
      %v2763 = vld [vmem:[#allocation3 + $0x68] sm:$0xff]
      %v2764 = vld [vmem:[#allocation3 + $0x70] sm:$0xff]
      %v2765 = vld [vmem:[#allocation3 + $0x78] sm:$0xff]
      %v2766 = vld [vmem:[#allocation3 + $0x80] sm:$0xff]
      %v2767 = vld [vmem:[#allocation3 + $0x88] sm:$0xff]
      %v2768 = vld [vmem:[#allocation3 + $0x90] sm:$0xff]
      %v2769 = vld [vmem:[#allocation3 + $0x98] sm:$0xff]
      %v2770 = vld [vmem:[#allocation3 + $0xa0] sm:$0xff]
      %v2771 = vld [vmem:[#allocation3 + $0xa8] sm:$0xff]
      %v2772 = vld [vmem:[#allocation3 + $0xb0] sm:$0xff]
      %v2773 = vld [vmem:[#allocation3 + $0xb8] sm:$0xff]
      %v2774 = vld [vmem:[#allocation3 + $0xc0] sm:$0xff]
      %v2775 = vld [vmem:[#allocation3 + $0xc8] sm:$0xff]
      %v2776 = vld [vmem:[#allocation3 + $0xd0] sm:$0xff]
      %v2777 = vld [vmem:[#allocation3 + $0xd8] sm:$0xff]
      %v2778 = vld [vmem:[#allocation3 + $0xe0] sm:$0xff]
      %v2779 = vld [vmem:[#allocation3 + $0xe8] sm:$0xff]
      %v2780 = vld [vmem:[#allocation3 + $0xf0] sm:$0xff]
      %v2781 = vld [vmem:[#allocation3 + $0xf8] sm:$0xff]
      %v2782 = vld [vmem:[#allocation3 + $0x100] sm:$0xff]
      %v2783 = vld [vmem:[#allocation3 + $0x108] sm:$0xff]
      %v2784 = vld [vmem:[#allocation3 + $0x110] sm:$0xff]
      %v2785 = vld [vmem:[#allocation3 + $0x118] sm:$0x3f]
      %v2786 = vadd.f32 %v2750, %v2661
      %v2787 = vadd.f32 %v2751, %v2663
      %v2788 = vadd.f32 %v2752, %v2666
      %v2789 = vadd.f32 %v2753, %v2668
      %v2790 = vadd.f32 %v2754, %v2671
      %v2791 = vadd.f32 %v2755, %v2673
      %v2792 = vadd.f32 %v2756, %v2676
      %v2793 = vadd.f32 %v2757, %v2678
      %v2794 = vadd.f32 %v2758, %v2681
      %v2795 = vadd.f32 %v2759, %v2683
      %v2796 = vadd.f32 %v2760, %v2686
      %v2797 = vadd.f32 %v2761, %v2688
      %v2798 = vadd.f32 %v2762, %v2691
      %v2799 = vadd.f32 %v2763, %v2693
      %v2800 = vadd.f32 %v2764, %v2696
      %v2801 = vadd.f32 %v2765, %v2698
      %v2802 = vadd.f32 %v2766, %v2701
      %v2803 = vadd.f32 %v2767, %v2703
      %v2804 = vadd.f32 %v2768, %v2706
      %v2805 = vadd.f32 %v2769, %v2708
      %v2806 = vadd.f32 %v2770, %v2711
      %v2807 = vadd.f32 %v2771, %v2713
      %v2808 = vadd.f32 %v2772, %v2716
      %v2809 = vadd.f32 %v2773, %v2718
      %v2810 = vadd.f32 %v2774, %v2721
      %v2811 = vadd.f32 %v2775, %v2723
      %v2812 = vadd.f32 %v2776, %v2726
      %v2813 = vadd.f32 %v2777, %v2728
      %v2814 = vadd.f32 %v2778, %v2731
      %v2815 = vadd.f32 %v2779, %v2733
      %v2816 = vadd.f32 %v2780, %v2736
      %v2817 = vadd.f32 %v2781, %v2738
      %v2818 = vadd.f32 %v2782, %v2741
      %v2819 = vadd.f32 %v2783, %v2743
      %v2820 = vadd.f32 %v2784, %v2746
      %v2821 = vadd.f32 %v2785, %v2748
      %2822 = vst [vmem:[#allocation3] sm:$0xff] %v2786
      %2823 = vst [vmem:[#allocation3 + $0x8] sm:$0xff] %v2787
      %2824 = vst [vmem:[#allocation3 + $0x10] sm:$0xff] %v2788
      %2825 = vst [vmem:[#allocation3 + $0x18] sm:$0xff] %v2789
      %2826 = vst [vmem:[#allocation3 + $0x20] sm:$0xff] %v2790
      %2827 = vst [vmem:[#allocation3 + $0x28] sm:$0xff] %v2791
      %2828 = vst [vmem:[#allocation3 + $0x30] sm:$0xff] %v2792
      %2829 = vst [vmem:[#allocation3 + $0x38] sm:$0xff] %v2793
      %2830 = vst [vmem:[#allocation3 + $0x40] sm:$0xff] %v2794
      %2831 = vst [vmem:[#allocation3 + $0x48] sm:$0xff] %v2795
      %2832 = vst [vmem:[#allocation3 + $0x50] sm:$0xff] %v2796
      %2833 = vst [vmem:[#allocation3 + $0x58] sm:$0xff] %v2797
      %2834 = vst [vmem:[#allocation3 + $0x60] sm:$0xff] %v2798
      %2835 = vst [vmem:[#allocation3 + $0x68] sm:$0xff] %v2799
      %2836 = vst [vmem:[#allocation3 + $0x70] sm:$0xff] %v2800
      %2837 = vst [vmem:[#allocation3 + $0x78] sm:$0xff] %v2801
      %2838 = vst [vmem:[#allocation3 + $0x80] sm:$0xff] %v2802
      %2839 = vst [vmem:[#allocation3 + $0x88] sm:$0xff] %v2803
      %2840 = vst [vmem:[#allocation3 + $0x90] sm:$0xff] %v2804
      %2841 = vst [vmem:[#allocation3 + $0x98] sm:$0xff] %v2805
      %2842 = vst [vmem:[#allocation3 + $0xa0] sm:$0xff] %v2806
      %2843 = vst [vmem:[#allocation3 + $0xa8] sm:$0xff] %v2807
      %2844 = vst [vmem:[#allocation3 + $0xb0] sm:$0xff] %v2808
      %2845 = vst [vmem:[#allocation3 + $0xb8] sm:$0xff] %v2809
      %2846 = vst [vmem:[#allocation3 + $0xc0] sm:$0xff] %v2810
      %2847 = vst [vmem:[#allocation3 + $0xc8] sm:$0xff] %v2811
      %2848 = vst [vmem:[#allocation3 + $0xd0] sm:$0xff] %v2812
      %2849 = vst [vmem:[#allocation3 + $0xd8] sm:$0xff] %v2813
      %2850 = vst [vmem:[#allocation3 + $0xe0] sm:$0xff] %v2814
      %2851 = vst [vmem:[#allocation3 + $0xe8] sm:$0xff] %v2815
      %2852 = vst [vmem:[#allocation3 + $0xf0] sm:$0xff] %v2816
      %2853 = vst [vmem:[#allocation3 + $0xf8] sm:$0xff] %v2817
      %2854 = vst [vmem:[#allocation3 + $0x100] sm:$0xff] %v2818
      %2855 = vst [vmem:[#allocation3 + $0x108] sm:$0xff] %v2819
      %2856 = vst [vmem:[#allocation3 + $0x110] sm:$0xff] %v2820
      %2857 = vst [vmem:[#allocation3 + $0x118] sm:$0x3f] %v2821
      %v2858 = vld [vmem:[#allocation2 + $0x25] sm:$0xff]
      %v2859 = vld [vmem:[#allocation2 + $0x2d] sm:$0xff]
      %v2860 = vld [vmem:[#allocation2 + $0x35] sm:$0xff]
      %v2861 = vld [vmem:[#allocation2 + $0x3d] sm:$0xff]
      %v2862 = vld [vmem:[#allocation2 + $0x45] sm:$0xff]
      %v2863 = vld [vmem:[#allocation2 + $0x4d] sm:$0xff]
      %v2864 = vld [vmem:[#allocation2 + $0x55] sm:$0xff]
      %v2865 = vld [vmem:[#allocation2 + $0x5d] sm:$0xff]
      %v2866 = vld [vmem:[#allocation2 + $0x65] sm:$0xff]
      %v2867 = vld [vmem:[#allocation2 + $0x6d] sm:$0xff]
      %v2868 = vld [vmem:[#allocation2 + $0x75] sm:$0xff]
      %v2869 = vld [vmem:[#allocation2 + $0x7d] sm:$0xff]
      %v2870 = vld [vmem:[#allocation2 + $0x85] sm:$0xff]
      %v2871 = vld [vmem:[#allocation2 + $0x8d] sm:$0xff]
      %v2872 = vld [vmem:[#allocation2 + $0x95] sm:$0xff]
      %v2873 = vld [vmem:[#allocation2 + $0x9d] sm:$0xff]
      %v2874 = vld [vmem:[#allocation2 + $0xa5] sm:$0xff]
      %v2875 = vld [vmem:[#allocation2 + $0xad] sm:$0xff]
      %v2876 = vld [vmem:[#allocation2 + $0xb5] sm:$0xff]
      %v2877 = vld [vmem:[#allocation2 + $0xbd] sm:$0xff]
      %v2878 = vld [vmem:[#allocation2 + $0xc5] sm:$0xff]
      %v2879 = vld [vmem:[#allocation2 + $0xcd] sm:$0xff]
      %v2880 = vld [vmem:[#allocation2 + $0xd5] sm:$0xff]
      %v2881 = vld [vmem:[#allocation2 + $0xdd] sm:$0xff]
      %v2882 = vld [vmem:[#allocation2 + $0xe5] sm:$0xff]
      %v2883 = vld [vmem:[#allocation2 + $0xed] sm:$0xff]
      %v2884 = vld [vmem:[#allocation2 + $0xf5] sm:$0xff]
      %v2885 = vld [vmem:[#allocation2 + $0xfd] sm:$0xff]
      %v2886 = vld [vmem:[#allocation2 + $0x105] sm:$0xff]
      %v2887 = vld [vmem:[#allocation2 + $0x10d] sm:$0xff]
      %v2888 = vld [vmem:[#allocation2 + $0x115] sm:$0xff]
      %v2889 = vld [vmem:[#allocation2 + $0x11d] sm:$0xff]
      %v2890 = vld [vmem:[#allocation2 + $0x125] sm:$0xff]
      %v2891 = vld [vmem:[#allocation2 + $0x12d] sm:$0xff]
      %v2892 = vld [vmem:[#allocation2 + $0x135] sm:$0xff]
      %v2893 = vld [vmem:[#allocation2 + $0x13d] sm:$0x3f]
      %v2894 = vpack.c.bf16 %v2859, %v2858
      %v2895 = vpack.c.bf16 %v2861, %v2860
      %v2896 = vpack.c.bf16 %v2863, %v2862
      %v2897 = vpack.c.bf16 %v2865, %v2864
      %v2898 = vpack.c.bf16 %v2867, %v2866
      %v2899 = vpack.c.bf16 %v2869, %v2868
      %v2900 = vpack.c.bf16 %v2871, %v2870
      %v2901 = vpack.c.bf16 %v2873, %v2872
      %v2902 = vpack.c.bf16 %v2875, %v2874
      %v2903 = vpack.c.bf16 %v2877, %v2876
      %v2904 = vpack.c.bf16 %v2879, %v2878
      %v2905 = vpack.c.bf16 %v2881, %v2880
      %v2906 = vpack.c.bf16 %v2883, %v2882
      %v2907 = vpack.c.bf16 %v2885, %v2884
      %v2908 = vpack.c.bf16 %v2887, %v2886
      %v2909 = vpack.c.bf16 %v2889, %v2888
      %v2910 = vpack.c.bf16 %v2891, %v2890
      %v2911 = vpack.c.bf16 %v2893, %v2892
      %s2912 = scalar_lea.vmem %s3, 448
      %v2913 = vld [vmem:[%s2912] sm:$0xf]
      %v2914 = vld [vmem:[%s2912 + $0x4] sm:$0xf]
      %v2915 = vld [vmem:[%s2912 + $0x8] sm:$0xf]
      %v2916 = vld [vmem:[%s2912 + $0xc] sm:$0xf]
      %v2917 = vld [vmem:[%s2912 + $0x10] sm:$0xf]
      %v2918 = vld [vmem:[%s2912 + $0x14] sm:$0xf]
      %v2919 = vld [vmem:[%s2912 + $0x18] sm:$0xf]
      %v2920 = vld [vmem:[%s2912 + $0x1c] sm:$0xf]
      %v2921 = vld [vmem:[%s2912 + $0x20] sm:$0xf]
      %v2922 = vld [vmem:[%s2912 + $0x24] sm:$0xf]
      %v2923 = vld [vmem:[%s2912 + $0x28] sm:$0xf]
      %v2924 = vld [vmem:[%s2912 + $0x2c] sm:$0xf]
      %v2925 = vld [vmem:[%s2912 + $0x30] sm:$0xf]
      %v2926 = vld [vmem:[%s2912 + $0x34] sm:$0xf]
      %v2927 = vld [vmem:[%s2912 + $0x38] sm:$0xf]
      %v2928 = vld [vmem:[%s2912 + $0x3c] sm:$0xf]
      %v2945 = vunpack.c.l.b16 %v2913
      %v2946 = vunpack.c.l.b16 %v2914
      %v2947 = vunpack.c.l.b16 %v2915
      %v2948 = vunpack.c.l.b16 %v2916
      %v2949 = vunpack.c.l.b16 %v2917
      %v2950 = vunpack.c.l.b16 %v2918
      %v2951 = vunpack.c.l.b16 %v2919
      %v2952 = vunpack.c.l.b16 %v2920
      %v2953 = vunpack.c.l.b16 %v2921
      %v2954 = vunpack.c.l.b16 %v2922
      %v2955 = vunpack.c.l.b16 %v2923
      %v2956 = vunpack.c.l.b16 %v2924
      %v2957 = vunpack.c.l.b16 %v2925
      %v2958 = vunpack.c.l.b16 %v2926
      %v2959 = vunpack.c.l.b16 %v2927
      %v2960 = vunpack.c.l.b16 %v2928
      %v2961 = vpack.c.b16 %v2946, %v2945
      %v2962 = vpack.c.b16 %v2948, %v2947
      %v2963 = vpack.c.b16 %v2950, %v2949
      %v2964 = vpack.c.b16 %v2952, %v2951
      %v2965 = vpack.c.b16 %v2954, %v2953
      %v2966 = vpack.c.b16 %v2956, %v2955
      %v2967 = vpack.c.b16 %v2958, %v2957
      %v2968 = vpack.c.b16 %v2960, %v2959
      %2977 = vmatpush.bf16.msra.mxu0 %v2968
      %2978 = vmatpush.bf16.msra.mxu0 %v2967
      %2979 = vmatpush.bf16.msra.mxu0 %v2966
      %2980 = vmatpush.bf16.msra.mxu0 %v2965
      %2981 = vmatpush.bf16.msra.mxu0 %v2964
      %2982 = vmatpush.bf16.msra.mxu0 %v2963
      %2983 = vmatpush.bf16.msra.mxu0 %v2962
      %2984 = vmatpush.bf16.msra.mxu0 %v2961
      %2985 = vmatmul.bf16.gmra.mxu0 %v2894
      %v2986 = vpop.f32.mrf.mxu0
      %v2987 = vadd.f32 0.0, %v2986
      %v2988 = vpop.f32.mrf.mxu0
      %v2989 = vadd.f32 0.0, %v2988
      %2990 = vmatmul.bf16.gmra.mxu0 %v2895
      %v2991 = vpop.f32.mrf.mxu0
      %v2992 = vadd.f32 0.0, %v2991
      %v2993 = vpop.f32.mrf.mxu0
      %v2994 = vadd.f32 0.0, %v2993
      %2995 = vmatmul.bf16.gmra.mxu0 %v2896
      %v2996 = vpop.f32.mrf.mxu0
      %v2997 = vadd.f32 0.0, %v2996
      %v2998 = vpop.f32.mrf.mxu0
      %v2999 = vadd.f32 0.0, %v2998
      %3000 = vmatmul.bf16.gmra.mxu0 %v2897
      %v3001 = vpop.f32.mrf.mxu0
      %v3002 = vadd.f32 0.0, %v3001
      %v3003 = vpop.f32.mrf.mxu0
      %v3004 = vadd.f32 0.0, %v3003
      %3005 = vmatmul.bf16.gmra.mxu0 %v2898
      %v3006 = vpop.f32.mrf.mxu0
      %v3007 = vadd.f32 0.0, %v3006
      %v3008 = vpop.f32.mrf.mxu0
      %v3009 = vadd.f32 0.0, %v3008
      %3010 = vmatmul.bf16.gmra.mxu0 %v2899
      %v3011 = vpop.f32.mrf.mxu0
      %v3012 = vadd.f32 0.0, %v3011
      %v3013 = vpop.f32.mrf.mxu0
      %v3014 = vadd.f32 0.0, %v3013
      %3015 = vmatmul.bf16.gmra.mxu0 %v2900
      %v3016 = vpop.f32.mrf.mxu0
      %v3017 = vadd.f32 0.0, %v3016
      %v3018 = vpop.f32.mrf.mxu0
      %v3019 = vadd.f32 0.0, %v3018
      %3020 = vmatmul.bf16.gmra.mxu0 %v2901
      %v3021 = vpop.f32.mrf.mxu0
      %v3022 = vadd.f32 0.0, %v3021
      %v3023 = vpop.f32.mrf.mxu0
      %v3024 = vadd.f32 0.0, %v3023
      %3025 = vmatmul.bf16.gmra.mxu0 %v2902
      %v3026 = vpop.f32.mrf.mxu0
      %v3027 = vadd.f32 0.0, %v3026
      %v3028 = vpop.f32.mrf.mxu0
      %v3029 = vadd.f32 0.0, %v3028
      %3030 = vmatmul.bf16.gmra.mxu0 %v2903
      %v3031 = vpop.f32.mrf.mxu0
      %v3032 = vadd.f32 0.0, %v3031
      %v3033 = vpop.f32.mrf.mxu0
      %v3034 = vadd.f32 0.0, %v3033
      %3035 = vmatmul.bf16.gmra.mxu0 %v2904
      %v3036 = vpop.f32.mrf.mxu0
      %v3037 = vadd.f32 0.0, %v3036
      %v3038 = vpop.f32.mrf.mxu0
      %v3039 = vadd.f32 0.0, %v3038
      %3040 = vmatmul.bf16.gmra.mxu0 %v2905
      %v3041 = vpop.f32.mrf.mxu0
      %v3042 = vadd.f32 0.0, %v3041
      %v3043 = vpop.f32.mrf.mxu0
      %v3044 = vadd.f32 0.0, %v3043
      %3045 = vmatmul.bf16.gmra.mxu0 %v2906
      %v3046 = vpop.f32.mrf.mxu0
      %v3047 = vadd.f32 0.0, %v3046
      %v3048 = vpop.f32.mrf.mxu0
      %v3049 = vadd.f32 0.0, %v3048
      %3050 = vmatmul.bf16.gmra.mxu0 %v2907
      %v3051 = vpop.f32.mrf.mxu0
      %v3052 = vadd.f32 0.0, %v3051
      %v3053 = vpop.f32.mrf.mxu0
      %v3054 = vadd.f32 0.0, %v3053
      %3055 = vmatmul.bf16.gmra.mxu0 %v2908
      %v3056 = vpop.f32.mrf.mxu0
      %v3057 = vadd.f32 0.0, %v3056
      %v3058 = vpop.f32.mrf.mxu0
      %v3059 = vadd.f32 0.0, %v3058
      %3060 = vmatmul.bf16.gmra.mxu0 %v2909
      %v3061 = vpop.f32.mrf.mxu0
      %v3062 = vadd.f32 0.0, %v3061
      %v3063 = vpop.f32.mrf.mxu0
      %v3064 = vadd.f32 0.0, %v3063
      %3065 = vmatmul.bf16.gmra.mxu0 %v2910
      %v3066 = vpop.f32.mrf.mxu0
      %v3067 = vadd.f32 0.0, %v3066
      %v3068 = vpop.f32.mrf.mxu0
      %v3069 = vadd.f32 0.0, %v3068
      %3070 = vmatmul.bf16.gmra.mxu0 %v2911
      %v3071 = vpop.f32.mrf.mxu0
      %v3072 = vadd.f32 0.0, %v3071
      %v3073 = vpop.f32.mrf.mxu0
      %v3074 = vadd.f32 0.0, %v3073
      %3075 = vdwg.mxu0
      %v3076 = vld [vmem:[#allocation3] sm:$0xff]
      %v3077 = vld [vmem:[#allocation3 + $0x8] sm:$0xff]
      %v3078 = vld [vmem:[#allocation3 + $0x10] sm:$0xff]
      %v3079 = vld [vmem:[#allocation3 + $0x18] sm:$0xff]
      %v3080 = vld [vmem:[#allocation3 + $0x20] sm:$0xff]
      %v3081 = vld [vmem:[#allocation3 + $0x28] sm:$0xff]
      %v3082 = vld [vmem:[#allocation3 + $0x30] sm:$0xff]
      %v3083 = vld [vmem:[#allocation3 + $0x38] sm:$0xff]
      %v3084 = vld [vmem:[#allocation3 + $0x40] sm:$0xff]
      %v3085 = vld [vmem:[#allocation3 + $0x48] sm:$0xff]
      %v3086 = vld [vmem:[#allocation3 + $0x50] sm:$0xff]
      %v3087 = vld [vmem:[#allocation3 + $0x58] sm:$0xff]
      %v3088 = vld [vmem:[#allocation3 + $0x60] sm:$0xff]
      %v3089 = vld [vmem:[#allocation3 + $0x68] sm:$0xff]
      %v3090 = vld [vmem:[#allocation3 + $0x70] sm:$0xff]
      %v3091 = vld [vmem:[#allocation3 + $0x78] sm:$0xff]
      %v3092 = vld [vmem:[#allocation3 + $0x80] sm:$0xff]
      %v3093 = vld [vmem:[#allocation3 + $0x88] sm:$0xff]
      %v3094 = vld [vmem:[#allocation3 + $0x90] sm:$0xff]
      %v3095 = vld [vmem:[#allocation3 + $0x98] sm:$0xff]
      %v3096 = vld [vmem:[#allocation3 + $0xa0] sm:$0xff]
      %v3097 = vld [vmem:[#allocation3 + $0xa8] sm:$0xff]
      %v3098 = vld [vmem:[#allocation3 + $0xb0] sm:$0xff]
      %v3099 = vld [vmem:[#allocation3 + $0xb8] sm:$0xff]
      %v3100 = vld [vmem:[#allocation3 + $0xc0] sm:$0xff]
      %v3101 = vld [vmem:[#allocation3 + $0xc8] sm:$0xff]
      %v3102 = vld [vmem:[#allocation3 + $0xd0] sm:$0xff]
      %v3103 = vld [vmem:[#allocation3 + $0xd8] sm:$0xff]
      %v3104 = vld [vmem:[#allocation3 + $0xe0] sm:$0xff]
      %v3105 = vld [vmem:[#allocation3 + $0xe8] sm:$0xff]
      %v3106 = vld [vmem:[#allocation3 + $0xf0] sm:$0xff]
      %v3107 = vld [vmem:[#allocation3 + $0xf8] sm:$0xff]
      %v3108 = vld [vmem:[#allocation3 + $0x100] sm:$0xff]
      %v3109 = vld [vmem:[#allocation3 + $0x108] sm:$0xff]
      %v3110 = vld [vmem:[#allocation3 + $0x110] sm:$0xff]
      %v3111 = vld [vmem:[#allocation3 + $0x118] sm:$0x3f]
      %v3112 = vadd.f32 %v3076, %v2987
      %v3113 = vadd.f32 %v3077, %v2989
      %v3114 = vadd.f32 %v3078, %v2992
      %v3115 = vadd.f32 %v3079, %v2994
      %v3116 = vadd.f32 %v3080, %v2997
      %v3117 = vadd.f32 %v3081, %v2999
      %v3118 = vadd.f32 %v3082, %v3002
      %v3119 = vadd.f32 %v3083, %v3004
      %v3120 = vadd.f32 %v3084, %v3007
      %v3121 = vadd.f32 %v3085, %v3009
      %v3122 = vadd.f32 %v3086, %v3012
      %v3123 = vadd.f32 %v3087, %v3014
      %v3124 = vadd.f32 %v3088, %v3017
      %v3125 = vadd.f32 %v3089, %v3019
      %v3126 = vadd.f32 %v3090, %v3022
      %v3127 = vadd.f32 %v3091, %v3024
      %v3128 = vadd.f32 %v3092, %v3027
      %v3129 = vadd.f32 %v3093, %v3029
      %v3130 = vadd.f32 %v3094, %v3032
      %v3131 = vadd.f32 %v3095, %v3034
      %v3132 = vadd.f32 %v3096, %v3037
      %v3133 = vadd.f32 %v3097, %v3039
      %v3134 = vadd.f32 %v3098, %v3042
      %v3135 = vadd.f32 %v3099, %v3044
      %v3136 = vadd.f32 %v3100, %v3047
      %v3137 = vadd.f32 %v3101, %v3049
      %v3138 = vadd.f32 %v3102, %v3052
      %v3139 = vadd.f32 %v3103, %v3054
      %v3140 = vadd.f32 %v3104, %v3057
      %v3141 = vadd.f32 %v3105, %v3059
      %v3142 = vadd.f32 %v3106, %v3062
      %v3143 = vadd.f32 %v3107, %v3064
      %v3144 = vadd.f32 %v3108, %v3067
      %v3145 = vadd.f32 %v3109, %v3069
      %v3146 = vadd.f32 %v3110, %v3072
      %v3147 = vadd.f32 %v3111, %v3074
      %3148 = vst [vmem:[#allocation3] sm:$0xff] %v3112
      %3149 = vst [vmem:[#allocation3 + $0x8] sm:$0xff] %v3113
      %3150 = vst [vmem:[#allocation3 + $0x10] sm:$0xff] %v3114
      %3151 = vst [vmem:[#allocation3 + $0x18] sm:$0xff] %v3115
      %3152 = vst [vmem:[#allocation3 + $0x20] sm:$0xff] %v3116
      %3153 = vst [vmem:[#allocation3 + $0x28] sm:$0xff] %v3117
      %3154 = vst [vmem:[#allocation3 + $0x30] sm:$0xff] %v3118
      %3155 = vst [vmem:[#allocation3 + $0x38] sm:$0xff] %v3119
      %3156 = vst [vmem:[#allocation3 + $0x40] sm:$0xff] %v3120
      %3157 = vst [vmem:[#allocation3 + $0x48] sm:$0xff] %v3121
      %3158 = vst [vmem:[#allocation3 + $0x50] sm:$0xff] %v3122
      %3159 = vst [vmem:[#allocation3 + $0x58] sm:$0xff] %v3123
      %3160 = vst [vmem:[#allocation3 + $0x60] sm:$0xff] %v3124
      %3161 = vst [vmem:[#allocation3 + $0x68] sm:$0xff] %v3125
      %3162 = vst [vmem:[#allocation3 + $0x70] sm:$0xff] %v3126
      %3163 = vst [vmem:[#allocation3 + $0x78] sm:$0xff] %v3127
      %3164 = vst [vmem:[#allocation3 + $0x80] sm:$0xff] %v3128
      %3165 = vst [vmem:[#allocation3 + $0x88] sm:$0xff] %v3129
      %3166 = vst [vmem:[#allocation3 + $0x90] sm:$0xff] %v3130
      %3167 = vst [vmem:[#allocation3 + $0x98] sm:$0xff] %v3131
      %3168 = vst [vmem:[#allocation3 + $0xa0] sm:$0xff] %v3132
      %3169 = vst [vmem:[#allocation3 + $0xa8] sm:$0xff] %v3133
      %3170 = vst [vmem:[#allocation3 + $0xb0] sm:$0xff] %v3134
      %3171 = vst [vmem:[#allocation3 + $0xb8] sm:$0xff] %v3135
      %3172 = vst [vmem:[#allocation3 + $0xc0] sm:$0xff] %v3136
      %3173 = vst [vmem:[#allocation3 + $0xc8] sm:$0xff] %v3137
      %3174 = vst [vmem:[#allocation3 + $0xd0] sm:$0xff] %v3138
      %3175 = vst [vmem:[#allocation3 + $0xd8] sm:$0xff] %v3139
      %3176 = vst [vmem:[#allocation3 + $0xe0] sm:$0xff] %v3140
      %3177 = vst [vmem:[#allocation3 + $0xe8] sm:$0xff] %v3141
      %3178 = vst [vmem:[#allocation3 + $0xf0] sm:$0xff] %v3142
      %3179 = vst [vmem:[#allocation3 + $0xf8] sm:$0xff] %v3143
      %3180 = vst [vmem:[#allocation3 + $0x100] sm:$0xff] %v3144
      %3181 = vst [vmem:[#allocation3 + $0x108] sm:$0xff] %v3145
      %3182 = vst [vmem:[#allocation3 + $0x110] sm:$0xff] %v3146
      %3183 = vst [vmem:[#allocation3 + $0x118] sm:$0x3f] %v3147
      %v3184 = vld [vmem:[#allocation2 + $0x26] sm:$0xff]
      %v3185 = vld [vmem:[#allocation2 + $0x2e] sm:$0xff]
      %v3186 = vld [vmem:[#allocation2 + $0x36] sm:$0xff]
      %v3187 = vld [vmem:[#allocation2 + $0x3e] sm:$0xff]
      %v3188 = vld [vmem:[#allocation2 + $0x46] sm:$0xff]
      %v3189 = vld [vmem:[#allocation2 + $0x4e] sm:$0xff]
      %v3190 = vld [vmem:[#allocation2 + $0x56] sm:$0xff]
      %v3191 = vld [vmem:[#allocation2 + $0x5e] sm:$0xff]
      %v3192 = vld [vmem:[#allocation2 + $0x66] sm:$0xff]
      %v3193 = vld [vmem:[#allocation2 + $0x6e] sm:$0xff]
      %v3194 = vld [vmem:[#allocation2 + $0x76] sm:$0xff]
      %v3195 = vld [vmem:[#allocation2 + $0x7e] sm:$0xff]
      %v3196 = vld [vmem:[#allocation2 + $0x86] sm:$0xff]
      %v3197 = vld [vmem:[#allocation2 + $0x8e] sm:$0xff]
      %v3198 = vld [vmem:[#allocation2 + $0x96] sm:$0xff]
      %v3199 = vld [vmem:[#allocation2 + $0x9e] sm:$0xff]
      %v3200 = vld [vmem:[#allocation2 + $0xa6] sm:$0xff]
      %v3201 = vld [vmem:[#allocation2 + $0xae] sm:$0xff]
      %v3202 = vld [vmem:[#allocation2 + $0xb6] sm:$0xff]
      %v3203 = vld [vmem:[#allocation2 + $0xbe] sm:$0xff]
      %v3204 = vld [vmem:[#allocation2 + $0xc6] sm:$0xff]
      %v3205 = vld [vmem:[#allocation2 + $0xce] sm:$0xff]
      %v3206 = vld [vmem:[#allocation2 + $0xd6] sm:$0xff]
      %v3207 = vld [vmem:[#allocation2 + $0xde] sm:$0xff]
      %v3208 = vld [vmem:[#allocation2 + $0xe6] sm:$0xff]
      %v3209 = vld [vmem:[#allocation2 + $0xee] sm:$0xff]
      %v3210 = vld [vmem:[#allocation2 + $0xf6] sm:$0xff]
      %v3211 = vld [vmem:[#allocation2 + $0xfe] sm:$0xff]
      %v3212 = vld [vmem:[#allocation2 + $0x106] sm:$0xff]
      %v3213 = vld [vmem:[#allocation2 + $0x10e] sm:$0xff]
      %v3214 = vld [vmem:[#allocation2 + $0x116] sm:$0xff]
      %v3215 = vld [vmem:[#allocation2 + $0x11e] sm:$0xff]
      %v3216 = vld [vmem:[#allocation2 + $0x126] sm:$0xff]
      %v3217 = vld [vmem:[#allocation2 + $0x12e] sm:$0xff]
      %v3218 = vld [vmem:[#allocation2 + $0x136] sm:$0xff]
      %v3219 = vld [vmem:[#allocation2 + $0x13e] sm:$0x3f]
      %v3220 = vpack.c.bf16 %v3185, %v3184
      %v3221 = vpack.c.bf16 %v3187, %v3186
      %v3222 = vpack.c.bf16 %v3189, %v3188
      %v3223 = vpack.c.bf16 %v3191, %v3190
      %v3224 = vpack.c.bf16 %v3193, %v3192
      %v3225 = vpack.c.bf16 %v3195, %v3194
      %v3226 = vpack.c.bf16 %v3197, %v3196
      %v3227 = vpack.c.bf16 %v3199, %v3198
      %v3228 = vpack.c.bf16 %v3201, %v3200
      %v3229 = vpack.c.bf16 %v3203, %v3202
      %v3230 = vpack.c.bf16 %v3205, %v3204
      %v3231 = vpack.c.bf16 %v3207, %v3206
      %v3232 = vpack.c.bf16 %v3209, %v3208
      %v3233 = vpack.c.bf16 %v3211, %v3210
      %v3234 = vpack.c.bf16 %v3213, %v3212
      %v3235 = vpack.c.bf16 %v3215, %v3214
      %v3236 = vpack.c.bf16 %v3217, %v3216
      %v3237 = vpack.c.bf16 %v3219, %v3218
      %s3238 = scalar_lea.vmem %s3, 512
      %v3239 = vld [vmem:[%s3238] sm:$0xf]
      %v3240 = vld [vmem:[%s3238 + $0x4] sm:$0xf]
      %v3241 = vld [vmem:[%s3238 + $0x8] sm:$0xf]
      %v3242 = vld [vmem:[%s3238 + $0xc] sm:$0xf]
      %v3243 = vld [vmem:[%s3238 + $0x10] sm:$0xf]
      %v3244 = vld [vmem:[%s3238 + $0x14] sm:$0xf]
      %v3245 = vld [vmem:[%s3238 + $0x18] sm:$0xf]
      %v3246 = vld [vmem:[%s3238 + $0x1c] sm:$0xf]
      %v3247 = vld [vmem:[%s3238 + $0x20] sm:$0xf]
      %v3248 = vld [vmem:[%s3238 + $0x24] sm:$0xf]
      %v3249 = vld [vmem:[%s3238 + $0x28] sm:$0xf]
      %v3250 = vld [vmem:[%s3238 + $0x2c] sm:$0xf]
      %v3251 = vld [vmem:[%s3238 + $0x30] sm:$0xf]
      %v3252 = vld [vmem:[%s3238 + $0x34] sm:$0xf]
      %v3253 = vld [vmem:[%s3238 + $0x38] sm:$0xf]
      %v3254 = vld [vmem:[%s3238 + $0x3c] sm:$0xf]
      %v3271 = vunpack.c.l.b16 %v3239
      %v3272 = vunpack.c.l.b16 %v3240
      %v3273 = vunpack.c.l.b16 %v3241
      %v3274 = vunpack.c.l.b16 %v3242
      %v3275 = vunpack.c.l.b16 %v3243
      %v3276 = vunpack.c.l.b16 %v3244
      %v3277 = vunpack.c.l.b16 %v3245
      %v3278 = vunpack.c.l.b16 %v3246
      %v3279 = vunpack.c.l.b16 %v3247
      %v3280 = vunpack.c.l.b16 %v3248
      %v3281 = vunpack.c.l.b16 %v3249
      %v3282 = vunpack.c.l.b16 %v3250
      %v3283 = vunpack.c.l.b16 %v3251
      %v3284 = vunpack.c.l.b16 %v3252
      %v3285 = vunpack.c.l.b16 %v3253
      %v3286 = vunpack.c.l.b16 %v3254
      %v3287 = vpack.c.b16 %v3272, %v3271
      %v3288 = vpack.c.b16 %v3274, %v3273
      %v3289 = vpack.c.b16 %v3276, %v3275
      %v3290 = vpack.c.b16 %v3278, %v3277
      %v3291 = vpack.c.b16 %v3280, %v3279
      %v3292 = vpack.c.b16 %v3282, %v3281
      %v3293 = vpack.c.b16 %v3284, %v3283
      %v3294 = vpack.c.b16 %v3286, %v3285
      %3303 = vmatpush.bf16.msra.mxu0 %v3294
      %3304 = vmatpush.bf16.msra.mxu0 %v3293
      %3305 = vmatpush.bf16.msra.mxu0 %v3292
      %3306 = vmatpush.bf16.msra.mxu0 %v3291
      %3307 = vmatpush.bf16.msra.mxu0 %v3290
      %3308 = vmatpush.bf16.msra.mxu0 %v3289
      %3309 = vmatpush.bf16.msra.mxu0 %v3288
      %3310 = vmatpush.bf16.msra.mxu0 %v3287
      %3311 = vmatmul.bf16.gmra.mxu0 %v3220
      %v3312 = vpop.f32.mrf.mxu0
      %v3313 = vadd.f32 0.0, %v3312
      %v3314 = vpop.f32.mrf.mxu0
      %v3315 = vadd.f32 0.0, %v3314
      %3316 = vmatmul.bf16.gmra.mxu0 %v3221
      %v3317 = vpop.f32.mrf.mxu0
      %v3318 = vadd.f32 0.0, %v3317
      %v3319 = vpop.f32.mrf.mxu0
      %v3320 = vadd.f32 0.0, %v3319
      %3321 = vmatmul.bf16.gmra.mxu0 %v3222
      %v3322 = vpop.f32.mrf.mxu0
      %v3323 = vadd.f32 0.0, %v3322
      %v3324 = vpop.f32.mrf.mxu0
      %v3325 = vadd.f32 0.0, %v3324
      %3326 = vmatmul.bf16.gmra.mxu0 %v3223
      %v3327 = vpop.f32.mrf.mxu0
      %v3328 = vadd.f32 0.0, %v3327
      %v3329 = vpop.f32.mrf.mxu0
      %v3330 = vadd.f32 0.0, %v3329
      %3331 = vmatmul.bf16.gmra.mxu0 %v3224
      %v3332 = vpop.f32.mrf.mxu0
      %v3333 = vadd.f32 0.0, %v3332
      %v3334 = vpop.f32.mrf.mxu0
      %v3335 = vadd.f32 0.0, %v3334
      %3336 = vmatmul.bf16.gmra.mxu0 %v3225
      %v3337 = vpop.f32.mrf.mxu0
      %v3338 = vadd.f32 0.0, %v3337
      %v3339 = vpop.f32.mrf.mxu0
      %v3340 = vadd.f32 0.0, %v3339
      %3341 = vmatmul.bf16.gmra.mxu0 %v3226
      %v3342 = vpop.f32.mrf.mxu0
      %v3343 = vadd.f32 0.0, %v3342
      %v3344 = vpop.f32.mrf.mxu0
      %v3345 = vadd.f32 0.0, %v3344
      %3346 = vmatmul.bf16.gmra.mxu0 %v3227
      %v3347 = vpop.f32.mrf.mxu0
      %v3348 = vadd.f32 0.0, %v3347
      %v3349 = vpop.f32.mrf.mxu0
      %v3350 = vadd.f32 0.0, %v3349
      %3351 = vmatmul.bf16.gmra.mxu0 %v3228
      %v3352 = vpop.f32.mrf.mxu0
      %v3353 = vadd.f32 0.0, %v3352
      %v3354 = vpop.f32.mrf.mxu0
      %v3355 = vadd.f32 0.0, %v3354
      %3356 = vmatmul.bf16.gmra.mxu0 %v3229
      %v3357 = vpop.f32.mrf.mxu0
      %v3358 = vadd.f32 0.0, %v3357
      %v3359 = vpop.f32.mrf.mxu0
      %v3360 = vadd.f32 0.0, %v3359
      %3361 = vmatmul.bf16.gmra.mxu0 %v3230
      %v3362 = vpop.f32.mrf.mxu0
      %v3363 = vadd.f32 0.0, %v3362
      %v3364 = vpop.f32.mrf.mxu0
      %v3365 = vadd.f32 0.0, %v3364
      %3366 = vmatmul.bf16.gmra.mxu0 %v3231
      %v3367 = vpop.f32.mrf.mxu0
      %v3368 = vadd.f32 0.0, %v3367
      %v3369 = vpop.f32.mrf.mxu0
      %v3370 = vadd.f32 0.0, %v3369
      %3371 = vmatmul.bf16.gmra.mxu0 %v3232
      %v3372 = vpop.f32.mrf.mxu0
      %v3373 = vadd.f32 0.0, %v3372
      %v3374 = vpop.f32.mrf.mxu0
      %v3375 = vadd.f32 0.0, %v3374
      %3376 = vmatmul.bf16.gmra.mxu0 %v3233
      %v3377 = vpop.f32.mrf.mxu0
      %v3378 = vadd.f32 0.0, %v3377
      %v3379 = vpop.f32.mrf.mxu0
      %v3380 = vadd.f32 0.0, %v3379
      %3381 = vmatmul.bf16.gmra.mxu0 %v3234
      %v3382 = vpop.f32.mrf.mxu0
      %v3383 = vadd.f32 0.0, %v3382
      %v3384 = vpop.f32.mrf.mxu0
      %v3385 = vadd.f32 0.0, %v3384
      %3386 = vmatmul.bf16.gmra.mxu0 %v3235
      %v3387 = vpop.f32.mrf.mxu0
      %v3388 = vadd.f32 0.0, %v3387
      %v3389 = vpop.f32.mrf.mxu0
      %v3390 = vadd.f32 0.0, %v3389
      %3391 = vmatmul.bf16.gmra.mxu0 %v3236
      %v3392 = vpop.f32.mrf.mxu0
      %v3393 = vadd.f32 0.0, %v3392
      %v3394 = vpop.f32.mrf.mxu0
      %v3395 = vadd.f32 0.0, %v3394
      %3396 = vmatmul.bf16.gmra.mxu0 %v3237
      %v3397 = vpop.f32.mrf.mxu0
      %v3398 = vadd.f32 0.0, %v3397
      %v3399 = vpop.f32.mrf.mxu0
      %v3400 = vadd.f32 0.0, %v3399
      %3401 = vdwg.mxu0
      %v3402 = vld [vmem:[#allocation3] sm:$0xff]
      %v3403 = vld [vmem:[#allocation3 + $0x8] sm:$0xff]
      %v3404 = vld [vmem:[#allocation3 + $0x10] sm:$0xff]
      %v3405 = vld [vmem:[#allocation3 + $0x18] sm:$0xff]
      %v3406 = vld [vmem:[#allocation3 + $0x20] sm:$0xff]
      %v3407 = vld [vmem:[#allocation3 + $0x28] sm:$0xff]
      %v3408 = vld [vmem:[#allocation3 + $0x30] sm:$0xff]
      %v3409 = vld [vmem:[#allocation3 + $0x38] sm:$0xff]
      %v3410 = vld [vmem:[#allocation3 + $0x40] sm:$0xff]
      %v3411 = vld [vmem:[#allocation3 + $0x48] sm:$0xff]
      %v3412 = vld [vmem:[#allocation3 + $0x50] sm:$0xff]
      %v3413 = vld [vmem:[#allocation3 + $0x58] sm:$0xff]
      %v3414 = vld [vmem:[#allocation3 + $0x60] sm:$0xff]
      %v3415 = vld [vmem:[#allocation3 + $0x68] sm:$0xff]
      %v3416 = vld [vmem:[#allocation3 + $0x70] sm:$0xff]
      %v3417 = vld [vmem:[#allocation3 + $0x78] sm:$0xff]
      %v3418 = vld [vmem:[#allocation3 + $0x80] sm:$0xff]
      %v3419 = vld [vmem:[#allocation3 + $0x88] sm:$0xff]
      %v3420 = vld [vmem:[#allocation3 + $0x90] sm:$0xff]
      %v3421 = vld [vmem:[#allocation3 + $0x98] sm:$0xff]
      %v3422 = vld [vmem:[#allocation3 + $0xa0] sm:$0xff]
      %v3423 = vld [vmem:[#allocation3 + $0xa8] sm:$0xff]
      %v3424 = vld [vmem:[#allocation3 + $0xb0] sm:$0xff]
      %v3425 = vld [vmem:[#allocation3 + $0xb8] sm:$0xff]
      %v3426 = vld [vmem:[#allocation3 + $0xc0] sm:$0xff]
      %v3427 = vld [vmem:[#allocation3 + $0xc8] sm:$0xff]
      %v3428 = vld [vmem:[#allocation3 + $0xd0] sm:$0xff]
      %v3429 = vld [vmem:[#allocation3 + $0xd8] sm:$0xff]
      %v3430 = vld [vmem:[#allocation3 + $0xe0] sm:$0xff]
      %v3431 = vld [vmem:[#allocation3 + $0xe8] sm:$0xff]
      %v3432 = vld [vmem:[#allocation3 + $0xf0] sm:$0xff]
      %v3433 = vld [vmem:[#allocation3 + $0xf8] sm:$0xff]
      %v3434 = vld [vmem:[#allocation3 + $0x100] sm:$0xff]
      %v3435 = vld [vmem:[#allocation3 + $0x108] sm:$0xff]
      %v3436 = vld [vmem:[#allocation3 + $0x110] sm:$0xff]
      %v3437 = vld [vmem:[#allocation3 + $0x118] sm:$0x3f]
      %v3438 = vadd.f32 %v3402, %v3313
      %v3439 = vadd.f32 %v3403, %v3315
      %v3440 = vadd.f32 %v3404, %v3318
      %v3441 = vadd.f32 %v3405, %v3320
      %v3442 = vadd.f32 %v3406, %v3323
      %v3443 = vadd.f32 %v3407, %v3325
      %v3444 = vadd.f32 %v3408, %v3328
      %v3445 = vadd.f32 %v3409, %v3330
      %v3446 = vadd.f32 %v3410, %v3333
      %v3447 = vadd.f32 %v3411, %v3335
      %v3448 = vadd.f32 %v3412, %v3338
      %v3449 = vadd.f32 %v3413, %v3340
      %v3450 = vadd.f32 %v3414, %v3343
      %v3451 = vadd.f32 %v3415, %v3345
      %v3452 = vadd.f32 %v3416, %v3348
      %v3453 = vadd.f32 %v3417, %v3350
      %v3454 = vadd.f32 %v3418, %v3353
      %v3455 = vadd.f32 %v3419, %v3355
      %v3456 = vadd.f32 %v3420, %v3358
      %v3457 = vadd.f32 %v3421, %v3360
      %v3458 = vadd.f32 %v3422, %v3363
      %v3459 = vadd.f32 %v3423, %v3365
      %v3460 = vadd.f32 %v3424, %v3368
      %v3461 = vadd.f32 %v3425, %v3370
      %v3462 = vadd.f32 %v3426, %v3373
      %v3463 = vadd.f32 %v3427, %v3375
      %v3464 = vadd.f32 %v3428, %v3378
      %v3465 = vadd.f32 %v3429, %v3380
      %v3466 = vadd.f32 %v3430, %v3383
      %v3467 = vadd.f32 %v3431, %v3385
      %v3468 = vadd.f32 %v3432, %v3388
      %v3469 = vadd.f32 %v3433, %v3390
      %v3470 = vadd.f32 %v3434, %v3393
      %v3471 = vadd.f32 %v3435, %v3395
      %v3472 = vadd.f32 %v3436, %v3398
      %v3473 = vadd.f32 %v3437, %v3400
      %3474 = vst [vmem:[#allocation3] sm:$0xff] %v3438
      %3475 = vst [vmem:[#allocation3 + $0x8] sm:$0xff] %v3439
      %3476 = vst [vmem:[#allocation3 + $0x10] sm:$0xff] %v3440
      %3477 = vst [vmem:[#allocation3 + $0x18] sm:$0xff] %v3441
      %3478 = vst [vmem:[#allocation3 + $0x20] sm:$0xff] %v3442
      %3479 = vst [vmem:[#allocation3 + $0x28] sm:$0xff] %v3443
      %3480 = vst [vmem:[#allocation3 + $0x30] sm:$0xff] %v3444
      %3481 = vst [vmem:[#allocation3 + $0x38] sm:$0xff] %v3445
      %3482 = vst [vmem:[#allocation3 + $0x40] sm:$0xff] %v3446
      %3483 = vst [vmem:[#allocation3 + $0x48] sm:$0xff] %v3447
      %3484 = vst [vmem:[#allocation3 + $0x50] sm:$0xff] %v3448
      %3485 = vst [vmem:[#allocation3 + $0x58] sm:$0xff] %v3449
      %3486 = vst [vmem:[#allocation3 + $0x60] sm:$0xff] %v3450
      %3487 = vst [vmem:[#allocation3 + $0x68] sm:$0xff] %v3451
      %3488 = vst [vmem:[#allocation3 + $0x70] sm:$0xff] %v3452
      %3489 = vst [vmem:[#allocation3 + $0x78] sm:$0xff] %v3453
      %3490 = vst [vmem:[#allocation3 + $0x80] sm:$0xff] %v3454
      %3491 = vst [vmem:[#allocation3 + $0x88] sm:$0xff] %v3455
      %3492 = vst [vmem:[#allocation3 + $0x90] sm:$0xff] %v3456
      %3493 = vst [vmem:[#allocation3 + $0x98] sm:$0xff] %v3457
      %3494 = vst [vmem:[#allocation3 + $0xa0] sm:$0xff] %v3458
      %3495 = vst [vmem:[#allocation3 + $0xa8] sm:$0xff] %v3459
      %3496 = vst [vmem:[#allocation3 + $0xb0] sm:$0xff] %v3460
      %3497 = vst [vmem:[#allocation3 + $0xb8] sm:$0xff] %v3461
      %3498 = vst [vmem:[#allocation3 + $0xc0] sm:$0xff] %v3462
      %3499 = vst [vmem:[#allocation3 + $0xc8] sm:$0xff] %v3463
      %3500 = vst [vmem:[#allocation3 + $0xd0] sm:$0xff] %v3464
      %3501 = vst [vmem:[#allocation3 + $0xd8] sm:$0xff] %v3465
      %3502 = vst [vmem:[#allocation3 + $0xe0] sm:$0xff] %v3466
      %3503 = vst [vmem:[#allocation3 + $0xe8] sm:$0xff] %v3467
      %3504 = vst [vmem:[#allocation3 + $0xf0] sm:$0xff] %v3468
      %3505 = vst [vmem:[#allocation3 + $0xf8] sm:$0xff] %v3469
      %3506 = vst [vmem:[#allocation3 + $0x100] sm:$0xff] %v3470
      %3507 = vst [vmem:[#allocation3 + $0x108] sm:$0xff] %v3471
      %3508 = vst [vmem:[#allocation3 + $0x110] sm:$0xff] %v3472
      %3509 = vst [vmem:[#allocation3 + $0x118] sm:$0x3f] %v3473
      %v3510 = vlaneseq
      %v3511 = vshrl.u32 %v3510, 7
      %v3512 = vlaneseq
      %v3513 = vand.u32 %v3512, 127
      %v3514 = vmul.u32 %v3511, 2
      %vm3515 = vcmp.eq.s32.totalorder %v3513, %v3514
      %v3516 = vsel %vm3515, 1, 0
      %v3517 = vcvt.s32.f32 %v3516
      %v3518 = vld [vmem:[#allocation3] sm:$0xff]
      %v3519 = vld [vmem:[#allocation3 + $0x8] sm:$0x7f]
      %vm3520 = vcmask 121856
      %v3522 = vsel %vm3520, %v3517, 0
      %vm3524 = vcmask 1046528
      %v3526 = vsel %vm3524, %v3519, 0
      %3528 = vmatpush.msra.mxu0 0.0
      %3529 = vmatpush.msra.mxu0 0.0
      %3530 = vmatpush.msra.mxu0 0.0
      %3531 = vmatpush.msra.mxu0 0.0
      %3532 = vmatpush.msra.mxu0 0.0
      %3533 = vmatpush.msra.mxu0 0.0
      %3534 = vmatpush.msra.mxu0 0.0
      %3535 = vmatpush.msra.mxu0 0.0
      %3536 = vmatpush.msra.mxu0 0.0
      %3537 = vmatpush.msra.mxu0 0.0
      %3538 = vmatpush.msra.mxu0 0.0
      %3539 = vmatpush.msra.mxu0 0.0
      %3540 = vmatpush.msra.mxu0 0.0
      %3541 = vmatpush.msra.mxu0 0.0
      %3542 = vmatpush.msra.mxu0 %v3526
      %3543 = vmatpush.msra.mxu0 %v3518
      %3544 = vmatmul.f32.gmra.mxu0 %v3522
      %v3545 = vpop.f32.mrf.mxu0
      %v3546 = vadd.f32 0.0, %v3545
      %3547 = vdwg.mxu0
      %v3548 = vld [vmem:[#allocation3 + $0x24] sm:$0xff]
      %v3549 = vld [vmem:[#allocation3 + $0x2c] sm:$0x7f]
      %v3551 = vsel %vm3524, %v3549, 0
      %3553 = vmatpush.msra.mxu0 0.0
      %3554 = vmatpush.msra.mxu0 0.0
      %3555 = vmatpush.msra.mxu0 0.0
      %3556 = vmatpush.msra.mxu0 0.0
      %3557 = vmatpush.msra.mxu0 0.0
      %3558 = vmatpush.msra.mxu0 0.0
      %3559 = vmatpush.msra.mxu0 0.0
      %3560 = vmatpush.msra.mxu0 0.0
      %3561 = vmatpush.msra.mxu0 0.0
      %3562 = vmatpush.msra.mxu0 0.0
      %3563 = vmatpush.msra.mxu0 0.0
      %3564 = vmatpush.msra.mxu0 0.0
      %3565 = vmatpush.msra.mxu0 0.0
      %3566 = vmatpush.msra.mxu0 0.0
      %3567 = vmatpush.msra.mxu0 %v3551
      %3568 = vmatpush.msra.mxu0 %v3548
      %3569 = vmatmul.f32.gmra.mxu0 %v3522
      %v3570 = vpop.f32.mrf.mxu0
      %v3571 = vadd.f32 0.0, %v3570
      %3572 = vdwg.mxu0
      %v3573 = vld [vmem:[#allocation3 + $0x48] sm:$0xff]
      %v3574 = vld [vmem:[#allocation3 + $0x50] sm:$0x7f]
      %v3576 = vsel %vm3524, %v3574, 0
      %3578 = vmatpush.msra.mxu0 0.0
      %3579 = vmatpush.msra.mxu0 0.0
      %3580 = vmatpush.msra.mxu0 0.0
      %3581 = vmatpush.msra.mxu0 0.0
      %3582 = vmatpush.msra.mxu0 0.0
      %3583 = vmatpush.msra.mxu0 0.0
      %3584 = vmatpush.msra.mxu0 0.0
      %3585 = vmatpush.msra.mxu0 0.0
      %3586 = vmatpush.msra.mxu0 0.0
      %3587 = vmatpush.msra.mxu0 0.0
      %3588 = vmatpush.msra.mxu0 0.0
      %3589 = vmatpush.msra.mxu0 0.0
      %3590 = vmatpush.msra.mxu0 0.0
      %3591 = vmatpush.msra.mxu0 0.0
      %3592 = vmatpush.msra.mxu0 %v3576
      %3593 = vmatpush.msra.mxu0 %v3573
      %3594 = vmatmul.f32.gmra.mxu0 %v3522
      %v3595 = vpop.f32.mrf.mxu0
      %v3596 = vadd.f32 0.0, %v3595
      %3597 = vdwg.mxu0
      %v3598 = vld [vmem:[#allocation3 + $0x6c] sm:$0xff]
      %v3599 = vld [vmem:[#allocation3 + $0x74] sm:$0x7f]
      %v3601 = vsel %vm3524, %v3599, 0
      %3603 = vmatpush.msra.mxu0 0.0
      %3604 = vmatpush.msra.mxu0 0.0
      %3605 = vmatpush.msra.mxu0 0.0
      %3606 = vmatpush.msra.mxu0 0.0
      %3607 = vmatpush.msra.mxu0 0.0
      %3608 = vmatpush.msra.mxu0 0.0
      %3609 = vmatpush.msra.mxu0 0.0
      %3610 = vmatpush.msra.mxu0 0.0
      %3611 = vmatpush.msra.mxu0 0.0
      %3612 = vmatpush.msra.mxu0 0.0
      %3613 = vmatpush.msra.mxu0 0.0
      %3614 = vmatpush.msra.mxu0 0.0
      %3615 = vmatpush.msra.mxu0 0.0
      %3616 = vmatpush.msra.mxu0 0.0
      %3617 = vmatpush.msra.mxu0 %v3601
      %3618 = vmatpush.msra.mxu0 %v3598
      %3619 = vmatmul.f32.gmra.mxu0 %v3522
      %v3620 = vpop.f32.mrf.mxu0
      %v3621 = vadd.f32 0.0, %v3620
      %3622 = vdwg.mxu0
      %v3623 = vld [vmem:[#allocation3 + $0x90] sm:$0xff]
      %v3624 = vld [vmem:[#allocation3 + $0x98] sm:$0x7f]
      %v3626 = vsel %vm3524, %v3624, 0
      %3628 = vmatpush.msra.mxu0 0.0
      %3629 = vmatpush.msra.mxu0 0.0
      %3630 = vmatpush.msra.mxu0 0.0
      %3631 = vmatpush.msra.mxu0 0.0
      %3632 = vmatpush.msra.mxu0 0.0
      %3633 = vmatpush.msra.mxu0 0.0
      %3634 = vmatpush.msra.mxu0 0.0
      %3635 = vmatpush.msra.mxu0 0.0
      %3636 = vmatpush.msra.mxu0 0.0
      %3637 = vmatpush.msra.mxu0 0.0
      %3638 = vmatpush.msra.mxu0 0.0
      %3639 = vmatpush.msra.mxu0 0.0
      %3640 = vmatpush.msra.mxu0 0.0
      %3641 = vmatpush.msra.mxu0 0.0
      %3642 = vmatpush.msra.mxu0 %v3626
      %3643 = vmatpush.msra.mxu0 %v3623
      %3644 = vmatmul.f32.gmra.mxu0 %v3522
      %v3645 = vpop.f32.mrf.mxu0
      %v3646 = vadd.f32 0.0, %v3645
      %3647 = vdwg.mxu0
      %v3648 = vld [vmem:[#allocation3 + $0xb4] sm:$0xff]
      %v3649 = vld [vmem:[#allocation3 + $0xbc] sm:$0x7f]
      %v3651 = vsel %vm3524, %v3649, 0
      %3653 = vmatpush.msra.mxu0 0.0
      %3654 = vmatpush.msra.mxu0 0.0
      %3655 = vmatpush.msra.mxu0 0.0
      %3656 = vmatpush.msra.mxu0 0.0
      %3657 = vmatpush.msra.mxu0 0.0
      %3658 = vmatpush.msra.mxu0 0.0
      %3659 = vmatpush.msra.mxu0 0.0
      %3660 = vmatpush.msra.mxu0 0.0
      %3661 = vmatpush.msra.mxu0 0.0
      %3662 = vmatpush.msra.mxu0 0.0
      %3663 = vmatpush.msra.mxu0 0.0
      %3664 = vmatpush.msra.mxu0 0.0
      %3665 = vmatpush.msra.mxu0 0.0
      %3666 = vmatpush.msra.mxu0 0.0
      %3667 = vmatpush.msra.mxu0 %v3651
      %3668 = vmatpush.msra.mxu0 %v3648
      %3669 = vmatmul.f32.gmra.mxu0 %v3522
      %v3670 = vpop.f32.mrf.mxu0
      %v3671 = vadd.f32 0.0, %v3670
      %3672 = vdwg.mxu0
      %v3673 = vld [vmem:[#allocation3 + $0xd8] sm:$0xff]
      %v3674 = vld [vmem:[#allocation3 + $0xe0] sm:$0x7f]
      %v3676 = vsel %vm3524, %v3674, 0
      %3678 = vmatpush.msra.mxu0 0.0
      %3679 = vmatpush.msra.mxu0 0.0
      %3680 = vmatpush.msra.mxu0 0.0
      %3681 = vmatpush.msra.mxu0 0.0
      %3682 = vmatpush.msra.mxu0 0.0
      %3683 = vmatpush.msra.mxu0 0.0
      %3684 = vmatpush.msra.mxu0 0.0
      %3685 = vmatpush.msra.mxu0 0.0
      %3686 = vmatpush.msra.mxu0 0.0
      %3687 = vmatpush.msra.mxu0 0.0
      %3688 = vmatpush.msra.mxu0 0.0
      %3689 = vmatpush.msra.mxu0 0.0
      %3690 = vmatpush.msra.mxu0 0.0
      %3691 = vmatpush.msra.mxu0 0.0
      %3692 = vmatpush.msra.mxu0 %v3676
      %3693 = vmatpush.msra.mxu0 %v3673
      %3694 = vmatmul.f32.gmra.mxu0 %v3522
      %v3695 = vpop.f32.mrf.mxu0
      %v3696 = vadd.f32 0.0, %v3695
      %3697 = vdwg.mxu0
      %v3698 = vld [vmem:[#allocation3 + $0xfc] sm:$0xff]
      %v3699 = vld [vmem:[#allocation3 + $0x104] sm:$0x7f]
      %v3701 = vsel %vm3524, %v3699, 0
      %3703 = vmatpush.msra.mxu0 0.0
      %3704 = vmatpush.msra.mxu0 0.0
      %3705 = vmatpush.msra.mxu0 0.0
      %3706 = vmatpush.msra.mxu0 0.0
      %3707 = vmatpush.msra.mxu0 0.0
      %3708 = vmatpush.msra.mxu0 0.0
      %3709 = vmatpush.msra.mxu0 0.0
      %3710 = vmatpush.msra.mxu0 0.0
      %3711 = vmatpush.msra.mxu0 0.0
      %3712 = vmatpush.msra.mxu0 0.0
      %3713 = vmatpush.msra.mxu0 0.0
      %3714 = vmatpush.msra.mxu0 0.0
      %3715 = vmatpush.msra.mxu0 0.0
      %3716 = vmatpush.msra.mxu0 0.0
      %3717 = vmatpush.msra.mxu0 %v3701
      %3718 = vmatpush.msra.mxu0 %v3698
      %3719 = vmatmul.f32.gmra.mxu0 %v3522
      %v3720 = vpop.f32.mrf.mxu0
      %v3721 = vadd.f32 0.0, %v3720
      %3722 = vdwg.mxu0
      %v3723 = vpack.c.bf16 %v3546, %v3546
      %v3724 = vpack.c.bf16 %v3571, %v3571
      %v3725 = vpack.c.bf16 %v3596, %v3596
      %v3726 = vpack.c.bf16 %v3621, %v3621
      %v3727 = vpack.c.bf16 %v3646, %v3646
      %v3728 = vpack.c.bf16 %v3671, %v3671
      %v3729 = vpack.c.bf16 %v3696, %v3696
      %v3730 = vpack.c.bf16 %v3721, %v3721
      %3731 = vst [vmem:[%s264] sm:$0xf] %v3723
      %3732 = vst [vmem:[%s264 + $0x4] sm:$0xf] %v3724
      %3733 = vst [vmem:[%s264 + $0x8] sm:$0xf] %v3725
      %3734 = vst [vmem:[%s264 + $0xc] sm:$0xf] %v3726
      %3735 = vst [vmem:[%s264 + $0x10] sm:$0xf] %v3727
      %3736 = vst [vmem:[%s264 + $0x14] sm:$0xf] %v3728
      %3737 = vst [vmem:[%s264 + $0x18] sm:$0xf] %v3729
      %3738 = vst [vmem:[%s264 + $0x1c] sm:$0xf] %v3730
      %v3739 = vadd.f32 %v3546, %v3571
      %v3740 = vadd.f32 %v3739, %v3596
      %v3741 = vadd.f32 %v3740, %v3621
      %v3742 = vadd.f32 %v3741, %v3646
      %v3743 = vadd.f32 %v3742, %v3671
      %v3744 = vadd.f32 %v3743, %v3696
      %v3745 = vadd.f32 %v3744, %v3721
      %v3746 = vrot.slane %v3745, 4
      %v3747 = vadd.f32 %v3745, %v3746
      %v3748 = vrot.slane %v3747, 2
      %v3749 = vadd.f32 %v3747, %v3748
      %v3750 = vrot.slane %v3749, 1
      %v3751 = vadd.f32 %v3749, %v3750
      %vm3752 = vcmask 7168
      %v3753 = vsel %vm3752, 1.0, 0.0
      %v3754 = vadd.f32 %v3753, %v3753
      %v3755 = vadd.f32 %v3754, %v3753
      %v3756 = vadd.f32 %v3755, %v3753
      %v3757 = vadd.f32 %v3756, %v3753
      %v3758 = vadd.f32 %v3757, %v3753
      %v3759 = vadd.f32 %v3758, %v3753
      %v3760 = vadd.f32 %v3759, %v3753
      %3761 = vadd.xlane.f32.xlu0 %v3760
      %v3762 = vpop.xlane.xlu0 %3761
      %v3763 = vrot.slane %v3762, 4
      %v3764 = vadd.f32 %v3762, %v3763
      %v3765 = vrot.slane %v3764, 2
      %v3766 = vadd.f32 %v3764, %v3765
      %v3767 = vrot.slane %v3766, 1
      %v3768 = vadd.f32 %v3766, %v3767
      %s3769 = vtos %v3768
      %s3770 = smax.f32 %s3769, 1.0
      %v3771 = vstv %s3770
      %v3772 = vrcp.pop %v3771
      %v3773 = vmul.f32 %v3771, %v3772
      %v3774 = vsub.f32 1.0, %v3773
      %v3775 = vmul.f32 %v3772, %v3774
      %v3776 = vadd.f32 %v3772, %v3775
      %vm3777 = vweird.f32 %v3771
      %vm3778 = vweird.f32 %v3772
      %vm3779 = vmor %vm3777, %vm3778
      %v3780 = vsel %vm3779, %v3772, %v3776
      %v3781 = vand.u32 2147483647, %v3771
      %vm3782 = vcmp.eq.f32.partialorder %v3781, 8.507059e+37
      %v3783 = vand.u32 %v3771, 2147483648
      %v3784 = vor.u32 1.1754944e-38, %v3783
      %v3785 = vsel %vm3782, %v3784, %v3780
      %v3786 = vmul.f32 %v3751, %v3785
      %v3787 = vsub.f32 %v3546, %v3786
      %v3788 = vsub.f32 %v3571, %v3786
      %v3789 = vsub.f32 %v3596, %v3786
      %v3790 = vsub.f32 %v3621, %v3786
      %v3791 = vsub.f32 %v3646, %v3786
      %v3792 = vsub.f32 %v3671, %v3786
      %v3793 = vsub.f32 %v3696, %v3786
      %v3794 = vsub.f32 %v3721, %v3786
      %v3795 = vmul.f32 %v3787, %v3787
      %v3796 = vmul.f32 %v3788, %v3788
      %v3797 = vmul.f32 %v3789, %v3789
      %v3798 = vmul.f32 %v3790, %v3790
      %v3799 = vmul.f32 %v3791, %v3791
      %v3800 = vmul.f32 %v3792, %v3792
      %v3801 = vmul.f32 %v3793, %v3793
      %v3802 = vmul.f32 %v3794, %v3794
      %v3803 = vadd.f32 %v3795, %v3796
      %v3804 = vadd.f32 %v3803, %v3797
      %v3805 = vadd.f32 %v3804, %v3798
      %v3806 = vadd.f32 %v3805, %v3799
      %v3807 = vadd.f32 %v3806, %v3800
      %v3808 = vadd.f32 %v3807, %v3801
      %v3809 = vadd.f32 %v3808, %v3802
      %v3810 = vrot.slane %v3809, 4
      %v3811 = vadd.f32 %v3809, %v3810
      %v3812 = vrot.slane %v3811, 2
      %v3813 = vadd.f32 %v3811, %v3812
      %v3814 = vrot.slane %v3813, 1
      %v3815 = vadd.f32 %v3813, %v3814
      %3816 = vst [vmem:[%s268] sm:$0xff] %v3751
      %3817 = vst [vmem:[%s272] sm:$0xff] %v3815
      %p3818 = scmp.lt.s32.totalorder %s18, 1
      %s3819 = scalar_select %p3818, %s18, 1
      %s3820 = smul.addr %s3819, 8
      %s3821 = smul.addr %s3820, 4
      %s3822 = scalar_lea.vmem %s4, %s3821
      %p3823 = scmp.lt.s32.totalorder %s18, 1
      %s3824 = scalar_select %p3823, %s18, 1
      %s3825 = smul.addr %s3824, 8
      %s3826 = scalar_lea.vmem %s5, %s3825
      %p3827 = scmp.lt.s32.totalorder %s18, 1
      %s3828 = scalar_select %p3827, %s18, 1
      %s3829 = smul.addr %s3828, 8
      %s3830 = scalar_lea.vmem %s6, %s3829
      // Predicated region
      $region37: #{resblock50_forward.7} parent=35 // pred_check
        %p3831 = pneg %p125
      $region38: #{resblock50_forward.7} parent=35 // pred_check_branch
        %3833 = sbr.rel (%p3831) target = $region40
      $region39: #{resblock50_forward.7} parent=35 // pred_region
        _
      $region40: #{resblock50_forward.7} parent=35 // pred_fallthru
        _
      // Predicated region
      $region41: #{resblock50_forward.7} parent=35 // pred_check
        %p3834 = pneg %p151
      $region42: #{resblock50_forward.7} parent=35 // pred_check_branch
        %3836 = sbr.rel (%p3834) target = $region44
      $region43: #{resblock50_forward.7} parent=35 // pred_region
        _
      $region44: #{resblock50_forward.7} parent=35 // pred_fallthru
        _
      // Predicated region
      $region45: #{resblock50_forward.7} parent=35 // pred_check
        %p3837 = pneg %p177
      $region46: #{resblock50_forward.7} parent=35 // pred_check_branch
        %3839 = sbr.rel (%p3837) target = $region48
      $region47: #{resblock50_forward.7} parent=35 // pred_region
        _
      $region48: #{resblock50_forward.7} parent=35 // pred_fallthru
        _
    $region36: #{resblock50_forward.7} parent=5 // pred_fallthru
      _
    %p3840 = scmp.le.s32.totalorder 2, %s13
    // Predicated region
    $region49: #{resblock50_forward.7} parent=5 // pred_check
      %p3841 = pneg %p3840
    $region50: #{resblock50_forward.7} parent=5 // pred_check_branch
      %3843 = sbr.rel (%p3841) target = $region52
    $region51: #{resblock50_forward.7} parent=5 // pred_region
      %s3844 = ssub.s32 %s13, 2
      // Predicated region
      $region53: #{resblock50_forward.7} parent=51 // pred_check
        %p3845 = pneg %p131
      $region54: #{resblock50_forward.7} parent=51 // pred_check_branch
        %3847 = sbr.rel (%p3845) target = $region56
      $region55: #{resblock50_forward.7} parent=51 // pred_region
        %p3848 = scmp.lt.s32.totalorder %s19, 1
        %s3849 = scalar_select %p3848, %s19, 1
        %s3850 = smul.addr %s3849, 8
        %s3851 = smul.addr %s3850, 4
        %s3852 = scalar_lea.vmem %s4, %s3851
      $region56: #{resblock50_forward.7} parent=51 // pred_fallthru
        _
      // Predicated region
      $region57: #{resblock50_forward.7} parent=51 // pred_check
        %p3853 = pneg %p157
      $region58: #{resblock50_forward.7} parent=51 // pred_check_branch
        %3855 = sbr.rel (%p3853) target = $region60
      $region59: #{resblock50_forward.7} parent=51 // pred_region
        %p3856 = scmp.lt.s32.totalorder %s19, 1
        %s3857 = scalar_select %p3856, %s19, 1
        %s3858 = smul.addr %s3857, 8
        %s3859 = scalar_lea.vmem %s5, %s3858
      $region60: #{resblock50_forward.7} parent=51 // pred_fallthru
        _
      // Predicated region
      $region61: #{resblock50_forward.7} parent=51 // pred_check
        %p3860 = pneg %p183
      $region62: #{resblock50_forward.7} parent=51 // pred_check_branch
        %3862 = sbr.rel (%p3860) target = $region64
      $region63: #{resblock50_forward.7} parent=51 // pred_region
        %p3863 = scmp.lt.s32.totalorder %s19, 1
        %s3864 = scalar_select %p3863, %s19, 1
        %s3865 = smul.addr %s3864, 8
        %s3866 = scalar_lea.vmem %s6, %s3865
      $region64: #{resblock50_forward.7} parent=51 // pred_fallthru
        _
    $region52: #{resblock50_forward.7} parent=5 // pred_fallthru
      _
  $region6: #{resblock50_forward.7} parent=0 // loop_footer
    %s17 = sadd.s32 1, %s13
  $region7: #{resblock50_forward.7} parent=0 // loop_footer_branch
    %12 = sbr.rel target = $region3
  $region8: #{resblock50_forward.7} parent=0 // loop_exit
    _

</llo_original>
